<compile_context>
chip_gen: v5e
topology: v5e:2x2
jax: 0.10.0
libtpu: 0.0.40
codegen_flags: <defaults>
</compile_context>

<pallas_src>
import functools

import jax
import jax.numpy as jnp
from jax.experimental import pallas as pl
from jax.experimental.pallas import tpu as pltpu


def _round_up(x, m):
    return (x + m - 1) // m * m


# ----------------------------------------------------------------------------
# Pallas kernel: tiled matmul (bf16 x bf16 -> f32 acc) + bias + LeakyReLU.
# Grid = (M tiles, N tiles, K tiles); K is the reduction axis (last,
# "arbitrary"); M and N tiles are "parallel" (megacore).
# ----------------------------------------------------------------------------
def _matmul_bias_act_kernel(p_ref, w_ref, b_ref, o_ref, acc_ref, *,
                            negative_slope):
    @pl.when(pl.program_id(2) == 0)
    def _():
        # Initialize the accumulator with the sublane-broadcast bias row.
        acc_ref[...] = jnp.broadcast_to(b_ref[0:1, :], acc_ref.shape)

    acc_ref[...] += jnp.dot(p_ref[...], w_ref[...],
                            preferred_element_type=jnp.float32)

    @pl.when(pl.program_id(2) == pl.num_programs(2) - 1)
    def _():
        acc = acc_ref[...]
        if negative_slope != 1.0:        # static: skip select for identity act
            acc = jnp.where(acc >= 0.0, acc, negative_slope * acc)
        o_ref[...] = acc.astype(o_ref.dtype)


# ----------------------------------------------------------------------------
# Dispatch heuristic: Pallas only where the matmul is worth it.
# ----------------------------------------------------------------------------
def _use_pallas_path(M, K, Cout):
    # Tiny layers would waste >2x MXU work on 128-lane padding and collapse
    # the grid to a single step; XLA conv is faster there.
    return (Cout >= 64) and (M >= 128) and (K >= 128)


# ----------------------------------------------------------------------------
# XLA conv (NHWC) -- used as the tiny-layer fallback and as the reference.
# ----------------------------------------------------------------------------
def _conv2d_xla(x, weight, bias, *, stride, padding, negative_slope,
                emulate_bf16):
    if emulate_bf16:
        # Mirror the Pallas path's bf16 input rounding (f32 accumulation).
        x = x.astype(jnp.bfloat16).astype(jnp.float32)
        weight = weight.astype(jnp.bfloat16).astype(jnp.float32)
    w_hwio = jnp.transpose(weight, (2, 3, 1, 0))       # OIHW -> HWIO
    y = jax.lax.conv_general_dilated(
        x, w_hwio, window_strides=(stride, stride),
        padding=[(padding, padding), (padding, padding)],
        dimension_numbers=("NHWC", "HWIO", "NHWC"),
        precision=jax.lax.Precision.HIGHEST)
    y = y + bias.reshape(1, 1, 1, -1)
    if negative_slope != 1.0:
        y = jnp.where(y >= 0.0, y, negative_slope * y)
    return y


# ----------------------------------------------------------------------------
# Conv2d (NHWC activations, OIHW weights) + LeakyReLU via the Pallas matmul.
# ----------------------------------------------------------------------------
def conv2d_act(x, weight, bias, *, stride=1, padding=0, negative_slope=1.0):
    N, H, W, Cin = x.shape
    Cout, _, kH, kW = weight.shape
    Ho = (H + 2 * padding - kH) // stride + 1
    Wo = (W + 2 * padding - kW) // stride + 1
    M = N * Ho * Wo
    K = Cin * kH * kW

    if not _use_pallas_path(M, K, Cout):
        return _conv2d_xla(x, weight, bias, stride=stride, padding=padding,
                           negative_slope=negative_slope, emulate_bf16=False)

    # ---- glue: im2col directly in (N, Ho, Wo, kH*kW*Cin) NHWC order ----
    # TODO(synk): still materializes a kH*kW-inflated tensor in HBM; a fully
    #             fused NHWC conv kernel (manual DMA of kH row slabs) would
    #             remove this traffic entirely.
    xp = jnp.pad(x, ((0, 0), (padding, padding), (padding, padding), (0, 0)))
    cols = [xp[:, i:i + stride * Ho:stride, j:j + stride * Wo:stride, :]
            for i in range(kH) for j in range(kW)]
    patches = cols[0] if len(cols) == 1 else jnp.concatenate(cols, axis=-1)
    patches = patches.reshape(M, K)
    # Weight -> (K, Cout) with matching (kh, kw, cin) row order.
    w_mat = jnp.transpose(weight, (2, 3, 1, 0)).reshape(K, Cout)

    # ---- tile selection (lane-dense outputs, minimal K padding) ----
    N_pad = _round_up(Cout, 128)
    TILE_N = 256 if N_pad % 256 == 0 else 128

    K_pad = _round_up(K, 128)
    if K_pad <= 1024:
        TILE_K = K_pad
    else:
        TILE_K, K_pad = min(((tk, _round_up(K_pad, tk))
                             for tk in (1024, 512, 256)),
                            key=lambda t: (t[1], -t[0]))

    M16 = _round_up(M, 16)                 # bf16 sublane packing
    TILE_M = M16 if M16 <= 1024 else 512
    M_pad = _round_up(M16, TILE_M)

    # ---- bf16 MXU feeds, f32 bias / accumulator / output ----
    patches_p = jnp.pad(patches, ((0, M_pad - M), (0, K_pad - K))
                        ).astype(jnp.bfloat16)
    w_p = jnp.pad(w_mat, ((0, K_pad - K), (0, N_pad - Cout))
                  ).astype(jnp.bfloat16)
    b_p = jnp.pad(jnp.broadcast_to(bias.reshape(1, Cout), (8, Cout)),
                  ((0, 0), (0, N_pad - Cout))).astype(jnp.float32)

    grid = (M_pad // TILE_M, N_pad // TILE_N, K_pad // TILE_K)

    # ---- VMEM budget (no 2x fudge; capped well below v7x's 64 MiB) ----
    vmem_need = (2 * (TILE_M * TILE_K * 2 + TILE_K * TILE_N * 2
                      + 8 * TILE_N * 4 + TILE_M * TILE_N * 4)
                 + TILE_M * TILE_N * 4)
    vmem_limit = int(min(max(2 * vmem_need, 16 * 1024 * 1024),
                         48 * 1024 * 1024))
    cost = pl.CostEstimate(
        flops=2 * M_pad * K_pad * N_pad,
        transcendentals=0,
        bytes_accessed=(2 * M_pad * K_pad + 2 * K_pad * N_pad
                        + 4 * M_pad * N_pad + 4 * 8 * N_pad))

    out_p = pl.pallas_call(
        functools.partial(_matmul_bias_act_kernel,
                          negative_slope=negative_slope),
        out_shape=jax.ShapeDtypeStruct((M_pad, N_pad), jnp.float32),
        grid_spec=pltpu.PrefetchScalarGridSpec(
            num_scalar_prefetch=0,
            grid=grid,
            in_specs=[
                pl.BlockSpec((TILE_M, TILE_K), lambda i, j, k: (i, k)),
                pl.BlockSpec((TILE_K, TILE_N), lambda i, j, k: (k, j)),
                pl.BlockSpec((8, TILE_N), lambda i, j, k: (0, j)),
            ],
            out_specs=pl.BlockSpec((TILE_M, TILE_N), lambda i, j, k: (i, j)),
            scratch_shapes=[pltpu.VMEM((TILE_M, TILE_N), jnp.float32)],
        ),
        compiler_params=pltpu.CompilerParams(
            dimension_semantics=("parallel", "parallel", "arbitrary"),
            vmem_limit_bytes=vmem_limit),
        cost_estimate=cost,
    )(patches_p, w_p, b_p)

    # ---- strip padding; output is already NHWC-ordered (no transpose) ----
    return out_p[:M, :Cout].reshape(N, Ho, Wo, Cout)


# ----------------------------------------------------------------------------
# Reference conv (pure JAX / lax) for correctness checking.  It mirrors the
# Pallas path's bf16 input rounding on the layers Pallas handles so the
# comparison tests the kernel, not the dtype choice.
# ----------------------------------------------------------------------------
def _conv2d_act_reference(x, weight, bias, *, stride=1, padding=0,
                          negative_slope=1.0):
    N, H, W, Cin = x.shape
    Cout, _, kH, kW = weight.shape
    Ho = (H + 2 * padding - kH) // stride + 1
    Wo = (W + 2 * padding - kW) // stride + 1
    M = N * Ho * Wo
    K = Cin * kH * kW
    return _conv2d_xla(x, weight, bias, stride=stride, padding=padding,
                       negative_slope=negative_slope,
                       emulate_bf16=_use_pallas_path(M, K, Cout))


# ----------------------------------------------------------------------------
# JAX glue ops (NHWC, no matmul content)
# ----------------------------------------------------------------------------
def upsample_bilinear_2x(x):
    """nn.Upsample(scale_factor=2, mode='bilinear', align_corners=True)."""
    N, H, W, C = x.shape
    H_out, W_out = 2 * H, 2 * W

    def coords(n_in, n_out):
        if n_in == 1:
            src = jnp.zeros((n_out,), jnp.float32)
        else:
            src = jnp.arange(n_out, dtype=jnp.float32) * (n_in - 1) / (n_out - 1)
        i0 = jnp.clip(jnp.floor(src).astype(jnp.int32), 0, n_in - 1)
        i1 = jnp.clip(i0 + 1, 0, n_in - 1)
        frac = src - i0.astype(jnp.float32)
        return i0, i1, frac

    h0, h1, fh = coords(H, H_out)
    w0, w1, fw = coords(W, W_out)
    top = jnp.take(x, h0, axis=1)
    bot = jnp.take(x, h1, axis=1)
    xh = top * (1.0 - fh)[None, :, None, None] + bot * fh[None, :, None, None]
    left = jnp.take(xh, w0, axis=2)
    right = jnp.take(xh, w1, axis=2)
    return (left * (1.0 - fw)[None, None, :, None]
            + right * fw[None, None, :, None])


def _reflect_pad1(x):  # NHWC
    return jnp.pad(x, ((0, 0), (1, 1), (1, 1), (0, 0)), mode="reflect")


# ----------------------------------------------------------------------------
# UNet forward (shared between the Pallas path and the XLA reference).
# Activations are NHWC end-to-end; converted once at entry / exit.
# ----------------------------------------------------------------------------
def unet_forward(params, x, *, conv_fn):
    xin = jnp.transpose(x, (0, 2, 3, 1))                 # NCHW -> NHWC, once

    def conv(p, h, *, stride=1, padding=1, slope=1.0):
        return conv_fn(h, p["w"], p["b"], stride=stride, padding=padding,
                       negative_slope=slope)

    x_head = conv(params["head"], xin, stride=1, padding=1, slope=1.0)
    x1 = conv(params["down1"], x_head, stride=2, padding=1, slope=0.2)
    x2 = conv(params["down2"], x1, stride=2, padding=1, slope=0.2)
    x3 = conv(params["down3"], x2, stride=2, padding=1, slope=0.2)
    x4 = conv(params["down4"], x3, stride=2, padding=1, slope=0.2)

    xt = x4
    for rp in params["res"]:
        h = conv(rp["c1"], _reflect_pad1(xt), stride=1, padding=0, slope=0.0)
        h = conv(rp["c2"], _reflect_pad1(h), stride=1, padding=0, slope=0.0)
        xt = xt + h

    def decoder(p, h):
        return conv(p, upsample_bilinear_2x(h), stride=1, padding=1, slope=0.0)

    x1_up = decoder(params["up1"], xt)
    # TODO(synk): Dropout2d(0.5) is identity in eval mode.
    x2_up = decoder(params["up2"], jnp.concatenate([x3, x1_up], axis=-1))
    x3_up = decoder(params["up3"], jnp.concatenate([x2, x2_up], axis=-1))
    x4_up = decoder(params["up4"], jnp.concatenate([x1, x3_up], axis=-1))

    x_final = conv(params["final"], jnp.concatenate([x_head, x4_up], axis=-1),
                   stride=1, padding=0, slope=1.0)
    out = jnp.clip(jnp.tanh(x_final) + xin, -1.0, 1.0)
    return jnp.transpose(out, (0, 3, 1, 2))              # NHWC -> NCHW, once


# ----------------------------------------------------------------------------
# Deterministic synthetic parameters (PyTorch OIHW weight layout)
# ----------------------------------------------------------------------------
def init_unet_params(key, in_channels, out_channels, kernel_channels):
    kc = kernel_channels

    def conv_init(k, cout, cin, kh, kw):
        kw_, kb_ = jax.random.split(k)
        scale = 1.0 / float(jnp.sqrt(cin * kh * kw))
        return {"w": scale * jax.random.normal(kw_, (cout, cin, kh, kw),
                                               jnp.float32),
                "b": scale * jax.random.normal(kb_, (cout,), jnp.float32)}

    keys = iter(jax.random.split(key, 32))
    params = {
        "head": conv_init(next(keys), kc, in_channels, 3, 3),
        "down1": conv_init(next(keys), 2 * kc, kc, 4, 4),
        "down2": conv_init(next(keys), 4 * kc, 2 * kc, 4, 4),
        "down3": conv_init(next(keys), 8 * kc, 4 * kc, 4, 4),
        "down4": conv_init(next(keys), 8 * kc, 8 * kc, 4, 4),
        "up1": conv_init(next(keys), 8 * kc, 8 * kc, 3, 3),
        "up2": conv_init(next(keys), 4 * kc, 16 * kc, 3, 3),
        "up3": conv_init(next(keys), 2 * kc, 8 * kc, 3, 3),
        "up4": conv_init(next(keys), kc, 4 * kc, 3, 3),
        "final": conv_init(next(keys), out_channels, 2 * kc, 1, 1),
    }
    res_keys = jax.random.split(next(keys), 18)
    params["res"] = [
        {"c1": conv_init(res_keys[2 * i], 8 * kc, 8 * kc, 3, 3),
         "c2": conv_init(res_keys[2 * i + 1], 8 * kc, 8 * kc, 3, 3)}
        for i in range(9)]
    return params


if __name__ == "__main__":
    key = jax.random.PRNGKey(0)
    k_p, k_x = jax.random.split(key)

    # Spatial must be >= 32 so the deepest feature map (H/16) is >= 2 for
    # ReflectionPad2d(1).  kernel_channels=16 so the mid-network convs
    # (Cout >= 64) exercise the Pallas path at these small shapes.
    N, C, H, W = 2, 3, 64, 64
    kernel_channels = 16

    params = init_unet_params(k_p, C, C, kernel_channels)
    x = jax.random.normal(k_x, (N, C, H, W), dtype=jnp.float32)

    fwd = jax.jit(functools.partial(unet_forward, conv_fn=conv2d_act))
    out = jax.block_until_ready(fwd(params, x))

    ref_fwd = jax.jit(functools.partial(unet_forward,
                                        conv_fn=_conv2d_act_reference))
    ref = jax.block_until_ready(ref_fwd(params, x))

    assert out.shape == (N, C, H, W), out.shape
    max_diff = float(jnp.max(jnp.abs(out - ref)))
    assert jnp.allclose(out, ref, atol=5e-3, rtol=5e-3), (
        "mismatch vs reference, max abs diff = " + str(max_diff))

    print("KERNEL_OK")
</pallas_src>

<mosaic_0001>
module attributes {stable_mosaic.version = 11 : i64} {
  func.func @_matmul_bias_act_kernel(%arg0: i32, %arg1: i32, %arg2: i32, %arg3: memref<512x512xbf16, #tpu.memory_space<vmem>>, %arg4: memref<512x128xbf16, #tpu.memory_space<vmem>>, %arg5: memref<8x128xf32, #tpu.memory_space<vmem>>, %arg6: memref<512x128xf32, #tpu.memory_space<vmem>>, %arg7: memref<512x128xf32, #tpu.memory_space<vmem>>) attributes {dimension_semantics = [#tpu.dimension_semantics<parallel>, #tpu.dimension_semantics<parallel>, #tpu.dimension_semantics<arbitrary>], iteration_bounds = array<i64: 1, 1, 1>, scalar_prefetch = 0 : i64, scratch_operands = 1 : i64, tpu.core_type = #tpu.core_type<tc>, window_params = [{transform_indices = @transform_0, window_bounds = array<i64: 512, 512>}, {transform_indices = @transform_1, window_bounds = array<i64: 512, 128>}, {transform_indices = @transform_2, window_bounds = array<i64: 8, 128>}, {transform_indices = @transform_3, window_bounds = array<i64: 512, 128>}]} {
    %c0_i32 = arith.constant 0 : i32
    %0 = arith.cmpi eq, %arg2, %c0_i32 : i32
    %1 = arith.extui %0 : i1 to i32
    %c0_i32_0 = arith.constant 0 : i32
    %2 = arith.cmpi ne, %1, %c0_i32_0 : i32
    scf.if %2 {
      %c0_10 = arith.constant 0 : index
      %c0_11 = arith.constant 0 : index
      %12 = vector.load %arg5[%c0_10, %c0_11] : memref<8x128xf32, #tpu.memory_space<vmem>>, vector<1x128xf32>
      %13 = vector.shape_cast %12 : vector<1x128xf32> to vector<1x128xf32>
      %14 = vector.broadcast %13 : vector<1x128xf32> to vector<512x128xf32>
      %c0_12 = arith.constant 0 : index
      %c0_13 = arith.constant 0 : index
      %15 = vector.load %arg7[%c0_12, %c0_13] : memref<512x128xf32, #tpu.memory_space<vmem>>, vector<512x128xf32>
      tpu.vector_store %arg7[%c0_12, %c0_13], %14 {strides = array<i32>} : memref<512x128xf32, #tpu.memory_space<vmem>>, vector<512x128xf32>,
    } else {
    }
    %c0 = arith.constant 0 : index
    %c0_1 = arith.constant 0 : index
    %3 = vector.load %arg7[%c0, %c0_1] : memref<512x128xf32, #tpu.memory_space<vmem>>, vector<512x128xf32>
    %c0_2 = arith.constant 0 : index
    %c0_3 = arith.constant 0 : index
    %4 = vector.load %arg3[%c0_2, %c0_3] : memref<512x512xbf16, #tpu.memory_space<vmem>>, vector<512x512xbf16>
    %c0_4 = arith.constant 0 : index
    %c0_5 = arith.constant 0 : index
    %5 = vector.load %arg4[%c0_4, %c0_5] : memref<512x128xbf16, #tpu.memory_space<vmem>>, vector<512x128xbf16>
    %cst = arith.constant dense<0.000000e+00> : vector<512x128xf32>
    %6 = tpu.matmul %4, %5, %cst {dimension_numbers = #tpu.dot_dimension_numbers<[1], [0], [0], [1], [0, 0, 1, 1], [], []>} : vector<512x512xbf16>, vector<512x128xbf16>, vector<512x128xf32> -> vector<512x128xf32>
    %7 = arith.addf %3, %6 : vector<512x128xf32>
    %c0_6 = arith.constant 0 : index
    %c0_7 = arith.constant 0 : index
    %8 = vector.load %arg7[%c0_6, %c0_7] : memref<512x128xf32, #tpu.memory_space<vmem>>, vector<512x128xf32>
    tpu.vector_store %arg7[%c0_6, %c0_7], %7 {strides = array<i32>} : memref<512x128xf32, #tpu.memory_space<vmem>>, vector<512x128xf32>,
    %c0_i32_8 = arith.constant 0 : i32
    %9 = arith.cmpi eq, %arg2, %c0_i32_8 : i32
    %10 = arith.extui %9 : i1 to i32
    %c0_i32_9 = arith.constant 0 : i32
    %11 = arith.cmpi ne, %10, %c0_i32_9 : i32
    scf.if %11 {
      %c0_10 = arith.constant 0 : index
      %c0_11 = arith.constant 0 : index
      %12 = vector.load %arg7[%c0_10, %c0_11] : memref<512x128xf32, #tpu.memory_space<vmem>>, vector<512x128xf32>
      %cst_12 = arith.constant 0.000000e+00 : f32
      %13 = vector.broadcast %cst_12 : f32 to vector<512x128xf32>
      %14 = arith.cmpf oge, %12, %13 : vector<512x128xf32>
      %cst_13 = arith.constant 2.000000e-01 : f32
      %15 = vector.broadcast %cst_13 : f32 to vector<512x128xf32>
      %16 = arith.mulf %15, %12 : vector<512x128xf32>
      %17 = arith.select %14, %12, %16 : vector<512x128xi1>, vector<512x128xf32>
      %c0_14 = arith.constant 0 : index
      %c0_15 = arith.constant 0 : index
      %18 = vector.load %arg6[%c0_14, %c0_15] : memref<512x128xf32, #tpu.memory_space<vmem>>, vector<512x128xf32>
      tpu.vector_store %arg6[%c0_14, %c0_15], %17 {strides = array<i32>} : memref<512x128xf32, #tpu.memory_space<vmem>>, vector<512x128xf32>,
    } else {
    }
    return
  }
  func.func @transform_0(%arg0: i32, %arg1: i32, %arg2: i32) -> (i32, i32) {
    %c0_i32 = arith.constant 0 : i32
    return %arg0, %arg2 : i32, i32
  }
  func.func @transform_1(%arg0: i32, %arg1: i32, %arg2: i32) -> (i32, i32) {
    %c0_i32 = arith.constant 0 : i32
    return %arg2, %arg1 : i32, i32
  }
  func.func @transform_2(%arg0: i32, %arg1: i32, %arg2: i32) -> (i32, i32) {
    %c0_i32 = arith.constant 0 : i32
    %c0_i32_0 = arith.constant 0 : i32
    return %c0_i32, %arg1 : i32, i32
  }
  func.func @transform_3(%arg0: i32, %arg1: i32, %arg2: i32) -> (i32, i32) {
    %c0_i32 = arith.constant 0 : i32
    return %arg0, %arg1 : i32, i32
  }
}

module attributes {stable_mosaic.version = 11 : i64} {
  func.func @_matmul_bias_act_kernel(%arg0: i32, %arg1: i32, %arg2: i32, %arg3: memref<128x1024xbf16, #tpu.memory_space<vmem>>, %arg4: memref<1024x128xbf16, #tpu.memory_space<vmem>>, %arg5: memref<8x128xf32, #tpu.memory_space<vmem>>, %arg6: memref<128x128xf32, #tpu.memory_space<vmem>>, %arg7: memref<128x128xf32, #tpu.memory_space<vmem>>) attributes {dimension_semantics = [#tpu.dimension_semantics<parallel>, #tpu.dimension_semantics<parallel>, #tpu.dimension_semantics<arbitrary>], iteration_bounds = array<i64: 1, 1, 1>, scalar_prefetch = 0 : i64, scratch_operands = 1 : i64, tpu.core_type = #tpu.core_type<tc>, window_params = [{transform_indices = @transform_0, window_bounds = array<i64: 128, 1024>}, {transform_indices = @transform_1, window_bounds = array<i64: 1024, 128>}, {transform_indices = @transform_2, window_bounds = array<i64: 8, 128>}, {transform_indices = @transform_3, window_bounds = array<i64: 128, 128>}]} {
    %c0_i32 = arith.constant 0 : i32
    %0 = arith.cmpi eq, %arg2, %c0_i32 : i32
    %1 = arith.extui %0 : i1 to i32
    %c0_i32_0 = arith.constant 0 : i32
    %2 = arith.cmpi ne, %1, %c0_i32_0 : i32
    scf.if %2 {
      %c0_10 = arith.constant 0 : index
      %c0_11 = arith.constant 0 : index
      %12 = vector.load %arg5[%c0_10, %c0_11] : memref<8x128xf32, #tpu.memory_space<vmem>>, vector<1x128xf32>
      %13 = vector.shape_cast %12 : vector<1x128xf32> to vector<1x128xf32>
      %14 = vector.broadcast %13 : vector<1x128xf32> to vector<128x128xf32>
      %c0_12 = arith.constant 0 : index
      %c0_13 = arith.constant 0 : index
      %15 = vector.load %arg7[%c0_12, %c0_13] : memref<128x128xf32, #tpu.memory_space<vmem>>, vector<128x128xf32>
      tpu.vector_store %arg7[%c0_12, %c0_13], %14 {strides = array<i32>} : memref<128x128xf32, #tpu.memory_space<vmem>>, vector<128x128xf32>,
    } else {
    }
    %c0 = arith.constant 0 : index
    %c0_1 = arith.constant 0 : index
    %3 = vector.load %arg7[%c0, %c0_1] : memref<128x128xf32, #tpu.memory_space<vmem>>, vector<128x128xf32>
    %c0_2 = arith.constant 0 : index
    %c0_3 = arith.constant 0 : index
    %4 = vector.load %arg3[%c0_2, %c0_3] : memref<128x1024xbf16, #tpu.memory_space<vmem>>, vector<128x1024xbf16>
    %c0_4 = arith.constant 0 : index
    %c0_5 = arith.constant 0 : index
    %5 = vector.load %arg4[%c0_4, %c0_5] : memref<1024x128xbf16, #tpu.memory_space<vmem>>, vector<1024x128xbf16>
    %cst = arith.constant dense<0.000000e+00> : vector<128x128xf32>
    %6 = tpu.matmul %4, %5, %cst {dimension_numbers = #tpu.dot_dimension_numbers<[1], [0], [0], [1], [0, 0, 1, 1], [], []>} : vector<128x1024xbf16>, vector<1024x128xbf16>, vector<128x128xf32> -> vector<128x128xf32>
    %7 = arith.addf %3, %6 : vector<128x128xf32>
    %c0_6 = arith.constant 0 : index
    %c0_7 = arith.constant 0 : index
    %8 = vector.load %arg7[%c0_6, %c0_7] : memref<128x128xf32, #tpu.memory_space<vmem>>, vector<128x128xf32>
    tpu.vector_store %arg7[%c0_6, %c0_7], %7 {strides = array<i32>} : memref<128x128xf32, #tpu.memory_space<vmem>>, vector<128x128xf32>,
    %c0_i32_8 = arith.constant 0 : i32
    %9 = arith.cmpi eq, %arg2, %c0_i32_8 : i32
    %10 = arith.extui %9 : i1 to i32
    %c0_i32_9 = arith.constant 0 : i32
    %11 = arith.cmpi ne, %10, %c0_i32_9 : i32
    scf.if %11 {
      %c0_10 = arith.constant 0 : index
      %c0_11 = arith.constant 0 : index
      %12 = vector.load %arg7[%c0_10, %c0_11] : memref<128x128xf32, #tpu.memory_space<vmem>>, vector<128x128xf32>
      %cst_12 = arith.constant 0.000000e+00 : f32
      %13 = vector.broadcast %cst_12 : f32 to vector<128x128xf32>
      %14 = arith.cmpf oge, %12, %13 : vector<128x128xf32>
      %cst_13 = arith.constant 2.000000e-01 : f32
      %15 = vector.broadcast %cst_13 : f32 to vector<128x128xf32>
      %16 = arith.mulf %15, %12 : vector<128x128xf32>
      %17 = arith.select %14, %12, %16 : vector<128x128xi1>, vector<128x128xf32>
      %c0_14 = arith.constant 0 : index
      %c0_15 = arith.constant 0 : index
      %18 = vector.load %arg6[%c0_14, %c0_15] : memref<128x128xf32, #tpu.memory_space<vmem>>, vector<128x128xf32>
      tpu.vector_store %arg6[%c0_14, %c0_15], %17 {strides = array<i32>} : memref<128x128xf32, #tpu.memory_space<vmem>>, vector<128x128xf32>,
    } else {
    }
    return
  }
  func.func @transform_0(%arg0: i32, %arg1: i32, %arg2: i32) -> (i32, i32) {
    %c0_i32 = arith.constant 0 : i32
    return %arg0, %arg2 : i32, i32
  }
  func.func @transform_1(%arg0: i32, %arg1: i32, %arg2: i32) -> (i32, i32) {
    %c0_i32 = arith.constant 0 : i32
    return %arg2, %arg1 : i32, i32
  }
  func.func @transform_2(%arg0: i32, %arg1: i32, %arg2: i32) -> (i32, i32) {
    %c0_i32 = arith.constant 0 : i32
    %c0_i32_0 = arith.constant 0 : i32
    return %c0_i32, %arg1 : i32, i32
  }
  func.func @transform_3(%arg0: i32, %arg1: i32, %arg2: i32) -> (i32, i32) {
    %c0_i32 = arith.constant 0 : i32
    return %arg0, %arg1 : i32, i32
  }
}

module attributes {stable_mosaic.version = 11 : i64} {
  func.func @_matmul_bias_act_kernel(%arg0: i32, %arg1: i32, %arg2: i32, %arg3: memref<128x256xbf16, #tpu.memory_space<vmem>>, %arg4: memref<256x128xbf16, #tpu.memory_space<vmem>>, %arg5: memref<8x128xf32, #tpu.memory_space<vmem>>, %arg6: memref<128x128xf32, #tpu.memory_space<vmem>>, %arg7: memref<128x128xf32, #tpu.memory_space<vmem>>) attributes {dimension_semantics = [#tpu.dimension_semantics<parallel>, #tpu.dimension_semantics<parallel>, #tpu.dimension_semantics<arbitrary>], iteration_bounds = array<i64: 1, 1, 5>, scalar_prefetch = 0 : i64, scratch_operands = 1 : i64, tpu.core_type = #tpu.core_type<tc>, window_params = [{transform_indices = @transform_0, window_bounds = array<i64: 128, 256>}, {transform_indices = @transform_1, window_bounds = array<i64: 256, 128>}, {transform_indices = @transform_2, window_bounds = array<i64: 8, 128>}, {transform_indices = @transform_3, window_bounds = array<i64: 128, 128>}]} {
    %c0_i32 = arith.constant 0 : i32
    %0 = arith.cmpi eq, %arg2, %c0_i32 : i32
    %1 = arith.extui %0 : i1 to i32
    %c0_i32_0 = arith.constant 0 : i32
    %2 = arith.cmpi ne, %1, %c0_i32_0 : i32
    scf.if %2 {
      %c0_9 = arith.constant 0 : index
      %c0_10 = arith.constant 0 : index
      %12 = vector.load %arg5[%c0_9, %c0_10] : memref<8x128xf32, #tpu.memory_space<vmem>>, vector<1x128xf32>
      %13 = vector.shape_cast %12 : vector<1x128xf32> to vector<1x128xf32>
      %14 = vector.broadcast %13 : vector<1x128xf32> to vector<128x128xf32>
      %c0_11 = arith.constant 0 : index
      %c0_12 = arith.constant 0 : index
      %15 = vector.load %arg7[%c0_11, %c0_12] : memref<128x128xf32, #tpu.memory_space<vmem>>, vector<128x128xf32>
      tpu.vector_store %arg7[%c0_11, %c0_12], %14 {strides = array<i32>} : memref<128x128xf32, #tpu.memory_space<vmem>>, vector<128x128xf32>,
    } else {
    }
    %c0 = arith.constant 0 : index
    %c0_1 = arith.constant 0 : index
    %3 = vector.load %arg7[%c0, %c0_1] : memref<128x128xf32, #tpu.memory_space<vmem>>, vector<128x128xf32>
    %c0_2 = arith.constant 0 : index
    %c0_3 = arith.constant 0 : index
    %4 = vector.load %arg3[%c0_2, %c0_3] : memref<128x256xbf16, #tpu.memory_space<vmem>>, vector<128x256xbf16>
    %c0_4 = arith.constant 0 : index
    %c0_5 = arith.constant 0 : index
    %5 = vector.load %arg4[%c0_4, %c0_5] : memref<256x128xbf16, #tpu.memory_space<vmem>>, vector<256x128xbf16>
    %cst = arith.constant dense<0.000000e+00> : vector<128x128xf32>
    %6 = tpu.matmul %4, %5, %cst {dimension_numbers = #tpu.dot_dimension_numbers<[1], [0], [0], [1], [0, 0, 1, 1], [], []>} : vector<128x256xbf16>, vector<256x128xbf16>, vector<128x128xf32> -> vector<128x128xf32>
    %7 = arith.addf %3, %6 : vector<128x128xf32>
    %c0_6 = arith.constant 0 : index
    %c0_7 = arith.constant 0 : index
    %8 = vector.load %arg7[%c0_6, %c0_7] : memref<128x128xf32, #tpu.memory_space<vmem>>, vector<128x128xf32>
    tpu.vector_store %arg7[%c0_6, %c0_7], %7 {strides = array<i32>} : memref<128x128xf32, #tpu.memory_space<vmem>>, vector<128x128xf32>,
    %c4_i32 = arith.constant 4 : i32
    %9 = arith.cmpi eq, %arg2, %c4_i32 : i32
    %10 = arith.extui %9 : i1 to i32
    %c0_i32_8 = arith.constant 0 : i32
    %11 = arith.cmpi ne, %10, %c0_i32_8 : i32
    scf.if %11 {
      %c0_9 = arith.constant 0 : index
      %c0_10 = arith.constant 0 : index
      %12 = vector.load %arg7[%c0_9, %c0_10] : memref<128x128xf32, #tpu.memory_space<vmem>>, vector<128x128xf32>
      %cst_11 = arith.constant 0.000000e+00 : f32
      %13 = vector.broadcast %cst_11 : f32 to vector<128x128xf32>
      %14 = arith.cmpf oge, %12, %13 : vector<128x128xf32>
      %cst_12 = arith.constant 0.000000e+00 : f32
      %15 = vector.broadcast %cst_12 : f32 to vector<128x128xf32>
      %16 = arith.mulf %15, %12 : vector<128x128xf32>
      %17 = arith.select %14, %12, %16 : vector<128x128xi1>, vector<128x128xf32>
      %c0_13 = arith.constant 0 : index
      %c0_14 = arith.constant 0 : index
      %18 = vector.load %arg6[%c0_13, %c0_14] : memref<128x128xf32, #tpu.memory_space<vmem>>, vector<128x128xf32>
      tpu.vector_store %arg6[%c0_13, %c0_14], %17 {strides = array<i32>} : memref<128x128xf32, #tpu.memory_space<vmem>>, vector<128x128xf32>,
    } else {
    }
    return
  }
  func.func @transform_0(%arg0: i32, %arg1: i32, %arg2: i32) -> (i32, i32) {
    %c0_i32 = arith.constant 0 : i32
    return %arg0, %arg2 : i32, i32
  }
  func.func @transform_1(%arg0: i32, %arg1: i32, %arg2: i32) -> (i32, i32) {
    %c0_i32 = arith.constant 0 : i32
    return %arg2, %arg1 : i32, i32
  }
  func.func @transform_2(%arg0: i32, %arg1: i32, %arg2: i32) -> (i32, i32) {
    %c0_i32 = arith.constant 0 : i32
    %c0_i32_0 = arith.constant 0 : i32
    return %c0_i32, %arg1 : i32, i32
  }
  func.func @transform_3(%arg0: i32, %arg1: i32, %arg2: i32) -> (i32, i32) {
    %c0_i32 = arith.constant 0 : i32
    return %arg0, %arg1 : i32, i32
  }
}

module attributes {stable_mosaic.version = 11 : i64} {
  func.func @_matmul_bias_act_kernel(%arg0: i32, %arg1: i32, %arg2: i32, %arg3: memref<512x256xbf16, #tpu.memory_space<vmem>>, %arg4: memref<256x128xbf16, #tpu.memory_space<vmem>>, %arg5: memref<8x128xf32, #tpu.memory_space<vmem>>, %arg6: memref<512x128xf32, #tpu.memory_space<vmem>>, %arg7: memref<512x128xf32, #tpu.memory_space<vmem>>) attributes {dimension_semantics = [#tpu.dimension_semantics<parallel>, #tpu.dimension_semantics<parallel>, #tpu.dimension_semantics<arbitrary>], iteration_bounds = array<i64: 1, 1, 9>, scalar_prefetch = 0 : i64, scratch_operands = 1 : i64, tpu.core_type = #tpu.core_type<tc>, window_params = [{transform_indices = @transform_0, window_bounds = array<i64: 512, 256>}, {transform_indices = @transform_1, window_bounds = array<i64: 256, 128>}, {transform_indices = @transform_2, window_bounds = array<i64: 8, 128>}, {transform_indices = @transform_3, window_bounds = array<i64: 512, 128>}]} {
    %c0_i32 = arith.constant 0 : i32
    %0 = arith.cmpi eq, %arg2, %c0_i32 : i32
    %1 = arith.extui %0 : i1 to i32
    %c0_i32_0 = arith.constant 0 : i32
    %2 = arith.cmpi ne, %1, %c0_i32_0 : i32
    scf.if %2 {
      %c0_9 = arith.constant 0 : index
      %c0_10 = arith.constant 0 : index
      %12 = vector.load %arg5[%c0_9, %c0_10] : memref<8x128xf32, #tpu.memory_space<vmem>>, vector<1x128xf32>
      %13 = vector.shape_cast %12 : vector<1x128xf32> to vector<1x128xf32>
      %14 = vector.broadcast %13 : vector<1x128xf32> to vector<512x128xf32>
      %c0_11 = arith.constant 0 : index
      %c0_12 = arith.constant 0 : index
      %15 = vector.load %arg7[%c0_11, %c0_12] : memref<512x128xf32, #tpu.memory_space<vmem>>, vector<512x128xf32>
      tpu.vector_store %arg7[%c0_11, %c0_12], %14 {strides = array<i32>} : memref<512x128xf32, #tpu.memory_space<vmem>>, vector<512x128xf32>,
    } else {
    }
    %c0 = arith.constant 0 : index
    %c0_1 = arith.constant 0 : index
    %3 = vector.load %arg7[%c0, %c0_1] : memref<512x128xf32, #tpu.memory_space<vmem>>, vector<512x128xf32>
    %c0_2 = arith.constant 0 : index
    %c0_3 = arith.constant 0 : index
    %4 = vector.load %arg3[%c0_2, %c0_3] : memref<512x256xbf16, #tpu.memory_space<vmem>>, vector<512x256xbf16>
    %c0_4 = arith.constant 0 : index
    %c0_5 = arith.constant 0 : index
    %5 = vector.load %arg4[%c0_4, %c0_5] : memref<256x128xbf16, #tpu.memory_space<vmem>>, vector<256x128xbf16>
    %cst = arith.constant dense<0.000000e+00> : vector<512x128xf32>
    %6 = tpu.matmul %4, %5, %cst {dimension_numbers = #tpu.dot_dimension_numbers<[1], [0], [0], [1], [0, 0, 1, 1], [], []>} : vector<512x256xbf16>, vector<256x128xbf16>, vector<512x128xf32> -> vector<512x128xf32>
    %7 = arith.addf %3, %6 : vector<512x128xf32>
    %c0_6 = arith.constant 0 : index
    %c0_7 = arith.constant 0 : index
    %8 = vector.load %arg7[%c0_6, %c0_7] : memref<512x128xf32, #tpu.memory_space<vmem>>, vector<512x128xf32>
    tpu.vector_store %arg7[%c0_6, %c0_7], %7 {strides = array<i32>} : memref<512x128xf32, #tpu.memory_space<vmem>>, vector<512x128xf32>,
    %c8_i32 = arith.constant 8 : i32
    %9 = arith.cmpi eq, %arg2, %c8_i32 : i32
    %10 = arith.extui %9 : i1 to i32
    %c0_i32_8 = arith.constant 0 : i32
    %11 = arith.cmpi ne, %10, %c0_i32_8 : i32
    scf.if %11 {
      %c0_9 = arith.constant 0 : index
      %c0_10 = arith.constant 0 : index
      %12 = vector.load %arg7[%c0_9, %c0_10] : memref<512x128xf32, #tpu.memory_space<vmem>>, vector<512x128xf32>
      %cst_11 = arith.constant 0.000000e+00 : f32
      %13 = vector.broadcast %cst_11 : f32 to vector<512x128xf32>
      %14 = arith.cmpf oge, %12, %13 : vector<512x128xf32>
      %cst_12 = arith.constant 0.000000e+00 : f32
      %15 = vector.broadcast %cst_12 : f32 to vector<512x128xf32>
      %16 = arith.mulf %15, %12 : vector<512x128xf32>
      %17 = arith.select %14, %12, %16 : vector<512x128xi1>, vector<512x128xf32>
      %c0_13 = arith.constant 0 : index
      %c0_14 = arith.constant 0 : index
      %18 = vector.load %arg6[%c0_13, %c0_14] : memref<512x128xf32, #tpu.memory_space<vmem>>, vector<512x128xf32>
      tpu.vector_store %arg6[%c0_13, %c0_14], %17 {strides = array<i32>} : memref<512x128xf32, #tpu.memory_space<vmem>>, vector<512x128xf32>,
    } else {
    }
    return
  }
  func.func @transform_0(%arg0: i32, %arg1: i32, %arg2: i32) -> (i32, i32) {
    %c0_i32 = arith.constant 0 : i32
    return %arg0, %arg2 : i32, i32
  }
  func.func @transform_1(%arg0: i32, %arg1: i32, %arg2: i32) -> (i32, i32) {
    %c0_i32 = arith.constant 0 : i32
    return %arg2, %arg1 : i32, i32
  }
  func.func @transform_2(%arg0: i32, %arg1: i32, %arg2: i32) -> (i32, i32) {
    %c0_i32 = arith.constant 0 : i32
    %c0_i32_0 = arith.constant 0 : i32
    return %c0_i32, %arg1 : i32, i32
  }
  func.func @transform_3(%arg0: i32, %arg1: i32, %arg2: i32) -> (i32, i32) {
    %c0_i32 = arith.constant 0 : i32
    return %arg0, %arg1 : i32, i32
  }
}

</mosaic_0001>

<llo_original>
// kernel: unet_forward.4
$region0: #{unet_forward.4}
  #allocation0 [shape = 'u32[]', space=smem, size = 0x4, offset = 0x4, fixed_abs, tag = 'smem constant byte address 0x4 - core index']
  #allocation1 [shape = 'u32[72,128]{1,0:T(1,128)}', space=vmem, size = 0x9000, scoped, tag = 'internal scratch']
  #allocation2 [shape = 'f32[512,128]{1,0:T(8,128)}', space=vmem, size = 0x40000, scoped, tag = 'scratch operand']
  %s0 = inlined_call_operand.vmem [shape: bf16[512,512], index: 0, kind: input, shape index: {}]
  %s1 = inlined_call_operand.vmem [shape: bf16[512,128], index: 1, kind: input, shape index: {}]
  %s2 = inlined_call_operand.vmem [shape: f32[8,128], index: 2, kind: input, shape index: {}]
  %s3 = inlined_call_operand.vmem [shape: f32[512,128], index: 3, kind: output, shape index: {}]
  %s4 = sld [smem:[#allocation0]]
  $region30: #{unet_forward.4} parent=0
    _
  %s6 = ssub.s32 1, %s4
  %s7 = scalar_select 0, %s6, %s4
  // Predicated region
  $region2: #{unet_forward.4} parent=0 // pred_check
    _
  $region3: #{unet_forward.4} parent=0 // pred_check_branch
    %9 = sbr.rel (0) target = $region5
  $region4: #{unet_forward.4} parent=0 // pred_region
    _
  $region5: #{unet_forward.4} parent=0 // pred_fallthru
    _
  // Predicated region
  $region6: #{unet_forward.4} parent=0 // pred_check
    _
  $region7: #{unet_forward.4} parent=0 // pred_check_branch
    %11 = sbr.rel (0) target = $region9
  $region8: #{unet_forward.4} parent=0 // pred_region
    _
  $region9: #{unet_forward.4} parent=0 // pred_fallthru
    _
  // Predicated region
  $region10: #{unet_forward.4} parent=0 // pred_check
    _
  $region11: #{unet_forward.4} parent=0 // pred_check_branch
    %13 = sbr.rel (0) target = $region13
  $region12: #{unet_forward.4} parent=0 // pred_region
    _
  $region13: #{unet_forward.4} parent=0 // pred_fallthru
    _
  %p14 = scmp.eq.s32.totalorder 0, 0
  // Predicated region
  $region14: #{unet_forward.4} parent=0 // pred_check
    %p15 = pneg %p14
  $region15: #{unet_forward.4} parent=0 // pred_check_branch
    %17 = sbr.rel (%p15) target = $region17
  $region16: #{unet_forward.4} parent=0 // pred_region
    %v18 = vld [vmem:[%s2] sm:$0x1]
    %v19 = vperm.slane %v18, 0
    %20 = vst [vmem:[#allocation2] sm:$0xff] %v19
    %21 = vst [vmem:[#allocation2 + $0x8] sm:$0xff] %v19
    %22 = vst [vmem:[#allocation2 + $0x10] sm:$0xff] %v19
    %23 = vst [vmem:[#allocation2 + $0x18] sm:$0xff] %v19
    %24 = vst [vmem:[#allocation2 + $0x20] sm:$0xff] %v19
    %25 = vst [vmem:[#allocation2 + $0x28] sm:$0xff] %v19
    %26 = vst [vmem:[#allocation2 + $0x30] sm:$0xff] %v19
    %27 = vst [vmem:[#allocation2 + $0x38] sm:$0xff] %v19
    %28 = vst [vmem:[#allocation2 + $0x40] sm:$0xff] %v19
    %29 = vst [vmem:[#allocation2 + $0x48] sm:$0xff] %v19
    %30 = vst [vmem:[#allocation2 + $0x50] sm:$0xff] %v19
    %31 = vst [vmem:[#allocation2 + $0x58] sm:$0xff] %v19
    %32 = vst [vmem:[#allocation2 + $0x60] sm:$0xff] %v19
    %33 = vst [vmem:[#allocation2 + $0x68] sm:$0xff] %v19
    %34 = vst [vmem:[#allocation2 + $0x70] sm:$0xff] %v19
    %35 = vst [vmem:[#allocation2 + $0x78] sm:$0xff] %v19
    %36 = vst [vmem:[#allocation2 + $0x80] sm:$0xff] %v19
    %37 = vst [vmem:[#allocation2 + $0x88] sm:$0xff] %v19
    %38 = vst [vmem:[#allocation2 + $0x90] sm:$0xff] %v19
    %39 = vst [vmem:[#allocation2 + $0x98] sm:$0xff] %v19
    %40 = vst [vmem:[#allocation2 + $0xa0] sm:$0xff] %v19
    %41 = vst [vmem:[#allocation2 + $0xa8] sm:$0xff] %v19
    %42 = vst [vmem:[#allocation2 + $0xb0] sm:$0xff] %v19
    %43 = vst [vmem:[#allocation2 + $0xb8] sm:$0xff] %v19
    %44 = vst [vmem:[#allocation2 + $0xc0] sm:$0xff] %v19
    %45 = vst [vmem:[#allocation2 + $0xc8] sm:$0xff] %v19
    %46 = vst [vmem:[#allocation2 + $0xd0] sm:$0xff] %v19
    %47 = vst [vmem:[#allocation2 + $0xd8] sm:$0xff] %v19
    %48 = vst [vmem:[#allocation2 + $0xe0] sm:$0xff] %v19
    %49 = vst [vmem:[#allocation2 + $0xe8] sm:$0xff] %v19
    %50 = vst [vmem:[#allocation2 + $0xf0] sm:$0xff] %v19
    %51 = vst [vmem:[#allocation2 + $0xf8] sm:$0xff] %v19
    %52 = vst [vmem:[#allocation2 + $0x100] sm:$0xff] %v19
    %53 = vst [vmem:[#allocation2 + $0x108] sm:$0xff] %v19
    %54 = vst [vmem:[#allocation2 + $0x110] sm:$0xff] %v19
    %55 = vst [vmem:[#allocation2 + $0x118] sm:$0xff] %v19
    %56 = vst [vmem:[#allocation2 + $0x120] sm:$0xff] %v19
    %57 = vst [vmem:[#allocation2 + $0x128] sm:$0xff] %v19
    %58 = vst [vmem:[#allocation2 + $0x130] sm:$0xff] %v19
    %59 = vst [vmem:[#allocation2 + $0x138] sm:$0xff] %v19
    %60 = vst [vmem:[#allocation2 + $0x140] sm:$0xff] %v19
    %61 = vst [vmem:[#allocation2 + $0x148] sm:$0xff] %v19
    %62 = vst [vmem:[#allocation2 + $0x150] sm:$0xff] %v19
    %63 = vst [vmem:[#allocation2 + $0x158] sm:$0xff] %v19
    %64 = vst [vmem:[#allocation2 + $0x160] sm:$0xff] %v19
    %65 = vst [vmem:[#allocation2 + $0x168] sm:$0xff] %v19
    %66 = vst [vmem:[#allocation2 + $0x170] sm:$0xff] %v19
    %67 = vst [vmem:[#allocation2 + $0x178] sm:$0xff] %v19
    %68 = vst [vmem:[#allocation2 + $0x180] sm:$0xff] %v19
    %69 = vst [vmem:[#allocation2 + $0x188] sm:$0xff] %v19
    %70 = vst [vmem:[#allocation2 + $0x190] sm:$0xff] %v19
    %71 = vst [vmem:[#allocation2 + $0x198] sm:$0xff] %v19
    %72 = vst [vmem:[#allocation2 + $0x1a0] sm:$0xff] %v19
    %73 = vst [vmem:[#allocation2 + $0x1a8] sm:$0xff] %v19
    %74 = vst [vmem:[#allocation2 + $0x1b0] sm:$0xff] %v19
    %75 = vst [vmem:[#allocation2 + $0x1b8] sm:$0xff] %v19
    %76 = vst [vmem:[#allocation2 + $0x1c0] sm:$0xff] %v19
    %77 = vst [vmem:[#allocation2 + $0x1c8] sm:$0xff] %v19
    %78 = vst [vmem:[#allocation2 + $0x1d0] sm:$0xff] %v19
    %79 = vst [vmem:[#allocation2 + $0x1d8] sm:$0xff] %v19
    %80 = vst [vmem:[#allocation2 + $0x1e0] sm:$0xff] %v19
    %81 = vst [vmem:[#allocation2 + $0x1e8] sm:$0xff] %v19
    %82 = vst [vmem:[#allocation2 + $0x1f0] sm:$0xff] %v19
    %83 = vst [vmem:[#allocation2 + $0x1f8] sm:$0xff] %v19
  $region17: #{unet_forward.4} parent=0 // pred_fallthru
    _
  %v84 = vld [vmem:[#allocation2] sm:$0xff]
  %v85 = vld [vmem:[#allocation2 + $0x8] sm:$0xff]
  %v86 = vld [vmem:[#allocation2 + $0x10] sm:$0xff]
  %v87 = vld [vmem:[#allocation2 + $0x18] sm:$0xff]
  %v88 = vld [vmem:[#allocation2 + $0x20] sm:$0xff]
  %v89 = vld [vmem:[#allocation2 + $0x28] sm:$0xff]
  %v90 = vld [vmem:[#allocation2 + $0x30] sm:$0xff]
  %v91 = vld [vmem:[#allocation2 + $0x38] sm:$0xff]
  %v92 = vld [vmem:[#allocation2 + $0x40] sm:$0xff]
  %v93 = vld [vmem:[#allocation2 + $0x48] sm:$0xff]
  %v94 = vld [vmem:[#allocation2 + $0x50] sm:$0xff]
  %v95 = vld [vmem:[#allocation2 + $0x58] sm:$0xff]
  %v96 = vld [vmem:[#allocation2 + $0x60] sm:$0xff]
  %v97 = vld [vmem:[#allocation2 + $0x68] sm:$0xff]
  %v98 = vld [vmem:[#allocation2 + $0x70] sm:$0xff]
  %v99 = vld [vmem:[#allocation2 + $0x78] sm:$0xff]
  %v100 = vld [vmem:[#allocation2 + $0x80] sm:$0xff]
  %v101 = vld [vmem:[#allocation2 + $0x88] sm:$0xff]
  %v102 = vld [vmem:[#allocation2 + $0x90] sm:$0xff]
  %v103 = vld [vmem:[#allocation2 + $0x98] sm:$0xff]
  %v104 = vld [vmem:[#allocation2 + $0xa0] sm:$0xff]
  %v105 = vld [vmem:[#allocation2 + $0xa8] sm:$0xff]
  %v106 = vld [vmem:[#allocation2 + $0xb0] sm:$0xff]
  %v107 = vld [vmem:[#allocation2 + $0xb8] sm:$0xff]
  %v108 = vld [vmem:[#allocation2 + $0xc0] sm:$0xff]
  %v109 = vld [vmem:[#allocation2 + $0xc8] sm:$0xff]
  %v110 = vld [vmem:[#allocation2 + $0xd0] sm:$0xff]
  %v111 = vld [vmem:[#allocation2 + $0xd8] sm:$0xff]
  %v112 = vld [vmem:[#allocation2 + $0xe0] sm:$0xff]
  %v113 = vld [vmem:[#allocation2 + $0xe8] sm:$0xff]
  %v114 = vld [vmem:[#allocation2 + $0xf0] sm:$0xff]
  %v115 = vld [vmem:[#allocation2 + $0xf8] sm:$0xff]
  %v116 = vld [vmem:[#allocation2 + $0x100] sm:$0xff]
  %v117 = vld [vmem:[#allocation2 + $0x108] sm:$0xff]
  %v118 = vld [vmem:[#allocation2 + $0x110] sm:$0xff]
  %v119 = vld [vmem:[#allocation2 + $0x118] sm:$0xff]
  %v120 = vld [vmem:[#allocation2 + $0x120] sm:$0xff]
  %v121 = vld [vmem:[#allocation2 + $0x128] sm:$0xff]
  %v122 = vld [vmem:[#allocation2 + $0x130] sm:$0xff]
  %v123 = vld [vmem:[#allocation2 + $0x138] sm:$0xff]
  %v124 = vld [vmem:[#allocation2 + $0x140] sm:$0xff]
  %v125 = vld [vmem:[#allocation2 + $0x148] sm:$0xff]
  %v126 = vld [vmem:[#allocation2 + $0x150] sm:$0xff]
  %v127 = vld [vmem:[#allocation2 + $0x158] sm:$0xff]
  %v128 = vld [vmem:[#allocation2 + $0x160] sm:$0xff]
  %v129 = vld [vmem:[#allocation2 + $0x168] sm:$0xff]
  %v130 = vld [vmem:[#allocation2 + $0x170] sm:$0xff]
  %v131 = vld [vmem:[#allocation2 + $0x178] sm:$0xff]
  %v132 = vld [vmem:[#allocation2 + $0x180] sm:$0xff]
  %v133 = vld [vmem:[#allocation2 + $0x188] sm:$0xff]
  %v134 = vld [vmem:[#allocation2 + $0x190] sm:$0xff]
  %v135 = vld [vmem:[#allocation2 + $0x198] sm:$0xff]
  %v136 = vld [vmem:[#allocation2 + $0x1a0] sm:$0xff]
  %v137 = vld [vmem:[#allocation2 + $0x1a8] sm:$0xff]
  %v138 = vld [vmem:[#allocation2 + $0x1b0] sm:$0xff]
  %v139 = vld [vmem:[#allocation2 + $0x1b8] sm:$0xff]
  %v140 = vld [vmem:[#allocation2 + $0x1c0] sm:$0xff]
  %v141 = vld [vmem:[#allocation2 + $0x1c8] sm:$0xff]
  %v142 = vld [vmem:[#allocation2 + $0x1d0] sm:$0xff]
  %v143 = vld [vmem:[#allocation2 + $0x1d8] sm:$0xff]
  %v144 = vld [vmem:[#allocation2 + $0x1e0] sm:$0xff]
  %v145 = vld [vmem:[#allocation2 + $0x1e8] sm:$0xff]
  %v146 = vld [vmem:[#allocation2 + $0x1f0] sm:$0xff]
  %v147 = vld [vmem:[#allocation2 + $0x1f8] sm:$0xff]
  %v148 = vld [vmem:[%s0] sm:$0xff]
  %v149 = vld [vmem:[%s0 + $0x8] sm:$0xff]
  %v150 = vld [vmem:[%s0 + $0x10] sm:$0xff]
  %v151 = vld [vmem:[%s0 + $0x18] sm:$0xff]
  %v152 = vld [vmem:[%s0 + $0x20] sm:$0xff]
  %v153 = vld [vmem:[%s0 + $0x28] sm:$0xff]
  %v154 = vld [vmem:[%s0 + $0x30] sm:$0xff]
  %v155 = vld [vmem:[%s0 + $0x38] sm:$0xff]
  %v156 = vld [vmem:[%s0 + $0x40] sm:$0xff]
  %v157 = vld [vmem:[%s0 + $0x48] sm:$0xff]
  %v158 = vld [vmem:[%s0 + $0x50] sm:$0xff]
  %v159 = vld [vmem:[%s0 + $0x58] sm:$0xff]
  %v160 = vld [vmem:[%s0 + $0x60] sm:$0xff]
  %v161 = vld [vmem:[%s0 + $0x68] sm:$0xff]
  %v162 = vld [vmem:[%s0 + $0x70] sm:$0xff]
  %v163 = vld [vmem:[%s0 + $0x78] sm:$0xff]
  %v164 = vld [vmem:[%s0 + $0x80] sm:$0xff]
  %v165 = vld [vmem:[%s0 + $0x88] sm:$0xff]
  %v166 = vld [vmem:[%s0 + $0x90] sm:$0xff]
  %v167 = vld [vmem:[%s0 + $0x98] sm:$0xff]
  %v168 = vld [vmem:[%s0 + $0xa0] sm:$0xff]
  %v169 = vld [vmem:[%s0 + $0xa8] sm:$0xff]
  %v170 = vld [vmem:[%s0 + $0xb0] sm:$0xff]
  %v171 = vld [vmem:[%s0 + $0xb8] sm:$0xff]
  %v172 = vld [vmem:[%s0 + $0xc0] sm:$0xff]
  %v173 = vld [vmem:[%s0 + $0xc8] sm:$0xff]
  %v174 = vld [vmem:[%s0 + $0xd0] sm:$0xff]
  %v175 = vld [vmem:[%s0 + $0xd8] sm:$0xff]
  %v176 = vld [vmem:[%s0 + $0xe0] sm:$0xff]
  %v177 = vld [vmem:[%s0 + $0xe8] sm:$0xff]
  %v178 = vld [vmem:[%s0 + $0xf0] sm:$0xff]
  %v179 = vld [vmem:[%s0 + $0xf8] sm:$0xff]
  %v180 = vld [vmem:[%s0 + $0x100] sm:$0xff]
  %v181 = vld [vmem:[%s0 + $0x108] sm:$0xff]
  %v182 = vld [vmem:[%s0 + $0x110] sm:$0xff]
  %v183 = vld [vmem:[%s0 + $0x118] sm:$0xff]
  %v184 = vld [vmem:[%s0 + $0x120] sm:$0xff]
  %v185 = vld [vmem:[%s0 + $0x128] sm:$0xff]
  %v186 = vld [vmem:[%s0 + $0x130] sm:$0xff]
  %v187 = vld [vmem:[%s0 + $0x138] sm:$0xff]
  %v188 = vld [vmem:[%s0 + $0x140] sm:$0xff]
  %v189 = vld [vmem:[%s0 + $0x148] sm:$0xff]
  %v190 = vld [vmem:[%s0 + $0x150] sm:$0xff]
  %v191 = vld [vmem:[%s0 + $0x158] sm:$0xff]
  %v192 = vld [vmem:[%s0 + $0x160] sm:$0xff]
  %v193 = vld [vmem:[%s0 + $0x168] sm:$0xff]
  %v194 = vld [vmem:[%s0 + $0x170] sm:$0xff]
  %v195 = vld [vmem:[%s0 + $0x178] sm:$0xff]
  %v196 = vld [vmem:[%s0 + $0x180] sm:$0xff]
  %v197 = vld [vmem:[%s0 + $0x188] sm:$0xff]
  %v198 = vld [vmem:[%s0 + $0x190] sm:$0xff]
  %v199 = vld [vmem:[%s0 + $0x198] sm:$0xff]
  %v200 = vld [vmem:[%s0 + $0x1a0] sm:$0xff]
  %v201 = vld [vmem:[%s0 + $0x1a8] sm:$0xff]
  %v202 = vld [vmem:[%s0 + $0x1b0] sm:$0xff]
  %v203 = vld [vmem:[%s0 + $0x1b8] sm:$0xff]
  %v204 = vld [vmem:[%s0 + $0x1c0] sm:$0xff]
  %v205 = vld [vmem:[%s0 + $0x1c8] sm:$0xff]
  %v206 = vld [vmem:[%s0 + $0x1d0] sm:$0xff]
  %v207 = vld [vmem:[%s0 + $0x1d8] sm:$0xff]
  %v208 = vld [vmem:[%s0 + $0x1e0] sm:$0xff]
  %v209 = vld [vmem:[%s0 + $0x1e8] sm:$0xff]
  %v210 = vld [vmem:[%s0 + $0x1f0] sm:$0xff]
  %v211 = vld [vmem:[%s0 + $0x1f8] sm:$0xff]
  %v212 = vld [vmem:[%s0 + $0x200] sm:$0xff]
  %v213 = vld [vmem:[%s0 + $0x208] sm:$0xff]
  %v214 = vld [vmem:[%s0 + $0x210] sm:$0xff]
  %v215 = vld [vmem:[%s0 + $0x218] sm:$0xff]
  %v216 = vld [vmem:[%s0 + $0x220] sm:$0xff]
  %v217 = vld [vmem:[%s0 + $0x228] sm:$0xff]
  %v218 = vld [vmem:[%s0 + $0x230] sm:$0xff]
  %v219 = vld [vmem:[%s0 + $0x238] sm:$0xff]
  %v220 = vld [vmem:[%s0 + $0x240] sm:$0xff]
  %v221 = vld [vmem:[%s0 + $0x248] sm:$0xff]
  %v222 = vld [vmem:[%s0 + $0x250] sm:$0xff]
  %v223 = vld [vmem:[%s0 + $0x258] sm:$0xff]
  %v224 = vld [vmem:[%s0 + $0x260] sm:$0xff]
  %v225 = vld [vmem:[%s0 + $0x268] sm:$0xff]
  %v226 = vld [vmem:[%s0 + $0x270] sm:$0xff]
  %v227 = vld [vmem:[%s0 + $0x278] sm:$0xff]
  %v228 = vld [vmem:[%s0 + $0x280] sm:$0xff]
  %v229 = vld [vmem:[%s0 + $0x288] sm:$0xff]
  %v230 = vld [vmem:[%s0 + $0x290] sm:$0xff]
  %v231 = vld [vmem:[%s0 + $0x298] sm:$0xff]
  %v232 = vld [vmem:[%s0 + $0x2a0] sm:$0xff]
  %v233 = vld [vmem:[%s0 + $0x2a8] sm:$0xff]
  %v234 = vld [vmem:[%s0 + $0x2b0] sm:$0xff]
  %v235 = vld [vmem:[%s0 + $0x2b8] sm:$0xff]
  %v236 = vld [vmem:[%s0 + $0x2c0] sm:$0xff]
  %v237 = vld [vmem:[%s0 + $0x2c8] sm:$0xff]
  %v238 = vld [vmem:[%s0 + $0x2d0] sm:$0xff]
  %v239 = vld [vmem:[%s0 + $0x2d8] sm:$0xff]
  %v240 = vld [vmem:[%s0 + $0x2e0] sm:$0xff]
  %v241 = vld [vmem:[%s0 + $0x2e8] sm:$0xff]
  %v242 = vld [vmem:[%s0 + $0x2f0] sm:$0xff]
  %v243 = vld [vmem:[%s0 + $0x2f8] sm:$0xff]
  %v244 = vld [vmem:[%s0 + $0x300] sm:$0xff]
  %v245 = vld [vmem:[%s0 + $0x308] sm:$0xff]
  %v246 = vld [vmem:[%s0 + $0x310] sm:$0xff]
  %v247 = vld [vmem:[%s0 + $0x318] sm:$0xff]
  %v248 = vld [vmem:[%s0 + $0x320] sm:$0xff]
  %v249 = vld [vmem:[%s0 + $0x328] sm:$0xff]
  %v250 = vld [vmem:[%s0 + $0x330] sm:$0xff]
  %v251 = vld [vmem:[%s0 + $0x338] sm:$0xff]
  %v252 = vld [vmem:[%s0 + $0x340] sm:$0xff]
  %v253 = vld [vmem:[%s0 + $0x348] sm:$0xff]
  %v254 = vld [vmem:[%s0 + $0x350] sm:$0xff]
  %v255 = vld [vmem:[%s0 + $0x358] sm:$0xff]
  %v256 = vld [vmem:[%s0 + $0x360] sm:$0xff]
  %v257 = vld [vmem:[%s0 + $0x368] sm:$0xff]
  %v258 = vld [vmem:[%s0 + $0x370] sm:$0xff]
  %v259 = vld [vmem:[%s0 + $0x378] sm:$0xff]
  %v260 = vld [vmem:[%s0 + $0x380] sm:$0xff]
  %v261 = vld [vmem:[%s0 + $0x388] sm:$0xff]
  %v262 = vld [vmem:[%s0 + $0x390] sm:$0xff]
  %v263 = vld [vmem:[%s0 + $0x398] sm:$0xff]
  %v264 = vld [vmem:[%s0 + $0x3a0] sm:$0xff]
  %v265 = vld [vmem:[%s0 + $0x3a8] sm:$0xff]
  %v266 = vld [vmem:[%s0 + $0x3b0] sm:$0xff]
  %v267 = vld [vmem:[%s0 + $0x3b8] sm:$0xff]
  %v268 = vld [vmem:[%s0 + $0x3c0] sm:$0xff]
  %v269 = vld [vmem:[%s0 + $0x3c8] sm:$0xff]
  %v270 = vld [vmem:[%s0 + $0x3d0] sm:$0xff]
  %v271 = vld [vmem:[%s0 + $0x3d8] sm:$0xff]
  %v272 = vld [vmem:[%s0 + $0x3e0] sm:$0xff]
  %v273 = vld [vmem:[%s0 + $0x3e8] sm:$0xff]
  %v274 = vld [vmem:[%s0 + $0x3f0] sm:$0xff]
  %v275 = vld [vmem:[%s0 + $0x3f8] sm:$0xff]
  %v276 = vld [vmem:[%s1] sm:$0xf]
  %v277 = vld [vmem:[%s1 + $0x4] sm:$0xf]
  %v278 = vld [vmem:[%s1 + $0x8] sm:$0xf]
  %v279 = vld [vmem:[%s1 + $0xc] sm:$0xf]
  %v280 = vld [vmem:[%s1 + $0x10] sm:$0xf]
  %v281 = vld [vmem:[%s1 + $0x14] sm:$0xf]
  %v282 = vld [vmem:[%s1 + $0x18] sm:$0xf]
  %v283 = vld [vmem:[%s1 + $0x1c] sm:$0xf]
  %v284 = vld [vmem:[%s1 + $0x20] sm:$0xf]
  %v285 = vld [vmem:[%s1 + $0x24] sm:$0xf]
  %v286 = vld [vmem:[%s1 + $0x28] sm:$0xf]
  %v287 = vld [vmem:[%s1 + $0x2c] sm:$0xf]
  %v288 = vld [vmem:[%s1 + $0x30] sm:$0xf]
  %v289 = vld [vmem:[%s1 + $0x34] sm:$0xf]
  %v290 = vld [vmem:[%s1 + $0x38] sm:$0xf]
  %v291 = vld [vmem:[%s1 + $0x3c] sm:$0xf]
  %v292 = vld [vmem:[%s1 + $0x40] sm:$0xf]
  %v293 = vld [vmem:[%s1 + $0x44] sm:$0xf]
  %v294 = vld [vmem:[%s1 + $0x48] sm:$0xf]
  %v295 = vld [vmem:[%s1 + $0x4c] sm:$0xf]
  %v296 = vld [vmem:[%s1 + $0x50] sm:$0xf]
  %v297 = vld [vmem:[%s1 + $0x54] sm:$0xf]
  %v298 = vld [vmem:[%s1 + $0x58] sm:$0xf]
  %v299 = vld [vmem:[%s1 + $0x5c] sm:$0xf]
  %v300 = vld [vmem:[%s1 + $0x60] sm:$0xf]
  %v301 = vld [vmem:[%s1 + $0x64] sm:$0xf]
  %v302 = vld [vmem:[%s1 + $0x68] sm:$0xf]
  %v303 = vld [vmem:[%s1 + $0x6c] sm:$0xf]
  %v304 = vld [vmem:[%s1 + $0x70] sm:$0xf]
  %v305 = vld [vmem:[%s1 + $0x74] sm:$0xf]
  %v306 = vld [vmem:[%s1 + $0x78] sm:$0xf]
  %v307 = vld [vmem:[%s1 + $0x7c] sm:$0xf]
  %v308 = vld [vmem:[%s1 + $0x80] sm:$0xf]
  %v309 = vld [vmem:[%s1 + $0x84] sm:$0xf]
  %v310 = vld [vmem:[%s1 + $0x88] sm:$0xf]
  %v311 = vld [vmem:[%s1 + $0x8c] sm:$0xf]
  %v312 = vld [vmem:[%s1 + $0x90] sm:$0xf]
  %v313 = vld [vmem:[%s1 + $0x94] sm:$0xf]
  %v314 = vld [vmem:[%s1 + $0x98] sm:$0xf]
  %v315 = vld [vmem:[%s1 + $0x9c] sm:$0xf]
  %v316 = vld [vmem:[%s1 + $0xa0] sm:$0xf]
  %v317 = vld [vmem:[%s1 + $0xa4] sm:$0xf]
  %v318 = vld [vmem:[%s1 + $0xa8] sm:$0xf]
  %v319 = vld [vmem:[%s1 + $0xac] sm:$0xf]
  %v320 = vld [vmem:[%s1 + $0xb0] sm:$0xf]
  %v321 = vld [vmem:[%s1 + $0xb4] sm:$0xf]
  %v322 = vld [vmem:[%s1 + $0xb8] sm:$0xf]
  %v323 = vld [vmem:[%s1 + $0xbc] sm:$0xf]
  %v324 = vld [vmem:[%s1 + $0xc0] sm:$0xf]
  %v325 = vld [vmem:[%s1 + $0xc4] sm:$0xf]
  %v326 = vld [vmem:[%s1 + $0xc8] sm:$0xf]
  %v327 = vld [vmem:[%s1 + $0xcc] sm:$0xf]
  %v328 = vld [vmem:[%s1 + $0xd0] sm:$0xf]
  %v329 = vld [vmem:[%s1 + $0xd4] sm:$0xf]
  %v330 = vld [vmem:[%s1 + $0xd8] sm:$0xf]
  %v331 = vld [vmem:[%s1 + $0xdc] sm:$0xf]
  %v332 = vld [vmem:[%s1 + $0xe0] sm:$0xf]
  %v333 = vld [vmem:[%s1 + $0xe4] sm:$0xf]
  %v334 = vld [vmem:[%s1 + $0xe8] sm:$0xf]
  %v335 = vld [vmem:[%s1 + $0xec] sm:$0xf]
  %v336 = vld [vmem:[%s1 + $0xf0] sm:$0xf]
  %v337 = vld [vmem:[%s1 + $0xf4] sm:$0xf]
  %v338 = vld [vmem:[%s1 + $0xf8] sm:$0xf]
  %v339 = vld [vmem:[%s1 + $0xfc] sm:$0xf]
  %v468 = vunpack.c.l.b16 %v148
  %v469 = vunpack.c.h.b16 %v148
  %v470 = vunpack.c.l.b16 %v149
  %v471 = vunpack.c.h.b16 %v149
  %v472 = vunpack.c.l.b16 %v150
  %v473 = vunpack.c.h.b16 %v150
  %v474 = vunpack.c.l.b16 %v151
  %v475 = vunpack.c.h.b16 %v151
  %v476 = vunpack.c.l.b16 %v152
  %v477 = vunpack.c.h.b16 %v152
  %v478 = vunpack.c.l.b16 %v153
  %v479 = vunpack.c.h.b16 %v153
  %v480 = vunpack.c.l.b16 %v154
  %v481 = vunpack.c.h.b16 %v154
  %v482 = vunpack.c.l.b16 %v155
  %v483 = vunpack.c.h.b16 %v155
  %v484 = vunpack.c.l.b16 %v156
  %v485 = vunpack.c.h.b16 %v156
  %v486 = vunpack.c.l.b16 %v157
  %v487 = vunpack.c.h.b16 %v157
  %v488 = vunpack.c.l.b16 %v158
  %v489 = vunpack.c.h.b16 %v158
  %v490 = vunpack.c.l.b16 %v159
  %v491 = vunpack.c.h.b16 %v159
  %v492 = vunpack.c.l.b16 %v160
  %v493 = vunpack.c.h.b16 %v160
  %v494 = vunpack.c.l.b16 %v161
  %v495 = vunpack.c.h.b16 %v161
  %v496 = vunpack.c.l.b16 %v162
  %v497 = vunpack.c.h.b16 %v162
  %v498 = vunpack.c.l.b16 %v163
  %v499 = vunpack.c.h.b16 %v163
  %v500 = vunpack.c.l.b16 %v164
  %v501 = vunpack.c.h.b16 %v164
  %v502 = vunpack.c.l.b16 %v165
  %v503 = vunpack.c.h.b16 %v165
  %v504 = vunpack.c.l.b16 %v166
  %v505 = vunpack.c.h.b16 %v166
  %v506 = vunpack.c.l.b16 %v167
  %v507 = vunpack.c.h.b16 %v167
  %v508 = vunpack.c.l.b16 %v168
  %v509 = vunpack.c.h.b16 %v168
  %v510 = vunpack.c.l.b16 %v169
  %v511 = vunpack.c.h.b16 %v169
  %v512 = vunpack.c.l.b16 %v170
  %v513 = vunpack.c.h.b16 %v170
  %v514 = vunpack.c.l.b16 %v171
  %v515 = vunpack.c.h.b16 %v171
  %v516 = vunpack.c.l.b16 %v172
  %v517 = vunpack.c.h.b16 %v172
  %v518 = vunpack.c.l.b16 %v173
  %v519 = vunpack.c.h.b16 %v173
  %v520 = vunpack.c.l.b16 %v174
  %v521 = vunpack.c.h.b16 %v174
  %v522 = vunpack.c.l.b16 %v175
  %v523 = vunpack.c.h.b16 %v175
  %v524 = vunpack.c.l.b16 %v176
  %v525 = vunpack.c.h.b16 %v176
  %v526 = vunpack.c.l.b16 %v177
  %v527 = vunpack.c.h.b16 %v177
  %v528 = vunpack.c.l.b16 %v178
  %v529 = vunpack.c.h.b16 %v178
  %v530 = vunpack.c.l.b16 %v179
  %v531 = vunpack.c.h.b16 %v179
  %v532 = vunpack.c.l.b16 %v180
  %v533 = vunpack.c.h.b16 %v180
  %v534 = vunpack.c.l.b16 %v181
  %v535 = vunpack.c.h.b16 %v181
  %v536 = vunpack.c.l.b16 %v182
  %v537 = vunpack.c.h.b16 %v182
  %v538 = vunpack.c.l.b16 %v183
  %v539 = vunpack.c.h.b16 %v183
  %v540 = vunpack.c.l.b16 %v184
  %v541 = vunpack.c.h.b16 %v184
  %v542 = vunpack.c.l.b16 %v185
  %v543 = vunpack.c.h.b16 %v185
  %v544 = vunpack.c.l.b16 %v186
  %v545 = vunpack.c.h.b16 %v186
  %v546 = vunpack.c.l.b16 %v187
  %v547 = vunpack.c.h.b16 %v187
  %v548 = vunpack.c.l.b16 %v188
  %v549 = vunpack.c.h.b16 %v188
  %v550 = vunpack.c.l.b16 %v189
  %v551 = vunpack.c.h.b16 %v189
  %v552 = vunpack.c.l.b16 %v190
  %v553 = vunpack.c.h.b16 %v190
  %v554 = vunpack.c.l.b16 %v191
  %v555 = vunpack.c.h.b16 %v191
  %v556 = vunpack.c.l.b16 %v192
  %v557 = vunpack.c.h.b16 %v192
  %v558 = vunpack.c.l.b16 %v193
  %v559 = vunpack.c.h.b16 %v193
  %v560 = vunpack.c.l.b16 %v194
  %v561 = vunpack.c.h.b16 %v194
  %v562 = vunpack.c.l.b16 %v195
  %v563 = vunpack.c.h.b16 %v195
  %v564 = vunpack.c.l.b16 %v196
  %v565 = vunpack.c.h.b16 %v196
  %v566 = vunpack.c.l.b16 %v197
  %v567 = vunpack.c.h.b16 %v197
  %v568 = vunpack.c.l.b16 %v198
  %v569 = vunpack.c.h.b16 %v198
  %v570 = vunpack.c.l.b16 %v199
  %v571 = vunpack.c.h.b16 %v199
  %v572 = vunpack.c.l.b16 %v200
  %v573 = vunpack.c.h.b16 %v200
  %v574 = vunpack.c.l.b16 %v201
  %v575 = vunpack.c.h.b16 %v201
  %v576 = vunpack.c.l.b16 %v202
  %v577 = vunpack.c.h.b16 %v202
  %v578 = vunpack.c.l.b16 %v203
  %v579 = vunpack.c.h.b16 %v203
  %v580 = vunpack.c.l.b16 %v204
  %v581 = vunpack.c.h.b16 %v204
  %v582 = vunpack.c.l.b16 %v205
  %v583 = vunpack.c.h.b16 %v205
  %v584 = vunpack.c.l.b16 %v206
  %v585 = vunpack.c.h.b16 %v206
  %v586 = vunpack.c.l.b16 %v207
  %v587 = vunpack.c.h.b16 %v207
  %v588 = vunpack.c.l.b16 %v208
  %v589 = vunpack.c.h.b16 %v208
  %v590 = vunpack.c.l.b16 %v209
  %v591 = vunpack.c.h.b16 %v209
  %v592 = vunpack.c.l.b16 %v210
  %v593 = vunpack.c.h.b16 %v210
  %v594 = vunpack.c.l.b16 %v211
  %v595 = vunpack.c.h.b16 %v211
  %v596 = vunpack.c.l.b16 %v212
  %v597 = vunpack.c.h.b16 %v212
  %v598 = vunpack.c.l.b16 %v213
  %v599 = vunpack.c.h.b16 %v213
  %v600 = vunpack.c.l.b16 %v214
  %v601 = vunpack.c.h.b16 %v214
  %v602 = vunpack.c.l.b16 %v215
  %v603 = vunpack.c.h.b16 %v215
  %v604 = vunpack.c.l.b16 %v216
  %v605 = vunpack.c.h.b16 %v216
  %v606 = vunpack.c.l.b16 %v217
  %v607 = vunpack.c.h.b16 %v217
  %v608 = vunpack.c.l.b16 %v218
  %v609 = vunpack.c.h.b16 %v218
  %v610 = vunpack.c.l.b16 %v219
  %v611 = vunpack.c.h.b16 %v219
  %v612 = vunpack.c.l.b16 %v220
  %v613 = vunpack.c.h.b16 %v220
  %v614 = vunpack.c.l.b16 %v221
  %v615 = vunpack.c.h.b16 %v221
  %v616 = vunpack.c.l.b16 %v222
  %v617 = vunpack.c.h.b16 %v222
  %v618 = vunpack.c.l.b16 %v223
  %v619 = vunpack.c.h.b16 %v223
  %v620 = vunpack.c.l.b16 %v224
  %v621 = vunpack.c.h.b16 %v224
  %v622 = vunpack.c.l.b16 %v225
  %v623 = vunpack.c.h.b16 %v225
  %v624 = vunpack.c.l.b16 %v226
  %v625 = vunpack.c.h.b16 %v226
  %v626 = vunpack.c.l.b16 %v227
  %v627 = vunpack.c.h.b16 %v227
  %v628 = vunpack.c.l.b16 %v228
  %v629 = vunpack.c.h.b16 %v228
  %v630 = vunpack.c.l.b16 %v229
  %v631 = vunpack.c.h.b16 %v229
  %v632 = vunpack.c.l.b16 %v230
  %v633 = vunpack.c.h.b16 %v230
  %v634 = vunpack.c.l.b16 %v231
  %v635 = vunpack.c.h.b16 %v231
  %v636 = vunpack.c.l.b16 %v232
  %v637 = vunpack.c.h.b16 %v232
  %v638 = vunpack.c.l.b16 %v233
  %v639 = vunpack.c.h.b16 %v233
  %v640 = vunpack.c.l.b16 %v234
  %v641 = vunpack.c.h.b16 %v234
  %v642 = vunpack.c.l.b16 %v235
  %v643 = vunpack.c.h.b16 %v235
  %v644 = vunpack.c.l.b16 %v236
  %v645 = vunpack.c.h.b16 %v236
  %v646 = vunpack.c.l.b16 %v237
  %v647 = vunpack.c.h.b16 %v237
  %v648 = vunpack.c.l.b16 %v238
  %v649 = vunpack.c.h.b16 %v238
  %v650 = vunpack.c.l.b16 %v239
  %v651 = vunpack.c.h.b16 %v239
  %v652 = vunpack.c.l.b16 %v240
  %v653 = vunpack.c.h.b16 %v240
  %v654 = vunpack.c.l.b16 %v241
  %v655 = vunpack.c.h.b16 %v241
  %v656 = vunpack.c.l.b16 %v242
  %v657 = vunpack.c.h.b16 %v242
  %v658 = vunpack.c.l.b16 %v243
  %v659 = vunpack.c.h.b16 %v243
  %v660 = vunpack.c.l.b16 %v244
  %v661 = vunpack.c.h.b16 %v244
  %v662 = vunpack.c.l.b16 %v245
  %v663 = vunpack.c.h.b16 %v245
  %v664 = vunpack.c.l.b16 %v246
  %v665 = vunpack.c.h.b16 %v246
  %v666 = vunpack.c.l.b16 %v247
  %v667 = vunpack.c.h.b16 %v247
  %v668 = vunpack.c.l.b16 %v248
  %v669 = vunpack.c.h.b16 %v248
  %v670 = vunpack.c.l.b16 %v249
  %v671 = vunpack.c.h.b16 %v249
  %v672 = vunpack.c.l.b16 %v250
  %v673 = vunpack.c.h.b16 %v250
  %v674 = vunpack.c.l.b16 %v251
  %v675 = vunpack.c.h.b16 %v251
  %v676 = vunpack.c.l.b16 %v252
  %v677 = vunpack.c.h.b16 %v252
  %v678 = vunpack.c.l.b16 %v253
  %v679 = vunpack.c.h.b16 %v253
  %v680 = vunpack.c.l.b16 %v254
  %v681 = vunpack.c.h.b16 %v254
  %v682 = vunpack.c.l.b16 %v255
  %v683 = vunpack.c.h.b16 %v255
  %v684 = vunpack.c.l.b16 %v256
  %v685 = vunpack.c.h.b16 %v256
  %v686 = vunpack.c.l.b16 %v257
  %v687 = vunpack.c.h.b16 %v257
  %v688 = vunpack.c.l.b16 %v258
  %v689 = vunpack.c.h.b16 %v258
  %v690 = vunpack.c.l.b16 %v259
  %v691 = vunpack.c.h.b16 %v259
  %v692 = vunpack.c.l.b16 %v260
  %v693 = vunpack.c.h.b16 %v260
  %v694 = vunpack.c.l.b16 %v261
  %v695 = vunpack.c.h.b16 %v261
  %v696 = vunpack.c.l.b16 %v262
  %v697 = vunpack.c.h.b16 %v262
  %v698 = vunpack.c.l.b16 %v263
  %v699 = vunpack.c.h.b16 %v263
  %v700 = vunpack.c.l.b16 %v264
  %v701 = vunpack.c.h.b16 %v264
  %v702 = vunpack.c.l.b16 %v265
  %v703 = vunpack.c.h.b16 %v265
  %v704 = vunpack.c.l.b16 %v266
  %v705 = vunpack.c.h.b16 %v266
  %v706 = vunpack.c.l.b16 %v267
  %v707 = vunpack.c.h.b16 %v267
  %v708 = vunpack.c.l.b16 %v268
  %v709 = vunpack.c.h.b16 %v268
  %v710 = vunpack.c.l.b16 %v269
  %v711 = vunpack.c.h.b16 %v269
  %v712 = vunpack.c.l.b16 %v270
  %v713 = vunpack.c.h.b16 %v270
  %v714 = vunpack.c.l.b16 %v271
  %v715 = vunpack.c.h.b16 %v271
  %v716 = vunpack.c.l.b16 %v272
  %v717 = vunpack.c.h.b16 %v272
  %v718 = vunpack.c.l.b16 %v273
  %v719 = vunpack.c.h.b16 %v273
  %v720 = vunpack.c.l.b16 %v274
  %v721 = vunpack.c.h.b16 %v274
  %v722 = vunpack.c.l.b16 %v275
  %v723 = vunpack.c.h.b16 %v275
  %v724 = vpack.c.b16 %v472, %v468
  %v725 = vpack.c.b16 %v473, %v469
  %v726 = vpack.c.b16 %v474, %v470
  %v727 = vpack.c.b16 %v475, %v471
  %v728 = vpack.c.b16 %v480, %v476
  %v729 = vpack.c.b16 %v481, %v477
  %v730 = vpack.c.b16 %v482, %v478
  %v731 = vpack.c.b16 %v483, %v479
  %v732 = vpack.c.b16 %v488, %v484
  %v733 = vpack.c.b16 %v489, %v485
  %v734 = vpack.c.b16 %v490, %v486
  %v735 = vpack.c.b16 %v491, %v487
  %v736 = vpack.c.b16 %v496, %v492
  %v737 = vpack.c.b16 %v497, %v493
  %v738 = vpack.c.b16 %v498, %v494
  %v739 = vpack.c.b16 %v499, %v495
  %v740 = vpack.c.b16 %v504, %v500
  %v741 = vpack.c.b16 %v505, %v501
  %v742 = vpack.c.b16 %v506, %v502
  %v743 = vpack.c.b16 %v507, %v503
  %v744 = vpack.c.b16 %v512, %v508
  %v745 = vpack.c.b16 %v513, %v509
  %v746 = vpack.c.b16 %v514, %v510
  %v747 = vpack.c.b16 %v515, %v511
  %v748 = vpack.c.b16 %v520, %v516
  %v749 = vpack.c.b16 %v521, %v517
  %v750 = vpack.c.b16 %v522, %v518
  %v751 = vpack.c.b16 %v523, %v519
  %v752 = vpack.c.b16 %v528, %v524
  %v753 = vpack.c.b16 %v529, %v525
  %v754 = vpack.c.b16 %v530, %v526
  %v755 = vpack.c.b16 %v531, %v527
  %v756 = vpack.c.b16 %v536, %v532
  %v757 = vpack.c.b16 %v537, %v533
  %v758 = vpack.c.b16 %v538, %v534
  %v759 = vpack.c.b16 %v539, %v535
  %v760 = vpack.c.b16 %v544, %v540
  %v761 = vpack.c.b16 %v545, %v541
  %v762 = vpack.c.b16 %v546, %v542
  %v763 = vpack.c.b16 %v547, %v543
  %v764 = vpack.c.b16 %v552, %v548
  %v765 = vpack.c.b16 %v553, %v549
  %v766 = vpack.c.b16 %v554, %v550
  %v767 = vpack.c.b16 %v555, %v551
  %v768 = vpack.c.b16 %v560, %v556
  %v769 = vpack.c.b16 %v561, %v557
  %v770 = vpack.c.b16 %v562, %v558
  %v771 = vpack.c.b16 %v563, %v559
  %v772 = vpack.c.b16 %v568, %v564
  %v773 = vpack.c.b16 %v569, %v565
  %v774 = vpack.c.b16 %v570, %v566
  %v775 = vpack.c.b16 %v571, %v567
  %v776 = vpack.c.b16 %v576, %v572
  %v777 = vpack.c.b16 %v577, %v573
  %v778 = vpack.c.b16 %v578, %v574
  %v779 = vpack.c.b16 %v579, %v575
  %v780 = vpack.c.b16 %v584, %v580
  %v781 = vpack.c.b16 %v585, %v581
  %v782 = vpack.c.b16 %v586, %v582
  %v783 = vpack.c.b16 %v587, %v583
  %v784 = vpack.c.b16 %v592, %v588
  %v785 = vpack.c.b16 %v593, %v589
  %v786 = vpack.c.b16 %v594, %v590
  %v787 = vpack.c.b16 %v595, %v591
  %v788 = vpack.c.b16 %v600, %v596
  %v789 = vpack.c.b16 %v601, %v597
  %v790 = vpack.c.b16 %v602, %v598
  %v791 = vpack.c.b16 %v603, %v599
  %v792 = vpack.c.b16 %v608, %v604
  %v793 = vpack.c.b16 %v609, %v605
  %v794 = vpack.c.b16 %v610, %v606
  %v795 = vpack.c.b16 %v611, %v607
  %v796 = vpack.c.b16 %v616, %v612
  %v797 = vpack.c.b16 %v617, %v613
  %v798 = vpack.c.b16 %v618, %v614
  %v799 = vpack.c.b16 %v619, %v615
  %v800 = vpack.c.b16 %v624, %v620
  %v801 = vpack.c.b16 %v625, %v621
  %v802 = vpack.c.b16 %v626, %v622
  %v803 = vpack.c.b16 %v627, %v623
  %v804 = vpack.c.b16 %v632, %v628
  %v805 = vpack.c.b16 %v633, %v629
  %v806 = vpack.c.b16 %v634, %v630
  %v807 = vpack.c.b16 %v635, %v631
  %v808 = vpack.c.b16 %v640, %v636
  %v809 = vpack.c.b16 %v641, %v637
  %v810 = vpack.c.b16 %v642, %v638
  %v811 = vpack.c.b16 %v643, %v639
  %v812 = vpack.c.b16 %v648, %v644
  %v813 = vpack.c.b16 %v649, %v645
  %v814 = vpack.c.b16 %v650, %v646
  %v815 = vpack.c.b16 %v651, %v647
  %v816 = vpack.c.b16 %v656, %v652
  %v817 = vpack.c.b16 %v657, %v653
  %v818 = vpack.c.b16 %v658, %v654
  %v819 = vpack.c.b16 %v659, %v655
  %v820 = vpack.c.b16 %v664, %v660
  %v821 = vpack.c.b16 %v665, %v661
  %v822 = vpack.c.b16 %v666, %v662
  %v823 = vpack.c.b16 %v667, %v663
  %v824 = vpack.c.b16 %v672, %v668
  %v825 = vpack.c.b16 %v673, %v669
  %v826 = vpack.c.b16 %v674, %v670
  %v827 = vpack.c.b16 %v675, %v671
  %v828 = vpack.c.b16 %v680, %v676
  %v829 = vpack.c.b16 %v681, %v677
  %v830 = vpack.c.b16 %v682, %v678
  %v831 = vpack.c.b16 %v683, %v679
  %v832 = vpack.c.b16 %v688, %v684
  %v833 = vpack.c.b16 %v689, %v685
  %v834 = vpack.c.b16 %v690, %v686
  %v835 = vpack.c.b16 %v691, %v687
  %v836 = vpack.c.b16 %v696, %v692
  %v837 = vpack.c.b16 %v697, %v693
  %v838 = vpack.c.b16 %v698, %v694
  %v839 = vpack.c.b16 %v699, %v695
  %v840 = vpack.c.b16 %v704, %v700
  %v841 = vpack.c.b16 %v705, %v701
  %v842 = vpack.c.b16 %v706, %v702
  %v843 = vpack.c.b16 %v707, %v703
  %v844 = vpack.c.b16 %v712, %v708
  %v845 = vpack.c.b16 %v713, %v709
  %v846 = vpack.c.b16 %v714, %v710
  %v847 = vpack.c.b16 %v715, %v711
  %v848 = vpack.c.b16 %v720, %v716
  %v849 = vpack.c.b16 %v721, %v717
  %v850 = vpack.c.b16 %v722, %v718
  %v851 = vpack.c.b16 %v723, %v719
  %v1044 = vunpack.c.l.b16 %v276
  %v1045 = vunpack.c.l.b16 %v277
  %v1046 = vunpack.c.l.b16 %v278
  %v1047 = vunpack.c.l.b16 %v279
  %v1048 = vunpack.c.l.b16 %v280
  %v1049 = vunpack.c.l.b16 %v281
  %v1050 = vunpack.c.l.b16 %v282
  %v1051 = vunpack.c.l.b16 %v283
  %v1052 = vunpack.c.l.b16 %v284
  %v1053 = vunpack.c.l.b16 %v285
  %v1054 = vunpack.c.l.b16 %v286
  %v1055 = vunpack.c.l.b16 %v287
  %v1056 = vunpack.c.l.b16 %v288
  %v1057 = vunpack.c.l.b16 %v289
  %v1058 = vunpack.c.l.b16 %v290
  %v1059 = vunpack.c.l.b16 %v291
  %v1060 = vunpack.c.l.b16 %v292
  %v1061 = vunpack.c.l.b16 %v293
  %v1062 = vunpack.c.l.b16 %v294
  %v1063 = vunpack.c.l.b16 %v295
  %v1064 = vunpack.c.l.b16 %v296
  %v1065 = vunpack.c.l.b16 %v297
  %v1066 = vunpack.c.l.b16 %v298
  %v1067 = vunpack.c.l.b16 %v299
  %v1068 = vunpack.c.l.b16 %v300
  %v1069 = vunpack.c.l.b16 %v301
  %v1070 = vunpack.c.l.b16 %v302
  %v1071 = vunpack.c.l.b16 %v303
  %v1072 = vunpack.c.l.b16 %v304
  %v1073 = vunpack.c.l.b16 %v305
  %v1074 = vunpack.c.l.b16 %v306
  %v1075 = vunpack.c.l.b16 %v307
  %v1076 = vunpack.c.l.b16 %v308
  %v1077 = vunpack.c.l.b16 %v309
  %v1078 = vunpack.c.l.b16 %v310
  %v1079 = vunpack.c.l.b16 %v311
  %v1080 = vunpack.c.l.b16 %v312
  %v1081 = vunpack.c.l.b16 %v313
  %v1082 = vunpack.c.l.b16 %v314
  %v1083 = vunpack.c.l.b16 %v315
  %v1084 = vunpack.c.l.b16 %v316
  %v1085 = vunpack.c.l.b16 %v317
  %v1086 = vunpack.c.l.b16 %v318
  %v1087 = vunpack.c.l.b16 %v319
  %v1088 = vunpack.c.l.b16 %v320
  %v1089 = vunpack.c.l.b16 %v321
  %v1090 = vunpack.c.l.b16 %v322
  %v1091 = vunpack.c.l.b16 %v323
  %v1092 = vunpack.c.l.b16 %v324
  %v1093 = vunpack.c.l.b16 %v325
  %v1094 = vunpack.c.l.b16 %v326
  %v1095 = vunpack.c.l.b16 %v327
  %v1096 = vunpack.c.l.b16 %v328
  %v1097 = vunpack.c.l.b16 %v329
  %v1098 = vunpack.c.l.b16 %v330
  %v1099 = vunpack.c.l.b16 %v331
  %v1100 = vunpack.c.l.b16 %v332
  %v1101 = vunpack.c.l.b16 %v333
  %v1102 = vunpack.c.l.b16 %v334
  %v1103 = vunpack.c.l.b16 %v335
  %v1104 = vunpack.c.l.b16 %v336
  %v1105 = vunpack.c.l.b16 %v337
  %v1106 = vunpack.c.l.b16 %v338
  %v1107 = vunpack.c.l.b16 %v339
  %v1108 = vpack.c.b16 %v1045, %v1044
  %v1109 = vpack.c.b16 %v1047, %v1046
  %v1110 = vpack.c.b16 %v1049, %v1048
  %v1111 = vpack.c.b16 %v1051, %v1050
  %v1112 = vpack.c.b16 %v1053, %v1052
  %v1113 = vpack.c.b16 %v1055, %v1054
  %v1114 = vpack.c.b16 %v1057, %v1056
  %v1115 = vpack.c.b16 %v1059, %v1058
  %v1116 = vpack.c.b16 %v1061, %v1060
  %v1117 = vpack.c.b16 %v1063, %v1062
  %v1118 = vpack.c.b16 %v1065, %v1064
  %v1119 = vpack.c.b16 %v1067, %v1066
  %v1120 = vpack.c.b16 %v1069, %v1068
  %v1121 = vpack.c.b16 %v1071, %v1070
  %v1122 = vpack.c.b16 %v1073, %v1072
  %v1123 = vpack.c.b16 %v1075, %v1074
  %v1124 = vpack.c.b16 %v1077, %v1076
  %v1125 = vpack.c.b16 %v1079, %v1078
  %v1126 = vpack.c.b16 %v1081, %v1080
  %v1127 = vpack.c.b16 %v1083, %v1082
  %v1128 = vpack.c.b16 %v1085, %v1084
  %v1129 = vpack.c.b16 %v1087, %v1086
  %v1130 = vpack.c.b16 %v1089, %v1088
  %v1131 = vpack.c.b16 %v1091, %v1090
  %v1132 = vpack.c.b16 %v1093, %v1092
  %v1133 = vpack.c.b16 %v1095, %v1094
  %v1134 = vpack.c.b16 %v1097, %v1096
  %v1135 = vpack.c.b16 %v1099, %v1098
  %v1136 = vpack.c.b16 %v1101, %v1100
  %v1137 = vpack.c.b16 %v1103, %v1102
  %v1138 = vpack.c.b16 %v1105, %v1104
  %v1139 = vpack.c.b16 %v1107, %v1106
  %1172 = vmatpush.bf16.msra.mxu0 %v1115
  %1173 = vmatpush.bf16.msra.mxu0 %v1114
  %1174 = vmatpush.bf16.msra.mxu0 %v1113
  %1175 = vmatpush.bf16.msra.mxu0 %v1112
  %1176 = vmatpush.bf16.msra.mxu0 %v1111
  %1177 = vmatpush.bf16.msra.mxu0 %v1110
  %1178 = vmatpush.bf16.msra.mxu0 %v1109
  %1179 = vmatpush.bf16.msra.mxu0 %v1108
  %1180 = vmatmul.bf16.gmra.mxu0 %v724
  %v1181 = vpop.f32.mrf.mxu0
  %v1182 = vadd.f32 0.0, %v1181
  %v1183 = vpop.f32.mrf.mxu0
  %v1184 = vadd.f32 0.0, %v1183
  %1185 = vmatmul.bf16.gmra.mxu0 %v728
  %v1186 = vpop.f32.mrf.mxu0
  %v1187 = vadd.f32 0.0, %v1186
  %v1188 = vpop.f32.mrf.mxu0
  %v1189 = vadd.f32 0.0, %v1188
  %1190 = vmatmul.bf16.gmra.mxu0 %v732
  %v1191 = vpop.f32.mrf.mxu0
  %v1192 = vadd.f32 0.0, %v1191
  %v1193 = vpop.f32.mrf.mxu0
  %v1194 = vadd.f32 0.0, %v1193
  %1195 = vmatmul.bf16.gmra.mxu0 %v736
  %v1196 = vpop.f32.mrf.mxu0
  %v1197 = vadd.f32 0.0, %v1196
  %v1198 = vpop.f32.mrf.mxu0
  %v1199 = vadd.f32 0.0, %v1198
  %1200 = vmatmul.bf16.gmra.mxu0 %v740
  %v1201 = vpop.f32.mrf.mxu0
  %v1202 = vadd.f32 0.0, %v1201
  %v1203 = vpop.f32.mrf.mxu0
  %v1204 = vadd.f32 0.0, %v1203
  %1205 = vmatmul.bf16.gmra.mxu0 %v744
  %v1206 = vpop.f32.mrf.mxu0
  %v1207 = vadd.f32 0.0, %v1206
  %v1208 = vpop.f32.mrf.mxu0
  %v1209 = vadd.f32 0.0, %v1208
  %1210 = vmatmul.bf16.gmra.mxu0 %v748
  %v1211 = vpop.f32.mrf.mxu0
  %v1212 = vadd.f32 0.0, %v1211
  %v1213 = vpop.f32.mrf.mxu0
  %v1214 = vadd.f32 0.0, %v1213
  %1215 = vmatmul.bf16.gmra.mxu0 %v752
  %v1216 = vpop.f32.mrf.mxu0
  %v1217 = vadd.f32 0.0, %v1216
  %v1218 = vpop.f32.mrf.mxu0
  %v1219 = vadd.f32 0.0, %v1218
  %1220 = vmatmul.bf16.gmra.mxu0 %v756
  %v1221 = vpop.f32.mrf.mxu0
  %v1222 = vadd.f32 0.0, %v1221
  %v1223 = vpop.f32.mrf.mxu0
  %v1224 = vadd.f32 0.0, %v1223
  %1225 = vmatmul.bf16.gmra.mxu0 %v760
  %v1226 = vpop.f32.mrf.mxu0
  %v1227 = vadd.f32 0.0, %v1226
  %v1228 = vpop.f32.mrf.mxu0
  %v1229 = vadd.f32 0.0, %v1228
  %1230 = vmatmul.bf16.gmra.mxu0 %v764
  %v1231 = vpop.f32.mrf.mxu0
  %v1232 = vadd.f32 0.0, %v1231
  %v1233 = vpop.f32.mrf.mxu0
  %v1234 = vadd.f32 0.0, %v1233
  %1235 = vmatmul.bf16.gmra.mxu0 %v768
  %v1236 = vpop.f32.mrf.mxu0
  %v1237 = vadd.f32 0.0, %v1236
  %v1238 = vpop.f32.mrf.mxu0
  %v1239 = vadd.f32 0.0, %v1238
  %1240 = vmatmul.bf16.gmra.mxu0 %v772
  %v1241 = vpop.f32.mrf.mxu0
  %v1242 = vadd.f32 0.0, %v1241
  %v1243 = vpop.f32.mrf.mxu0
  %v1244 = vadd.f32 0.0, %v1243
  %1245 = vmatmul.bf16.gmra.mxu0 %v776
  %v1246 = vpop.f32.mrf.mxu0
  %v1247 = vadd.f32 0.0, %v1246
  %v1248 = vpop.f32.mrf.mxu0
  %v1249 = vadd.f32 0.0, %v1248
  %1250 = vmatmul.bf16.gmra.mxu0 %v780
  %v1251 = vpop.f32.mrf.mxu0
  %v1252 = vadd.f32 0.0, %v1251
  %v1253 = vpop.f32.mrf.mxu0
  %v1254 = vadd.f32 0.0, %v1253
  %1255 = vmatmul.bf16.gmra.mxu0 %v784
  %v1256 = vpop.f32.mrf.mxu0
  %v1257 = vadd.f32 0.0, %v1256
  %v1258 = vpop.f32.mrf.mxu0
  %v1259 = vadd.f32 0.0, %v1258
  %1260 = vmatmul.bf16.gmra.mxu0 %v788
  %v1261 = vpop.f32.mrf.mxu0
  %v1262 = vadd.f32 0.0, %v1261
  %v1263 = vpop.f32.mrf.mxu0
  %v1264 = vadd.f32 0.0, %v1263
  %1265 = vmatmul.bf16.gmra.mxu0 %v792
  %v1266 = vpop.f32.mrf.mxu0
  %v1267 = vadd.f32 0.0, %v1266
  %v1268 = vpop.f32.mrf.mxu0
  %v1269 = vadd.f32 0.0, %v1268
  %1270 = vmatmul.bf16.gmra.mxu0 %v796
  %v1271 = vpop.f32.mrf.mxu0
  %v1272 = vadd.f32 0.0, %v1271
  %v1273 = vpop.f32.mrf.mxu0
  %v1274 = vadd.f32 0.0, %v1273
  %1275 = vmatmul.bf16.gmra.mxu0 %v800
  %v1276 = vpop.f32.mrf.mxu0
  %v1277 = vadd.f32 0.0, %v1276
  %v1278 = vpop.f32.mrf.mxu0
  %v1279 = vadd.f32 0.0, %v1278
  %1280 = vmatmul.bf16.gmra.mxu0 %v804
  %v1281 = vpop.f32.mrf.mxu0
  %v1282 = vadd.f32 0.0, %v1281
  %v1283 = vpop.f32.mrf.mxu0
  %v1284 = vadd.f32 0.0, %v1283
  %1285 = vmatmul.bf16.gmra.mxu0 %v808
  %v1286 = vpop.f32.mrf.mxu0
  %v1287 = vadd.f32 0.0, %v1286
  %v1288 = vpop.f32.mrf.mxu0
  %v1289 = vadd.f32 0.0, %v1288
  %1290 = vmatmul.bf16.gmra.mxu0 %v812
  %v1291 = vpop.f32.mrf.mxu0
  %v1292 = vadd.f32 0.0, %v1291
  %v1293 = vpop.f32.mrf.mxu0
  %v1294 = vadd.f32 0.0, %v1293
  %1295 = vmatmul.bf16.gmra.mxu0 %v816
  %v1296 = vpop.f32.mrf.mxu0
  %v1297 = vadd.f32 0.0, %v1296
  %v1298 = vpop.f32.mrf.mxu0
  %v1299 = vadd.f32 0.0, %v1298
  %1300 = vmatmul.bf16.gmra.mxu0 %v820
  %v1301 = vpop.f32.mrf.mxu0
  %v1302 = vadd.f32 0.0, %v1301
  %v1303 = vpop.f32.mrf.mxu0
  %v1304 = vadd.f32 0.0, %v1303
  %1305 = vmatmul.bf16.gmra.mxu0 %v824
  %v1306 = vpop.f32.mrf.mxu0
  %v1307 = vadd.f32 0.0, %v1306
  %v1308 = vpop.f32.mrf.mxu0
  %v1309 = vadd.f32 0.0, %v1308
  %1310 = vmatmul.bf16.gmra.mxu0 %v828
  %v1311 = vpop.f32.mrf.mxu0
  %v1312 = vadd.f32 0.0, %v1311
  %v1313 = vpop.f32.mrf.mxu0
  %v1314 = vadd.f32 0.0, %v1313
  %1315 = vmatmul.bf16.gmra.mxu0 %v832
  %v1316 = vpop.f32.mrf.mxu0
  %v1317 = vadd.f32 0.0, %v1316
  %v1318 = vpop.f32.mrf.mxu0
  %v1319 = vadd.f32 0.0, %v1318
  %1320 = vmatmul.bf16.gmra.mxu0 %v836
  %v1321 = vpop.f32.mrf.mxu0
  %v1322 = vadd.f32 0.0, %v1321
  %v1323 = vpop.f32.mrf.mxu0
  %v1324 = vadd.f32 0.0, %v1323
  %1325 = vmatmul.bf16.gmra.mxu0 %v840
  %v1326 = vpop.f32.mrf.mxu0
  %v1327 = vadd.f32 0.0, %v1326
  %v1328 = vpop.f32.mrf.mxu0
  %v1329 = vadd.f32 0.0, %v1328
  %1330 = vmatmul.bf16.gmra.mxu0 %v844
  %v1331 = vpop.f32.mrf.mxu0
  %v1332 = vadd.f32 0.0, %v1331
  %v1333 = vpop.f32.mrf.mxu0
  %v1334 = vadd.f32 0.0, %v1333
  %1335 = vmatmul.bf16.gmra.mxu0 %v848
  %v1336 = vpop.f32.mrf.mxu0
  %v1337 = vadd.f32 0.0, %v1336
  %v1338 = vpop.f32.mrf.mxu0
  %v1339 = vadd.f32 0.0, %v1338
  %1340 = vdwg.mxu0
  %1341 = vmatpush.bf16.msra.mxu0 %v1123
  %1342 = vmatpush.bf16.msra.mxu0 %v1122
  %1343 = vmatpush.bf16.msra.mxu0 %v1121
  %1344 = vmatpush.bf16.msra.mxu0 %v1120
  %1345 = vmatpush.bf16.msra.mxu0 %v1119
  %1346 = vmatpush.bf16.msra.mxu0 %v1118
  %1347 = vmatpush.bf16.msra.mxu0 %v1117
  %1348 = vmatpush.bf16.msra.mxu0 %v1116
  %1349 = vmatmul.bf16.gmra.mxu0 %v725
  %v1350 = vpop.f32.mrf.mxu0
  %v1351 = vadd.f32 %v1182, %v1350
  %v1352 = vpop.f32.mrf.mxu0
  %v1353 = vadd.f32 %v1184, %v1352
  %1354 = vmatmul.bf16.gmra.mxu0 %v729
  %v1355 = vpop.f32.mrf.mxu0
  %v1356 = vadd.f32 %v1187, %v1355
  %v1357 = vpop.f32.mrf.mxu0
  %v1358 = vadd.f32 %v1189, %v1357
  %1359 = vmatmul.bf16.gmra.mxu0 %v733
  %v1360 = vpop.f32.mrf.mxu0
  %v1361 = vadd.f32 %v1192, %v1360
  %v1362 = vpop.f32.mrf.mxu0
  %v1363 = vadd.f32 %v1194, %v1362
  %1364 = vmatmul.bf16.gmra.mxu0 %v737
  %v1365 = vpop.f32.mrf.mxu0
  %v1366 = vadd.f32 %v1197, %v1365
  %v1367 = vpop.f32.mrf.mxu0
  %v1368 = vadd.f32 %v1199, %v1367
  %1369 = vmatmul.bf16.gmra.mxu0 %v741
  %v1370 = vpop.f32.mrf.mxu0
  %v1371 = vadd.f32 %v1202, %v1370
  %v1372 = vpop.f32.mrf.mxu0
  %v1373 = vadd.f32 %v1204, %v1372
  %1374 = vmatmul.bf16.gmra.mxu0 %v745
  %v1375 = vpop.f32.mrf.mxu0
  %v1376 = vadd.f32 %v1207, %v1375
  %v1377 = vpop.f32.mrf.mxu0
  %v1378 = vadd.f32 %v1209, %v1377
  %1379 = vmatmul.bf16.gmra.mxu0 %v749
  %v1380 = vpop.f32.mrf.mxu0
  %v1381 = vadd.f32 %v1212, %v1380
  %v1382 = vpop.f32.mrf.mxu0
  %v1383 = vadd.f32 %v1214, %v1382
  %1384 = vmatmul.bf16.gmra.mxu0 %v753
  %v1385 = vpop.f32.mrf.mxu0
  %v1386 = vadd.f32 %v1217, %v1385
  %v1387 = vpop.f32.mrf.mxu0
  %v1388 = vadd.f32 %v1219, %v1387
  %1389 = vmatmul.bf16.gmra.mxu0 %v757
  %v1390 = vpop.f32.mrf.mxu0
  %v1391 = vadd.f32 %v1222, %v1390
  %v1392 = vpop.f32.mrf.mxu0
  %v1393 = vadd.f32 %v1224, %v1392
  %1394 = vmatmul.bf16.gmra.mxu0 %v761
  %v1395 = vpop.f32.mrf.mxu0
  %v1396 = vadd.f32 %v1227, %v1395
  %v1397 = vpop.f32.mrf.mxu0
  %v1398 = vadd.f32 %v1229, %v1397
  %1399 = vmatmul.bf16.gmra.mxu0 %v765
  %v1400 = vpop.f32.mrf.mxu0
  %v1401 = vadd.f32 %v1232, %v1400
  %v1402 = vpop.f32.mrf.mxu0
  %v1403 = vadd.f32 %v1234, %v1402
  %1404 = vmatmul.bf16.gmra.mxu0 %v769
  %v1405 = vpop.f32.mrf.mxu0
  %v1406 = vadd.f32 %v1237, %v1405
  %v1407 = vpop.f32.mrf.mxu0
  %v1408 = vadd.f32 %v1239, %v1407
  %1409 = vmatmul.bf16.gmra.mxu0 %v773
  %v1410 = vpop.f32.mrf.mxu0
  %v1411 = vadd.f32 %v1242, %v1410
  %v1412 = vpop.f32.mrf.mxu0
  %v1413 = vadd.f32 %v1244, %v1412
  %1414 = vmatmul.bf16.gmra.mxu0 %v777
  %v1415 = vpop.f32.mrf.mxu0
  %v1416 = vadd.f32 %v1247, %v1415
  %v1417 = vpop.f32.mrf.mxu0
  %v1418 = vadd.f32 %v1249, %v1417
  %1419 = vmatmul.bf16.gmra.mxu0 %v781
  %v1420 = vpop.f32.mrf.mxu0
  %v1421 = vadd.f32 %v1252, %v1420
  %v1422 = vpop.f32.mrf.mxu0
  %v1423 = vadd.f32 %v1254, %v1422
  %1424 = vmatmul.bf16.gmra.mxu0 %v785
  %v1425 = vpop.f32.mrf.mxu0
  %v1426 = vadd.f32 %v1257, %v1425
  %v1427 = vpop.f32.mrf.mxu0
  %v1428 = vadd.f32 %v1259, %v1427
  %1429 = vmatmul.bf16.gmra.mxu0 %v789
  %v1430 = vpop.f32.mrf.mxu0
  %v1431 = vadd.f32 %v1262, %v1430
  %v1432 = vpop.f32.mrf.mxu0
  %v1433 = vadd.f32 %v1264, %v1432
  %1434 = vmatmul.bf16.gmra.mxu0 %v793
  %v1435 = vpop.f32.mrf.mxu0
  %v1436 = vadd.f32 %v1267, %v1435
  %v1437 = vpop.f32.mrf.mxu0
  %v1438 = vadd.f32 %v1269, %v1437
  %1439 = vmatmul.bf16.gmra.mxu0 %v797
  %v1440 = vpop.f32.mrf.mxu0
  %v1441 = vadd.f32 %v1272, %v1440
  %v1442 = vpop.f32.mrf.mxu0
  %v1443 = vadd.f32 %v1274, %v1442
  %1444 = vmatmul.bf16.gmra.mxu0 %v801
  %v1445 = vpop.f32.mrf.mxu0
  %v1446 = vadd.f32 %v1277, %v1445
  %v1447 = vpop.f32.mrf.mxu0
  %v1448 = vadd.f32 %v1279, %v1447
  %1449 = vmatmul.bf16.gmra.mxu0 %v805
  %v1450 = vpop.f32.mrf.mxu0
  %v1451 = vadd.f32 %v1282, %v1450
  %v1452 = vpop.f32.mrf.mxu0
  %v1453 = vadd.f32 %v1284, %v1452
  %1454 = vmatmul.bf16.gmra.mxu0 %v809
  %v1455 = vpop.f32.mrf.mxu0
  %v1456 = vadd.f32 %v1287, %v1455
  %v1457 = vpop.f32.mrf.mxu0
  %v1458 = vadd.f32 %v1289, %v1457
  %1459 = vmatmul.bf16.gmra.mxu0 %v813
  %v1460 = vpop.f32.mrf.mxu0
  %v1461 = vadd.f32 %v1292, %v1460
  %v1462 = vpop.f32.mrf.mxu0
  %v1463 = vadd.f32 %v1294, %v1462
  %1464 = vmatmul.bf16.gmra.mxu0 %v817
  %v1465 = vpop.f32.mrf.mxu0
  %v1466 = vadd.f32 %v1297, %v1465
  %v1467 = vpop.f32.mrf.mxu0
  %v1468 = vadd.f32 %v1299, %v1467
  %1469 = vmatmul.bf16.gmra.mxu0 %v821
  %v1470 = vpop.f32.mrf.mxu0
  %v1471 = vadd.f32 %v1302, %v1470
  %v1472 = vpop.f32.mrf.mxu0
  %v1473 = vadd.f32 %v1304, %v1472
  %1474 = vmatmul.bf16.gmra.mxu0 %v825
  %v1475 = vpop.f32.mrf.mxu0
  %v1476 = vadd.f32 %v1307, %v1475
  %v1477 = vpop.f32.mrf.mxu0
  %v1478 = vadd.f32 %v1309, %v1477
  %1479 = vmatmul.bf16.gmra.mxu0 %v829
  %v1480 = vpop.f32.mrf.mxu0
  %v1481 = vadd.f32 %v1312, %v1480
  %v1482 = vpop.f32.mrf.mxu0
  %v1483 = vadd.f32 %v1314, %v1482
  %1484 = vmatmul.bf16.gmra.mxu0 %v833
  %v1485 = vpop.f32.mrf.mxu0
  %v1486 = vadd.f32 %v1317, %v1485
  %v1487 = vpop.f32.mrf.mxu0
  %v1488 = vadd.f32 %v1319, %v1487
  %1489 = vmatmul.bf16.gmra.mxu0 %v837
  %v1490 = vpop.f32.mrf.mxu0
  %v1491 = vadd.f32 %v1322, %v1490
  %v1492 = vpop.f32.mrf.mxu0
  %v1493 = vadd.f32 %v1324, %v1492
  %1494 = vmatmul.bf16.gmra.mxu0 %v841
  %v1495 = vpop.f32.mrf.mxu0
  %v1496 = vadd.f32 %v1327, %v1495
  %v1497 = vpop.f32.mrf.mxu0
  %v1498 = vadd.f32 %v1329, %v1497
  %1499 = vmatmul.bf16.gmra.mxu0 %v845
  %v1500 = vpop.f32.mrf.mxu0
  %v1501 = vadd.f32 %v1332, %v1500
  %v1502 = vpop.f32.mrf.mxu0
  %v1503 = vadd.f32 %v1334, %v1502
  %1504 = vmatmul.bf16.gmra.mxu0 %v849
  %v1505 = vpop.f32.mrf.mxu0
  %v1506 = vadd.f32 %v1337, %v1505
  %v1507 = vpop.f32.mrf.mxu0
  %v1508 = vadd.f32 %v1339, %v1507
  %1509 = vdwg.mxu0
  %1510 = vmatpush.bf16.msra.mxu0 %v1131
  %1511 = vmatpush.bf16.msra.mxu0 %v1130
  %1512 = vmatpush.bf16.msra.mxu0 %v1129
  %1513 = vmatpush.bf16.msra.mxu0 %v1128
  %1514 = vmatpush.bf16.msra.mxu0 %v1127
  %1515 = vmatpush.bf16.msra.mxu0 %v1126
  %1516 = vmatpush.bf16.msra.mxu0 %v1125
  %1517 = vmatpush.bf16.msra.mxu0 %v1124
  %1518 = vmatmul.bf16.gmra.mxu0 %v726
  %v1519 = vpop.f32.mrf.mxu0
  %v1520 = vadd.f32 %v1351, %v1519
  %v1521 = vpop.f32.mrf.mxu0
  %v1522 = vadd.f32 %v1353, %v1521
  %1523 = vmatmul.bf16.gmra.mxu0 %v730
  %v1524 = vpop.f32.mrf.mxu0
  %v1525 = vadd.f32 %v1356, %v1524
  %v1526 = vpop.f32.mrf.mxu0
  %v1527 = vadd.f32 %v1358, %v1526
  %1528 = vmatmul.bf16.gmra.mxu0 %v734
  %v1529 = vpop.f32.mrf.mxu0
  %v1530 = vadd.f32 %v1361, %v1529
  %v1531 = vpop.f32.mrf.mxu0
  %v1532 = vadd.f32 %v1363, %v1531
  %1533 = vmatmul.bf16.gmra.mxu0 %v738
  %v1534 = vpop.f32.mrf.mxu0
  %v1535 = vadd.f32 %v1366, %v1534
  %v1536 = vpop.f32.mrf.mxu0
  %v1537 = vadd.f32 %v1368, %v1536
  %1538 = vmatmul.bf16.gmra.mxu0 %v742
  %v1539 = vpop.f32.mrf.mxu0
  %v1540 = vadd.f32 %v1371, %v1539
  %v1541 = vpop.f32.mrf.mxu0
  %v1542 = vadd.f32 %v1373, %v1541
  %1543 = vmatmul.bf16.gmra.mxu0 %v746
  %v1544 = vpop.f32.mrf.mxu0
  %v1545 = vadd.f32 %v1376, %v1544
  %v1546 = vpop.f32.mrf.mxu0
  %v1547 = vadd.f32 %v1378, %v1546
  %1548 = vmatmul.bf16.gmra.mxu0 %v750
  %v1549 = vpop.f32.mrf.mxu0
  %v1550 = vadd.f32 %v1381, %v1549
  %v1551 = vpop.f32.mrf.mxu0
  %v1552 = vadd.f32 %v1383, %v1551
  %1553 = vmatmul.bf16.gmra.mxu0 %v754
  %v1554 = vpop.f32.mrf.mxu0
  %v1555 = vadd.f32 %v1386, %v1554
  %v1556 = vpop.f32.mrf.mxu0
  %v1557 = vadd.f32 %v1388, %v1556
  %1558 = vmatmul.bf16.gmra.mxu0 %v758
  %v1559 = vpop.f32.mrf.mxu0
  %v1560 = vadd.f32 %v1391, %v1559
  %v1561 = vpop.f32.mrf.mxu0
  %v1562 = vadd.f32 %v1393, %v1561
  %1563 = vmatmul.bf16.gmra.mxu0 %v762
  %v1564 = vpop.f32.mrf.mxu0
  %v1565 = vadd.f32 %v1396, %v1564
  %v1566 = vpop.f32.mrf.mxu0
  %v1567 = vadd.f32 %v1398, %v1566
  %1568 = vmatmul.bf16.gmra.mxu0 %v766
  %v1569 = vpop.f32.mrf.mxu0
  %v1570 = vadd.f32 %v1401, %v1569
  %v1571 = vpop.f32.mrf.mxu0
  %v1572 = vadd.f32 %v1403, %v1571
  %1573 = vmatmul.bf16.gmra.mxu0 %v770
  %v1574 = vpop.f32.mrf.mxu0
  %v1575 = vadd.f32 %v1406, %v1574
  %v1576 = vpop.f32.mrf.mxu0
  %v1577 = vadd.f32 %v1408, %v1576
  %1578 = vmatmul.bf16.gmra.mxu0 %v774
  %v1579 = vpop.f32.mrf.mxu0
  %v1580 = vadd.f32 %v1411, %v1579
  %v1581 = vpop.f32.mrf.mxu0
  %v1582 = vadd.f32 %v1413, %v1581
  %1583 = vmatmul.bf16.gmra.mxu0 %v778
  %v1584 = vpop.f32.mrf.mxu0
  %v1585 = vadd.f32 %v1416, %v1584
  %v1586 = vpop.f32.mrf.mxu0
  %v1587 = vadd.f32 %v1418, %v1586
  %1588 = vmatmul.bf16.gmra.mxu0 %v782
  %v1589 = vpop.f32.mrf.mxu0
  %v1590 = vadd.f32 %v1421, %v1589
  %v1591 = vpop.f32.mrf.mxu0
  %v1592 = vadd.f32 %v1423, %v1591
  %1593 = vmatmul.bf16.gmra.mxu0 %v786
  %v1594 = vpop.f32.mrf.mxu0
  %v1595 = vadd.f32 %v1426, %v1594
  %v1596 = vpop.f32.mrf.mxu0
  %v1597 = vadd.f32 %v1428, %v1596
  %1598 = vmatmul.bf16.gmra.mxu0 %v790
  %v1599 = vpop.f32.mrf.mxu0
  %v1600 = vadd.f32 %v1431, %v1599
  %v1601 = vpop.f32.mrf.mxu0
  %v1602 = vadd.f32 %v1433, %v1601
  %1603 = vmatmul.bf16.gmra.mxu0 %v794
  %v1604 = vpop.f32.mrf.mxu0
  %v1605 = vadd.f32 %v1436, %v1604
  %v1606 = vpop.f32.mrf.mxu0
  %v1607 = vadd.f32 %v1438, %v1606
  %1608 = vmatmul.bf16.gmra.mxu0 %v798
  %v1609 = vpop.f32.mrf.mxu0
  %v1610 = vadd.f32 %v1441, %v1609
  %v1611 = vpop.f32.mrf.mxu0
  %v1612 = vadd.f32 %v1443, %v1611
  %1613 = vmatmul.bf16.gmra.mxu0 %v802
  %v1614 = vpop.f32.mrf.mxu0
  %v1615 = vadd.f32 %v1446, %v1614
  %v1616 = vpop.f32.mrf.mxu0
  %v1617 = vadd.f32 %v1448, %v1616
  %1618 = vmatmul.bf16.gmra.mxu0 %v806
  %v1619 = vpop.f32.mrf.mxu0
  %v1620 = vadd.f32 %v1451, %v1619
  %v1621 = vpop.f32.mrf.mxu0
  %v1622 = vadd.f32 %v1453, %v1621
  %1623 = vmatmul.bf16.gmra.mxu0 %v810
  %v1624 = vpop.f32.mrf.mxu0
  %v1625 = vadd.f32 %v1456, %v1624
  %v1626 = vpop.f32.mrf.mxu0
  %v1627 = vadd.f32 %v1458, %v1626
  %1628 = vmatmul.bf16.gmra.mxu0 %v814
  %v1629 = vpop.f32.mrf.mxu0
  %v1630 = vadd.f32 %v1461, %v1629
  %v1631 = vpop.f32.mrf.mxu0
  %v1632 = vadd.f32 %v1463, %v1631
  %1633 = vmatmul.bf16.gmra.mxu0 %v818
  %v1634 = vpop.f32.mrf.mxu0
  %v1635 = vadd.f32 %v1466, %v1634
  %v1636 = vpop.f32.mrf.mxu0
  %v1637 = vadd.f32 %v1468, %v1636
  %1638 = vmatmul.bf16.gmra.mxu0 %v822
  %v1639 = vpop.f32.mrf.mxu0
  %v1640 = vadd.f32 %v1471, %v1639
  %v1641 = vpop.f32.mrf.mxu0
  %v1642 = vadd.f32 %v1473, %v1641
  %1643 = vmatmul.bf16.gmra.mxu0 %v826
  %v1644 = vpop.f32.mrf.mxu0
  %v1645 = vadd.f32 %v1476, %v1644
  %v1646 = vpop.f32.mrf.mxu0
  %v1647 = vadd.f32 %v1478, %v1646
  %1648 = vmatmul.bf16.gmra.mxu0 %v830
  %v1649 = vpop.f32.mrf.mxu0
  %v1650 = vadd.f32 %v1481, %v1649
  %v1651 = vpop.f32.mrf.mxu0
  %v1652 = vadd.f32 %v1483, %v1651
  %1653 = vmatmul.bf16.gmra.mxu0 %v834
  %v1654 = vpop.f32.mrf.mxu0
  %v1655 = vadd.f32 %v1486, %v1654
  %v1656 = vpop.f32.mrf.mxu0
  %v1657 = vadd.f32 %v1488, %v1656
  %1658 = vmatmul.bf16.gmra.mxu0 %v838
  %v1659 = vpop.f32.mrf.mxu0
  %v1660 = vadd.f32 %v1491, %v1659
  %v1661 = vpop.f32.mrf.mxu0
  %v1662 = vadd.f32 %v1493, %v1661
  %1663 = vmatmul.bf16.gmra.mxu0 %v842
  %v1664 = vpop.f32.mrf.mxu0
  %v1665 = vadd.f32 %v1496, %v1664
  %v1666 = vpop.f32.mrf.mxu0
  %v1667 = vadd.f32 %v1498, %v1666
  %1668 = vmatmul.bf16.gmra.mxu0 %v846
  %v1669 = vpop.f32.mrf.mxu0
  %v1670 = vadd.f32 %v1501, %v1669
  %v1671 = vpop.f32.mrf.mxu0
  %v1672 = vadd.f32 %v1503, %v1671
  %1673 = vmatmul.bf16.gmra.mxu0 %v850
  %v1674 = vpop.f32.mrf.mxu0
  %v1675 = vadd.f32 %v1506, %v1674
  %v1676 = vpop.f32.mrf.mxu0
  %v1677 = vadd.f32 %v1508, %v1676
  %1678 = vdwg.mxu0
  %1679 = vmatpush.bf16.msra.mxu0 %v1139
  %1680 = vmatpush.bf16.msra.mxu0 %v1138
  %1681 = vmatpush.bf16.msra.mxu0 %v1137
  %1682 = vmatpush.bf16.msra.mxu0 %v1136
  %1683 = vmatpush.bf16.msra.mxu0 %v1135
  %1684 = vmatpush.bf16.msra.mxu0 %v1134
  %1685 = vmatpush.bf16.msra.mxu0 %v1133
  %1686 = vmatpush.bf16.msra.mxu0 %v1132
  %1687 = vmatmul.bf16.gmra.mxu0 %v727
  %v1688 = vpop.f32.mrf.mxu0
  %v1689 = vadd.f32 %v1520, %v1688
  %v1690 = vpop.f32.mrf.mxu0
  %v1691 = vadd.f32 %v1522, %v1690
  %1692 = vmatmul.bf16.gmra.mxu0 %v731
  %v1693 = vpop.f32.mrf.mxu0
  %v1694 = vadd.f32 %v1525, %v1693
  %v1695 = vpop.f32.mrf.mxu0
  %v1696 = vadd.f32 %v1527, %v1695
  %1697 = vmatmul.bf16.gmra.mxu0 %v735
  %v1698 = vpop.f32.mrf.mxu0
  %v1699 = vadd.f32 %v1530, %v1698
  %v1700 = vpop.f32.mrf.mxu0
  %v1701 = vadd.f32 %v1532, %v1700
  %1702 = vmatmul.bf16.gmra.mxu0 %v739
  %v1703 = vpop.f32.mrf.mxu0
  %v1704 = vadd.f32 %v1535, %v1703
  %v1705 = vpop.f32.mrf.mxu0
  %v1706 = vadd.f32 %v1537, %v1705
  %1707 = vmatmul.bf16.gmra.mxu0 %v743
  %v1708 = vpop.f32.mrf.mxu0
  %v1709 = vadd.f32 %v1540, %v1708
  %v1710 = vpop.f32.mrf.mxu0
  %v1711 = vadd.f32 %v1542, %v1710
  %1712 = vmatmul.bf16.gmra.mxu0 %v747
  %v1713 = vpop.f32.mrf.mxu0
  %v1714 = vadd.f32 %v1545, %v1713
  %v1715 = vpop.f32.mrf.mxu0
  %v1716 = vadd.f32 %v1547, %v1715
  %1717 = vmatmul.bf16.gmra.mxu0 %v751
  %v1718 = vpop.f32.mrf.mxu0
  %v1719 = vadd.f32 %v1550, %v1718
  %v1720 = vpop.f32.mrf.mxu0
  %v1721 = vadd.f32 %v1552, %v1720
  %1722 = vmatmul.bf16.gmra.mxu0 %v755
  %v1723 = vpop.f32.mrf.mxu0
  %v1724 = vadd.f32 %v1555, %v1723
  %v1725 = vpop.f32.mrf.mxu0
  %v1726 = vadd.f32 %v1557, %v1725
  %1727 = vmatmul.bf16.gmra.mxu0 %v759
  %v1728 = vpop.f32.mrf.mxu0
  %v1729 = vadd.f32 %v1560, %v1728
  %v1730 = vpop.f32.mrf.mxu0
  %v1731 = vadd.f32 %v1562, %v1730
  %1732 = vmatmul.bf16.gmra.mxu0 %v763
  %v1733 = vpop.f32.mrf.mxu0
  %v1734 = vadd.f32 %v1565, %v1733
  %v1735 = vpop.f32.mrf.mxu0
  %v1736 = vadd.f32 %v1567, %v1735
  %1737 = vmatmul.bf16.gmra.mxu0 %v767
  %v1738 = vpop.f32.mrf.mxu0
  %v1739 = vadd.f32 %v1570, %v1738
  %v1740 = vpop.f32.mrf.mxu0
  %v1741 = vadd.f32 %v1572, %v1740
  %1742 = vmatmul.bf16.gmra.mxu0 %v771
  %v1743 = vpop.f32.mrf.mxu0
  %v1744 = vadd.f32 %v1575, %v1743
  %v1745 = vpop.f32.mrf.mxu0
  %v1746 = vadd.f32 %v1577, %v1745
  %1747 = vmatmul.bf16.gmra.mxu0 %v775
  %v1748 = vpop.f32.mrf.mxu0
  %v1749 = vadd.f32 %v1580, %v1748
  %v1750 = vpop.f32.mrf.mxu0
  %v1751 = vadd.f32 %v1582, %v1750
  %1752 = vmatmul.bf16.gmra.mxu0 %v779
  %v1753 = vpop.f32.mrf.mxu0
  %v1754 = vadd.f32 %v1585, %v1753
  %v1755 = vpop.f32.mrf.mxu0
  %v1756 = vadd.f32 %v1587, %v1755
  %1757 = vmatmul.bf16.gmra.mxu0 %v783
  %v1758 = vpop.f32.mrf.mxu0
  %v1759 = vadd.f32 %v1590, %v1758
  %v1760 = vpop.f32.mrf.mxu0
  %v1761 = vadd.f32 %v1592, %v1760
  %1762 = vmatmul.bf16.gmra.mxu0 %v787
  %v1763 = vpop.f32.mrf.mxu0
  %v1764 = vadd.f32 %v1595, %v1763
  %v1765 = vpop.f32.mrf.mxu0
  %v1766 = vadd.f32 %v1597, %v1765
  %1767 = vmatmul.bf16.gmra.mxu0 %v791
  %v1768 = vpop.f32.mrf.mxu0
  %v1769 = vadd.f32 %v1600, %v1768
  %v1770 = vpop.f32.mrf.mxu0
  %v1771 = vadd.f32 %v1602, %v1770
  %1772 = vmatmul.bf16.gmra.mxu0 %v795
  %v1773 = vpop.f32.mrf.mxu0
  %v1774 = vadd.f32 %v1605, %v1773
  %v1775 = vpop.f32.mrf.mxu0
  %v1776 = vadd.f32 %v1607, %v1775
  %1777 = vmatmul.bf16.gmra.mxu0 %v799
  %v1778 = vpop.f32.mrf.mxu0
  %v1779 = vadd.f32 %v1610, %v1778
  %v1780 = vpop.f32.mrf.mxu0
  %v1781 = vadd.f32 %v1612, %v1780
  %1782 = vmatmul.bf16.gmra.mxu0 %v803
  %v1783 = vpop.f32.mrf.mxu0
  %v1784 = vadd.f32 %v1615, %v1783
  %v1785 = vpop.f32.mrf.mxu0
  %v1786 = vadd.f32 %v1617, %v1785
  %1787 = vmatmul.bf16.gmra.mxu0 %v807
  %v1788 = vpop.f32.mrf.mxu0
  %v1789 = vadd.f32 %v1620, %v1788
  %v1790 = vpop.f32.mrf.mxu0
  %v1791 = vadd.f32 %v1622, %v1790
  %1792 = vmatmul.bf16.gmra.mxu0 %v811
  %v1793 = vpop.f32.mrf.mxu0
  %v1794 = vadd.f32 %v1625, %v1793
  %v1795 = vpop.f32.mrf.mxu0
  %v1796 = vadd.f32 %v1627, %v1795
  %1797 = vmatmul.bf16.gmra.mxu0 %v815
  %v1798 = vpop.f32.mrf.mxu0
  %v1799 = vadd.f32 %v1630, %v1798
  %v1800 = vpop.f32.mrf.mxu0
  %v1801 = vadd.f32 %v1632, %v1800
  %1802 = vmatmul.bf16.gmra.mxu0 %v819
  %v1803 = vpop.f32.mrf.mxu0
  %v1804 = vadd.f32 %v1635, %v1803
  %v1805 = vpop.f32.mrf.mxu0
  %v1806 = vadd.f32 %v1637, %v1805
  %1807 = vmatmul.bf16.gmra.mxu0 %v823
  %v1808 = vpop.f32.mrf.mxu0
  %v1809 = vadd.f32 %v1640, %v1808
  %v1810 = vpop.f32.mrf.mxu0
  %v1811 = vadd.f32 %v1642, %v1810
  %1812 = vmatmul.bf16.gmra.mxu0 %v827
  %v1813 = vpop.f32.mrf.mxu0
  %v1814 = vadd.f32 %v1645, %v1813
  %v1815 = vpop.f32.mrf.mxu0
  %v1816 = vadd.f32 %v1647, %v1815
  %1817 = vmatmul.bf16.gmra.mxu0 %v831
  %v1818 = vpop.f32.mrf.mxu0
  %v1819 = vadd.f32 %v1650, %v1818
  %v1820 = vpop.f32.mrf.mxu0
  %v1821 = vadd.f32 %v1652, %v1820
  %1822 = vmatmul.bf16.gmra.mxu0 %v835
  %v1823 = vpop.f32.mrf.mxu0
  %v1824 = vadd.f32 %v1655, %v1823
  %v1825 = vpop.f32.mrf.mxu0
  %v1826 = vadd.f32 %v1657, %v1825
  %1827 = vmatmul.bf16.gmra.mxu0 %v839
  %v1828 = vpop.f32.mrf.mxu0
  %v1829 = vadd.f32 %v1660, %v1828
  %v1830 = vpop.f32.mrf.mxu0
  %v1831 = vadd.f32 %v1662, %v1830
  %1832 = vmatmul.bf16.gmra.mxu0 %v843
  %v1833 = vpop.f32.mrf.mxu0
  %v1834 = vadd.f32 %v1665, %v1833
  %v1835 = vpop.f32.mrf.mxu0
  %v1836 = vadd.f32 %v1667, %v1835
  %1837 = vmatmul.bf16.gmra.mxu0 %v847
  %v1838 = vpop.f32.mrf.mxu0
  %v1839 = vadd.f32 %v1670, %v1838
  %v1840 = vpop.f32.mrf.mxu0
  %v1841 = vadd.f32 %v1672, %v1840
  %1842 = vmatmul.bf16.gmra.mxu0 %v851
  %v1843 = vpop.f32.mrf.mxu0
  %v1844 = vadd.f32 %v1675, %v1843
  %v1845 = vpop.f32.mrf.mxu0
  %v1846 = vadd.f32 %v1677, %v1845
  %1847 = vdwg.mxu0
  %v1848 = vadd.f32 %v84, %v1689
  %v1849 = vadd.f32 %v85, %v1691
  %v1850 = vadd.f32 %v86, %v1694
  %v1851 = vadd.f32 %v87, %v1696
  %v1852 = vadd.f32 %v88, %v1699
  %v1853 = vadd.f32 %v89, %v1701
  %v1854 = vadd.f32 %v90, %v1704
  %v1855 = vadd.f32 %v91, %v1706
  %v1856 = vadd.f32 %v92, %v1709
  %v1857 = vadd.f32 %v93, %v1711
  %v1858 = vadd.f32 %v94, %v1714
  %v1859 = vadd.f32 %v95, %v1716
  %v1860 = vadd.f32 %v96, %v1719
  %v1861 = vadd.f32 %v97, %v1721
  %v1862 = vadd.f32 %v98, %v1724
  %v1863 = vadd.f32 %v99, %v1726
  %v1864 = vadd.f32 %v100, %v1729
  %v1865 = vadd.f32 %v101, %v1731
  %v1866 = vadd.f32 %v102, %v1734
  %v1867 = vadd.f32 %v103, %v1736
  %v1868 = vadd.f32 %v104, %v1739
  %v1869 = vadd.f32 %v105, %v1741
  %v1870 = vadd.f32 %v106, %v1744
  %v1871 = vadd.f32 %v107, %v1746
  %v1872 = vadd.f32 %v108, %v1749
  %v1873 = vadd.f32 %v109, %v1751
  %v1874 = vadd.f32 %v110, %v1754
  %v1875 = vadd.f32 %v111, %v1756
  %v1876 = vadd.f32 %v112, %v1759
  %v1877 = vadd.f32 %v113, %v1761
  %v1878 = vadd.f32 %v114, %v1764
  %v1879 = vadd.f32 %v115, %v1766
  %v1880 = vadd.f32 %v116, %v1769
  %v1881 = vadd.f32 %v117, %v1771
  %v1882 = vadd.f32 %v118, %v1774
  %v1883 = vadd.f32 %v119, %v1776
  %v1884 = vadd.f32 %v120, %v1779
  %v1885 = vadd.f32 %v121, %v1781
  %v1886 = vadd.f32 %v122, %v1784
  %v1887 = vadd.f32 %v123, %v1786
  %v1888 = vadd.f32 %v124, %v1789
  %v1889 = vadd.f32 %v125, %v1791
  %v1890 = vadd.f32 %v126, %v1794
  %v1891 = vadd.f32 %v127, %v1796
  %v1892 = vadd.f32 %v128, %v1799
  %v1893 = vadd.f32 %v129, %v1801
  %v1894 = vadd.f32 %v130, %v1804
  %v1895 = vadd.f32 %v131, %v1806
  %v1896 = vadd.f32 %v132, %v1809
  %v1897 = vadd.f32 %v133, %v1811
  %v1898 = vadd.f32 %v134, %v1814
  %v1899 = vadd.f32 %v135, %v1816
  %v1900 = vadd.f32 %v136, %v1819
  %v1901 = vadd.f32 %v137, %v1821
  %v1902 = vadd.f32 %v138, %v1824
  %v1903 = vadd.f32 %v139, %v1826
  %v1904 = vadd.f32 %v140, %v1829
  %v1905 = vadd.f32 %v141, %v1831
  %v1906 = vadd.f32 %v142, %v1834
  %v1907 = vadd.f32 %v143, %v1836
  %v1908 = vadd.f32 %v144, %v1839
  %v1909 = vadd.f32 %v145, %v1841
  %v1910 = vadd.f32 %v146, %v1844
  %v1911 = vadd.f32 %v147, %v1846
  %1912 = vst [vmem:[#allocation2] sm:$0xff] %v1848
  %1913 = vst [vmem:[#allocation2 + $0x8] sm:$0xff] %v1849
  %1914 = vst [vmem:[#allocation2 + $0x10] sm:$0xff] %v1850
  %1915 = vst [vmem:[#allocation2 + $0x18] sm:$0xff] %v1851
  %1916 = vst [vmem:[#allocation2 + $0x20] sm:$0xff] %v1852
  %1917 = vst [vmem:[#allocation2 + $0x28] sm:$0xff] %v1853
  %1918 = vst [vmem:[#allocation2 + $0x30] sm:$0xff] %v1854
  %1919 = vst [vmem:[#allocation2 + $0x38] sm:$0xff] %v1855
  %1920 = vst [vmem:[#allocation2 + $0x40] sm:$0xff] %v1856
  %1921 = vst [vmem:[#allocation2 + $0x48] sm:$0xff] %v1857
  %1922 = vst [vmem:[#allocation2 + $0x50] sm:$0xff] %v1858
  %1923 = vst [vmem:[#allocation2 + $0x58] sm:$0xff] %v1859
  %1924 = vst [vmem:[#allocation2 + $0x60] sm:$0xff] %v1860
  %1925 = vst [vmem:[#allocation2 + $0x68] sm:$0xff] %v1861
  %1926 = vst [vmem:[#allocation2 + $0x70] sm:$0xff] %v1862
  %1927 = vst [vmem:[#allocation2 + $0x78] sm:$0xff] %v1863
  %1928 = vst [vmem:[#allocation2 + $0x80] sm:$0xff] %v1864
  %1929 = vst [vmem:[#allocation2 + $0x88] sm:$0xff] %v1865
  %1930 = vst [vmem:[#allocation2 + $0x90] sm:$0xff] %v1866
  %1931 = vst [vmem:[#allocation2 + $0x98] sm:$0xff] %v1867
  %1932 = vst [vmem:[#allocation2 + $0xa0] sm:$0xff] %v1868
  %1933 = vst [vmem:[#allocation2 + $0xa8] sm:$0xff] %v1869
  %1934 = vst [vmem:[#allocation2 + $0xb0] sm:$0xff] %v1870
  %1935 = vst [vmem:[#allocation2 + $0xb8] sm:$0xff] %v1871
  %1936 = vst [vmem:[#allocation2 + $0xc0] sm:$0xff] %v1872
  %1937 = vst [vmem:[#allocation2 + $0xc8] sm:$0xff] %v1873
  %1938 = vst [vmem:[#allocation2 + $0xd0] sm:$0xff] %v1874
  %1939 = vst [vmem:[#allocation2 + $0xd8] sm:$0xff] %v1875
  %1940 = vst [vmem:[#allocation2 + $0xe0] sm:$0xff] %v1876
  %1941 = vst [vmem:[#allocation2 + $0xe8] sm:$0xff] %v1877
  %1942 = vst [vmem:[#allocation2 + $0xf0] sm:$0xff] %v1878
  %1943 = vst [vmem:[#allocation2 + $0xf8] sm:$0xff] %v1879
  %1944 = vst [vmem:[#allocation2 + $0x100] sm:$0xff] %v1880
  %1945 = vst [vmem:[#allocation2 + $0x108] sm:$0xff] %v1881
  %1946 = vst [vmem:[#allocation2 + $0x110] sm:$0xff] %v1882
  %1947 = vst [vmem:[#allocation2 + $0x118] sm:$0xff] %v1883
  %1948 = vst [vmem:[#allocation2 + $0x120] sm:$0xff] %v1884
  %1949 = vst [vmem:[#allocation2 + $0x128] sm:$0xff] %v1885
  %1950 = vst [vmem:[#allocation2 + $0x130] sm:$0xff] %v1886
  %1951 = vst [vmem:[#allocation2 + $0x138] sm:$0xff] %v1887
  %1952 = vst [vmem:[#allocation2 + $0x140] sm:$0xff] %v1888
  %1953 = vst [vmem:[#allocation2 + $0x148] sm:$0xff] %v1889
  %1954 = vst [vmem:[#allocation2 + $0x150] sm:$0xff] %v1890
  %1955 = vst [vmem:[#allocation2 + $0x158] sm:$0xff] %v1891
  %1956 = vst [vmem:[#allocation2 + $0x160] sm:$0xff] %v1892
  %1957 = vst [vmem:[#allocation2 + $0x168] sm:$0xff] %v1893
  %1958 = vst [vmem:[#allocation2 + $0x170] sm:$0xff] %v1894
  %1959 = vst [vmem:[#allocation2 + $0x178] sm:$0xff] %v1895
  %1960 = vst [vmem:[#allocation2 + $0x180] sm:$0xff] %v1896
  %1961 = vst [vmem:[#allocation2 + $0x188] sm:$0xff] %v1897
  %1962 = vst [vmem:[#allocation2 + $0x190] sm:$0xff] %v1898
  %1963 = vst [vmem:[#allocation2 + $0x198] sm:$0xff] %v1899
  %1964 = vst [vmem:[#allocation2 + $0x1a0] sm:$0xff] %v1900
  %1965 = vst [vmem:[#allocation2 + $0x1a8] sm:$0xff] %v1901
  %1966 = vst [vmem:[#allocation2 + $0x1b0] sm:$0xff] %v1902
  %1967 = vst [vmem:[#allocation2 + $0x1b8] sm:$0xff] %v1903
  %1968 = vst [vmem:[#allocation2 + $0x1c0] sm:$0xff] %v1904
  %1969 = vst [vmem:[#allocation2 + $0x1c8] sm:$0xff] %v1905
  %1970 = vst [vmem:[#allocation2 + $0x1d0] sm:$0xff] %v1906
  %1971 = vst [vmem:[#allocation2 + $0x1d8] sm:$0xff] %v1907
  %1972 = vst [vmem:[#allocation2 + $0x1e0] sm:$0xff] %v1908
  %1973 = vst [vmem:[#allocation2 + $0x1e8] sm:$0xff] %v1909
  %1974 = vst [vmem:[#allocation2 + $0x1f0] sm:$0xff] %v1910
  %1975 = vst [vmem:[#allocation2 + $0x1f8] sm:$0xff] %v1911
  // Predicated region
  $region18: #{unet_forward.4} parent=0 // pred_check
    %p1976 = pneg %p14
  $region19: #{unet_forward.4} parent=0 // pred_check_branch
    %1978 = sbr.rel (%p1976) target = $region21
  $region20: #{unet_forward.4} parent=0 // pred_region
    %v1979 = vld [vmem:[#allocation2] sm:$0xff]
    %v1980 = vld [vmem:[#allocation2 + $0x8] sm:$0xff]
    %v1981 = vld [vmem:[#allocation2 + $0x10] sm:$0xff]
    %v1982 = vld [vmem:[#allocation2 + $0x18] sm:$0xff]
    %v1983 = vld [vmem:[#allocation2 + $0x20] sm:$0xff]
    %v1984 = vld [vmem:[#allocation2 + $0x28] sm:$0xff]
    %v1985 = vld [vmem:[#allocation2 + $0x30] sm:$0xff]
    %v1986 = vld [vmem:[#allocation2 + $0x38] sm:$0xff]
    %v1987 = vld [vmem:[#allocation2 + $0x40] sm:$0xff]
    %v1988 = vld [vmem:[#allocation2 + $0x48] sm:$0xff]
    %v1989 = vld [vmem:[#allocation2 + $0x50] sm:$0xff]
    %v1990 = vld [vmem:[#allocation2 + $0x58] sm:$0xff]
    %v1991 = vld [vmem:[#allocation2 + $0x60] sm:$0xff]
    %v1992 = vld [vmem:[#allocation2 + $0x68] sm:$0xff]
    %v1993 = vld [vmem:[#allocation2 + $0x70] sm:$0xff]
    %v1994 = vld [vmem:[#allocation2 + $0x78] sm:$0xff]
    %v1995 = vld [vmem:[#allocation2 + $0x80] sm:$0xff]
    %v1996 = vld [vmem:[#allocation2 + $0x88] sm:$0xff]
    %v1997 = vld [vmem:[#allocation2 + $0x90] sm:$0xff]
    %v1998 = vld [vmem:[#allocation2 + $0x98] sm:$0xff]
    %v1999 = vld [vmem:[#allocation2 + $0xa0] sm:$0xff]
    %v2000 = vld [vmem:[#allocation2 + $0xa8] sm:$0xff]
    %v2001 = vld [vmem:[#allocation2 + $0xb0] sm:$0xff]
    %v2002 = vld [vmem:[#allocation2 + $0xb8] sm:$0xff]
    %v2003 = vld [vmem:[#allocation2 + $0xc0] sm:$0xff]
    %v2004 = vld [vmem:[#allocation2 + $0xc8] sm:$0xff]
    %v2005 = vld [vmem:[#allocation2 + $0xd0] sm:$0xff]
    %v2006 = vld [vmem:[#allocation2 + $0xd8] sm:$0xff]
    %v2007 = vld [vmem:[#allocation2 + $0xe0] sm:$0xff]
    %v2008 = vld [vmem:[#allocation2 + $0xe8] sm:$0xff]
    %v2009 = vld [vmem:[#allocation2 + $0xf0] sm:$0xff]
    %v2010 = vld [vmem:[#allocation2 + $0xf8] sm:$0xff]
    %v2011 = vld [vmem:[#allocation2 + $0x100] sm:$0xff]
    %v2012 = vld [vmem:[#allocation2 + $0x108] sm:$0xff]
    %v2013 = vld [vmem:[#allocation2 + $0x110] sm:$0xff]
    %v2014 = vld [vmem:[#allocation2 + $0x118] sm:$0xff]
    %v2015 = vld [vmem:[#allocation2 + $0x120] sm:$0xff]
    %v2016 = vld [vmem:[#allocation2 + $0x128] sm:$0xff]
    %v2017 = vld [vmem:[#allocation2 + $0x130] sm:$0xff]
    %v2018 = vld [vmem:[#allocation2 + $0x138] sm:$0xff]
    %v2019 = vld [vmem:[#allocation2 + $0x140] sm:$0xff]
    %v2020 = vld [vmem:[#allocation2 + $0x148] sm:$0xff]
    %v2021 = vld [vmem:[#allocation2 + $0x150] sm:$0xff]
    %v2022 = vld [vmem:[#allocation2 + $0x158] sm:$0xff]
    %v2023 = vld [vmem:[#allocation2 + $0x160] sm:$0xff]
    %v2024 = vld [vmem:[#allocation2 + $0x168] sm:$0xff]
    %v2025 = vld [vmem:[#allocation2 + $0x170] sm:$0xff]
    %v2026 = vld [vmem:[#allocation2 + $0x178] sm:$0xff]
    %v2027 = vld [vmem:[#allocation2 + $0x180] sm:$0xff]
    %v2028 = vld [vmem:[#allocation2 + $0x188] sm:$0xff]
    %v2029 = vld [vmem:[#allocation2 + $0x190] sm:$0xff]
    %v2030 = vld [vmem:[#allocation2 + $0x198] sm:$0xff]
    %v2031 = vld [vmem:[#allocation2 + $0x1a0] sm:$0xff]
    %v2032 = vld [vmem:[#allocation2 + $0x1a8] sm:$0xff]
    %v2033 = vld [vmem:[#allocation2 + $0x1b0] sm:$0xff]
    %v2034 = vld [vmem:[#allocation2 + $0x1b8] sm:$0xff]
    %v2035 = vld [vmem:[#allocation2 + $0x1c0] sm:$0xff]
    %v2036 = vld [vmem:[#allocation2 + $0x1c8] sm:$0xff]
    %v2037 = vld [vmem:[#allocation2 + $0x1d0] sm:$0xff]
    %v2038 = vld [vmem:[#allocation2 + $0x1d8] sm:$0xff]
    %v2039 = vld [vmem:[#allocation2 + $0x1e0] sm:$0xff]
    %v2040 = vld [vmem:[#allocation2 + $0x1e8] sm:$0xff]
    %v2041 = vld [vmem:[#allocation2 + $0x1f0] sm:$0xff]
    %v2042 = vld [vmem:[#allocation2 + $0x1f8] sm:$0xff]
    %vm2043 = vcmp.ge.f32.partialorder %v1979, 0.0
    %vm2044 = vcmp.ge.f32.partialorder %v1980, 0.0
    %vm2045 = vcmp.ge.f32.partialorder %v1981, 0.0
    %vm2046 = vcmp.ge.f32.partialorder %v1982, 0.0
    %vm2047 = vcmp.ge.f32.partialorder %v1983, 0.0
    %vm2048 = vcmp.ge.f32.partialorder %v1984, 0.0
    %vm2049 = vcmp.ge.f32.partialorder %v1985, 0.0
    %vm2050 = vcmp.ge.f32.partialorder %v1986, 0.0
    %vm2051 = vcmp.ge.f32.partialorder %v1987, 0.0
    %vm2052 = vcmp.ge.f32.partialorder %v1988, 0.0
    %vm2053 = vcmp.ge.f32.partialorder %v1989, 0.0
    %vm2054 = vcmp.ge.f32.partialorder %v1990, 0.0
    %vm2055 = vcmp.ge.f32.partialorder %v1991, 0.0
    %vm2056 = vcmp.ge.f32.partialorder %v1992, 0.0
    %vm2057 = vcmp.ge.f32.partialorder %v1993, 0.0
    %vm2058 = vcmp.ge.f32.partialorder %v1994, 0.0
    %vm2059 = vcmp.ge.f32.partialorder %v1995, 0.0
    %vm2060 = vcmp.ge.f32.partialorder %v1996, 0.0
    %vm2061 = vcmp.ge.f32.partialorder %v1997, 0.0
    %vm2062 = vcmp.ge.f32.partialorder %v1998, 0.0
    %vm2063 = vcmp.ge.f32.partialorder %v1999, 0.0
    %vm2064 = vcmp.ge.f32.partialorder %v2000, 0.0
    %vm2065 = vcmp.ge.f32.partialorder %v2001, 0.0
    %vm2066 = vcmp.ge.f32.partialorder %v2002, 0.0
    %vm2067 = vcmp.ge.f32.partialorder %v2003, 0.0
    %vm2068 = vcmp.ge.f32.partialorder %v2004, 0.0
    %vm2069 = vcmp.ge.f32.partialorder %v2005, 0.0
    %vm2070 = vcmp.ge.f32.partialorder %v2006, 0.0
    %vm2071 = vcmp.ge.f32.partialorder %v2007, 0.0
    %vm2072 = vcmp.ge.f32.partialorder %v2008, 0.0
    %vm2073 = vcmp.ge.f32.partialorder %v2009, 0.0
    %vm2074 = vcmp.ge.f32.partialorder %v2010, 0.0
    %vm2075 = vcmp.ge.f32.partialorder %v2011, 0.0
    %vm2076 = vcmp.ge.f32.partialorder %v2012, 0.0
    %vm2077 = vcmp.ge.f32.partialorder %v2013, 0.0
    %vm2078 = vcmp.ge.f32.partialorder %v2014, 0.0
    %vm2079 = vcmp.ge.f32.partialorder %v2015, 0.0
    %vm2080 = vcmp.ge.f32.partialorder %v2016, 0.0
    %vm2081 = vcmp.ge.f32.partialorder %v2017, 0.0
    %vm2082 = vcmp.ge.f32.partialorder %v2018, 0.0
    %vm2083 = vcmp.ge.f32.partialorder %v2019, 0.0
    %vm2084 = vcmp.ge.f32.partialorder %v2020, 0.0
    %vm2085 = vcmp.ge.f32.partialorder %v2021, 0.0
    %vm2086 = vcmp.ge.f32.partialorder %v2022, 0.0
    %vm2087 = vcmp.ge.f32.partialorder %v2023, 0.0
    %vm2088 = vcmp.ge.f32.partialorder %v2024, 0.0
    %vm2089 = vcmp.ge.f32.partialorder %v2025, 0.0
    %vm2090 = vcmp.ge.f32.partialorder %v2026, 0.0
    %vm2091 = vcmp.ge.f32.partialorder %v2027, 0.0
    %vm2092 = vcmp.ge.f32.partialorder %v2028, 0.0
    %vm2093 = vcmp.ge.f32.partialorder %v2029, 0.0
    %vm2094 = vcmp.ge.f32.partialorder %v2030, 0.0
    %vm2095 = vcmp.ge.f32.partialorder %v2031, 0.0
    %vm2096 = vcmp.ge.f32.partialorder %v2032, 0.0
    %vm2097 = vcmp.ge.f32.partialorder %v2033, 0.0
    %vm2098 = vcmp.ge.f32.partialorder %v2034, 0.0
    %vm2099 = vcmp.ge.f32.partialorder %v2035, 0.0
    %vm2100 = vcmp.ge.f32.partialorder %v2036, 0.0
    %vm2101 = vcmp.ge.f32.partialorder %v2037, 0.0
    %vm2102 = vcmp.ge.f32.partialorder %v2038, 0.0
    %vm2103 = vcmp.ge.f32.partialorder %v2039, 0.0
    %vm2104 = vcmp.ge.f32.partialorder %v2040, 0.0
    %vm2105 = vcmp.ge.f32.partialorder %v2041, 0.0
    %vm2106 = vcmp.ge.f32.partialorder %v2042, 0.0
    %v2107 = vmul.f32 %v1979, 0.2
    %v2108 = vmul.f32 %v1980, 0.2
    %v2109 = vmul.f32 %v1981, 0.2
    %v2110 = vmul.f32 %v1982, 0.2
    %v2111 = vmul.f32 %v1983, 0.2
    %v2112 = vmul.f32 %v1984, 0.2
    %v2113 = vmul.f32 %v1985, 0.2
    %v2114 = vmul.f32 %v1986, 0.2
    %v2115 = vmul.f32 %v1987, 0.2
    %v2116 = vmul.f32 %v1988, 0.2
    %v2117 = vmul.f32 %v1989, 0.2
    %v2118 = vmul.f32 %v1990, 0.2
    %v2119 = vmul.f32 %v1991, 0.2
    %v2120 = vmul.f32 %v1992, 0.2
    %v2121 = vmul.f32 %v1993, 0.2
    %v2122 = vmul.f32 %v1994, 0.2
    %v2123 = vmul.f32 %v1995, 0.2
    %v2124 = vmul.f32 %v1996, 0.2
    %v2125 = vmul.f32 %v1997, 0.2
    %v2126 = vmul.f32 %v1998, 0.2
    %v2127 = vmul.f32 %v1999, 0.2
    %v2128 = vmul.f32 %v2000, 0.2
    %v2129 = vmul.f32 %v2001, 0.2
    %v2130 = vmul.f32 %v2002, 0.2
    %v2131 = vmul.f32 %v2003, 0.2
    %v2132 = vmul.f32 %v2004, 0.2
    %v2133 = vmul.f32 %v2005, 0.2
    %v2134 = vmul.f32 %v2006, 0.2
    %v2135 = vmul.f32 %v2007, 0.2
    %v2136 = vmul.f32 %v2008, 0.2
    %v2137 = vmul.f32 %v2009, 0.2
    %v2138 = vmul.f32 %v2010, 0.2
    %v2139 = vmul.f32 %v2011, 0.2
    %v2140 = vmul.f32 %v2012, 0.2
    %v2141 = vmul.f32 %v2013, 0.2
    %v2142 = vmul.f32 %v2014, 0.2
    %v2143 = vmul.f32 %v2015, 0.2
    %v2144 = vmul.f32 %v2016, 0.2
    %v2145 = vmul.f32 %v2017, 0.2
    %v2146 = vmul.f32 %v2018, 0.2
    %v2147 = vmul.f32 %v2019, 0.2
    %v2148 = vmul.f32 %v2020, 0.2
    %v2149 = vmul.f32 %v2021, 0.2
    %v2150 = vmul.f32 %v2022, 0.2
    %v2151 = vmul.f32 %v2023, 0.2
    %v2152 = vmul.f32 %v2024, 0.2
    %v2153 = vmul.f32 %v2025, 0.2
    %v2154 = vmul.f32 %v2026, 0.2
    %v2155 = vmul.f32 %v2027, 0.2
    %v2156 = vmul.f32 %v2028, 0.2
    %v2157 = vmul.f32 %v2029, 0.2
    %v2158 = vmul.f32 %v2030, 0.2
    %v2159 = vmul.f32 %v2031, 0.2
    %v2160 = vmul.f32 %v2032, 0.2
    %v2161 = vmul.f32 %v2033, 0.2
    %v2162 = vmul.f32 %v2034, 0.2
    %v2163 = vmul.f32 %v2035, 0.2
    %v2164 = vmul.f32 %v2036, 0.2
    %v2165 = vmul.f32 %v2037, 0.2
    %v2166 = vmul.f32 %v2038, 0.2
    %v2167 = vmul.f32 %v2039, 0.2
    %v2168 = vmul.f32 %v2040, 0.2
    %v2169 = vmul.f32 %v2041, 0.2
    %v2170 = vmul.f32 %v2042, 0.2
    %v2171 = vsel %vm2043, %v1979, %v2107
    %v2172 = vsel %vm2044, %v1980, %v2108
    %v2173 = vsel %vm2045, %v1981, %v2109
    %v2174 = vsel %vm2046, %v1982, %v2110
    %v2175 = vsel %vm2047, %v1983, %v2111
    %v2176 = vsel %vm2048, %v1984, %v2112
    %v2177 = vsel %vm2049, %v1985, %v2113
    %v2178 = vsel %vm2050, %v1986, %v2114
    %v2179 = vsel %vm2051, %v1987, %v2115
    %v2180 = vsel %vm2052, %v1988, %v2116
    %v2181 = vsel %vm2053, %v1989, %v2117
    %v2182 = vsel %vm2054, %v1990, %v2118
    %v2183 = vsel %vm2055, %v1991, %v2119
    %v2184 = vsel %vm2056, %v1992, %v2120
    %v2185 = vsel %vm2057, %v1993, %v2121
    %v2186 = vsel %vm2058, %v1994, %v2122
    %v2187 = vsel %vm2059, %v1995, %v2123
    %v2188 = vsel %vm2060, %v1996, %v2124
    %v2189 = vsel %vm2061, %v1997, %v2125
    %v2190 = vsel %vm2062, %v1998, %v2126
    %v2191 = vsel %vm2063, %v1999, %v2127
    %v2192 = vsel %vm2064, %v2000, %v2128
    %v2193 = vsel %vm2065, %v2001, %v2129
    %v2194 = vsel %vm2066, %v2002, %v2130
    %v2195 = vsel %vm2067, %v2003, %v2131
    %v2196 = vsel %vm2068, %v2004, %v2132
    %v2197 = vsel %vm2069, %v2005, %v2133
    %v2198 = vsel %vm2070, %v2006, %v2134
    %v2199 = vsel %vm2071, %v2007, %v2135
    %v2200 = vsel %vm2072, %v2008, %v2136
    %v2201 = vsel %vm2073, %v2009, %v2137
    %v2202 = vsel %vm2074, %v2010, %v2138
    %v2203 = vsel %vm2075, %v2011, %v2139
    %v2204 = vsel %vm2076, %v2012, %v2140
    %v2205 = vsel %vm2077, %v2013, %v2141
    %v2206 = vsel %vm2078, %v2014, %v2142
    %v2207 = vsel %vm2079, %v2015, %v2143
    %v2208 = vsel %vm2080, %v2016, %v2144
    %v2209 = vsel %vm2081, %v2017, %v2145
    %v2210 = vsel %vm2082, %v2018, %v2146
    %v2211 = vsel %vm2083, %v2019, %v2147
    %v2212 = vsel %vm2084, %v2020, %v2148
    %v2213 = vsel %vm2085, %v2021, %v2149
    %v2214 = vsel %vm2086, %v2022, %v2150
    %v2215 = vsel %vm2087, %v2023, %v2151
    %v2216 = vsel %vm2088, %v2024, %v2152
    %v2217 = vsel %vm2089, %v2025, %v2153
    %v2218 = vsel %vm2090, %v2026, %v2154
    %v2219 = vsel %vm2091, %v2027, %v2155
    %v2220 = vsel %vm2092, %v2028, %v2156
    %v2221 = vsel %vm2093, %v2029, %v2157
    %v2222 = vsel %vm2094, %v2030, %v2158
    %v2223 = vsel %vm2095, %v2031, %v2159
    %v2224 = vsel %vm2096, %v2032, %v2160
    %v2225 = vsel %vm2097, %v2033, %v2161
    %v2226 = vsel %vm2098, %v2034, %v2162
    %v2227 = vsel %vm2099, %v2035, %v2163
    %v2228 = vsel %vm2100, %v2036, %v2164
    %v2229 = vsel %vm2101, %v2037, %v2165
    %v2230 = vsel %vm2102, %v2038, %v2166
    %v2231 = vsel %vm2103, %v2039, %v2167
    %v2232 = vsel %vm2104, %v2040, %v2168
    %v2233 = vsel %vm2105, %v2041, %v2169
    %v2234 = vsel %vm2106, %v2042, %v2170
    %2235 = vst [vmem:[%s3] sm:$0xff] %v2171
    %2236 = vst [vmem:[%s3 + $0x8] sm:$0xff] %v2172
    %2237 = vst [vmem:[%s3 + $0x10] sm:$0xff] %v2173
    %2238 = vst [vmem:[%s3 + $0x18] sm:$0xff] %v2174
    %2239 = vst [vmem:[%s3 + $0x20] sm:$0xff] %v2175
    %2240 = vst [vmem:[%s3 + $0x28] sm:$0xff] %v2176
    %2241 = vst [vmem:[%s3 + $0x30] sm:$0xff] %v2177
    %2242 = vst [vmem:[%s3 + $0x38] sm:$0xff] %v2178
    %2243 = vst [vmem:[%s3 + $0x40] sm:$0xff] %v2179
    %2244 = vst [vmem:[%s3 + $0x48] sm:$0xff] %v2180
    %2245 = vst [vmem:[%s3 + $0x50] sm:$0xff] %v2181
    %2246 = vst [vmem:[%s3 + $0x58] sm:$0xff] %v2182
    %2247 = vst [vmem:[%s3 + $0x60] sm:$0xff] %v2183
    %2248 = vst [vmem:[%s3 + $0x68] sm:$0xff] %v2184
    %2249 = vst [vmem:[%s3 + $0x70] sm:$0xff] %v2185
    %2250 = vst [vmem:[%s3 + $0x78] sm:$0xff] %v2186
    %2251 = vst [vmem:[%s3 + $0x80] sm:$0xff] %v2187
    %2252 = vst [vmem:[%s3 + $0x88] sm:$0xff] %v2188
    %2253 = vst [vmem:[%s3 + $0x90] sm:$0xff] %v2189
    %2254 = vst [vmem:[%s3 + $0x98] sm:$0xff] %v2190
    %2255 = vst [vmem:[%s3 + $0xa0] sm:$0xff] %v2191
    %2256 = vst [vmem:[%s3 + $0xa8] sm:$0xff] %v2192
    %2257 = vst [vmem:[%s3 + $0xb0] sm:$0xff] %v2193
    %2258 = vst [vmem:[%s3 + $0xb8] sm:$0xff] %v2194
    %2259 = vst [vmem:[%s3 + $0xc0] sm:$0xff] %v2195
    %2260 = vst [vmem:[%s3 + $0xc8] sm:$0xff] %v2196
    %2261 = vst [vmem:[%s3 + $0xd0] sm:$0xff] %v2197
    %2262 = vst [vmem:[%s3 + $0xd8] sm:$0xff] %v2198
    %2263 = vst [vmem:[%s3 + $0xe0] sm:$0xff] %v2199
    %2264 = vst [vmem:[%s3 + $0xe8] sm:$0xff] %v2200
    %2265 = vst [vmem:[%s3 + $0xf0] sm:$0xff] %v2201
    %2266 = vst [vmem:[%s3 + $0xf8] sm:$0xff] %v2202
    %2267 = vst [vmem:[%s3 + $0x100] sm:$0xff] %v2203
    %2268 = vst [vmem:[%s3 + $0x108] sm:$0xff] %v2204
    %2269 = vst [vmem:[%s3 + $0x110] sm:$0xff] %v2205
    %2270 = vst [vmem:[%s3 + $0x118] sm:$0xff] %v2206
    %2271 = vst [vmem:[%s3 + $0x120] sm:$0xff] %v2207
    %2272 = vst [vmem:[%s3 + $0x128] sm:$0xff] %v2208
    %2273 = vst [vmem:[%s3 + $0x130] sm:$0xff] %v2209
    %2274 = vst [vmem:[%s3 + $0x138] sm:$0xff] %v2210
    %2275 = vst [vmem:[%s3 + $0x140] sm:$0xff] %v2211
    %2276 = vst [vmem:[%s3 + $0x148] sm:$0xff] %v2212
    %2277 = vst [vmem:[%s3 + $0x150] sm:$0xff] %v2213
    %2278 = vst [vmem:[%s3 + $0x158] sm:$0xff] %v2214
    %2279 = vst [vmem:[%s3 + $0x160] sm:$0xff] %v2215
    %2280 = vst [vmem:[%s3 + $0x168] sm:$0xff] %v2216
    %2281 = vst [vmem:[%s3 + $0x170] sm:$0xff] %v2217
    %2282 = vst [vmem:[%s3 + $0x178] sm:$0xff] %v2218
    %2283 = vst [vmem:[%s3 + $0x180] sm:$0xff] %v2219
    %2284 = vst [vmem:[%s3 + $0x188] sm:$0xff] %v2220
    %2285 = vst [vmem:[%s3 + $0x190] sm:$0xff] %v2221
    %2286 = vst [vmem:[%s3 + $0x198] sm:$0xff] %v2222
    %2287 = vst [vmem:[%s3 + $0x1a0] sm:$0xff] %v2223
    %2288 = vst [vmem:[%s3 + $0x1a8] sm:$0xff] %v2224
    %2289 = vst [vmem:[%s3 + $0x1b0] sm:$0xff] %v2225
    %2290 = vst [vmem:[%s3 + $0x1b8] sm:$0xff] %v2226
    %2291 = vst [vmem:[%s3 + $0x1c0] sm:$0xff] %v2227
    %2292 = vst [vmem:[%s3 + $0x1c8] sm:$0xff] %v2228
    %2293 = vst [vmem:[%s3 + $0x1d0] sm:$0xff] %v2229
    %2294 = vst [vmem:[%s3 + $0x1d8] sm:$0xff] %v2230
    %2295 = vst [vmem:[%s3 + $0x1e0] sm:$0xff] %v2231
    %2296 = vst [vmem:[%s3 + $0x1e8] sm:$0xff] %v2232
    %2297 = vst [vmem:[%s3 + $0x1f0] sm:$0xff] %v2233
    %2298 = vst [vmem:[%s3 + $0x1f8] sm:$0xff] %v2234
  $region21: #{unet_forward.4} parent=0 // pred_fallthru
    _
  // Predicated region
  $region22: #{unet_forward.4} parent=0 // pred_check
    _
  $region23: #{unet_forward.4} parent=0 // pred_check_branch
    %2300 = sbr.rel (0) target = $region25
  $region24: #{unet_forward.4} parent=0 // pred_region
    _
  $region25: #{unet_forward.4} parent=0 // pred_fallthru
    _
  // Predicated region
  $region26: #{unet_forward.4} parent=0 // pred_check
    _
  $region27: #{unet_forward.4} parent=0 // pred_check_branch
    %2302 = sbr.rel (0) target = $region29
  $region28: #{unet_forward.4} parent=0 // pred_region
    _
  $region29: #{unet_forward.4} parent=0 // pred_fallthru
    _

// kernel: unet_forward.5
$region0: #{unet_forward.5}
  #allocation0 [shape = 'u32[]', space=smem, size = 0x4, offset = 0x4, fixed_abs, tag = 'smem constant byte address 0x4 - core index']
  #allocation1 [shape = 'u32[72,128]{1,0:T(1,128)}', space=vmem, size = 0x9000, scoped, tag = 'internal scratch']
  #allocation2 [shape = 'f32[128,128]{1,0:T(8,128)}', space=vmem, size = 0x10000, scoped, tag = 'scratch operand']
  %s0 = inlined_call_operand.vmem [shape: bf16[128,1024], index: 0, kind: input, shape index: {}]
  %s1 = inlined_call_operand.vmem [shape: bf16[1024,128], index: 1, kind: input, shape index: {}]
  %s2 = inlined_call_operand.vmem [shape: f32[8,128], index: 2, kind: input, shape index: {}]
  %s3 = inlined_call_operand.vmem [shape: f32[128,128], index: 3, kind: output, shape index: {}]
  %s4 = sld [smem:[#allocation0]]
  $region30: #{unet_forward.5} parent=0
    _
  %s6 = ssub.s32 1, %s4
  %s7 = scalar_select 0, %s6, %s4
  // Predicated region
  $region2: #{unet_forward.5} parent=0 // pred_check
    _
  $region3: #{unet_forward.5} parent=0 // pred_check_branch
    %9 = sbr.rel (0) target = $region5
  $region4: #{unet_forward.5} parent=0 // pred_region
    _
  $region5: #{unet_forward.5} parent=0 // pred_fallthru
    _
  // Predicated region
  $region6: #{unet_forward.5} parent=0 // pred_check
    _
  $region7: #{unet_forward.5} parent=0 // pred_check_branch
    %11 = sbr.rel (0) target = $region9
  $region8: #{unet_forward.5} parent=0 // pred_region
    _
  $region9: #{unet_forward.5} parent=0 // pred_fallthru
    _
  // Predicated region
  $region10: #{unet_forward.5} parent=0 // pred_check
    _
  $region11: #{unet_forward.5} parent=0 // pred_check_branch
    %13 = sbr.rel (0) target = $region13
  $region12: #{unet_forward.5} parent=0 // pred_region
    _
  $region13: #{unet_forward.5} parent=0 // pred_fallthru
    _
  %p14 = scmp.eq.s32.totalorder 0, 0
  // Predicated region
  $region14: #{unet_forward.5} parent=0 // pred_check
    %p15 = pneg %p14
  $region15: #{unet_forward.5} parent=0 // pred_check_branch
    %17 = sbr.rel (%p15) target = $region17
  $region16: #{unet_forward.5} parent=0 // pred_region
    %v18 = vld [vmem:[%s2] sm:$0x1]
    %v19 = vperm.slane %v18, 0
    %20 = vst [vmem:[#allocation2] sm:$0xff] %v19
    %21 = vst [vmem:[#allocation2 + $0x8] sm:$0xff] %v19
    %22 = vst [vmem:[#allocation2 + $0x10] sm:$0xff] %v19
    %23 = vst [vmem:[#allocation2 + $0x18] sm:$0xff] %v19
    %24 = vst [vmem:[#allocation2 + $0x20] sm:$0xff] %v19
    %25 = vst [vmem:[#allocation2 + $0x28] sm:$0xff] %v19
    %26 = vst [vmem:[#allocation2 + $0x30] sm:$0xff] %v19
    %27 = vst [vmem:[#allocation2 + $0x38] sm:$0xff] %v19
    %28 = vst [vmem:[#allocation2 + $0x40] sm:$0xff] %v19
    %29 = vst [vmem:[#allocation2 + $0x48] sm:$0xff] %v19
    %30 = vst [vmem:[#allocation2 + $0x50] sm:$0xff] %v19
    %31 = vst [vmem:[#allocation2 + $0x58] sm:$0xff] %v19
    %32 = vst [vmem:[#allocation2 + $0x60] sm:$0xff] %v19
    %33 = vst [vmem:[#allocation2 + $0x68] sm:$0xff] %v19
    %34 = vst [vmem:[#allocation2 + $0x70] sm:$0xff] %v19
    %35 = vst [vmem:[#allocation2 + $0x78] sm:$0xff] %v19
  $region17: #{unet_forward.5} parent=0 // pred_fallthru
    _
  %v36 = vld [vmem:[#allocation2] sm:$0xff]
  %v37 = vld [vmem:[#allocation2 + $0x8] sm:$0xff]
  %v38 = vld [vmem:[#allocation2 + $0x10] sm:$0xff]
  %v39 = vld [vmem:[#allocation2 + $0x18] sm:$0xff]
  %v40 = vld [vmem:[#allocation2 + $0x20] sm:$0xff]
  %v41 = vld [vmem:[#allocation2 + $0x28] sm:$0xff]
  %v42 = vld [vmem:[#allocation2 + $0x30] sm:$0xff]
  %v43 = vld [vmem:[#allocation2 + $0x38] sm:$0xff]
  %v44 = vld [vmem:[#allocation2 + $0x40] sm:$0xff]
  %v45 = vld [vmem:[#allocation2 + $0x48] sm:$0xff]
  %v46 = vld [vmem:[#allocation2 + $0x50] sm:$0xff]
  %v47 = vld [vmem:[#allocation2 + $0x58] sm:$0xff]
  %v48 = vld [vmem:[#allocation2 + $0x60] sm:$0xff]
  %v49 = vld [vmem:[#allocation2 + $0x68] sm:$0xff]
  %v50 = vld [vmem:[#allocation2 + $0x70] sm:$0xff]
  %v51 = vld [vmem:[#allocation2 + $0x78] sm:$0xff]
  %v52 = vld [vmem:[%s0] sm:$0xff]
  %v53 = vld [vmem:[%s0 + $0x8] sm:$0xff]
  %v54 = vld [vmem:[%s0 + $0x10] sm:$0xff]
  %v55 = vld [vmem:[%s0 + $0x18] sm:$0xff]
  %v56 = vld [vmem:[%s0 + $0x20] sm:$0xff]
  %v57 = vld [vmem:[%s0 + $0x28] sm:$0xff]
  %v58 = vld [vmem:[%s0 + $0x30] sm:$0xff]
  %v59 = vld [vmem:[%s0 + $0x38] sm:$0xff]
  %v60 = vld [vmem:[%s0 + $0x40] sm:$0xff]
  %v61 = vld [vmem:[%s0 + $0x48] sm:$0xff]
  %v62 = vld [vmem:[%s0 + $0x50] sm:$0xff]
  %v63 = vld [vmem:[%s0 + $0x58] sm:$0xff]
  %v64 = vld [vmem:[%s0 + $0x60] sm:$0xff]
  %v65 = vld [vmem:[%s0 + $0x68] sm:$0xff]
  %v66 = vld [vmem:[%s0 + $0x70] sm:$0xff]
  %v67 = vld [vmem:[%s0 + $0x78] sm:$0xff]
  %v68 = vld [vmem:[%s0 + $0x80] sm:$0xff]
  %v69 = vld [vmem:[%s0 + $0x88] sm:$0xff]
  %v70 = vld [vmem:[%s0 + $0x90] sm:$0xff]
  %v71 = vld [vmem:[%s0 + $0x98] sm:$0xff]
  %v72 = vld [vmem:[%s0 + $0xa0] sm:$0xff]
  %v73 = vld [vmem:[%s0 + $0xa8] sm:$0xff]
  %v74 = vld [vmem:[%s0 + $0xb0] sm:$0xff]
  %v75 = vld [vmem:[%s0 + $0xb8] sm:$0xff]
  %v76 = vld [vmem:[%s0 + $0xc0] sm:$0xff]
  %v77 = vld [vmem:[%s0 + $0xc8] sm:$0xff]
  %v78 = vld [vmem:[%s0 + $0xd0] sm:$0xff]
  %v79 = vld [vmem:[%s0 + $0xd8] sm:$0xff]
  %v80 = vld [vmem:[%s0 + $0xe0] sm:$0xff]
  %v81 = vld [vmem:[%s0 + $0xe8] sm:$0xff]
  %v82 = vld [vmem:[%s0 + $0xf0] sm:$0xff]
  %v83 = vld [vmem:[%s0 + $0xf8] sm:$0xff]
  %v84 = vld [vmem:[%s0 + $0x100] sm:$0xff]
  %v85 = vld [vmem:[%s0 + $0x108] sm:$0xff]
  %v86 = vld [vmem:[%s0 + $0x110] sm:$0xff]
  %v87 = vld [vmem:[%s0 + $0x118] sm:$0xff]
  %v88 = vld [vmem:[%s0 + $0x120] sm:$0xff]
  %v89 = vld [vmem:[%s0 + $0x128] sm:$0xff]
  %v90 = vld [vmem:[%s0 + $0x130] sm:$0xff]
  %v91 = vld [vmem:[%s0 + $0x138] sm:$0xff]
  %v92 = vld [vmem:[%s0 + $0x140] sm:$0xff]
  %v93 = vld [vmem:[%s0 + $0x148] sm:$0xff]
  %v94 = vld [vmem:[%s0 + $0x150] sm:$0xff]
  %v95 = vld [vmem:[%s0 + $0x158] sm:$0xff]
  %v96 = vld [vmem:[%s0 + $0x160] sm:$0xff]
  %v97 = vld [vmem:[%s0 + $0x168] sm:$0xff]
  %v98 = vld [vmem:[%s0 + $0x170] sm:$0xff]
  %v99 = vld [vmem:[%s0 + $0x178] sm:$0xff]
  %v100 = vld [vmem:[%s0 + $0x180] sm:$0xff]
  %v101 = vld [vmem:[%s0 + $0x188] sm:$0xff]
  %v102 = vld [vmem:[%s0 + $0x190] sm:$0xff]
  %v103 = vld [vmem:[%s0 + $0x198] sm:$0xff]
  %v104 = vld [vmem:[%s0 + $0x1a0] sm:$0xff]
  %v105 = vld [vmem:[%s0 + $0x1a8] sm:$0xff]
  %v106 = vld [vmem:[%s0 + $0x1b0] sm:$0xff]
  %v107 = vld [vmem:[%s0 + $0x1b8] sm:$0xff]
  %v108 = vld [vmem:[%s0 + $0x1c0] sm:$0xff]
  %v109 = vld [vmem:[%s0 + $0x1c8] sm:$0xff]
  %v110 = vld [vmem:[%s0 + $0x1d0] sm:$0xff]
  %v111 = vld [vmem:[%s0 + $0x1d8] sm:$0xff]
  %v112 = vld [vmem:[%s0 + $0x1e0] sm:$0xff]
  %v113 = vld [vmem:[%s0 + $0x1e8] sm:$0xff]
  %v114 = vld [vmem:[%s0 + $0x1f0] sm:$0xff]
  %v115 = vld [vmem:[%s0 + $0x1f8] sm:$0xff]
  %v116 = vld [vmem:[%s1] sm:$0xf]
  %v117 = vld [vmem:[%s1 + $0x4] sm:$0xf]
  %v118 = vld [vmem:[%s1 + $0x8] sm:$0xf]
  %v119 = vld [vmem:[%s1 + $0xc] sm:$0xf]
  %v120 = vld [vmem:[%s1 + $0x10] sm:$0xf]
  %v121 = vld [vmem:[%s1 + $0x14] sm:$0xf]
  %v122 = vld [vmem:[%s1 + $0x18] sm:$0xf]
  %v123 = vld [vmem:[%s1 + $0x1c] sm:$0xf]
  %v124 = vld [vmem:[%s1 + $0x20] sm:$0xf]
  %v125 = vld [vmem:[%s1 + $0x24] sm:$0xf]
  %v126 = vld [vmem:[%s1 + $0x28] sm:$0xf]
  %v127 = vld [vmem:[%s1 + $0x2c] sm:$0xf]
  %v128 = vld [vmem:[%s1 + $0x30] sm:$0xf]
  %v129 = vld [vmem:[%s1 + $0x34] sm:$0xf]
  %v130 = vld [vmem:[%s1 + $0x38] sm:$0xf]
  %v131 = vld [vmem:[%s1 + $0x3c] sm:$0xf]
  %v132 = vld [vmem:[%s1 + $0x40] sm:$0xf]
  %v133 = vld [vmem:[%s1 + $0x44] sm:$0xf]
  %v134 = vld [vmem:[%s1 + $0x48] sm:$0xf]
  %v135 = vld [vmem:[%s1 + $0x4c] sm:$0xf]
  %v136 = vld [vmem:[%s1 + $0x50] sm:$0xf]
  %v137 = vld [vmem:[%s1 + $0x54] sm:$0xf]
  %v138 = vld [vmem:[%s1 + $0x58] sm:$0xf]
  %v139 = vld [vmem:[%s1 + $0x5c] sm:$0xf]
  %v140 = vld [vmem:[%s1 + $0x60] sm:$0xf]
  %v141 = vld [vmem:[%s1 + $0x64] sm:$0xf]
  %v142 = vld [vmem:[%s1 + $0x68] sm:$0xf]
  %v143 = vld [vmem:[%s1 + $0x6c] sm:$0xf]
  %v144 = vld [vmem:[%s1 + $0x70] sm:$0xf]
  %v145 = vld [vmem:[%s1 + $0x74] sm:$0xf]
  %v146 = vld [vmem:[%s1 + $0x78] sm:$0xf]
  %v147 = vld [vmem:[%s1 + $0x7c] sm:$0xf]
  %v148 = vld [vmem:[%s1 + $0x80] sm:$0xf]
  %v149 = vld [vmem:[%s1 + $0x84] sm:$0xf]
  %v150 = vld [vmem:[%s1 + $0x88] sm:$0xf]
  %v151 = vld [vmem:[%s1 + $0x8c] sm:$0xf]
  %v152 = vld [vmem:[%s1 + $0x90] sm:$0xf]
  %v153 = vld [vmem:[%s1 + $0x94] sm:$0xf]
  %v154 = vld [vmem:[%s1 + $0x98] sm:$0xf]
  %v155 = vld [vmem:[%s1 + $0x9c] sm:$0xf]
  %v156 = vld [vmem:[%s1 + $0xa0] sm:$0xf]
  %v157 = vld [vmem:[%s1 + $0xa4] sm:$0xf]
  %v158 = vld [vmem:[%s1 + $0xa8] sm:$0xf]
  %v159 = vld [vmem:[%s1 + $0xac] sm:$0xf]
  %v160 = vld [vmem:[%s1 + $0xb0] sm:$0xf]
  %v161 = vld [vmem:[%s1 + $0xb4] sm:$0xf]
  %v162 = vld [vmem:[%s1 + $0xb8] sm:$0xf]
  %v163 = vld [vmem:[%s1 + $0xbc] sm:$0xf]
  %v164 = vld [vmem:[%s1 + $0xc0] sm:$0xf]
  %v165 = vld [vmem:[%s1 + $0xc4] sm:$0xf]
  %v166 = vld [vmem:[%s1 + $0xc8] sm:$0xf]
  %v167 = vld [vmem:[%s1 + $0xcc] sm:$0xf]
  %v168 = vld [vmem:[%s1 + $0xd0] sm:$0xf]
  %v169 = vld [vmem:[%s1 + $0xd4] sm:$0xf]
  %v170 = vld [vmem:[%s1 + $0xd8] sm:$0xf]
  %v171 = vld [vmem:[%s1 + $0xdc] sm:$0xf]
  %v172 = vld [vmem:[%s1 + $0xe0] sm:$0xf]
  %v173 = vld [vmem:[%s1 + $0xe4] sm:$0xf]
  %v174 = vld [vmem:[%s1 + $0xe8] sm:$0xf]
  %v175 = vld [vmem:[%s1 + $0xec] sm:$0xf]
  %v176 = vld [vmem:[%s1 + $0xf0] sm:$0xf]
  %v177 = vld [vmem:[%s1 + $0xf4] sm:$0xf]
  %v178 = vld [vmem:[%s1 + $0xf8] sm:$0xf]
  %v179 = vld [vmem:[%s1 + $0xfc] sm:$0xf]
  %v180 = vld [vmem:[%s1 + $0x100] sm:$0xf]
  %v181 = vld [vmem:[%s1 + $0x104] sm:$0xf]
  %v182 = vld [vmem:[%s1 + $0x108] sm:$0xf]
  %v183 = vld [vmem:[%s1 + $0x10c] sm:$0xf]
  %v184 = vld [vmem:[%s1 + $0x110] sm:$0xf]
  %v185 = vld [vmem:[%s1 + $0x114] sm:$0xf]
  %v186 = vld [vmem:[%s1 + $0x118] sm:$0xf]
  %v187 = vld [vmem:[%s1 + $0x11c] sm:$0xf]
  %v188 = vld [vmem:[%s1 + $0x120] sm:$0xf]
  %v189 = vld [vmem:[%s1 + $0x124] sm:$0xf]
  %v190 = vld [vmem:[%s1 + $0x128] sm:$0xf]
  %v191 = vld [vmem:[%s1 + $0x12c] sm:$0xf]
  %v192 = vld [vmem:[%s1 + $0x130] sm:$0xf]
  %v193 = vld [vmem:[%s1 + $0x134] sm:$0xf]
  %v194 = vld [vmem:[%s1 + $0x138] sm:$0xf]
  %v195 = vld [vmem:[%s1 + $0x13c] sm:$0xf]
  %v196 = vld [vmem:[%s1 + $0x140] sm:$0xf]
  %v197 = vld [vmem:[%s1 + $0x144] sm:$0xf]
  %v198 = vld [vmem:[%s1 + $0x148] sm:$0xf]
  %v199 = vld [vmem:[%s1 + $0x14c] sm:$0xf]
  %v200 = vld [vmem:[%s1 + $0x150] sm:$0xf]
  %v201 = vld [vmem:[%s1 + $0x154] sm:$0xf]
  %v202 = vld [vmem:[%s1 + $0x158] sm:$0xf]
  %v203 = vld [vmem:[%s1 + $0x15c] sm:$0xf]
  %v204 = vld [vmem:[%s1 + $0x160] sm:$0xf]
  %v205 = vld [vmem:[%s1 + $0x164] sm:$0xf]
  %v206 = vld [vmem:[%s1 + $0x168] sm:$0xf]
  %v207 = vld [vmem:[%s1 + $0x16c] sm:$0xf]
  %v208 = vld [vmem:[%s1 + $0x170] sm:$0xf]
  %v209 = vld [vmem:[%s1 + $0x174] sm:$0xf]
  %v210 = vld [vmem:[%s1 + $0x178] sm:$0xf]
  %v211 = vld [vmem:[%s1 + $0x17c] sm:$0xf]
  %v212 = vld [vmem:[%s1 + $0x180] sm:$0xf]
  %v213 = vld [vmem:[%s1 + $0x184] sm:$0xf]
  %v214 = vld [vmem:[%s1 + $0x188] sm:$0xf]
  %v215 = vld [vmem:[%s1 + $0x18c] sm:$0xf]
  %v216 = vld [vmem:[%s1 + $0x190] sm:$0xf]
  %v217 = vld [vmem:[%s1 + $0x194] sm:$0xf]
  %v218 = vld [vmem:[%s1 + $0x198] sm:$0xf]
  %v219 = vld [vmem:[%s1 + $0x19c] sm:$0xf]
  %v220 = vld [vmem:[%s1 + $0x1a0] sm:$0xf]
  %v221 = vld [vmem:[%s1 + $0x1a4] sm:$0xf]
  %v222 = vld [vmem:[%s1 + $0x1a8] sm:$0xf]
  %v223 = vld [vmem:[%s1 + $0x1ac] sm:$0xf]
  %v224 = vld [vmem:[%s1 + $0x1b0] sm:$0xf]
  %v225 = vld [vmem:[%s1 + $0x1b4] sm:$0xf]
  %v226 = vld [vmem:[%s1 + $0x1b8] sm:$0xf]
  %v227 = vld [vmem:[%s1 + $0x1bc] sm:$0xf]
  %v228 = vld [vmem:[%s1 + $0x1c0] sm:$0xf]
  %v229 = vld [vmem:[%s1 + $0x1c4] sm:$0xf]
  %v230 = vld [vmem:[%s1 + $0x1c8] sm:$0xf]
  %v231 = vld [vmem:[%s1 + $0x1cc] sm:$0xf]
  %v232 = vld [vmem:[%s1 + $0x1d0] sm:$0xf]
  %v233 = vld [vmem:[%s1 + $0x1d4] sm:$0xf]
  %v234 = vld [vmem:[%s1 + $0x1d8] sm:$0xf]
  %v235 = vld [vmem:[%s1 + $0x1dc] sm:$0xf]
  %v236 = vld [vmem:[%s1 + $0x1e0] sm:$0xf]
  %v237 = vld [vmem:[%s1 + $0x1e4] sm:$0xf]
  %v238 = vld [vmem:[%s1 + $0x1e8] sm:$0xf]
  %v239 = vld [vmem:[%s1 + $0x1ec] sm:$0xf]
  %v240 = vld [vmem:[%s1 + $0x1f0] sm:$0xf]
  %v241 = vld [vmem:[%s1 + $0x1f4] sm:$0xf]
  %v242 = vld [vmem:[%s1 + $0x1f8] sm:$0xf]
  %v243 = vld [vmem:[%s1 + $0x1fc] sm:$0xf]
  %v308 = vunpack.c.l.b16 %v52
  %v309 = vunpack.c.h.b16 %v52
  %v310 = vunpack.c.l.b16 %v53
  %v311 = vunpack.c.h.b16 %v53
  %v312 = vunpack.c.l.b16 %v54
  %v313 = vunpack.c.h.b16 %v54
  %v314 = vunpack.c.l.b16 %v55
  %v315 = vunpack.c.h.b16 %v55
  %v316 = vunpack.c.l.b16 %v56
  %v317 = vunpack.c.h.b16 %v56
  %v318 = vunpack.c.l.b16 %v57
  %v319 = vunpack.c.h.b16 %v57
  %v320 = vunpack.c.l.b16 %v58
  %v321 = vunpack.c.h.b16 %v58
  %v322 = vunpack.c.l.b16 %v59
  %v323 = vunpack.c.h.b16 %v59
  %v324 = vunpack.c.l.b16 %v60
  %v325 = vunpack.c.h.b16 %v60
  %v326 = vunpack.c.l.b16 %v61
  %v327 = vunpack.c.h.b16 %v61
  %v328 = vunpack.c.l.b16 %v62
  %v329 = vunpack.c.h.b16 %v62
  %v330 = vunpack.c.l.b16 %v63
  %v331 = vunpack.c.h.b16 %v63
  %v332 = vunpack.c.l.b16 %v64
  %v333 = vunpack.c.h.b16 %v64
  %v334 = vunpack.c.l.b16 %v65
  %v335 = vunpack.c.h.b16 %v65
  %v336 = vunpack.c.l.b16 %v66
  %v337 = vunpack.c.h.b16 %v66
  %v338 = vunpack.c.l.b16 %v67
  %v339 = vunpack.c.h.b16 %v67
  %v340 = vunpack.c.l.b16 %v68
  %v341 = vunpack.c.h.b16 %v68
  %v342 = vunpack.c.l.b16 %v69
  %v343 = vunpack.c.h.b16 %v69
  %v344 = vunpack.c.l.b16 %v70
  %v345 = vunpack.c.h.b16 %v70
  %v346 = vunpack.c.l.b16 %v71
  %v347 = vunpack.c.h.b16 %v71
  %v348 = vunpack.c.l.b16 %v72
  %v349 = vunpack.c.h.b16 %v72
  %v350 = vunpack.c.l.b16 %v73
  %v351 = vunpack.c.h.b16 %v73
  %v352 = vunpack.c.l.b16 %v74
  %v353 = vunpack.c.h.b16 %v74
  %v354 = vunpack.c.l.b16 %v75
  %v355 = vunpack.c.h.b16 %v75
  %v356 = vunpack.c.l.b16 %v76
  %v357 = vunpack.c.h.b16 %v76
  %v358 = vunpack.c.l.b16 %v77
  %v359 = vunpack.c.h.b16 %v77
  %v360 = vunpack.c.l.b16 %v78
  %v361 = vunpack.c.h.b16 %v78
  %v362 = vunpack.c.l.b16 %v79
  %v363 = vunpack.c.h.b16 %v79
  %v364 = vunpack.c.l.b16 %v80
  %v365 = vunpack.c.h.b16 %v80
  %v366 = vunpack.c.l.b16 %v81
  %v367 = vunpack.c.h.b16 %v81
  %v368 = vunpack.c.l.b16 %v82
  %v369 = vunpack.c.h.b16 %v82
  %v370 = vunpack.c.l.b16 %v83
  %v371 = vunpack.c.h.b16 %v83
  %v372 = vunpack.c.l.b16 %v84
  %v373 = vunpack.c.h.b16 %v84
  %v374 = vunpack.c.l.b16 %v85
  %v375 = vunpack.c.h.b16 %v85
  %v376 = vunpack.c.l.b16 %v86
  %v377 = vunpack.c.h.b16 %v86
  %v378 = vunpack.c.l.b16 %v87
  %v379 = vunpack.c.h.b16 %v87
  %v380 = vunpack.c.l.b16 %v88
  %v381 = vunpack.c.h.b16 %v88
  %v382 = vunpack.c.l.b16 %v89
  %v383 = vunpack.c.h.b16 %v89
  %v384 = vunpack.c.l.b16 %v90
  %v385 = vunpack.c.h.b16 %v90
  %v386 = vunpack.c.l.b16 %v91
  %v387 = vunpack.c.h.b16 %v91
  %v388 = vunpack.c.l.b16 %v92
  %v389 = vunpack.c.h.b16 %v92
  %v390 = vunpack.c.l.b16 %v93
  %v391 = vunpack.c.h.b16 %v93
  %v392 = vunpack.c.l.b16 %v94
  %v393 = vunpack.c.h.b16 %v94
  %v394 = vunpack.c.l.b16 %v95
  %v395 = vunpack.c.h.b16 %v95
  %v396 = vunpack.c.l.b16 %v96
  %v397 = vunpack.c.h.b16 %v96
  %v398 = vunpack.c.l.b16 %v97
  %v399 = vunpack.c.h.b16 %v97
  %v400 = vunpack.c.l.b16 %v98
  %v401 = vunpack.c.h.b16 %v98
  %v402 = vunpack.c.l.b16 %v99
  %v403 = vunpack.c.h.b16 %v99
  %v404 = vunpack.c.l.b16 %v100
  %v405 = vunpack.c.h.b16 %v100
  %v406 = vunpack.c.l.b16 %v101
  %v407 = vunpack.c.h.b16 %v101
  %v408 = vunpack.c.l.b16 %v102
  %v409 = vunpack.c.h.b16 %v102
  %v410 = vunpack.c.l.b16 %v103
  %v411 = vunpack.c.h.b16 %v103
  %v412 = vunpack.c.l.b16 %v104
  %v413 = vunpack.c.h.b16 %v104
  %v414 = vunpack.c.l.b16 %v105
  %v415 = vunpack.c.h.b16 %v105
  %v416 = vunpack.c.l.b16 %v106
  %v417 = vunpack.c.h.b16 %v106
  %v418 = vunpack.c.l.b16 %v107
  %v419 = vunpack.c.h.b16 %v107
  %v420 = vunpack.c.l.b16 %v108
  %v421 = vunpack.c.h.b16 %v108
  %v422 = vunpack.c.l.b16 %v109
  %v423 = vunpack.c.h.b16 %v109
  %v424 = vunpack.c.l.b16 %v110
  %v425 = vunpack.c.h.b16 %v110
  %v426 = vunpack.c.l.b16 %v111
  %v427 = vunpack.c.h.b16 %v111
  %v428 = vunpack.c.l.b16 %v112
  %v429 = vunpack.c.h.b16 %v112
  %v430 = vunpack.c.l.b16 %v113
  %v431 = vunpack.c.h.b16 %v113
  %v432 = vunpack.c.l.b16 %v114
  %v433 = vunpack.c.h.b16 %v114
  %v434 = vunpack.c.l.b16 %v115
  %v435 = vunpack.c.h.b16 %v115
  %v436 = vpack.c.b16 %v316, %v308
  %v437 = vpack.c.b16 %v317, %v309
  %v438 = vpack.c.b16 %v318, %v310
  %v439 = vpack.c.b16 %v319, %v311
  %v440 = vpack.c.b16 %v320, %v312
  %v441 = vpack.c.b16 %v321, %v313
  %v442 = vpack.c.b16 %v322, %v314
  %v443 = vpack.c.b16 %v323, %v315
  %v444 = vpack.c.b16 %v332, %v324
  %v445 = vpack.c.b16 %v333, %v325
  %v446 = vpack.c.b16 %v334, %v326
  %v447 = vpack.c.b16 %v335, %v327
  %v448 = vpack.c.b16 %v336, %v328
  %v449 = vpack.c.b16 %v337, %v329
  %v450 = vpack.c.b16 %v338, %v330
  %v451 = vpack.c.b16 %v339, %v331
  %v452 = vpack.c.b16 %v348, %v340
  %v453 = vpack.c.b16 %v349, %v341
  %v454 = vpack.c.b16 %v350, %v342
  %v455 = vpack.c.b16 %v351, %v343
  %v456 = vpack.c.b16 %v352, %v344
  %v457 = vpack.c.b16 %v353, %v345
  %v458 = vpack.c.b16 %v354, %v346
  %v459 = vpack.c.b16 %v355, %v347
  %v460 = vpack.c.b16 %v364, %v356
  %v461 = vpack.c.b16 %v365, %v357
  %v462 = vpack.c.b16 %v366, %v358
  %v463 = vpack.c.b16 %v367, %v359
  %v464 = vpack.c.b16 %v368, %v360
  %v465 = vpack.c.b16 %v369, %v361
  %v466 = vpack.c.b16 %v370, %v362
  %v467 = vpack.c.b16 %v371, %v363
  %v468 = vpack.c.b16 %v380, %v372
  %v469 = vpack.c.b16 %v381, %v373
  %v470 = vpack.c.b16 %v382, %v374
  %v471 = vpack.c.b16 %v383, %v375
  %v472 = vpack.c.b16 %v384, %v376
  %v473 = vpack.c.b16 %v385, %v377
  %v474 = vpack.c.b16 %v386, %v378
  %v475 = vpack.c.b16 %v387, %v379
  %v476 = vpack.c.b16 %v396, %v388
  %v477 = vpack.c.b16 %v397, %v389
  %v478 = vpack.c.b16 %v398, %v390
  %v479 = vpack.c.b16 %v399, %v391
  %v480 = vpack.c.b16 %v400, %v392
  %v481 = vpack.c.b16 %v401, %v393
  %v482 = vpack.c.b16 %v402, %v394
  %v483 = vpack.c.b16 %v403, %v395
  %v484 = vpack.c.b16 %v412, %v404
  %v485 = vpack.c.b16 %v413, %v405
  %v486 = vpack.c.b16 %v414, %v406
  %v487 = vpack.c.b16 %v415, %v407
  %v488 = vpack.c.b16 %v416, %v408
  %v489 = vpack.c.b16 %v417, %v409
  %v490 = vpack.c.b16 %v418, %v410
  %v491 = vpack.c.b16 %v419, %v411
  %v492 = vpack.c.b16 %v428, %v420
  %v493 = vpack.c.b16 %v429, %v421
  %v494 = vpack.c.b16 %v430, %v422
  %v495 = vpack.c.b16 %v431, %v423
  %v496 = vpack.c.b16 %v432, %v424
  %v497 = vpack.c.b16 %v433, %v425
  %v498 = vpack.c.b16 %v434, %v426
  %v499 = vpack.c.b16 %v435, %v427
  %v692 = vunpack.c.l.b16 %v116
  %v693 = vunpack.c.l.b16 %v117
  %v694 = vunpack.c.l.b16 %v118
  %v695 = vunpack.c.l.b16 %v119
  %v696 = vunpack.c.l.b16 %v120
  %v697 = vunpack.c.l.b16 %v121
  %v698 = vunpack.c.l.b16 %v122
  %v699 = vunpack.c.l.b16 %v123
  %v700 = vunpack.c.l.b16 %v124
  %v701 = vunpack.c.l.b16 %v125
  %v702 = vunpack.c.l.b16 %v126
  %v703 = vunpack.c.l.b16 %v127
  %v704 = vunpack.c.l.b16 %v128
  %v705 = vunpack.c.l.b16 %v129
  %v706 = vunpack.c.l.b16 %v130
  %v707 = vunpack.c.l.b16 %v131
  %v708 = vunpack.c.l.b16 %v132
  %v709 = vunpack.c.l.b16 %v133
  %v710 = vunpack.c.l.b16 %v134
  %v711 = vunpack.c.l.b16 %v135
  %v712 = vunpack.c.l.b16 %v136
  %v713 = vunpack.c.l.b16 %v137
  %v714 = vunpack.c.l.b16 %v138
  %v715 = vunpack.c.l.b16 %v139
  %v716 = vunpack.c.l.b16 %v140
  %v717 = vunpack.c.l.b16 %v141
  %v718 = vunpack.c.l.b16 %v142
  %v719 = vunpack.c.l.b16 %v143
  %v720 = vunpack.c.l.b16 %v144
  %v721 = vunpack.c.l.b16 %v145
  %v722 = vunpack.c.l.b16 %v146
  %v723 = vunpack.c.l.b16 %v147
  %v724 = vunpack.c.l.b16 %v148
  %v725 = vunpack.c.l.b16 %v149
  %v726 = vunpack.c.l.b16 %v150
  %v727 = vunpack.c.l.b16 %v151
  %v728 = vunpack.c.l.b16 %v152
  %v729 = vunpack.c.l.b16 %v153
  %v730 = vunpack.c.l.b16 %v154
  %v731 = vunpack.c.l.b16 %v155
  %v732 = vunpack.c.l.b16 %v156
  %v733 = vunpack.c.l.b16 %v157
  %v734 = vunpack.c.l.b16 %v158
  %v735 = vunpack.c.l.b16 %v159
  %v736 = vunpack.c.l.b16 %v160
  %v737 = vunpack.c.l.b16 %v161
  %v738 = vunpack.c.l.b16 %v162
  %v739 = vunpack.c.l.b16 %v163
  %v740 = vunpack.c.l.b16 %v164
  %v741 = vunpack.c.l.b16 %v165
  %v742 = vunpack.c.l.b16 %v166
  %v743 = vunpack.c.l.b16 %v167
  %v744 = vunpack.c.l.b16 %v168
  %v745 = vunpack.c.l.b16 %v169
  %v746 = vunpack.c.l.b16 %v170
  %v747 = vunpack.c.l.b16 %v171
  %v748 = vunpack.c.l.b16 %v172
  %v749 = vunpack.c.l.b16 %v173
  %v750 = vunpack.c.l.b16 %v174
  %v751 = vunpack.c.l.b16 %v175
  %v752 = vunpack.c.l.b16 %v176
  %v753 = vunpack.c.l.b16 %v177
  %v754 = vunpack.c.l.b16 %v178
  %v755 = vunpack.c.l.b16 %v179
  %v756 = vunpack.c.l.b16 %v180
  %v757 = vunpack.c.l.b16 %v181
  %v758 = vunpack.c.l.b16 %v182
  %v759 = vunpack.c.l.b16 %v183
  %v760 = vunpack.c.l.b16 %v184
  %v761 = vunpack.c.l.b16 %v185
  %v762 = vunpack.c.l.b16 %v186
  %v763 = vunpack.c.l.b16 %v187
  %v764 = vunpack.c.l.b16 %v188
  %v765 = vunpack.c.l.b16 %v189
  %v766 = vunpack.c.l.b16 %v190
  %v767 = vunpack.c.l.b16 %v191
  %v768 = vunpack.c.l.b16 %v192
  %v769 = vunpack.c.l.b16 %v193
  %v770 = vunpack.c.l.b16 %v194
  %v771 = vunpack.c.l.b16 %v195
  %v772 = vunpack.c.l.b16 %v196
  %v773 = vunpack.c.l.b16 %v197
  %v774 = vunpack.c.l.b16 %v198
  %v775 = vunpack.c.l.b16 %v199
  %v776 = vunpack.c.l.b16 %v200
  %v777 = vunpack.c.l.b16 %v201
  %v778 = vunpack.c.l.b16 %v202
  %v779 = vunpack.c.l.b16 %v203
  %v780 = vunpack.c.l.b16 %v204
  %v781 = vunpack.c.l.b16 %v205
  %v782 = vunpack.c.l.b16 %v206
  %v783 = vunpack.c.l.b16 %v207
  %v784 = vunpack.c.l.b16 %v208
  %v785 = vunpack.c.l.b16 %v209
  %v786 = vunpack.c.l.b16 %v210
  %v787 = vunpack.c.l.b16 %v211
  %v788 = vunpack.c.l.b16 %v212
  %v789 = vunpack.c.l.b16 %v213
  %v790 = vunpack.c.l.b16 %v214
  %v791 = vunpack.c.l.b16 %v215
  %v792 = vunpack.c.l.b16 %v216
  %v793 = vunpack.c.l.b16 %v217
  %v794 = vunpack.c.l.b16 %v218
  %v795 = vunpack.c.l.b16 %v219
  %v796 = vunpack.c.l.b16 %v220
  %v797 = vunpack.c.l.b16 %v221
  %v798 = vunpack.c.l.b16 %v222
  %v799 = vunpack.c.l.b16 %v223
  %v800 = vunpack.c.l.b16 %v224
  %v801 = vunpack.c.l.b16 %v225
  %v802 = vunpack.c.l.b16 %v226
  %v803 = vunpack.c.l.b16 %v227
  %v804 = vunpack.c.l.b16 %v228
  %v805 = vunpack.c.l.b16 %v229
  %v806 = vunpack.c.l.b16 %v230
  %v807 = vunpack.c.l.b16 %v231
  %v808 = vunpack.c.l.b16 %v232
  %v809 = vunpack.c.l.b16 %v233
  %v810 = vunpack.c.l.b16 %v234
  %v811 = vunpack.c.l.b16 %v235
  %v812 = vunpack.c.l.b16 %v236
  %v813 = vunpack.c.l.b16 %v237
  %v814 = vunpack.c.l.b16 %v238
  %v815 = vunpack.c.l.b16 %v239
  %v816 = vunpack.c.l.b16 %v240
  %v817 = vunpack.c.l.b16 %v241
  %v818 = vunpack.c.l.b16 %v242
  %v819 = vunpack.c.l.b16 %v243
  %v820 = vpack.c.b16 %v693, %v692
  %v821 = vpack.c.b16 %v695, %v694
  %v822 = vpack.c.b16 %v697, %v696
  %v823 = vpack.c.b16 %v699, %v698
  %v824 = vpack.c.b16 %v701, %v700
  %v825 = vpack.c.b16 %v703, %v702
  %v826 = vpack.c.b16 %v705, %v704
  %v827 = vpack.c.b16 %v707, %v706
  %v828 = vpack.c.b16 %v709, %v708
  %v829 = vpack.c.b16 %v711, %v710
  %v830 = vpack.c.b16 %v713, %v712
  %v831 = vpack.c.b16 %v715, %v714
  %v832 = vpack.c.b16 %v717, %v716
  %v833 = vpack.c.b16 %v719, %v718
  %v834 = vpack.c.b16 %v721, %v720
  %v835 = vpack.c.b16 %v723, %v722
  %v836 = vpack.c.b16 %v725, %v724
  %v837 = vpack.c.b16 %v727, %v726
  %v838 = vpack.c.b16 %v729, %v728
  %v839 = vpack.c.b16 %v731, %v730
  %v840 = vpack.c.b16 %v733, %v732
  %v841 = vpack.c.b16 %v735, %v734
  %v842 = vpack.c.b16 %v737, %v736
  %v843 = vpack.c.b16 %v739, %v738
  %v844 = vpack.c.b16 %v741, %v740
  %v845 = vpack.c.b16 %v743, %v742
  %v846 = vpack.c.b16 %v745, %v744
  %v847 = vpack.c.b16 %v747, %v746
  %v848 = vpack.c.b16 %v749, %v748
  %v849 = vpack.c.b16 %v751, %v750
  %v850 = vpack.c.b16 %v753, %v752
  %v851 = vpack.c.b16 %v755, %v754
  %v852 = vpack.c.b16 %v757, %v756
  %v853 = vpack.c.b16 %v759, %v758
  %v854 = vpack.c.b16 %v761, %v760
  %v855 = vpack.c.b16 %v763, %v762
  %v856 = vpack.c.b16 %v765, %v764
  %v857 = vpack.c.b16 %v767, %v766
  %v858 = vpack.c.b16 %v769, %v768
  %v859 = vpack.c.b16 %v771, %v770
  %v860 = vpack.c.b16 %v773, %v772
  %v861 = vpack.c.b16 %v775, %v774
  %v862 = vpack.c.b16 %v777, %v776
  %v863 = vpack.c.b16 %v779, %v778
  %v864 = vpack.c.b16 %v781, %v780
  %v865 = vpack.c.b16 %v783, %v782
  %v866 = vpack.c.b16 %v785, %v784
  %v867 = vpack.c.b16 %v787, %v786
  %v868 = vpack.c.b16 %v789, %v788
  %v869 = vpack.c.b16 %v791, %v790
  %v870 = vpack.c.b16 %v793, %v792
  %v871 = vpack.c.b16 %v795, %v794
  %v872 = vpack.c.b16 %v797, %v796
  %v873 = vpack.c.b16 %v799, %v798
  %v874 = vpack.c.b16 %v801, %v800
  %v875 = vpack.c.b16 %v803, %v802
  %v876 = vpack.c.b16 %v805, %v804
  %v877 = vpack.c.b16 %v807, %v806
  %v878 = vpack.c.b16 %v809, %v808
  %v879 = vpack.c.b16 %v811, %v810
  %v880 = vpack.c.b16 %v813, %v812
  %v881 = vpack.c.b16 %v815, %v814
  %v882 = vpack.c.b16 %v817, %v816
  %v883 = vpack.c.b16 %v819, %v818
  %948 = vmatpush.bf16.msra.mxu0 %v827
  %949 = vmatpush.bf16.msra.mxu0 %v826
  %950 = vmatpush.bf16.msra.mxu0 %v825
  %951 = vmatpush.bf16.msra.mxu0 %v824
  %952 = vmatpush.bf16.msra.mxu0 %v823
  %953 = vmatpush.bf16.msra.mxu0 %v822
  %954 = vmatpush.bf16.msra.mxu0 %v821
  %955 = vmatpush.bf16.msra.mxu0 %v820
  %956 = vmatmul.bf16.gmra.mxu0 %v436
  %v957 = vpop.f32.mrf.mxu0
  %v958 = vadd.f32 0.0, %v957
  %v959 = vpop.f32.mrf.mxu0
  %v960 = vadd.f32 0.0, %v959
  %961 = vmatmul.bf16.gmra.mxu0 %v444
  %v962 = vpop.f32.mrf.mxu0
  %v963 = vadd.f32 0.0, %v962
  %v964 = vpop.f32.mrf.mxu0
  %v965 = vadd.f32 0.0, %v964
  %966 = vmatmul.bf16.gmra.mxu0 %v452
  %v967 = vpop.f32.mrf.mxu0
  %v968 = vadd.f32 0.0, %v967
  %v969 = vpop.f32.mrf.mxu0
  %v970 = vadd.f32 0.0, %v969
  %971 = vmatmul.bf16.gmra.mxu0 %v460
  %v972 = vpop.f32.mrf.mxu0
  %v973 = vadd.f32 0.0, %v972
  %v974 = vpop.f32.mrf.mxu0
  %v975 = vadd.f32 0.0, %v974
  %976 = vmatmul.bf16.gmra.mxu0 %v468
  %v977 = vpop.f32.mrf.mxu0
  %v978 = vadd.f32 0.0, %v977
  %v979 = vpop.f32.mrf.mxu0
  %v980 = vadd.f32 0.0, %v979
  %981 = vmatmul.bf16.gmra.mxu0 %v476
  %v982 = vpop.f32.mrf.mxu0
  %v983 = vadd.f32 0.0, %v982
  %v984 = vpop.f32.mrf.mxu0
  %v985 = vadd.f32 0.0, %v984
  %986 = vmatmul.bf16.gmra.mxu0 %v484
  %v987 = vpop.f32.mrf.mxu0
  %v988 = vadd.f32 0.0, %v987
  %v989 = vpop.f32.mrf.mxu0
  %v990 = vadd.f32 0.0, %v989
  %991 = vmatmul.bf16.gmra.mxu0 %v492
  %v992 = vpop.f32.mrf.mxu0
  %v993 = vadd.f32 0.0, %v992
  %v994 = vpop.f32.mrf.mxu0
  %v995 = vadd.f32 0.0, %v994
  %996 = vdwg.mxu0
  %997 = vmatpush.bf16.msra.mxu0 %v835
  %998 = vmatpush.bf16.msra.mxu0 %v834
  %999 = vmatpush.bf16.msra.mxu0 %v833
  %1000 = vmatpush.bf16.msra.mxu0 %v832
  %1001 = vmatpush.bf16.msra.mxu0 %v831
  %1002 = vmatpush.bf16.msra.mxu0 %v830
  %1003 = vmatpush.bf16.msra.mxu0 %v829
  %1004 = vmatpush.bf16.msra.mxu0 %v828
  %1005 = vmatmul.bf16.gmra.mxu0 %v437
  %v1006 = vpop.f32.mrf.mxu0
  %v1007 = vadd.f32 %v958, %v1006
  %v1008 = vpop.f32.mrf.mxu0
  %v1009 = vadd.f32 %v960, %v1008
  %1010 = vmatmul.bf16.gmra.mxu0 %v445
  %v1011 = vpop.f32.mrf.mxu0
  %v1012 = vadd.f32 %v963, %v1011
  %v1013 = vpop.f32.mrf.mxu0
  %v1014 = vadd.f32 %v965, %v1013
  %1015 = vmatmul.bf16.gmra.mxu0 %v453
  %v1016 = vpop.f32.mrf.mxu0
  %v1017 = vadd.f32 %v968, %v1016
  %v1018 = vpop.f32.mrf.mxu0
  %v1019 = vadd.f32 %v970, %v1018
  %1020 = vmatmul.bf16.gmra.mxu0 %v461
  %v1021 = vpop.f32.mrf.mxu0
  %v1022 = vadd.f32 %v973, %v1021
  %v1023 = vpop.f32.mrf.mxu0
  %v1024 = vadd.f32 %v975, %v1023
  %1025 = vmatmul.bf16.gmra.mxu0 %v469
  %v1026 = vpop.f32.mrf.mxu0
  %v1027 = vadd.f32 %v978, %v1026
  %v1028 = vpop.f32.mrf.mxu0
  %v1029 = vadd.f32 %v980, %v1028
  %1030 = vmatmul.bf16.gmra.mxu0 %v477
  %v1031 = vpop.f32.mrf.mxu0
  %v1032 = vadd.f32 %v983, %v1031
  %v1033 = vpop.f32.mrf.mxu0
  %v1034 = vadd.f32 %v985, %v1033
  %1035 = vmatmul.bf16.gmra.mxu0 %v485
  %v1036 = vpop.f32.mrf.mxu0
  %v1037 = vadd.f32 %v988, %v1036
  %v1038 = vpop.f32.mrf.mxu0
  %v1039 = vadd.f32 %v990, %v1038
  %1040 = vmatmul.bf16.gmra.mxu0 %v493
  %v1041 = vpop.f32.mrf.mxu0
  %v1042 = vadd.f32 %v993, %v1041
  %v1043 = vpop.f32.mrf.mxu0
  %v1044 = vadd.f32 %v995, %v1043
  %1045 = vdwg.mxu0
  %1046 = vmatpush.bf16.msra.mxu0 %v843
  %1047 = vmatpush.bf16.msra.mxu0 %v842
  %1048 = vmatpush.bf16.msra.mxu0 %v841
  %1049 = vmatpush.bf16.msra.mxu0 %v840
  %1050 = vmatpush.bf16.msra.mxu0 %v839
  %1051 = vmatpush.bf16.msra.mxu0 %v838
  %1052 = vmatpush.bf16.msra.mxu0 %v837
  %1053 = vmatpush.bf16.msra.mxu0 %v836
  %1054 = vmatmul.bf16.gmra.mxu0 %v438
  %v1055 = vpop.f32.mrf.mxu0
  %v1056 = vadd.f32 %v1007, %v1055
  %v1057 = vpop.f32.mrf.mxu0
  %v1058 = vadd.f32 %v1009, %v1057
  %1059 = vmatmul.bf16.gmra.mxu0 %v446
  %v1060 = vpop.f32.mrf.mxu0
  %v1061 = vadd.f32 %v1012, %v1060
  %v1062 = vpop.f32.mrf.mxu0
  %v1063 = vadd.f32 %v1014, %v1062
  %1064 = vmatmul.bf16.gmra.mxu0 %v454
  %v1065 = vpop.f32.mrf.mxu0
  %v1066 = vadd.f32 %v1017, %v1065
  %v1067 = vpop.f32.mrf.mxu0
  %v1068 = vadd.f32 %v1019, %v1067
  %1069 = vmatmul.bf16.gmra.mxu0 %v462
  %v1070 = vpop.f32.mrf.mxu0
  %v1071 = vadd.f32 %v1022, %v1070
  %v1072 = vpop.f32.mrf.mxu0
  %v1073 = vadd.f32 %v1024, %v1072
  %1074 = vmatmul.bf16.gmra.mxu0 %v470
  %v1075 = vpop.f32.mrf.mxu0
  %v1076 = vadd.f32 %v1027, %v1075
  %v1077 = vpop.f32.mrf.mxu0
  %v1078 = vadd.f32 %v1029, %v1077
  %1079 = vmatmul.bf16.gmra.mxu0 %v478
  %v1080 = vpop.f32.mrf.mxu0
  %v1081 = vadd.f32 %v1032, %v1080
  %v1082 = vpop.f32.mrf.mxu0
  %v1083 = vadd.f32 %v1034, %v1082
  %1084 = vmatmul.bf16.gmra.mxu0 %v486
  %v1085 = vpop.f32.mrf.mxu0
  %v1086 = vadd.f32 %v1037, %v1085
  %v1087 = vpop.f32.mrf.mxu0
  %v1088 = vadd.f32 %v1039, %v1087
  %1089 = vmatmul.bf16.gmra.mxu0 %v494
  %v1090 = vpop.f32.mrf.mxu0
  %v1091 = vadd.f32 %v1042, %v1090
  %v1092 = vpop.f32.mrf.mxu0
  %v1093 = vadd.f32 %v1044, %v1092
  %1094 = vdwg.mxu0
  %1095 = vmatpush.bf16.msra.mxu0 %v851
  %1096 = vmatpush.bf16.msra.mxu0 %v850
  %1097 = vmatpush.bf16.msra.mxu0 %v849
  %1098 = vmatpush.bf16.msra.mxu0 %v848
  %1099 = vmatpush.bf16.msra.mxu0 %v847
  %1100 = vmatpush.bf16.msra.mxu0 %v846
  %1101 = vmatpush.bf16.msra.mxu0 %v845
  %1102 = vmatpush.bf16.msra.mxu0 %v844
  %1103 = vmatmul.bf16.gmra.mxu0 %v439
  %v1104 = vpop.f32.mrf.mxu0
  %v1105 = vadd.f32 %v1056, %v1104
  %v1106 = vpop.f32.mrf.mxu0
  %v1107 = vadd.f32 %v1058, %v1106
  %1108 = vmatmul.bf16.gmra.mxu0 %v447
  %v1109 = vpop.f32.mrf.mxu0
  %v1110 = vadd.f32 %v1061, %v1109
  %v1111 = vpop.f32.mrf.mxu0
  %v1112 = vadd.f32 %v1063, %v1111
  %1113 = vmatmul.bf16.gmra.mxu0 %v455
  %v1114 = vpop.f32.mrf.mxu0
  %v1115 = vadd.f32 %v1066, %v1114
  %v1116 = vpop.f32.mrf.mxu0
  %v1117 = vadd.f32 %v1068, %v1116
  %1118 = vmatmul.bf16.gmra.mxu0 %v463
  %v1119 = vpop.f32.mrf.mxu0
  %v1120 = vadd.f32 %v1071, %v1119
  %v1121 = vpop.f32.mrf.mxu0
  %v1122 = vadd.f32 %v1073, %v1121
  %1123 = vmatmul.bf16.gmra.mxu0 %v471
  %v1124 = vpop.f32.mrf.mxu0
  %v1125 = vadd.f32 %v1076, %v1124
  %v1126 = vpop.f32.mrf.mxu0
  %v1127 = vadd.f32 %v1078, %v1126
  %1128 = vmatmul.bf16.gmra.mxu0 %v479
  %v1129 = vpop.f32.mrf.mxu0
  %v1130 = vadd.f32 %v1081, %v1129
  %v1131 = vpop.f32.mrf.mxu0
  %v1132 = vadd.f32 %v1083, %v1131
  %1133 = vmatmul.bf16.gmra.mxu0 %v487
  %v1134 = vpop.f32.mrf.mxu0
  %v1135 = vadd.f32 %v1086, %v1134
  %v1136 = vpop.f32.mrf.mxu0
  %v1137 = vadd.f32 %v1088, %v1136
  %1138 = vmatmul.bf16.gmra.mxu0 %v495
  %v1139 = vpop.f32.mrf.mxu0
  %v1140 = vadd.f32 %v1091, %v1139
  %v1141 = vpop.f32.mrf.mxu0
  %v1142 = vadd.f32 %v1093, %v1141
  %1143 = vdwg.mxu0
  %1144 = vmatpush.bf16.msra.mxu0 %v859
  %1145 = vmatpush.bf16.msra.mxu0 %v858
  %1146 = vmatpush.bf16.msra.mxu0 %v857
  %1147 = vmatpush.bf16.msra.mxu0 %v856
  %1148 = vmatpush.bf16.msra.mxu0 %v855
  %1149 = vmatpush.bf16.msra.mxu0 %v854
  %1150 = vmatpush.bf16.msra.mxu0 %v853
  %1151 = vmatpush.bf16.msra.mxu0 %v852
  %1152 = vmatmul.bf16.gmra.mxu0 %v440
  %v1153 = vpop.f32.mrf.mxu0
  %v1154 = vadd.f32 %v1105, %v1153
  %v1155 = vpop.f32.mrf.mxu0
  %v1156 = vadd.f32 %v1107, %v1155
  %1157 = vmatmul.bf16.gmra.mxu0 %v448
  %v1158 = vpop.f32.mrf.mxu0
  %v1159 = vadd.f32 %v1110, %v1158
  %v1160 = vpop.f32.mrf.mxu0
  %v1161 = vadd.f32 %v1112, %v1160
  %1162 = vmatmul.bf16.gmra.mxu0 %v456
  %v1163 = vpop.f32.mrf.mxu0
  %v1164 = vadd.f32 %v1115, %v1163
  %v1165 = vpop.f32.mrf.mxu0
  %v1166 = vadd.f32 %v1117, %v1165
  %1167 = vmatmul.bf16.gmra.mxu0 %v464
  %v1168 = vpop.f32.mrf.mxu0
  %v1169 = vadd.f32 %v1120, %v1168
  %v1170 = vpop.f32.mrf.mxu0
  %v1171 = vadd.f32 %v1122, %v1170
  %1172 = vmatmul.bf16.gmra.mxu0 %v472
  %v1173 = vpop.f32.mrf.mxu0
  %v1174 = vadd.f32 %v1125, %v1173
  %v1175 = vpop.f32.mrf.mxu0
  %v1176 = vadd.f32 %v1127, %v1175
  %1177 = vmatmul.bf16.gmra.mxu0 %v480
  %v1178 = vpop.f32.mrf.mxu0
  %v1179 = vadd.f32 %v1130, %v1178
  %v1180 = vpop.f32.mrf.mxu0
  %v1181 = vadd.f32 %v1132, %v1180
  %1182 = vmatmul.bf16.gmra.mxu0 %v488
  %v1183 = vpop.f32.mrf.mxu0
  %v1184 = vadd.f32 %v1135, %v1183
  %v1185 = vpop.f32.mrf.mxu0
  %v1186 = vadd.f32 %v1137, %v1185
  %1187 = vmatmul.bf16.gmra.mxu0 %v496
  %v1188 = vpop.f32.mrf.mxu0
  %v1189 = vadd.f32 %v1140, %v1188
  %v1190 = vpop.f32.mrf.mxu0
  %v1191 = vadd.f32 %v1142, %v1190
  %1192 = vdwg.mxu0
  %1193 = vmatpush.bf16.msra.mxu0 %v867
  %1194 = vmatpush.bf16.msra.mxu0 %v866
  %1195 = vmatpush.bf16.msra.mxu0 %v865
  %1196 = vmatpush.bf16.msra.mxu0 %v864
  %1197 = vmatpush.bf16.msra.mxu0 %v863
  %1198 = vmatpush.bf16.msra.mxu0 %v862
  %1199 = vmatpush.bf16.msra.mxu0 %v861
  %1200 = vmatpush.bf16.msra.mxu0 %v860
  %1201 = vmatmul.bf16.gmra.mxu0 %v441
  %v1202 = vpop.f32.mrf.mxu0
  %v1203 = vadd.f32 %v1154, %v1202
  %v1204 = vpop.f32.mrf.mxu0
  %v1205 = vadd.f32 %v1156, %v1204
  %1206 = vmatmul.bf16.gmra.mxu0 %v449
  %v1207 = vpop.f32.mrf.mxu0
  %v1208 = vadd.f32 %v1159, %v1207
  %v1209 = vpop.f32.mrf.mxu0
  %v1210 = vadd.f32 %v1161, %v1209
  %1211 = vmatmul.bf16.gmra.mxu0 %v457
  %v1212 = vpop.f32.mrf.mxu0
  %v1213 = vadd.f32 %v1164, %v1212
  %v1214 = vpop.f32.mrf.mxu0
  %v1215 = vadd.f32 %v1166, %v1214
  %1216 = vmatmul.bf16.gmra.mxu0 %v465
  %v1217 = vpop.f32.mrf.mxu0
  %v1218 = vadd.f32 %v1169, %v1217
  %v1219 = vpop.f32.mrf.mxu0
  %v1220 = vadd.f32 %v1171, %v1219
  %1221 = vmatmul.bf16.gmra.mxu0 %v473
  %v1222 = vpop.f32.mrf.mxu0
  %v1223 = vadd.f32 %v1174, %v1222
  %v1224 = vpop.f32.mrf.mxu0
  %v1225 = vadd.f32 %v1176, %v1224
  %1226 = vmatmul.bf16.gmra.mxu0 %v481
  %v1227 = vpop.f32.mrf.mxu0
  %v1228 = vadd.f32 %v1179, %v1227
  %v1229 = vpop.f32.mrf.mxu0
  %v1230 = vadd.f32 %v1181, %v1229
  %1231 = vmatmul.bf16.gmra.mxu0 %v489
  %v1232 = vpop.f32.mrf.mxu0
  %v1233 = vadd.f32 %v1184, %v1232
  %v1234 = vpop.f32.mrf.mxu0
  %v1235 = vadd.f32 %v1186, %v1234
  %1236 = vmatmul.bf16.gmra.mxu0 %v497
  %v1237 = vpop.f32.mrf.mxu0
  %v1238 = vadd.f32 %v1189, %v1237
  %v1239 = vpop.f32.mrf.mxu0
  %v1240 = vadd.f32 %v1191, %v1239
  %1241 = vdwg.mxu0
  %1242 = vmatpush.bf16.msra.mxu0 %v875
  %1243 = vmatpush.bf16.msra.mxu0 %v874
  %1244 = vmatpush.bf16.msra.mxu0 %v873
  %1245 = vmatpush.bf16.msra.mxu0 %v872
  %1246 = vmatpush.bf16.msra.mxu0 %v871
  %1247 = vmatpush.bf16.msra.mxu0 %v870
  %1248 = vmatpush.bf16.msra.mxu0 %v869
  %1249 = vmatpush.bf16.msra.mxu0 %v868
  %1250 = vmatmul.bf16.gmra.mxu0 %v442
  %v1251 = vpop.f32.mrf.mxu0
  %v1252 = vadd.f32 %v1203, %v1251
  %v1253 = vpop.f32.mrf.mxu0
  %v1254 = vadd.f32 %v1205, %v1253
  %1255 = vmatmul.bf16.gmra.mxu0 %v450
  %v1256 = vpop.f32.mrf.mxu0
  %v1257 = vadd.f32 %v1208, %v1256
  %v1258 = vpop.f32.mrf.mxu0
  %v1259 = vadd.f32 %v1210, %v1258
  %1260 = vmatmul.bf16.gmra.mxu0 %v458
  %v1261 = vpop.f32.mrf.mxu0
  %v1262 = vadd.f32 %v1213, %v1261
  %v1263 = vpop.f32.mrf.mxu0
  %v1264 = vadd.f32 %v1215, %v1263
  %1265 = vmatmul.bf16.gmra.mxu0 %v466
  %v1266 = vpop.f32.mrf.mxu0
  %v1267 = vadd.f32 %v1218, %v1266
  %v1268 = vpop.f32.mrf.mxu0
  %v1269 = vadd.f32 %v1220, %v1268
  %1270 = vmatmul.bf16.gmra.mxu0 %v474
  %v1271 = vpop.f32.mrf.mxu0
  %v1272 = vadd.f32 %v1223, %v1271
  %v1273 = vpop.f32.mrf.mxu0
  %v1274 = vadd.f32 %v1225, %v1273
  %1275 = vmatmul.bf16.gmra.mxu0 %v482
  %v1276 = vpop.f32.mrf.mxu0
  %v1277 = vadd.f32 %v1228, %v1276
  %v1278 = vpop.f32.mrf.mxu0
  %v1279 = vadd.f32 %v1230, %v1278
  %1280 = vmatmul.bf16.gmra.mxu0 %v490
  %v1281 = vpop.f32.mrf.mxu0
  %v1282 = vadd.f32 %v1233, %v1281
  %v1283 = vpop.f32.mrf.mxu0
  %v1284 = vadd.f32 %v1235, %v1283
  %1285 = vmatmul.bf16.gmra.mxu0 %v498
  %v1286 = vpop.f32.mrf.mxu0
  %v1287 = vadd.f32 %v1238, %v1286
  %v1288 = vpop.f32.mrf.mxu0
  %v1289 = vadd.f32 %v1240, %v1288
  %1290 = vdwg.mxu0
  %1291 = vmatpush.bf16.msra.mxu0 %v883
  %1292 = vmatpush.bf16.msra.mxu0 %v882
  %1293 = vmatpush.bf16.msra.mxu0 %v881
  %1294 = vmatpush.bf16.msra.mxu0 %v880
  %1295 = vmatpush.bf16.msra.mxu0 %v879
  %1296 = vmatpush.bf16.msra.mxu0 %v878
  %1297 = vmatpush.bf16.msra.mxu0 %v877
  %1298 = vmatpush.bf16.msra.mxu0 %v876
  %1299 = vmatmul.bf16.gmra.mxu0 %v443
  %v1300 = vpop.f32.mrf.mxu0
  %v1301 = vadd.f32 %v1252, %v1300
  %v1302 = vpop.f32.mrf.mxu0
  %v1303 = vadd.f32 %v1254, %v1302
  %1304 = vmatmul.bf16.gmra.mxu0 %v451
  %v1305 = vpop.f32.mrf.mxu0
  %v1306 = vadd.f32 %v1257, %v1305
  %v1307 = vpop.f32.mrf.mxu0
  %v1308 = vadd.f32 %v1259, %v1307
  %1309 = vmatmul.bf16.gmra.mxu0 %v459
  %v1310 = vpop.f32.mrf.mxu0
  %v1311 = vadd.f32 %v1262, %v1310
  %v1312 = vpop.f32.mrf.mxu0
  %v1313 = vadd.f32 %v1264, %v1312
  %1314 = vmatmul.bf16.gmra.mxu0 %v467
  %v1315 = vpop.f32.mrf.mxu0
  %v1316 = vadd.f32 %v1267, %v1315
  %v1317 = vpop.f32.mrf.mxu0
  %v1318 = vadd.f32 %v1269, %v1317
  %1319 = vmatmul.bf16.gmra.mxu0 %v475
  %v1320 = vpop.f32.mrf.mxu0
  %v1321 = vadd.f32 %v1272, %v1320
  %v1322 = vpop.f32.mrf.mxu0
  %v1323 = vadd.f32 %v1274, %v1322
  %1324 = vmatmul.bf16.gmra.mxu0 %v483
  %v1325 = vpop.f32.mrf.mxu0
  %v1326 = vadd.f32 %v1277, %v1325
  %v1327 = vpop.f32.mrf.mxu0
  %v1328 = vadd.f32 %v1279, %v1327
  %1329 = vmatmul.bf16.gmra.mxu0 %v491
  %v1330 = vpop.f32.mrf.mxu0
  %v1331 = vadd.f32 %v1282, %v1330
  %v1332 = vpop.f32.mrf.mxu0
  %v1333 = vadd.f32 %v1284, %v1332
  %1334 = vmatmul.bf16.gmra.mxu0 %v499
  %v1335 = vpop.f32.mrf.mxu0
  %v1336 = vadd.f32 %v1287, %v1335
  %v1337 = vpop.f32.mrf.mxu0
  %v1338 = vadd.f32 %v1289, %v1337
  %1339 = vdwg.mxu0
  %v1340 = vadd.f32 %v36, %v1301
  %v1341 = vadd.f32 %v37, %v1303
  %v1342 = vadd.f32 %v38, %v1306
  %v1343 = vadd.f32 %v39, %v1308
  %v1344 = vadd.f32 %v40, %v1311
  %v1345 = vadd.f32 %v41, %v1313
  %v1346 = vadd.f32 %v42, %v1316
  %v1347 = vadd.f32 %v43, %v1318
  %v1348 = vadd.f32 %v44, %v1321
  %v1349 = vadd.f32 %v45, %v1323
  %v1350 = vadd.f32 %v46, %v1326
  %v1351 = vadd.f32 %v47, %v1328
  %v1352 = vadd.f32 %v48, %v1331
  %v1353 = vadd.f32 %v49, %v1333
  %v1354 = vadd.f32 %v50, %v1336
  %v1355 = vadd.f32 %v51, %v1338
  %1356 = vst [vmem:[#allocation2] sm:$0xff] %v1340
  %1357 = vst [vmem:[#allocation2 + $0x8] sm:$0xff] %v1341
  %1358 = vst [vmem:[#allocation2 + $0x10] sm:$0xff] %v1342
  %1359 = vst [vmem:[#allocation2 + $0x18] sm:$0xff] %v1343
  %1360 = vst [vmem:[#allocation2 + $0x20] sm:$0xff] %v1344
  %1361 = vst [vmem:[#allocation2 + $0x28] sm:$0xff] %v1345
  %1362 = vst [vmem:[#allocation2 + $0x30] sm:$0xff] %v1346
  %1363 = vst [vmem:[#allocation2 + $0x38] sm:$0xff] %v1347
  %1364 = vst [vmem:[#allocation2 + $0x40] sm:$0xff] %v1348
  %1365 = vst [vmem:[#allocation2 + $0x48] sm:$0xff] %v1349
  %1366 = vst [vmem:[#allocation2 + $0x50] sm:$0xff] %v1350
  %1367 = vst [vmem:[#allocation2 + $0x58] sm:$0xff] %v1351
  %1368 = vst [vmem:[#allocation2 + $0x60] sm:$0xff] %v1352
  %1369 = vst [vmem:[#allocation2 + $0x68] sm:$0xff] %v1353
  %1370 = vst [vmem:[#allocation2 + $0x70] sm:$0xff] %v1354
  %1371 = vst [vmem:[#allocation2 + $0x78] sm:$0xff] %v1355
  // Predicated region
  $region18: #{unet_forward.5} parent=0 // pred_check
    %p1372 = pneg %p14
  $region19: #{unet_forward.5} parent=0 // pred_check_branch
    %1374 = sbr.rel (%p1372) target = $region21
  $region20: #{unet_forward.5} parent=0 // pred_region
    %v1375 = vld [vmem:[#allocation2] sm:$0xff]
    %v1376 = vld [vmem:[#allocation2 + $0x8] sm:$0xff]
    %v1377 = vld [vmem:[#allocation2 + $0x10] sm:$0xff]
    %v1378 = vld [vmem:[#allocation2 + $0x18] sm:$0xff]
    %v1379 = vld [vmem:[#allocation2 + $0x20] sm:$0xff]
    %v1380 = vld [vmem:[#allocation2 + $0x28] sm:$0xff]
    %v1381 = vld [vmem:[#allocation2 + $0x30] sm:$0xff]
    %v1382 = vld [vmem:[#allocation2 + $0x38] sm:$0xff]
    %v1383 = vld [vmem:[#allocation2 + $0x40] sm:$0xff]
    %v1384 = vld [vmem:[#allocation2 + $0x48] sm:$0xff]
    %v1385 = vld [vmem:[#allocation2 + $0x50] sm:$0xff]
    %v1386 = vld [vmem:[#allocation2 + $0x58] sm:$0xff]
    %v1387 = vld [vmem:[#allocation2 + $0x60] sm:$0xff]
    %v1388 = vld [vmem:[#allocation2 + $0x68] sm:$0xff]
    %v1389 = vld [vmem:[#allocation2 + $0x70] sm:$0xff]
    %v1390 = vld [vmem:[#allocation2 + $0x78] sm:$0xff]
    %vm1391 = vcmp.ge.f32.partialorder %v1375, 0.0
    %vm1392 = vcmp.ge.f32.partialorder %v1376, 0.0
    %vm1393 = vcmp.ge.f32.partialorder %v1377, 0.0
    %vm1394 = vcmp.ge.f32.partialorder %v1378, 0.0
    %vm1395 = vcmp.ge.f32.partialorder %v1379, 0.0
    %vm1396 = vcmp.ge.f32.partialorder %v1380, 0.0
    %vm1397 = vcmp.ge.f32.partialorder %v1381, 0.0
    %vm1398 = vcmp.ge.f32.partialorder %v1382, 0.0
    %vm1399 = vcmp.ge.f32.partialorder %v1383, 0.0
    %vm1400 = vcmp.ge.f32.partialorder %v1384, 0.0
    %vm1401 = vcmp.ge.f32.partialorder %v1385, 0.0
    %vm1402 = vcmp.ge.f32.partialorder %v1386, 0.0
    %vm1403 = vcmp.ge.f32.partialorder %v1387, 0.0
    %vm1404 = vcmp.ge.f32.partialorder %v1388, 0.0
    %vm1405 = vcmp.ge.f32.partialorder %v1389, 0.0
    %vm1406 = vcmp.ge.f32.partialorder %v1390, 0.0
    %v1407 = vmul.f32 %v1375, 0.2
    %v1408 = vmul.f32 %v1376, 0.2
    %v1409 = vmul.f32 %v1377, 0.2
    %v1410 = vmul.f32 %v1378, 0.2
    %v1411 = vmul.f32 %v1379, 0.2
    %v1412 = vmul.f32 %v1380, 0.2
    %v1413 = vmul.f32 %v1381, 0.2
    %v1414 = vmul.f32 %v1382, 0.2
    %v1415 = vmul.f32 %v1383, 0.2
    %v1416 = vmul.f32 %v1384, 0.2
    %v1417 = vmul.f32 %v1385, 0.2
    %v1418 = vmul.f32 %v1386, 0.2
    %v1419 = vmul.f32 %v1387, 0.2
    %v1420 = vmul.f32 %v1388, 0.2
    %v1421 = vmul.f32 %v1389, 0.2
    %v1422 = vmul.f32 %v1390, 0.2
    %v1423 = vsel %vm1391, %v1375, %v1407
    %v1424 = vsel %vm1392, %v1376, %v1408
    %v1425 = vsel %vm1393, %v1377, %v1409
    %v1426 = vsel %vm1394, %v1378, %v1410
    %v1427 = vsel %vm1395, %v1379, %v1411
    %v1428 = vsel %vm1396, %v1380, %v1412
    %v1429 = vsel %vm1397, %v1381, %v1413
    %v1430 = vsel %vm1398, %v1382, %v1414
    %v1431 = vsel %vm1399, %v1383, %v1415
    %v1432 = vsel %vm1400, %v1384, %v1416
    %v1433 = vsel %vm1401, %v1385, %v1417
    %v1434 = vsel %vm1402, %v1386, %v1418
    %v1435 = vsel %vm1403, %v1387, %v1419
    %v1436 = vsel %vm1404, %v1388, %v1420
    %v1437 = vsel %vm1405, %v1389, %v1421
    %v1438 = vsel %vm1406, %v1390, %v1422
    %1439 = vst [vmem:[%s3] sm:$0xff] %v1423
    %1440 = vst [vmem:[%s3 + $0x8] sm:$0xff] %v1424
    %1441 = vst [vmem:[%s3 + $0x10] sm:$0xff] %v1425
    %1442 = vst [vmem:[%s3 + $0x18] sm:$0xff] %v1426
    %1443 = vst [vmem:[%s3 + $0x20] sm:$0xff] %v1427
    %1444 = vst [vmem:[%s3 + $0x28] sm:$0xff] %v1428
    %1445 = vst [vmem:[%s3 + $0x30] sm:$0xff] %v1429
    %1446 = vst [vmem:[%s3 + $0x38] sm:$0xff] %v1430
    %1447 = vst [vmem:[%s3 + $0x40] sm:$0xff] %v1431
    %1448 = vst [vmem:[%s3 + $0x48] sm:$0xff] %v1432
    %1449 = vst [vmem:[%s3 + $0x50] sm:$0xff] %v1433
    %1450 = vst [vmem:[%s3 + $0x58] sm:$0xff] %v1434
    %1451 = vst [vmem:[%s3 + $0x60] sm:$0xff] %v1435
    %1452 = vst [vmem:[%s3 + $0x68] sm:$0xff] %v1436
    %1453 = vst [vmem:[%s3 + $0x70] sm:$0xff] %v1437
    %1454 = vst [vmem:[%s3 + $0x78] sm:$0xff] %v1438
  $region21: #{unet_forward.5} parent=0 // pred_fallthru
    _
  // Predicated region
  $region22: #{unet_forward.5} parent=0 // pred_check
    _
  $region23: #{unet_forward.5} parent=0 // pred_check_branch
    %1456 = sbr.rel (0) target = $region25
  $region24: #{unet_forward.5} parent=0 // pred_region
    _
  $region25: #{unet_forward.5} parent=0 // pred_fallthru
    _
  // Predicated region
  $region26: #{unet_forward.5} parent=0 // pred_check
    _
  $region27: #{unet_forward.5} parent=0 // pred_check_branch
    %1458 = sbr.rel (0) target = $region29
  $region28: #{unet_forward.5} parent=0 // pred_region
    _
  $region29: #{unet_forward.5} parent=0 // pred_fallthru
    _

// kernel: unet_forward.6
$region0: #{unet_forward.6}
  #allocation0 [shape = 'u32[]', space=smem, size = 0x4, offset = 0x4, fixed_abs, tag = 'smem constant byte address 0x4 - core index']
  #allocation1 [shape = 'u32[72,128]{1,0:T(1,128)}', space=vmem, size = 0x9000, scoped, tag = 'internal scratch']
  #allocation2 [shape = 'f32[128,128]{1,0:T(8,128)}', space=vmem, size = 0x10000, scoped, tag = 'scratch operand']
  %s0 = inlined_call_operand.vmem [shape: bf16[128,1280], index: 0, kind: input, shape index: {}]
  %s1 = inlined_call_operand.vmem [shape: bf16[1280,128], index: 1, kind: input, shape index: {}]
  %s2 = inlined_call_operand.vmem [shape: f32[8,128], index: 2, kind: input, shape index: {}]
  %s3 = inlined_call_operand.vmem [shape: f32[128,128], index: 3, kind: output, shape index: {}]
  %s4 = sld [smem:[#allocation0]]
  $region91: #{unet_forward.6} parent=0
    _
  %s6 = ssub.s32 1, %s4
  %s7 = scalar_select 0, %s6, %s4
  $region1: #{unet_forward.6} parent=0
    #allocation3 [shape = 'u8[131072]{0}', space=vmem, size = 0x20000, scoped, tag = 'input window, operand 0']
    loop: start=0, step=1, limit=7
    $region2: #{unet_forward.6} parent=1 // loop_pre_header
      _
    $region3: #{unet_forward.6} parent=1 // loop_header
      %s9 = sphi 0, %s13
      %p10 = scmp.ge.s32.totalorder %s9, 7
      %s16 = sphi 0, %s35
      %s17 = sphi 0, %s31
      %s18 = sphi 0, %s27
      %s19 = sphi 0, %s16
      %s20 = sphi 0, %s17
      %s21 = sphi 0, %s18
      %s22 = sphi 0, %s19
      %s23 = sphi 0, %s20
      %s24 = sphi 0, %s21
      %s40 = sphi 0, %s42
      %s43 = sphi 0, %s40
      %s44 = sphi 0, %s43
      %s60 = sphi 0, %s44
      %s68 = sphi 0, %s70
      %s71 = sphi 0, %s68
      %s72 = sphi 0, %s71
      %s88 = sphi 0, %s72
      %s94 = sphi 0, %s96
      %s97 = sphi 0, %s94
      %s98 = sphi 0, %s97
      %s114 = sphi 0, %s98
      %s122 = sphi 0, %s124
      %s125 = sphi 0, %s122
      %s126 = sphi 0, %s125
      %s142 = sphi 0, %s126
    $region4: #{unet_forward.6} parent=1 // loop_header_branch
      %12 = sbr.rel (%p10) target = $region8
    $region5: #{unet_forward.6} parent=1 // loop_body
      %s14 = ssub.s32 %s9, 1
      %s15 = ssub.s32 %s9, 2
      %s25 = sadd.s32 1, %s18
      %p26 = scmp.ge.s32.totalorder %s25, 5
      %s27 = scalar_select %p26, 0, %s25
      %s28 = sadd.s32 1, %s17
      %s29 = scalar_select %p26, %s28, %s17
      %p30 = scmp.ge.s32.totalorder %s29, 1
      %s31 = scalar_select %p30, 0, %s29
      %s32 = sadd.s32 1, %s16
      %s33 = scalar_select %p30, %s32, %s16
      %p34 = scmp.ge.s32.totalorder %s33, 1
      %s35 = scalar_select %p34, 0, %s33
      %s36 = ssub.s32 %s16, %s35
      %s37 = ssub.s32 %s18, %s27
      %s38 = sor.u32 %s36, %s37
      %p39 = scmp.eq.s32.totalorder %s38, 0
      %s41 = sadd.s32 %s40, 1
      %s42 = scalar_select %p39, %s40, %s41
      %p45 = pneg %p39
      %p46 = scmp.eq.s32.totalorder %s9, 4
      %p47 = por %p45, %p46
      %p48 = scmp.ne.s32.totalorder %s40, %s43
      %p49 = scmp.eq.s32.totalorder %s9, 0
      %p50 = por %p48, %p49
      %p51 = scmp.ne.s32.totalorder %s40, %s43
      %p52 = scmp.eq.s32.totalorder %s14, 4
      %p53 = por %p51, %p52
      %p54 = scmp.ne.s32.totalorder %s43, %s44
      %p55 = scmp.eq.s32.totalorder %s14, 0
      %p56 = por %p54, %p55
      %p57 = scmp.ne.s32.totalorder %s43, %s44
      %p58 = scmp.eq.s32.totalorder %s15, 4
      %p59 = por %p57, %p58
      %p61 = scmp.ne.s32.totalorder %s44, %s60
      %p62 = scmp.eq.s32.totalorder %s15, 0
      %p63 = por %p61, %p62
      %s64 = ssub.s32 %s18, %s27
      %s65 = ssub.s32 %s17, %s31
      %s66 = sor.u32 %s64, %s65
      %p67 = scmp.eq.s32.totalorder %s66, 0
      %s69 = sadd.s32 %s68, 1
      %s70 = scalar_select %p67, %s68, %s69
      %p73 = pneg %p67
      %p74 = scmp.eq.s32.totalorder %s9, 4
      %p75 = por %p73, %p74
      %p76 = scmp.ne.s32.totalorder %s68, %s71
      %p77 = scmp.eq.s32.totalorder %s9, 0
      %p78 = por %p76, %p77
      %p79 = scmp.ne.s32.totalorder %s68, %s71
      %p80 = scmp.eq.s32.totalorder %s14, 4
      %p81 = por %p79, %p80
      %p82 = scmp.ne.s32.totalorder %s71, %s72
      %p83 = scmp.eq.s32.totalorder %s14, 0
      %p84 = por %p82, %p83
      %p85 = scmp.ne.s32.totalorder %s71, %s72
      %p86 = scmp.eq.s32.totalorder %s15, 4
      %p87 = por %p85, %p86
      %p89 = scmp.ne.s32.totalorder %s72, %s88
      %p90 = scmp.eq.s32.totalorder %s15, 0
      %p91 = por %p89, %p90
      %s92 = ssub.s32 %s17, %s31
      %p93 = scmp.eq.s32.totalorder %s92, 0
      %s95 = sadd.s32 %s94, 1
      %s96 = scalar_select %p93, %s94, %s95
      %p99 = pneg %p93
      %p100 = scmp.eq.s32.totalorder %s9, 4
      %p101 = por %p99, %p100
      %p102 = scmp.ne.s32.totalorder %s94, %s97
      %p103 = scmp.eq.s32.totalorder %s9, 0
      %p104 = por %p102, %p103
      %p105 = scmp.ne.s32.totalorder %s94, %s97
      %p106 = scmp.eq.s32.totalorder %s14, 4
      %p107 = por %p105, %p106
      %p108 = scmp.ne.s32.totalorder %s97, %s98
      %p109 = scmp.eq.s32.totalorder %s14, 0
      %p110 = por %p108, %p109
      %p111 = scmp.ne.s32.totalorder %s97, %s98
      %p112 = scmp.eq.s32.totalorder %s15, 4
      %p113 = por %p111, %p112
      %p115 = scmp.ne.s32.totalorder %s98, %s114
      %p116 = scmp.eq.s32.totalorder %s15, 0
      %p117 = por %p115, %p116
      %s118 = ssub.s32 %s16, %s35
      %s119 = ssub.s32 %s17, %s31
      %s120 = sor.u32 %s118, %s119
      %p121 = scmp.eq.s32.totalorder %s120, 0
      %s123 = sadd.s32 %s122, 1
      %s124 = scalar_select %p121, %s122, %s123
      %p127 = pneg %p121
      %p128 = scmp.eq.s32.totalorder %s9, 4
      %p129 = por %p127, %p128
      %p130 = scmp.ne.s32.totalorder %s122, %s125
      %p131 = scmp.eq.s32.totalorder %s9, 0
      %p132 = por %p130, %p131
      %p133 = scmp.ne.s32.totalorder %s122, %s125
      %p134 = scmp.eq.s32.totalorder %s14, 4
      %p135 = por %p133, %p134
      %p136 = scmp.ne.s32.totalorder %s125, %s126
      %p137 = scmp.eq.s32.totalorder %s14, 0
      %p138 = por %p136, %p137
      %p139 = scmp.ne.s32.totalorder %s125, %s126
      %p140 = scmp.eq.s32.totalorder %s15, 4
      %p141 = por %p139, %p140
      %p143 = scmp.ne.s32.totalorder %s126, %s142
      %p144 = scmp.eq.s32.totalorder %s15, 0
      %p145 = por %p143, %p144
      %p146 = scmp.le.s32.totalorder 1, %s9
      %p147 = scmp.lt.s32.totalorder %s9, 6
      %p148 = pnand %p146, %p147
      %p149 = pneg %p148
      // Predicated region
      $region9: #{unet_forward.6} parent=5 // pred_check
        _
      $region10: #{unet_forward.6} parent=5 // pred_check_branch
        %151 = sbr.rel (%p148) target = $region12
      $region11: #{unet_forward.6} parent=5 // pred_region
        %s152 = ssub.s32 %s9, 1
        // Predicated region
        $region13: #{unet_forward.6} parent=11 // pred_check
          %p153 = pneg %p110
        $region14: #{unet_forward.6} parent=11 // pred_check_branch
          %155 = sbr.rel (%p153) target = $region16
        $region15: #{unet_forward.6} parent=11 // pred_region
          %p156 = scmp.lt.s32.totalorder %s20, 0
          %s157 = scalar_select %p156, %s20, 0
          %s158 = smul.addr %s157, 8
          %s159 = scalar_lea.vmem %s2, %s158
        $region16: #{unet_forward.6} parent=11 // pred_fallthru
          _
      $region12: #{unet_forward.6} parent=5 // pred_fallthru
        _
      %p160 = scmp.lt.s32.totalorder %s9, 5
      // Predicated region
      $region17: #{unet_forward.6} parent=5 // pred_check
        %p161 = pneg %p160
      $region18: #{unet_forward.6} parent=5 // pred_check_branch
        %163 = sbr.rel (%p161) target = $region20
      $region19: #{unet_forward.6} parent=5 // pred_region
        // Predicated region
        $region21: #{unet_forward.6} parent=19 // pred_check
          %p164 = pneg %p50
        $region22: #{unet_forward.6} parent=19 // pred_check_branch
          %166 = sbr.rel (%p164) target = $region24
        $region23: #{unet_forward.6} parent=19 // pred_region
          %s167 = sand.u32 %s40, 1
          %s168 = sand.u32 %s40, 1
          %s169 = smul.addr %s168, 128
          %s170 = scalar_lea.vmem [#allocation3], %s169
          %s171 = smul.u32 16, %s16
          %s172 = smul.u32 2, %s18
          %s173 = smul.addr %s171, 10
          %s174 = sadd.s32 %s172, %s173
          %s175 = smul.addr %s174, 4
          %s176 = scalar_lea.vmem %s0, %s175
          // Predicated region
          $region25: #{unet_forward.6} parent=23 // pred_check
            _
          $region26: #{unet_forward.6} parent=23 // pred_check_branch
            %178 = sbr.rel (0) target = $region28
          $region27: #{unet_forward.6} parent=23 // pred_region
            // Predicated region
            $region29: #{unet_forward.6} parent=27 // pred_check
              _
            $region30: #{unet_forward.6} parent=27 // pred_check_branch
              %180 = sbr.rel (0) target = $region32
            $region31: #{unet_forward.6} parent=27 // pred_region
              // Predicated region
              $region44: #{unet_forward.6} parent=31 // pred_check
                _
              $region45: #{unet_forward.6} parent=31 // pred_check_branch
                %226 = sbr.rel (0) target = $region47
              $region46: #{unet_forward.6} parent=31 // pred_region
                loop: start=0, step=1, limit=1
                $region48: #{unet_forward.6} parent=46 // loop_pre_header
                  _
                $region49: #{unet_forward.6} parent=46 // loop_header
                  %s228 = sphi 0, %s232
                  %p229 = scmp.ge.s32.totalorder %s228, 1
                  %s233 = sphi %s176, %s176
                  %s234 = sphi %s170, %s170
                $region50: #{unet_forward.6} parent=46 // loop_header_branch
                  %231 = sbr.rel (%p229) target = $region54
                $region51: #{unet_forward.6} parent=46 // loop_body
                  %v235 = vld [vmem:[%s233] sm:$0xff]
                  %236 = vst [vmem:[%s234] sm:$0xff] %v235
                  %v237 = vld [vmem:[%s233 + $0x28] sm:$0xff]
                  %238 = vst [vmem:[%s234 + $0x8] sm:$0xff] %v237
                  %v239 = vld [vmem:[%s233 + $0x50] sm:$0xff]
                  %240 = vst [vmem:[%s234 + $0x10] sm:$0xff] %v239
                  %v241 = vld [vmem:[%s233 + $0x78] sm:$0xff]
                  %242 = vst [vmem:[%s234 + $0x18] sm:$0xff] %v241
                  %v243 = vld [vmem:[%s233 + $0xa0] sm:$0xff]
                  %244 = vst [vmem:[%s234 + $0x20] sm:$0xff] %v243
                  %v245 = vld [vmem:[%s233 + $0xc8] sm:$0xff]
                  %246 = vst [vmem:[%s234 + $0x28] sm:$0xff] %v245
                  %v247 = vld [vmem:[%s233 + $0xf0] sm:$0xff]
                  %248 = vst [vmem:[%s234 + $0x30] sm:$0xff] %v247
                  %v249 = vld [vmem:[%s233 + $0x118] sm:$0xff]
                  %250 = vst [vmem:[%s234 + $0x38] sm:$0xff] %v249
                  %v251 = vld [vmem:[%s233 + $0x140] sm:$0xff]
                  %252 = vst [vmem:[%s234 + $0x40] sm:$0xff] %v251
                  %v253 = vld [vmem:[%s233 + $0x168] sm:$0xff]
                  %254 = vst [vmem:[%s234 + $0x48] sm:$0xff] %v253
                  %v255 = vld [vmem:[%s233 + $0x190] sm:$0xff]
                  %256 = vst [vmem:[%s234 + $0x50] sm:$0xff] %v255
                  %v257 = vld [vmem:[%s233 + $0x1b8] sm:$0xff]
                  %258 = vst [vmem:[%s234 + $0x58] sm:$0xff] %v257
                  %v259 = vld [vmem:[%s233 + $0x1e0] sm:$0xff]
                  %260 = vst [vmem:[%s234 + $0x60] sm:$0xff] %v259
                  %v261 = vld [vmem:[%s233 + $0x208] sm:$0xff]
                  %262 = vst [vmem:[%s234 + $0x68] sm:$0xff] %v261
                  %v263 = vld [vmem:[%s233 + $0x230] sm:$0xff]
                  %264 = vst [vmem:[%s234 + $0x70] sm:$0xff] %v263
                  %v265 = vld [vmem:[%s233 + $0x258] sm:$0xff]
                  %266 = vst [vmem:[%s234 + $0x78] sm:$0xff] %v265
                $region52: #{unet_forward.6} parent=46 // loop_footer
                  %s232 = sadd.s32 1, %s228
                $region53: #{unet_forward.6} parent=46 // loop_footer_branch
                  %227 = sbr.rel target = $region49
                $region54: #{unet_forward.6} parent=46 // loop_exit
                  _
              $region47: #{unet_forward.6} parent=31 // pred_fallthru
                _
              // Predicated region
              $region55: #{unet_forward.6} parent=31 // pred_check
                _
              $region56: #{unet_forward.6} parent=31 // pred_check_branch
                %268 = sbr.rel target = $region58
              $region57: #{unet_forward.6} parent=31 // pred_region
                _
              $region58: #{unet_forward.6} parent=31 // pred_fallthru
                _
            $region32: #{unet_forward.6} parent=27 // pred_fallthru
              _
            // Predicated region
            $region33: #{unet_forward.6} parent=27 // pred_check
              _
            $region34: #{unet_forward.6} parent=27 // pred_check_branch
              %182 = sbr.rel target = $region36
            $region35: #{unet_forward.6} parent=27 // pred_region
              %s184 = ssub.s32 256, 1
              loop: start=0, step=1, limit=1
              $region37: #{unet_forward.6} parent=35 // loop_pre_header
                _
              $region38: #{unet_forward.6} parent=35 // loop_header
                %s186 = sphi 0, %s190
                %p187 = scmp.ge.s32.totalorder %s186, 1
                %s191 = sphi %s176, %s176
                %s192 = sphi %s170, %s170
              $region39: #{unet_forward.6} parent=35 // loop_header_branch
                %189 = sbr.rel (%p187) target = $region43
              $region40: #{unet_forward.6} parent=35 // loop_body
                %v193 = vld [vmem:[%s191] sm:%s184]
                %194 = vst [vmem:[%s192] sm:%s184] %v193
                %v195 = vld [vmem:[%s191 + $0x28] sm:%s184]
                %196 = vst [vmem:[%s192 + $0x8] sm:%s184] %v195
                %v197 = vld [vmem:[%s191 + $0x50] sm:%s184]
                %198 = vst [vmem:[%s192 + $0x10] sm:%s184] %v197
                %v199 = vld [vmem:[%s191 + $0x78] sm:%s184]
                %200 = vst [vmem:[%s192 + $0x18] sm:%s184] %v199
                %v201 = vld [vmem:[%s191 + $0xa0] sm:%s184]
                %202 = vst [vmem:[%s192 + $0x20] sm:%s184] %v201
                %v203 = vld [vmem:[%s191 + $0xc8] sm:%s184]
                %204 = vst [vmem:[%s192 + $0x28] sm:%s184] %v203
                %v205 = vld [vmem:[%s191 + $0xf0] sm:%s184]
                %206 = vst [vmem:[%s192 + $0x30] sm:%s184] %v205
                %v207 = vld [vmem:[%s191 + $0x118] sm:%s184]
                %208 = vst [vmem:[%s192 + $0x38] sm:%s184] %v207
                %v209 = vld [vmem:[%s191 + $0x140] sm:%s184]
                %210 = vst [vmem:[%s192 + $0x40] sm:%s184] %v209
                %v211 = vld [vmem:[%s191 + $0x168] sm:%s184]
                %212 = vst [vmem:[%s192 + $0x48] sm:%s184] %v211
                %v213 = vld [vmem:[%s191 + $0x190] sm:%s184]
                %214 = vst [vmem:[%s192 + $0x50] sm:%s184] %v213
                %v215 = vld [vmem:[%s191 + $0x1b8] sm:%s184]
                %216 = vst [vmem:[%s192 + $0x58] sm:%s184] %v215
                %v217 = vld [vmem:[%s191 + $0x1e0] sm:%s184]
                %218 = vst [vmem:[%s192 + $0x60] sm:%s184] %v217
                %v219 = vld [vmem:[%s191 + $0x208] sm:%s184]
                %220 = vst [vmem:[%s192 + $0x68] sm:%s184] %v219
                %v221 = vld [vmem:[%s191 + $0x230] sm:%s184]
                %222 = vst [vmem:[%s192 + $0x70] sm:%s184] %v221
                %v223 = vld [vmem:[%s191 + $0x258] sm:%s184]
                %224 = vst [vmem:[%s192 + $0x78] sm:%s184] %v223
              $region41: #{unet_forward.6} parent=35 // loop_footer
                %s190 = sadd.s32 1, %s186
              $region42: #{unet_forward.6} parent=35 // loop_footer_branch
                %185 = sbr.rel target = $region38
              $region43: #{unet_forward.6} parent=35 // loop_exit
                _
            $region36: #{unet_forward.6} parent=27 // pred_fallthru
              _
          $region28: #{unet_forward.6} parent=23 // pred_fallthru
            _
          %269 = vnop
        $region24: #{unet_forward.6} parent=19 // pred_fallthru
          _
        // Predicated region
        $region59: #{unet_forward.6} parent=19 // pred_check
          %p270 = pneg %p78
        $region60: #{unet_forward.6} parent=19 // pred_check_branch
          %272 = sbr.rel (%p270) target = $region62
        $region61: #{unet_forward.6} parent=19 // pred_region
          %s273 = smul.u32 32, %s18
          %p274 = scmp.lt.s32.totalorder %s273, 159
          %s275 = scalar_select %p274, %s273, 159
          %p276 = scmp.lt.s32.totalorder %s17, 0
          %s277 = scalar_select %p276, %s17, 0
          %s278 = sadd.s32 %s277, %s275
          %s279 = smul.addr %s278, 4
          %s280 = scalar_lea.vmem %s1, %s279
          %s281 = smul.u32 32, %s18
        $region62: #{unet_forward.6} parent=19 // pred_fallthru
          _
      $region20: #{unet_forward.6} parent=5 // pred_fallthru
        _
      %p282 = scmp.le.s32.totalorder 1, %s9
      %p283 = scmp.lt.s32.totalorder %s9, 6
      %p284 = pnand %p282, %p283
      %p285 = pneg %p284
      // Predicated region
      $region63: #{unet_forward.6} parent=5 // pred_check
        _
      $region64: #{unet_forward.6} parent=5 // pred_check_branch
        %287 = sbr.rel (%p284) target = $region66
      $region65: #{unet_forward.6} parent=5 // pred_region
        %s288 = ssub.s32 %s9, 1
        %s289 = sand.u32 %s43, 1
        %s290 = sand.u32 %s43, 1
        %s291 = smul.addr %s290, 128
        %s292 = scalar_lea.vmem [#allocation3], %s291
        // Predicated region
        $region67: #{unet_forward.6} parent=65 // pred_check
          %p293 = pneg %p56
        $region68: #{unet_forward.6} parent=65 // pred_check_branch
          %295 = sbr.rel (%p293) target = $region70
        $region69: #{unet_forward.6} parent=65 // pred_region
          _
        $region70: #{unet_forward.6} parent=65 // pred_fallthru
          _
        %s296 = sand.u32 %s43, 1
        %s297 = sand.u32 %s43, 1
        %s298 = smul.addr %s297, 128
        %s299 = scalar_lea.vmem [#allocation3], %s298
        %p300 = pneg %p56
        %p301 = pneg %p53
        %s302 = smul.u32 32, %s21
        %p303 = scmp.lt.s32.totalorder %s302, 159
        %s304 = scalar_select %p303, %s302, 159
        %p305 = scmp.lt.s32.totalorder %s20, 0
        %s306 = scalar_select %p305, %s20, 0
        %s307 = sadd.s32 %s306, %s304
        %s308 = smul.addr %s307, 4
        %s309 = scalar_lea.vmem %s1, %s308
        %p310 = pneg %p84
        %p311 = pneg %p81
        %p312 = scmp.lt.s32.totalorder %s20, 0
        %s313 = scalar_select %p312, %s20, 0
        %s314 = smul.addr %s313, 8
        %s315 = scalar_lea.vmem %s2, %s314
        %p316 = pneg %p110
        %p317 = pneg %p107
        %p318 = pneg %p138
        %p319 = pneg %p135
        %s320 = smul.u32 16, %s19
        %p321 = scmp.lt.s32.totalorder %s320, 15
        %s322 = scalar_select %p321, %s320, 15
        %p323 = scmp.lt.s32.totalorder %s20, 0
        %s324 = scalar_select %p323, %s20, 0
        %s325 = sadd.s32 %s324, %s322
        %s326 = smul.addr %s325, 8
        %s327 = scalar_lea.vmem %s3, %s326
        %s328 = smul.u32 16, %s19
        %s329 = smul.u32 2, %s21
        %s330 = smul.u32 32, %s21
        %p331 = scmp.lt.s32.totalorder %s330, 159
        %s332 = scalar_select %p331, %s330, 159
        %p333 = scmp.lt.s32.totalorder %s20, 0
        %s334 = scalar_select %p333, %s20, 0
        %s335 = sadd.s32 %s334, %s332
        %s336 = smul.addr %s335, 4
        %s337 = scalar_lea.vmem %s1, %s336
        %s338 = smul.u32 32, %s21
        %p339 = scmp.lt.s32.totalorder %s20, 0
        %s340 = scalar_select %p339, %s20, 0
        %s341 = smul.addr %s340, 8
        %s342 = scalar_lea.vmem %s2, %s341
        %s343 = smul.u32 16, %s19
        %p344 = scmp.lt.s32.totalorder %s343, 15
        %s345 = scalar_select %p344, %s343, 15
        %p346 = scmp.lt.s32.totalorder %s20, 0
        %s347 = scalar_select %p346, %s20, 0
        %s348 = sadd.s32 %s347, %s345
        %s349 = smul.addr %s348, 8
        %s350 = scalar_lea.vmem %s3, %s349
        %s351 = smul.u32 16, %s19
        %p352 = scmp.eq.s32.totalorder %s21, 0
        // Predicated region
        $region71: #{unet_forward.6} parent=65 // pred_check
          %p353 = pneg %p352
        $region72: #{unet_forward.6} parent=65 // pred_check_branch
          %355 = sbr.rel (%p353) target = $region74
        $region73: #{unet_forward.6} parent=65 // pred_region
          %v356 = vld [vmem:[%s342] sm:$0x1]
          %v357 = vperm.slane %v356, 0
          %358 = vst [vmem:[#allocation2] sm:$0xff] %v357
          %359 = vst [vmem:[#allocation2 + $0x8] sm:$0xff] %v357
          %360 = vst [vmem:[#allocation2 + $0x10] sm:$0xff] %v357
          %361 = vst [vmem:[#allocation2 + $0x18] sm:$0xff] %v357
          %362 = vst [vmem:[#allocation2 + $0x20] sm:$0xff] %v357
          %363 = vst [vmem:[#allocation2 + $0x28] sm:$0xff] %v357
          %364 = vst [vmem:[#allocation2 + $0x30] sm:$0xff] %v357
          %365 = vst [vmem:[#allocation2 + $0x38] sm:$0xff] %v357
          %366 = vst [vmem:[#allocation2 + $0x40] sm:$0xff] %v357
          %367 = vst [vmem:[#allocation2 + $0x48] sm:$0xff] %v357
          %368 = vst [vmem:[#allocation2 + $0x50] sm:$0xff] %v357
          %369 = vst [vmem:[#allocation2 + $0x58] sm:$0xff] %v357
          %370 = vst [vmem:[#allocation2 + $0x60] sm:$0xff] %v357
          %371 = vst [vmem:[#allocation2 + $0x68] sm:$0xff] %v357
          %372 = vst [vmem:[#allocation2 + $0x70] sm:$0xff] %v357
          %373 = vst [vmem:[#allocation2 + $0x78] sm:$0xff] %v357
        $region74: #{unet_forward.6} parent=65 // pred_fallthru
          _
        %v374 = vld [vmem:[#allocation2] sm:$0xff]
        %v375 = vld [vmem:[#allocation2 + $0x8] sm:$0xff]
        %v376 = vld [vmem:[#allocation2 + $0x10] sm:$0xff]
        %v377 = vld [vmem:[#allocation2 + $0x18] sm:$0xff]
        %v378 = vld [vmem:[#allocation2 + $0x20] sm:$0xff]
        %v379 = vld [vmem:[#allocation2 + $0x28] sm:$0xff]
        %v380 = vld [vmem:[#allocation2 + $0x30] sm:$0xff]
        %v381 = vld [vmem:[#allocation2 + $0x38] sm:$0xff]
        %v382 = vld [vmem:[#allocation2 + $0x40] sm:$0xff]
        %v383 = vld [vmem:[#allocation2 + $0x48] sm:$0xff]
        %v384 = vld [vmem:[#allocation2 + $0x50] sm:$0xff]
        %v385 = vld [vmem:[#allocation2 + $0x58] sm:$0xff]
        %v386 = vld [vmem:[#allocation2 + $0x60] sm:$0xff]
        %v387 = vld [vmem:[#allocation2 + $0x68] sm:$0xff]
        %v388 = vld [vmem:[#allocation2 + $0x70] sm:$0xff]
        %v389 = vld [vmem:[#allocation2 + $0x78] sm:$0xff]
        %v390 = vld [vmem:[%s292] sm:$0xff]
        %v391 = vld [vmem:[%s292 + $0x8] sm:$0xff]
        %v392 = vld [vmem:[%s292 + $0x10] sm:$0xff]
        %v393 = vld [vmem:[%s292 + $0x18] sm:$0xff]
        %v394 = vld [vmem:[%s292 + $0x20] sm:$0xff]
        %v395 = vld [vmem:[%s292 + $0x28] sm:$0xff]
        %v396 = vld [vmem:[%s292 + $0x30] sm:$0xff]
        %v397 = vld [vmem:[%s292 + $0x38] sm:$0xff]
        %v398 = vld [vmem:[%s292 + $0x40] sm:$0xff]
        %v399 = vld [vmem:[%s292 + $0x48] sm:$0xff]
        %v400 = vld [vmem:[%s292 + $0x50] sm:$0xff]
        %v401 = vld [vmem:[%s292 + $0x58] sm:$0xff]
        %v402 = vld [vmem:[%s292 + $0x60] sm:$0xff]
        %v403 = vld [vmem:[%s292 + $0x68] sm:$0xff]
        %v404 = vld [vmem:[%s292 + $0x70] sm:$0xff]
        %v405 = vld [vmem:[%s292 + $0x78] sm:$0xff]
        %v406 = vld [vmem:[%s337] sm:$0xf]
        %v407 = vld [vmem:[%s337 + $0x4] sm:$0xf]
        %v408 = vld [vmem:[%s337 + $0x8] sm:$0xf]
        %v409 = vld [vmem:[%s337 + $0xc] sm:$0xf]
        %v410 = vld [vmem:[%s337 + $0x10] sm:$0xf]
        %v411 = vld [vmem:[%s337 + $0x14] sm:$0xf]
        %v412 = vld [vmem:[%s337 + $0x18] sm:$0xf]
        %v413 = vld [vmem:[%s337 + $0x1c] sm:$0xf]
        %v414 = vld [vmem:[%s337 + $0x20] sm:$0xf]
        %v415 = vld [vmem:[%s337 + $0x24] sm:$0xf]
        %v416 = vld [vmem:[%s337 + $0x28] sm:$0xf]
        %v417 = vld [vmem:[%s337 + $0x2c] sm:$0xf]
        %v418 = vld [vmem:[%s337 + $0x30] sm:$0xf]
        %v419 = vld [vmem:[%s337 + $0x34] sm:$0xf]
        %v420 = vld [vmem:[%s337 + $0x38] sm:$0xf]
        %v421 = vld [vmem:[%s337 + $0x3c] sm:$0xf]
        %v422 = vld [vmem:[%s337 + $0x40] sm:$0xf]
        %v423 = vld [vmem:[%s337 + $0x44] sm:$0xf]
        %v424 = vld [vmem:[%s337 + $0x48] sm:$0xf]
        %v425 = vld [vmem:[%s337 + $0x4c] sm:$0xf]
        %v426 = vld [vmem:[%s337 + $0x50] sm:$0xf]
        %v427 = vld [vmem:[%s337 + $0x54] sm:$0xf]
        %v428 = vld [vmem:[%s337 + $0x58] sm:$0xf]
        %v429 = vld [vmem:[%s337 + $0x5c] sm:$0xf]
        %v430 = vld [vmem:[%s337 + $0x60] sm:$0xf]
        %v431 = vld [vmem:[%s337 + $0x64] sm:$0xf]
        %v432 = vld [vmem:[%s337 + $0x68] sm:$0xf]
        %v433 = vld [vmem:[%s337 + $0x6c] sm:$0xf]
        %v434 = vld [vmem:[%s337 + $0x70] sm:$0xf]
        %v435 = vld [vmem:[%s337 + $0x74] sm:$0xf]
        %v436 = vld [vmem:[%s337 + $0x78] sm:$0xf]
        %v437 = vld [vmem:[%s337 + $0x7c] sm:$0xf]
        %v454 = vunpack.c.l.b16 %v390
        %v455 = vunpack.c.h.b16 %v390
        %v456 = vunpack.c.l.b16 %v391
        %v457 = vunpack.c.h.b16 %v391
        %v458 = vunpack.c.l.b16 %v392
        %v459 = vunpack.c.h.b16 %v392
        %v460 = vunpack.c.l.b16 %v393
        %v461 = vunpack.c.h.b16 %v393
        %v462 = vunpack.c.l.b16 %v394
        %v463 = vunpack.c.h.b16 %v394
        %v464 = vunpack.c.l.b16 %v395
        %v465 = vunpack.c.h.b16 %v395
        %v466 = vunpack.c.l.b16 %v396
        %v467 = vunpack.c.h.b16 %v396
        %v468 = vunpack.c.l.b16 %v397
        %v469 = vunpack.c.h.b16 %v397
        %v470 = vunpack.c.l.b16 %v398
        %v471 = vunpack.c.h.b16 %v398
        %v472 = vunpack.c.l.b16 %v399
        %v473 = vunpack.c.h.b16 %v399
        %v474 = vunpack.c.l.b16 %v400
        %v475 = vunpack.c.h.b16 %v400
        %v476 = vunpack.c.l.b16 %v401
        %v477 = vunpack.c.h.b16 %v401
        %v478 = vunpack.c.l.b16 %v402
        %v479 = vunpack.c.h.b16 %v402
        %v480 = vunpack.c.l.b16 %v403
        %v481 = vunpack.c.h.b16 %v403
        %v482 = vunpack.c.l.b16 %v404
        %v483 = vunpack.c.h.b16 %v404
        %v484 = vunpack.c.l.b16 %v405
        %v485 = vunpack.c.h.b16 %v405
        %v486 = vpack.c.b16 %v456, %v454
        %v487 = vpack.c.b16 %v457, %v455
        %v488 = vpack.c.b16 %v460, %v458
        %v489 = vpack.c.b16 %v461, %v459
        %v490 = vpack.c.b16 %v464, %v462
        %v491 = vpack.c.b16 %v465, %v463
        %v492 = vpack.c.b16 %v468, %v466
        %v493 = vpack.c.b16 %v469, %v467
        %v494 = vpack.c.b16 %v472, %v470
        %v495 = vpack.c.b16 %v473, %v471
        %v496 = vpack.c.b16 %v476, %v474
        %v497 = vpack.c.b16 %v477, %v475
        %v498 = vpack.c.b16 %v480, %v478
        %v499 = vpack.c.b16 %v481, %v479
        %v500 = vpack.c.b16 %v484, %v482
        %v501 = vpack.c.b16 %v485, %v483
        %v550 = vunpack.c.l.b16 %v406
        %v551 = vunpack.c.l.b16 %v407
        %v552 = vunpack.c.l.b16 %v408
        %v553 = vunpack.c.l.b16 %v409
        %v554 = vunpack.c.l.b16 %v410
        %v555 = vunpack.c.l.b16 %v411
        %v556 = vunpack.c.l.b16 %v412
        %v557 = vunpack.c.l.b16 %v413
        %v558 = vunpack.c.l.b16 %v414
        %v559 = vunpack.c.l.b16 %v415
        %v560 = vunpack.c.l.b16 %v416
        %v561 = vunpack.c.l.b16 %v417
        %v562 = vunpack.c.l.b16 %v418
        %v563 = vunpack.c.l.b16 %v419
        %v564 = vunpack.c.l.b16 %v420
        %v565 = vunpack.c.l.b16 %v421
        %v566 = vunpack.c.l.b16 %v422
        %v567 = vunpack.c.l.b16 %v423
        %v568 = vunpack.c.l.b16 %v424
        %v569 = vunpack.c.l.b16 %v425
        %v570 = vunpack.c.l.b16 %v426
        %v571 = vunpack.c.l.b16 %v427
        %v572 = vunpack.c.l.b16 %v428
        %v573 = vunpack.c.l.b16 %v429
        %v574 = vunpack.c.l.b16 %v430
        %v575 = vunpack.c.l.b16 %v431
        %v576 = vunpack.c.l.b16 %v432
        %v577 = vunpack.c.l.b16 %v433
        %v578 = vunpack.c.l.b16 %v434
        %v579 = vunpack.c.l.b16 %v435
        %v580 = vunpack.c.l.b16 %v436
        %v581 = vunpack.c.l.b16 %v437
        %v582 = vpack.c.b16 %v551, %v550
        %v583 = vpack.c.b16 %v553, %v552
        %v584 = vpack.c.b16 %v555, %v554
        %v585 = vpack.c.b16 %v557, %v556
        %v586 = vpack.c.b16 %v559, %v558
        %v587 = vpack.c.b16 %v561, %v560
        %v588 = vpack.c.b16 %v563, %v562
        %v589 = vpack.c.b16 %v565, %v564
        %v590 = vpack.c.b16 %v567, %v566
        %v591 = vpack.c.b16 %v569, %v568
        %v592 = vpack.c.b16 %v571, %v570
        %v593 = vpack.c.b16 %v573, %v572
        %v594 = vpack.c.b16 %v575, %v574
        %v595 = vpack.c.b16 %v577, %v576
        %v596 = vpack.c.b16 %v579, %v578
        %v597 = vpack.c.b16 %v581, %v580
        %614 = vmatpush.bf16.msra.mxu0 %v589
        %615 = vmatpush.bf16.msra.mxu0 %v588
        %616 = vmatpush.bf16.msra.mxu0 %v587
        %617 = vmatpush.bf16.msra.mxu0 %v586
        %618 = vmatpush.bf16.msra.mxu0 %v585
        %619 = vmatpush.bf16.msra.mxu0 %v584
        %620 = vmatpush.bf16.msra.mxu0 %v583
        %621 = vmatpush.bf16.msra.mxu0 %v582
        %622 = vmatmul.bf16.gmra.mxu0 %v486
        %v623 = vpop.f32.mrf.mxu0
        %v624 = vadd.f32 0.0, %v623
        %v625 = vpop.f32.mrf.mxu0
        %v626 = vadd.f32 0.0, %v625
        %627 = vmatmul.bf16.gmra.mxu0 %v488
        %v628 = vpop.f32.mrf.mxu0
        %v629 = vadd.f32 0.0, %v628
        %v630 = vpop.f32.mrf.mxu0
        %v631 = vadd.f32 0.0, %v630
        %632 = vmatmul.bf16.gmra.mxu0 %v490
        %v633 = vpop.f32.mrf.mxu0
        %v634 = vadd.f32 0.0, %v633
        %v635 = vpop.f32.mrf.mxu0
        %v636 = vadd.f32 0.0, %v635
        %637 = vmatmul.bf16.gmra.mxu0 %v492
        %v638 = vpop.f32.mrf.mxu0
        %v639 = vadd.f32 0.0, %v638
        %v640 = vpop.f32.mrf.mxu0
        %v641 = vadd.f32 0.0, %v640
        %642 = vmatmul.bf16.gmra.mxu0 %v494
        %v643 = vpop.f32.mrf.mxu0
        %v644 = vadd.f32 0.0, %v643
        %v645 = vpop.f32.mrf.mxu0
        %v646 = vadd.f32 0.0, %v645
        %647 = vmatmul.bf16.gmra.mxu0 %v496
        %v648 = vpop.f32.mrf.mxu0
        %v649 = vadd.f32 0.0, %v648
        %v650 = vpop.f32.mrf.mxu0
        %v651 = vadd.f32 0.0, %v650
        %652 = vmatmul.bf16.gmra.mxu0 %v498
        %v653 = vpop.f32.mrf.mxu0
        %v654 = vadd.f32 0.0, %v653
        %v655 = vpop.f32.mrf.mxu0
        %v656 = vadd.f32 0.0, %v655
        %657 = vmatmul.bf16.gmra.mxu0 %v500
        %v658 = vpop.f32.mrf.mxu0
        %v659 = vadd.f32 0.0, %v658
        %v660 = vpop.f32.mrf.mxu0
        %v661 = vadd.f32 0.0, %v660
        %662 = vdwg.mxu0
        %663 = vmatpush.bf16.msra.mxu0 %v597
        %664 = vmatpush.bf16.msra.mxu0 %v596
        %665 = vmatpush.bf16.msra.mxu0 %v595
        %666 = vmatpush.bf16.msra.mxu0 %v594
        %667 = vmatpush.bf16.msra.mxu0 %v593
        %668 = vmatpush.bf16.msra.mxu0 %v592
        %669 = vmatpush.bf16.msra.mxu0 %v591
        %670 = vmatpush.bf16.msra.mxu0 %v590
        %671 = vmatmul.bf16.gmra.mxu0 %v487
        %v672 = vpop.f32.mrf.mxu0
        %v673 = vadd.f32 %v624, %v672
        %v674 = vpop.f32.mrf.mxu0
        %v675 = vadd.f32 %v626, %v674
        %676 = vmatmul.bf16.gmra.mxu0 %v489
        %v677 = vpop.f32.mrf.mxu0
        %v678 = vadd.f32 %v629, %v677
        %v679 = vpop.f32.mrf.mxu0
        %v680 = vadd.f32 %v631, %v679
        %681 = vmatmul.bf16.gmra.mxu0 %v491
        %v682 = vpop.f32.mrf.mxu0
        %v683 = vadd.f32 %v634, %v682
        %v684 = vpop.f32.mrf.mxu0
        %v685 = vadd.f32 %v636, %v684
        %686 = vmatmul.bf16.gmra.mxu0 %v493
        %v687 = vpop.f32.mrf.mxu0
        %v688 = vadd.f32 %v639, %v687
        %v689 = vpop.f32.mrf.mxu0
        %v690 = vadd.f32 %v641, %v689
        %691 = vmatmul.bf16.gmra.mxu0 %v495
        %v692 = vpop.f32.mrf.mxu0
        %v693 = vadd.f32 %v644, %v692
        %v694 = vpop.f32.mrf.mxu0
        %v695 = vadd.f32 %v646, %v694
        %696 = vmatmul.bf16.gmra.mxu0 %v497
        %v697 = vpop.f32.mrf.mxu0
        %v698 = vadd.f32 %v649, %v697
        %v699 = vpop.f32.mrf.mxu0
        %v700 = vadd.f32 %v651, %v699
        %701 = vmatmul.bf16.gmra.mxu0 %v499
        %v702 = vpop.f32.mrf.mxu0
        %v703 = vadd.f32 %v654, %v702
        %v704 = vpop.f32.mrf.mxu0
        %v705 = vadd.f32 %v656, %v704
        %706 = vmatmul.bf16.gmra.mxu0 %v501
        %v707 = vpop.f32.mrf.mxu0
        %v708 = vadd.f32 %v659, %v707
        %v709 = vpop.f32.mrf.mxu0
        %v710 = vadd.f32 %v661, %v709
        %711 = vdwg.mxu0
        %v712 = vadd.f32 %v374, %v673
        %v713 = vadd.f32 %v375, %v675
        %v714 = vadd.f32 %v376, %v678
        %v715 = vadd.f32 %v377, %v680
        %v716 = vadd.f32 %v378, %v683
        %v717 = vadd.f32 %v379, %v685
        %v718 = vadd.f32 %v380, %v688
        %v719 = vadd.f32 %v381, %v690
        %v720 = vadd.f32 %v382, %v693
        %v721 = vadd.f32 %v383, %v695
        %v722 = vadd.f32 %v384, %v698
        %v723 = vadd.f32 %v385, %v700
        %v724 = vadd.f32 %v386, %v703
        %v725 = vadd.f32 %v387, %v705
        %v726 = vadd.f32 %v388, %v708
        %v727 = vadd.f32 %v389, %v710
        %728 = vst [vmem:[#allocation2] sm:$0xff] %v712
        %729 = vst [vmem:[#allocation2 + $0x8] sm:$0xff] %v713
        %730 = vst [vmem:[#allocation2 + $0x10] sm:$0xff] %v714
        %731 = vst [vmem:[#allocation2 + $0x18] sm:$0xff] %v715
        %732 = vst [vmem:[#allocation2 + $0x20] sm:$0xff] %v716
        %733 = vst [vmem:[#allocation2 + $0x28] sm:$0xff] %v717
        %734 = vst [vmem:[#allocation2 + $0x30] sm:$0xff] %v718
        %735 = vst [vmem:[#allocation2 + $0x38] sm:$0xff] %v719
        %736 = vst [vmem:[#allocation2 + $0x40] sm:$0xff] %v720
        %737 = vst [vmem:[#allocation2 + $0x48] sm:$0xff] %v721
        %738 = vst [vmem:[#allocation2 + $0x50] sm:$0xff] %v722
        %739 = vst [vmem:[#allocation2 + $0x58] sm:$0xff] %v723
        %740 = vst [vmem:[#allocation2 + $0x60] sm:$0xff] %v724
        %741 = vst [vmem:[#allocation2 + $0x68] sm:$0xff] %v725
        %742 = vst [vmem:[#allocation2 + $0x70] sm:$0xff] %v726
        %743 = vst [vmem:[#allocation2 + $0x78] sm:$0xff] %v727
        %p744 = scmp.eq.s32.totalorder %s21, 4
        // Predicated region
        $region75: #{unet_forward.6} parent=65 // pred_check
          %p745 = pneg %p744
        $region76: #{unet_forward.6} parent=65 // pred_check_branch
          %747 = sbr.rel (%p745) target = $region78
        $region77: #{unet_forward.6} parent=65 // pred_region
          %v748 = vld [vmem:[#allocation2] sm:$0xff]
          %v749 = vld [vmem:[#allocation2 + $0x8] sm:$0xff]
          %v750 = vld [vmem:[#allocation2 + $0x10] sm:$0xff]
          %v751 = vld [vmem:[#allocation2 + $0x18] sm:$0xff]
          %v752 = vld [vmem:[#allocation2 + $0x20] sm:$0xff]
          %v753 = vld [vmem:[#allocation2 + $0x28] sm:$0xff]
          %v754 = vld [vmem:[#allocation2 + $0x30] sm:$0xff]
          %v755 = vld [vmem:[#allocation2 + $0x38] sm:$0xff]
          %v756 = vld [vmem:[#allocation2 + $0x40] sm:$0xff]
          %v757 = vld [vmem:[#allocation2 + $0x48] sm:$0xff]
          %v758 = vld [vmem:[#allocation2 + $0x50] sm:$0xff]
          %v759 = vld [vmem:[#allocation2 + $0x58] sm:$0xff]
          %v760 = vld [vmem:[#allocation2 + $0x60] sm:$0xff]
          %v761 = vld [vmem:[#allocation2 + $0x68] sm:$0xff]
          %v762 = vld [vmem:[#allocation2 + $0x70] sm:$0xff]
          %v763 = vld [vmem:[#allocation2 + $0x78] sm:$0xff]
          %vm764 = vcmp.ge.f32.partialorder %v748, 0.0
          %vm765 = vcmp.ge.f32.partialorder %v749, 0.0
          %vm766 = vcmp.ge.f32.partialorder %v750, 0.0
          %vm767 = vcmp.ge.f32.partialorder %v751, 0.0
          %vm768 = vcmp.ge.f32.partialorder %v752, 0.0
          %vm769 = vcmp.ge.f32.partialorder %v753, 0.0
          %vm770 = vcmp.ge.f32.partialorder %v754, 0.0
          %vm771 = vcmp.ge.f32.partialorder %v755, 0.0
          %vm772 = vcmp.ge.f32.partialorder %v756, 0.0
          %vm773 = vcmp.ge.f32.partialorder %v757, 0.0
          %vm774 = vcmp.ge.f32.partialorder %v758, 0.0
          %vm775 = vcmp.ge.f32.partialorder %v759, 0.0
          %vm776 = vcmp.ge.f32.partialorder %v760, 0.0
          %vm777 = vcmp.ge.f32.partialorder %v761, 0.0
          %vm778 = vcmp.ge.f32.partialorder %v762, 0.0
          %vm779 = vcmp.ge.f32.partialorder %v763, 0.0
          %v780 = vmul.f32 %v748, 0.0
          %v781 = vmul.f32 %v749, 0.0
          %v782 = vmul.f32 %v750, 0.0
          %v783 = vmul.f32 %v751, 0.0
          %v784 = vmul.f32 %v752, 0.0
          %v785 = vmul.f32 %v753, 0.0
          %v786 = vmul.f32 %v754, 0.0
          %v787 = vmul.f32 %v755, 0.0
          %v788 = vmul.f32 %v756, 0.0
          %v789 = vmul.f32 %v757, 0.0
          %v790 = vmul.f32 %v758, 0.0
          %v791 = vmul.f32 %v759, 0.0
          %v792 = vmul.f32 %v760, 0.0
          %v793 = vmul.f32 %v761, 0.0
          %v794 = vmul.f32 %v762, 0.0
          %v795 = vmul.f32 %v763, 0.0
          %v796 = vsel %vm764, %v748, %v780
          %v797 = vsel %vm765, %v749, %v781
          %v798 = vsel %vm766, %v750, %v782
          %v799 = vsel %vm767, %v751, %v783
          %v800 = vsel %vm768, %v752, %v784
          %v801 = vsel %vm769, %v753, %v785
          %v802 = vsel %vm770, %v754, %v786
          %v803 = vsel %vm771, %v755, %v787
          %v804 = vsel %vm772, %v756, %v788
          %v805 = vsel %vm773, %v757, %v789
          %v806 = vsel %vm774, %v758, %v790
          %v807 = vsel %vm775, %v759, %v791
          %v808 = vsel %vm776, %v760, %v792
          %v809 = vsel %vm777, %v761, %v793
          %v810 = vsel %vm778, %v762, %v794
          %v811 = vsel %vm779, %v763, %v795
          %812 = vst [vmem:[%s350] sm:$0xff] %v796
          %813 = vst [vmem:[%s350 + $0x8] sm:$0xff] %v797
          %814 = vst [vmem:[%s350 + $0x10] sm:$0xff] %v798
          %815 = vst [vmem:[%s350 + $0x18] sm:$0xff] %v799
          %816 = vst [vmem:[%s350 + $0x20] sm:$0xff] %v800
          %817 = vst [vmem:[%s350 + $0x28] sm:$0xff] %v801
          %818 = vst [vmem:[%s350 + $0x30] sm:$0xff] %v802
          %819 = vst [vmem:[%s350 + $0x38] sm:$0xff] %v803
          %820 = vst [vmem:[%s350 + $0x40] sm:$0xff] %v804
          %821 = vst [vmem:[%s350 + $0x48] sm:$0xff] %v805
          %822 = vst [vmem:[%s350 + $0x50] sm:$0xff] %v806
          %823 = vst [vmem:[%s350 + $0x58] sm:$0xff] %v807
          %824 = vst [vmem:[%s350 + $0x60] sm:$0xff] %v808
          %825 = vst [vmem:[%s350 + $0x68] sm:$0xff] %v809
          %826 = vst [vmem:[%s350 + $0x70] sm:$0xff] %v810
          %827 = vst [vmem:[%s350 + $0x78] sm:$0xff] %v811
        $region78: #{unet_forward.6} parent=65 // pred_fallthru
          _
        %s828 = smul.u32 16, %s19
        %p829 = scmp.lt.s32.totalorder %s828, 15
        %s830 = scalar_select %p829, %s828, 15
        %p831 = scmp.lt.s32.totalorder %s20, 0
        %s832 = scalar_select %p831, %s20, 0
        %s833 = sadd.s32 %s832, %s830
        %s834 = smul.addr %s833, 8
        %s835 = scalar_lea.vmem %s3, %s834
        // Predicated region
        $region79: #{unet_forward.6} parent=65 // pred_check
          %p836 = pneg %p135
        $region80: #{unet_forward.6} parent=65 // pred_check_branch
          %838 = sbr.rel (%p836) target = $region82
        $region81: #{unet_forward.6} parent=65 // pred_region
          %s839 = smul.u32 16, %s19
        $region82: #{unet_forward.6} parent=65 // pred_fallthru
          _
        // Predicated region
        $region83: #{unet_forward.6} parent=65 // pred_check
          %p840 = pneg %p135
        $region84: #{unet_forward.6} parent=65 // pred_check_branch
          %842 = sbr.rel (%p840) target = $region86
        $region85: #{unet_forward.6} parent=65 // pred_region
          %s843 = smul.u32 16, %s19
          %p844 = scmp.lt.s32.totalorder %s843, 15
          %s845 = scalar_select %p844, %s843, 15
          %p846 = scmp.lt.s32.totalorder %s20, 0
          %s847 = scalar_select %p846, %s20, 0
          %s848 = sadd.s32 %s847, %s845
          %s849 = smul.addr %s848, 8
          %s850 = scalar_lea.vmem %s3, %s849
        $region86: #{unet_forward.6} parent=65 // pred_fallthru
          _
      $region66: #{unet_forward.6} parent=5 // pred_fallthru
        _
      %p851 = scmp.le.s32.totalorder 2, %s9
      // Predicated region
      $region87: #{unet_forward.6} parent=5 // pred_check
        %p852 = pneg %p851
      $region88: #{unet_forward.6} parent=5 // pred_check_branch
        %854 = sbr.rel (%p852) target = $region90
      $region89: #{unet_forward.6} parent=5 // pred_region
        %s855 = ssub.s32 %s9, 2
      $region90: #{unet_forward.6} parent=5 // pred_fallthru
        _
    $region6: #{unet_forward.6} parent=1 // loop_footer
      %s13 = sadd.s32 1, %s9
    $region7: #{unet_forward.6} parent=1 // loop_footer_branch
      %8 = sbr.rel target = $region3
    $region8: #{unet_forward.6} parent=1 // loop_exit
      _

// kernel: unet_forward.7
$region0: #{unet_forward.7}
  #allocation0 [shape = 'u32[]', space=smem, size = 0x4, offset = 0x4, fixed_abs, tag = 'smem constant byte address 0x4 - core index']
  #allocation1 [shape = 'u32[72,128]{1,0:T(1,128)}', space=vmem, size = 0x9000, scoped, tag = 'internal scratch']
  #allocation2 [shape = 'f32[512,128]{1,0:T(8,128)}', space=vmem, size = 0x40000, scoped, tag = 'scratch operand']
  %s0 = inlined_call_operand.vmem [shape: bf16[512,2304], index: 0, kind: input, shape index: {}]
  %s1 = inlined_call_operand.vmem [shape: bf16[2304,128], index: 1, kind: input, shape index: {}]
  %s2 = inlined_call_operand.vmem [shape: f32[8,128], index: 2, kind: input, shape index: {}]
  %s3 = inlined_call_operand.vmem [shape: f32[512,128], index: 3, kind: output, shape index: {}]
  %s4 = sld [smem:[#allocation0]]
  $region91: #{unet_forward.7} parent=0
    _
  %s6 = ssub.s32 1, %s4
  %s7 = scalar_select 0, %s6, %s4
  $region1: #{unet_forward.7} parent=0
    #allocation3 [shape = 'u8[524288]{0}', space=vmem, size = 0x80000, scoped, tag = 'input window, operand 0']
    loop: start=0, step=1, limit=11
    $region2: #{unet_forward.7} parent=1 // loop_pre_header
      _
    $region3: #{unet_forward.7} parent=1 // loop_header
      %s9 = sphi 0, %s13
      %p10 = scmp.ge.s32.totalorder %s9, 11
      %s16 = sphi 0, %s35
      %s17 = sphi 0, %s31
      %s18 = sphi 0, %s27
      %s19 = sphi 0, %s16
      %s20 = sphi 0, %s17
      %s21 = sphi 0, %s18
      %s22 = sphi 0, %s19
      %s23 = sphi 0, %s20
      %s24 = sphi 0, %s21
      %s40 = sphi 0, %s42
      %s43 = sphi 0, %s40
      %s44 = sphi 0, %s43
      %s60 = sphi 0, %s44
      %s68 = sphi 0, %s70
      %s71 = sphi 0, %s68
      %s72 = sphi 0, %s71
      %s88 = sphi 0, %s72
      %s94 = sphi 0, %s96
      %s97 = sphi 0, %s94
      %s98 = sphi 0, %s97
      %s114 = sphi 0, %s98
      %s122 = sphi 0, %s124
      %s125 = sphi 0, %s122
      %s126 = sphi 0, %s125
      %s142 = sphi 0, %s126
    $region4: #{unet_forward.7} parent=1 // loop_header_branch
      %12 = sbr.rel (%p10) target = $region8
    $region5: #{unet_forward.7} parent=1 // loop_body
      %s14 = ssub.s32 %s9, 1
      %s15 = ssub.s32 %s9, 2
      %s25 = sadd.s32 1, %s18
      %p26 = scmp.ge.s32.totalorder %s25, 9
      %s27 = scalar_select %p26, 0, %s25
      %s28 = sadd.s32 1, %s17
      %s29 = scalar_select %p26, %s28, %s17
      %p30 = scmp.ge.s32.totalorder %s29, 1
      %s31 = scalar_select %p30, 0, %s29
      %s32 = sadd.s32 1, %s16
      %s33 = scalar_select %p30, %s32, %s16
      %p34 = scmp.ge.s32.totalorder %s33, 1
      %s35 = scalar_select %p34, 0, %s33
      %s36 = ssub.s32 %s16, %s35
      %s37 = ssub.s32 %s18, %s27
      %s38 = sor.u32 %s36, %s37
      %p39 = scmp.eq.s32.totalorder %s38, 0
      %s41 = sadd.s32 %s40, 1
      %s42 = scalar_select %p39, %s40, %s41
      %p45 = pneg %p39
      %p46 = scmp.eq.s32.totalorder %s9, 8
      %p47 = por %p45, %p46
      %p48 = scmp.ne.s32.totalorder %s40, %s43
      %p49 = scmp.eq.s32.totalorder %s9, 0
      %p50 = por %p48, %p49
      %p51 = scmp.ne.s32.totalorder %s40, %s43
      %p52 = scmp.eq.s32.totalorder %s14, 8
      %p53 = por %p51, %p52
      %p54 = scmp.ne.s32.totalorder %s43, %s44
      %p55 = scmp.eq.s32.totalorder %s14, 0
      %p56 = por %p54, %p55
      %p57 = scmp.ne.s32.totalorder %s43, %s44
      %p58 = scmp.eq.s32.totalorder %s15, 8
      %p59 = por %p57, %p58
      %p61 = scmp.ne.s32.totalorder %s44, %s60
      %p62 = scmp.eq.s32.totalorder %s15, 0
      %p63 = por %p61, %p62
      %s64 = ssub.s32 %s18, %s27
      %s65 = ssub.s32 %s17, %s31
      %s66 = sor.u32 %s64, %s65
      %p67 = scmp.eq.s32.totalorder %s66, 0
      %s69 = sadd.s32 %s68, 1
      %s70 = scalar_select %p67, %s68, %s69
      %p73 = pneg %p67
      %p74 = scmp.eq.s32.totalorder %s9, 8
      %p75 = por %p73, %p74
      %p76 = scmp.ne.s32.totalorder %s68, %s71
      %p77 = scmp.eq.s32.totalorder %s9, 0
      %p78 = por %p76, %p77
      %p79 = scmp.ne.s32.totalorder %s68, %s71
      %p80 = scmp.eq.s32.totalorder %s14, 8
      %p81 = por %p79, %p80
      %p82 = scmp.ne.s32.totalorder %s71, %s72
      %p83 = scmp.eq.s32.totalorder %s14, 0
      %p84 = por %p82, %p83
      %p85 = scmp.ne.s32.totalorder %s71, %s72
      %p86 = scmp.eq.s32.totalorder %s15, 8
      %p87 = por %p85, %p86
      %p89 = scmp.ne.s32.totalorder %s72, %s88
      %p90 = scmp.eq.s32.totalorder %s15, 0
      %p91 = por %p89, %p90
      %s92 = ssub.s32 %s17, %s31
      %p93 = scmp.eq.s32.totalorder %s92, 0
      %s95 = sadd.s32 %s94, 1
      %s96 = scalar_select %p93, %s94, %s95
      %p99 = pneg %p93
      %p100 = scmp.eq.s32.totalorder %s9, 8
      %p101 = por %p99, %p100
      %p102 = scmp.ne.s32.totalorder %s94, %s97
      %p103 = scmp.eq.s32.totalorder %s9, 0
      %p104 = por %p102, %p103
      %p105 = scmp.ne.s32.totalorder %s94, %s97
      %p106 = scmp.eq.s32.totalorder %s14, 8
      %p107 = por %p105, %p106
      %p108 = scmp.ne.s32.totalorder %s97, %s98
      %p109 = scmp.eq.s32.totalorder %s14, 0
      %p110 = por %p108, %p109
      %p111 = scmp.ne.s32.totalorder %s97, %s98
      %p112 = scmp.eq.s32.totalorder %s15, 8
      %p113 = por %p111, %p112
      %p115 = scmp.ne.s32.totalorder %s98, %s114
      %p116 = scmp.eq.s32.totalorder %s15, 0
      %p117 = por %p115, %p116
      %s118 = ssub.s32 %s16, %s35
      %s119 = ssub.s32 %s17, %s31
      %s120 = sor.u32 %s118, %s119
      %p121 = scmp.eq.s32.totalorder %s120, 0
      %s123 = sadd.s32 %s122, 1
      %s124 = scalar_select %p121, %s122, %s123
      %p127 = pneg %p121
      %p128 = scmp.eq.s32.totalorder %s9, 8
      %p129 = por %p127, %p128
      %p130 = scmp.ne.s32.totalorder %s122, %s125
      %p131 = scmp.eq.s32.totalorder %s9, 0
      %p132 = por %p130, %p131
      %p133 = scmp.ne.s32.totalorder %s122, %s125
      %p134 = scmp.eq.s32.totalorder %s14, 8
      %p135 = por %p133, %p134
      %p136 = scmp.ne.s32.totalorder %s125, %s126
      %p137 = scmp.eq.s32.totalorder %s14, 0
      %p138 = por %p136, %p137
      %p139 = scmp.ne.s32.totalorder %s125, %s126
      %p140 = scmp.eq.s32.totalorder %s15, 8
      %p141 = por %p139, %p140
      %p143 = scmp.ne.s32.totalorder %s126, %s142
      %p144 = scmp.eq.s32.totalorder %s15, 0
      %p145 = por %p143, %p144
      %p146 = scmp.le.s32.totalorder 1, %s9
      %p147 = scmp.lt.s32.totalorder %s9, 10
      %p148 = pnand %p146, %p147
      %p149 = pneg %p148
      // Predicated region
      $region9: #{unet_forward.7} parent=5 // pred_check
        _
      $region10: #{unet_forward.7} parent=5 // pred_check_branch
        %151 = sbr.rel (%p148) target = $region12
      $region11: #{unet_forward.7} parent=5 // pred_region
        %s152 = ssub.s32 %s9, 1
        // Predicated region
        $region13: #{unet_forward.7} parent=11 // pred_check
          %p153 = pneg %p110
        $region14: #{unet_forward.7} parent=11 // pred_check_branch
          %155 = sbr.rel (%p153) target = $region16
        $region15: #{unet_forward.7} parent=11 // pred_region
          %p156 = scmp.lt.s32.totalorder %s20, 0
          %s157 = scalar_select %p156, %s20, 0
          %s158 = smul.addr %s157, 8
          %s159 = scalar_lea.vmem %s2, %s158
        $region16: #{unet_forward.7} parent=11 // pred_fallthru
          _
      $region12: #{unet_forward.7} parent=5 // pred_fallthru
        _
      %p160 = scmp.lt.s32.totalorder %s9, 9
      // Predicated region
      $region17: #{unet_forward.7} parent=5 // pred_check
        %p161 = pneg %p160
      $region18: #{unet_forward.7} parent=5 // pred_check_branch
        %163 = sbr.rel (%p161) target = $region20
      $region19: #{unet_forward.7} parent=5 // pred_region
        // Predicated region
        $region21: #{unet_forward.7} parent=19 // pred_check
          %p164 = pneg %p50
        $region22: #{unet_forward.7} parent=19 // pred_check_branch
          %166 = sbr.rel (%p164) target = $region24
        $region23: #{unet_forward.7} parent=19 // pred_region
          %s167 = sand.u32 %s40, 1
          %s168 = sand.u32 %s40, 1
          %s169 = smul.addr %s168, 512
          %s170 = scalar_lea.vmem [#allocation3], %s169
          %s171 = smul.u32 64, %s16
          %s172 = smul.u32 2, %s18
          %s173 = smul.addr %s171, 18
          %s174 = sadd.s32 %s172, %s173
          %s175 = smul.addr %s174, 4
          %s176 = scalar_lea.vmem %s0, %s175
          // Predicated region
          $region25: #{unet_forward.7} parent=23 // pred_check
            _
          $region26: #{unet_forward.7} parent=23 // pred_check_branch
            %178 = sbr.rel (0) target = $region28
          $region27: #{unet_forward.7} parent=23 // pred_region
            // Predicated region
            $region29: #{unet_forward.7} parent=27 // pred_check
              _
            $region30: #{unet_forward.7} parent=27 // pred_check_branch
              %180 = sbr.rel (0) target = $region32
            $region31: #{unet_forward.7} parent=27 // pred_region
              // Predicated region
              $region44: #{unet_forward.7} parent=31 // pred_check
                _
              $region45: #{unet_forward.7} parent=31 // pred_check_branch
                %322 = sbr.rel (0) target = $region47
              $region46: #{unet_forward.7} parent=31 // pred_region
                loop: start=0, step=1, limit=1
                $region48: #{unet_forward.7} parent=46 // loop_pre_header
                  _
                $region49: #{unet_forward.7} parent=46 // loop_header
                  %s324 = sphi 0, %s328
                  %p325 = scmp.ge.s32.totalorder %s324, 1
                  %s329 = sphi %s176, %s176
                  %s330 = sphi %s170, %s170
                $region50: #{unet_forward.7} parent=46 // loop_header_branch
                  %327 = sbr.rel (%p325) target = $region54
                $region51: #{unet_forward.7} parent=46 // loop_body
                  %v331 = vld [vmem:[%s329] sm:$0xff]
                  %332 = vst [vmem:[%s330] sm:$0xff] %v331
                  %v333 = vld [vmem:[%s329 + $0x48] sm:$0xff]
                  %334 = vst [vmem:[%s330 + $0x8] sm:$0xff] %v333
                  %v335 = vld [vmem:[%s329 + $0x90] sm:$0xff]
                  %336 = vst [vmem:[%s330 + $0x10] sm:$0xff] %v335
                  %v337 = vld [vmem:[%s329 + $0xd8] sm:$0xff]
                  %338 = vst [vmem:[%s330 + $0x18] sm:$0xff] %v337
                  %v339 = vld [vmem:[%s329 + $0x120] sm:$0xff]
                  %340 = vst [vmem:[%s330 + $0x20] sm:$0xff] %v339
                  %v341 = vld [vmem:[%s329 + $0x168] sm:$0xff]
                  %342 = vst [vmem:[%s330 + $0x28] sm:$0xff] %v341
                  %v343 = vld [vmem:[%s329 + $0x1b0] sm:$0xff]
                  %344 = vst [vmem:[%s330 + $0x30] sm:$0xff] %v343
                  %v345 = vld [vmem:[%s329 + $0x1f8] sm:$0xff]
                  %346 = vst [vmem:[%s330 + $0x38] sm:$0xff] %v345
                  %v347 = vld [vmem:[%s329 + $0x240] sm:$0xff]
                  %348 = vst [vmem:[%s330 + $0x40] sm:$0xff] %v347
                  %v349 = vld [vmem:[%s329 + $0x288] sm:$0xff]
                  %350 = vst [vmem:[%s330 + $0x48] sm:$0xff] %v349
                  %v351 = vld [vmem:[%s329 + $0x2d0] sm:$0xff]
                  %352 = vst [vmem:[%s330 + $0x50] sm:$0xff] %v351
                  %v353 = vld [vmem:[%s329 + $0x318] sm:$0xff]
                  %354 = vst [vmem:[%s330 + $0x58] sm:$0xff] %v353
                  %v355 = vld [vmem:[%s329 + $0x360] sm:$0xff]
                  %356 = vst [vmem:[%s330 + $0x60] sm:$0xff] %v355
                  %v357 = vld [vmem:[%s329 + $0x3a8] sm:$0xff]
                  %358 = vst [vmem:[%s330 + $0x68] sm:$0xff] %v357
                  %v359 = vld [vmem:[%s329 + $0x3f0] sm:$0xff]
                  %360 = vst [vmem:[%s330 + $0x70] sm:$0xff] %v359
                  %v361 = vld [vmem:[%s329 + $0x438] sm:$0xff]
                  %362 = vst [vmem:[%s330 + $0x78] sm:$0xff] %v361
                  %v363 = vld [vmem:[%s329 + $0x480] sm:$0xff]
                  %364 = vst [vmem:[%s330 + $0x80] sm:$0xff] %v363
                  %v365 = vld [vmem:[%s329 + $0x4c8] sm:$0xff]
                  %366 = vst [vmem:[%s330 + $0x88] sm:$0xff] %v365
                  %v367 = vld [vmem:[%s329 + $0x510] sm:$0xff]
                  %368 = vst [vmem:[%s330 + $0x90] sm:$0xff] %v367
                  %v369 = vld [vmem:[%s329 + $0x558] sm:$0xff]
                  %370 = vst [vmem:[%s330 + $0x98] sm:$0xff] %v369
                  %v371 = vld [vmem:[%s329 + $0x5a0] sm:$0xff]
                  %372 = vst [vmem:[%s330 + $0xa0] sm:$0xff] %v371
                  %v373 = vld [vmem:[%s329 + $0x5e8] sm:$0xff]
                  %374 = vst [vmem:[%s330 + $0xa8] sm:$0xff] %v373
                  %v375 = vld [vmem:[%s329 + $0x630] sm:$0xff]
                  %376 = vst [vmem:[%s330 + $0xb0] sm:$0xff] %v375
                  %v377 = vld [vmem:[%s329 + $0x678] sm:$0xff]
                  %378 = vst [vmem:[%s330 + $0xb8] sm:$0xff] %v377
                  %v379 = vld [vmem:[%s329 + $0x6c0] sm:$0xff]
                  %380 = vst [vmem:[%s330 + $0xc0] sm:$0xff] %v379
                  %v381 = vld [vmem:[%s329 + $0x708] sm:$0xff]
                  %382 = vst [vmem:[%s330 + $0xc8] sm:$0xff] %v381
                  %v383 = vld [vmem:[%s329 + $0x750] sm:$0xff]
                  %384 = vst [vmem:[%s330 + $0xd0] sm:$0xff] %v383
                  %v385 = vld [vmem:[%s329 + $0x798] sm:$0xff]
                  %386 = vst [vmem:[%s330 + $0xd8] sm:$0xff] %v385
                  %v387 = vld [vmem:[%s329 + $0x7e0] sm:$0xff]
                  %388 = vst [vmem:[%s330 + $0xe0] sm:$0xff] %v387
                  %v389 = vld [vmem:[%s329 + $0x828] sm:$0xff]
                  %390 = vst [vmem:[%s330 + $0xe8] sm:$0xff] %v389
                  %v391 = vld [vmem:[%s329 + $0x870] sm:$0xff]
                  %392 = vst [vmem:[%s330 + $0xf0] sm:$0xff] %v391
                  %v393 = vld [vmem:[%s329 + $0x8b8] sm:$0xff]
                  %394 = vst [vmem:[%s330 + $0xf8] sm:$0xff] %v393
                  %v395 = vld [vmem:[%s329 + $0x900] sm:$0xff]
                  %396 = vst [vmem:[%s330 + $0x100] sm:$0xff] %v395
                  %v397 = vld [vmem:[%s329 + $0x948] sm:$0xff]
                  %398 = vst [vmem:[%s330 + $0x108] sm:$0xff] %v397
                  %v399 = vld [vmem:[%s329 + $0x990] sm:$0xff]
                  %400 = vst [vmem:[%s330 + $0x110] sm:$0xff] %v399
                  %v401 = vld [vmem:[%s329 + $0x9d8] sm:$0xff]
                  %402 = vst [vmem:[%s330 + $0x118] sm:$0xff] %v401
                  %v403 = vld [vmem:[%s329 + $0xa20] sm:$0xff]
                  %404 = vst [vmem:[%s330 + $0x120] sm:$0xff] %v403
                  %v405 = vld [vmem:[%s329 + $0xa68] sm:$0xff]
                  %406 = vst [vmem:[%s330 + $0x128] sm:$0xff] %v405
                  %v407 = vld [vmem:[%s329 + $0xab0] sm:$0xff]
                  %408 = vst [vmem:[%s330 + $0x130] sm:$0xff] %v407
                  %v409 = vld [vmem:[%s329 + $0xaf8] sm:$0xff]
                  %410 = vst [vmem:[%s330 + $0x138] sm:$0xff] %v409
                  %v411 = vld [vmem:[%s329 + $0xb40] sm:$0xff]
                  %412 = vst [vmem:[%s330 + $0x140] sm:$0xff] %v411
                  %v413 = vld [vmem:[%s329 + $0xb88] sm:$0xff]
                  %414 = vst [vmem:[%s330 + $0x148] sm:$0xff] %v413
                  %v415 = vld [vmem:[%s329 + $0xbd0] sm:$0xff]
                  %416 = vst [vmem:[%s330 + $0x150] sm:$0xff] %v415
                  %v417 = vld [vmem:[%s329 + $0xc18] sm:$0xff]
                  %418 = vst [vmem:[%s330 + $0x158] sm:$0xff] %v417
                  %v419 = vld [vmem:[%s329 + $0xc60] sm:$0xff]
                  %420 = vst [vmem:[%s330 + $0x160] sm:$0xff] %v419
                  %v421 = vld [vmem:[%s329 + $0xca8] sm:$0xff]
                  %422 = vst [vmem:[%s330 + $0x168] sm:$0xff] %v421
                  %v423 = vld [vmem:[%s329 + $0xcf0] sm:$0xff]
                  %424 = vst [vmem:[%s330 + $0x170] sm:$0xff] %v423
                  %v425 = vld [vmem:[%s329 + $0xd38] sm:$0xff]
                  %426 = vst [vmem:[%s330 + $0x178] sm:$0xff] %v425
                  %v427 = vld [vmem:[%s329 + $0xd80] sm:$0xff]
                  %428 = vst [vmem:[%s330 + $0x180] sm:$0xff] %v427
                  %v429 = vld [vmem:[%s329 + $0xdc8] sm:$0xff]
                  %430 = vst [vmem:[%s330 + $0x188] sm:$0xff] %v429
                  %v431 = vld [vmem:[%s329 + $0xe10] sm:$0xff]
                  %432 = vst [vmem:[%s330 + $0x190] sm:$0xff] %v431
                  %v433 = vld [vmem:[%s329 + $0xe58] sm:$0xff]
                  %434 = vst [vmem:[%s330 + $0x198] sm:$0xff] %v433
                  %v435 = vld [vmem:[%s329 + $0xea0] sm:$0xff]
                  %436 = vst [vmem:[%s330 + $0x1a0] sm:$0xff] %v435
                  %v437 = vld [vmem:[%s329 + $0xee8] sm:$0xff]
                  %438 = vst [vmem:[%s330 + $0x1a8] sm:$0xff] %v437
                  %v439 = vld [vmem:[%s329 + $0xf30] sm:$0xff]
                  %440 = vst [vmem:[%s330 + $0x1b0] sm:$0xff] %v439
                  %v441 = vld [vmem:[%s329 + $0xf78] sm:$0xff]
                  %442 = vst [vmem:[%s330 + $0x1b8] sm:$0xff] %v441
                  %v443 = vld [vmem:[%s329 + $0xfc0] sm:$0xff]
                  %444 = vst [vmem:[%s330 + $0x1c0] sm:$0xff] %v443
                  %v445 = vld [vmem:[%s329 + $0x1008] sm:$0xff]
                  %446 = vst [vmem:[%s330 + $0x1c8] sm:$0xff] %v445
                  %v447 = vld [vmem:[%s329 + $0x1050] sm:$0xff]
                  %448 = vst [vmem:[%s330 + $0x1d0] sm:$0xff] %v447
                  %v449 = vld [vmem:[%s329 + $0x1098] sm:$0xff]
                  %450 = vst [vmem:[%s330 + $0x1d8] sm:$0xff] %v449
                  %v451 = vld [vmem:[%s329 + $0x10e0] sm:$0xff]
                  %452 = vst [vmem:[%s330 + $0x1e0] sm:$0xff] %v451
                  %v453 = vld [vmem:[%s329 + $0x1128] sm:$0xff]
                  %454 = vst [vmem:[%s330 + $0x1e8] sm:$0xff] %v453
                  %v455 = vld [vmem:[%s329 + $0x1170] sm:$0xff]
                  %456 = vst [vmem:[%s330 + $0x1f0] sm:$0xff] %v455
                  %v457 = vld [vmem:[%s329 + $0x11b8] sm:$0xff]
                  %458 = vst [vmem:[%s330 + $0x1f8] sm:$0xff] %v457
                $region52: #{unet_forward.7} parent=46 // loop_footer
                  %s328 = sadd.s32 1, %s324
                $region53: #{unet_forward.7} parent=46 // loop_footer_branch
                  %323 = sbr.rel target = $region49
                $region54: #{unet_forward.7} parent=46 // loop_exit
                  _
              $region47: #{unet_forward.7} parent=31 // pred_fallthru
                _
              // Predicated region
              $region55: #{unet_forward.7} parent=31 // pred_check
                _
              $region56: #{unet_forward.7} parent=31 // pred_check_branch
                %460 = sbr.rel target = $region58
              $region57: #{unet_forward.7} parent=31 // pred_region
                _
              $region58: #{unet_forward.7} parent=31 // pred_fallthru
                _
            $region32: #{unet_forward.7} parent=27 // pred_fallthru
              _
            // Predicated region
            $region33: #{unet_forward.7} parent=27 // pred_check
              _
            $region34: #{unet_forward.7} parent=27 // pred_check_branch
              %182 = sbr.rel target = $region36
            $region35: #{unet_forward.7} parent=27 // pred_region
              %s184 = ssub.s32 256, 1
              loop: start=0, step=1, limit=1
              $region37: #{unet_forward.7} parent=35 // loop_pre_header
                _
              $region38: #{unet_forward.7} parent=35 // loop_header
                %s186 = sphi 0, %s190
                %p187 = scmp.ge.s32.totalorder %s186, 1
                %s191 = sphi %s176, %s176
                %s192 = sphi %s170, %s170
              $region39: #{unet_forward.7} parent=35 // loop_header_branch
                %189 = sbr.rel (%p187) target = $region43
              $region40: #{unet_forward.7} parent=35 // loop_body
                %v193 = vld [vmem:[%s191] sm:%s184]
                %194 = vst [vmem:[%s192] sm:%s184] %v193
                %v195 = vld [vmem:[%s191 + $0x48] sm:%s184]
                %196 = vst [vmem:[%s192 + $0x8] sm:%s184] %v195
                %v197 = vld [vmem:[%s191 + $0x90] sm:%s184]
                %198 = vst [vmem:[%s192 + $0x10] sm:%s184] %v197
                %v199 = vld [vmem:[%s191 + $0xd8] sm:%s184]
                %200 = vst [vmem:[%s192 + $0x18] sm:%s184] %v199
                %v201 = vld [vmem:[%s191 + $0x120] sm:%s184]
                %202 = vst [vmem:[%s192 + $0x20] sm:%s184] %v201
                %v203 = vld [vmem:[%s191 + $0x168] sm:%s184]
                %204 = vst [vmem:[%s192 + $0x28] sm:%s184] %v203
                %v205 = vld [vmem:[%s191 + $0x1b0] sm:%s184]
                %206 = vst [vmem:[%s192 + $0x30] sm:%s184] %v205
                %v207 = vld [vmem:[%s191 + $0x1f8] sm:%s184]
                %208 = vst [vmem:[%s192 + $0x38] sm:%s184] %v207
                %v209 = vld [vmem:[%s191 + $0x240] sm:%s184]
                %210 = vst [vmem:[%s192 + $0x40] sm:%s184] %v209
                %v211 = vld [vmem:[%s191 + $0x288] sm:%s184]
                %212 = vst [vmem:[%s192 + $0x48] sm:%s184] %v211
                %v213 = vld [vmem:[%s191 + $0x2d0] sm:%s184]
                %214 = vst [vmem:[%s192 + $0x50] sm:%s184] %v213
                %v215 = vld [vmem:[%s191 + $0x318] sm:%s184]
                %216 = vst [vmem:[%s192 + $0x58] sm:%s184] %v215
                %v217 = vld [vmem:[%s191 + $0x360] sm:%s184]
                %218 = vst [vmem:[%s192 + $0x60] sm:%s184] %v217
                %v219 = vld [vmem:[%s191 + $0x3a8] sm:%s184]
                %220 = vst [vmem:[%s192 + $0x68] sm:%s184] %v219
                %v221 = vld [vmem:[%s191 + $0x3f0] sm:%s184]
                %222 = vst [vmem:[%s192 + $0x70] sm:%s184] %v221
                %v223 = vld [vmem:[%s191 + $0x438] sm:%s184]
                %224 = vst [vmem:[%s192 + $0x78] sm:%s184] %v223
                %v225 = vld [vmem:[%s191 + $0x480] sm:%s184]
                %226 = vst [vmem:[%s192 + $0x80] sm:%s184] %v225
                %v227 = vld [vmem:[%s191 + $0x4c8] sm:%s184]
                %228 = vst [vmem:[%s192 + $0x88] sm:%s184] %v227
                %v229 = vld [vmem:[%s191 + $0x510] sm:%s184]
                %230 = vst [vmem:[%s192 + $0x90] sm:%s184] %v229
                %v231 = vld [vmem:[%s191 + $0x558] sm:%s184]
                %232 = vst [vmem:[%s192 + $0x98] sm:%s184] %v231
                %v233 = vld [vmem:[%s191 + $0x5a0] sm:%s184]
                %234 = vst [vmem:[%s192 + $0xa0] sm:%s184] %v233
                %v235 = vld [vmem:[%s191 + $0x5e8] sm:%s184]
                %236 = vst [vmem:[%s192 + $0xa8] sm:%s184] %v235
                %v237 = vld [vmem:[%s191 + $0x630] sm:%s184]
                %238 = vst [vmem:[%s192 + $0xb0] sm:%s184] %v237
                %v239 = vld [vmem:[%s191 + $0x678] sm:%s184]
                %240 = vst [vmem:[%s192 + $0xb8] sm:%s184] %v239
                %v241 = vld [vmem:[%s191 + $0x6c0] sm:%s184]
                %242 = vst [vmem:[%s192 + $0xc0] sm:%s184] %v241
                %v243 = vld [vmem:[%s191 + $0x708] sm:%s184]
                %244 = vst [vmem:[%s192 + $0xc8] sm:%s184] %v243
                %v245 = vld [vmem:[%s191 + $0x750] sm:%s184]
                %246 = vst [vmem:[%s192 + $0xd0] sm:%s184] %v245
                %v247 = vld [vmem:[%s191 + $0x798] sm:%s184]
                %248 = vst [vmem:[%s192 + $0xd8] sm:%s184] %v247
                %v249 = vld [vmem:[%s191 + $0x7e0] sm:%s184]
                %250 = vst [vmem:[%s192 + $0xe0] sm:%s184] %v249
                %v251 = vld [vmem:[%s191 + $0x828] sm:%s184]
                %252 = vst [vmem:[%s192 + $0xe8] sm:%s184] %v251
                %v253 = vld [vmem:[%s191 + $0x870] sm:%s184]
                %254 = vst [vmem:[%s192 + $0xf0] sm:%s184] %v253
                %v255 = vld [vmem:[%s191 + $0x8b8] sm:%s184]
                %256 = vst [vmem:[%s192 + $0xf8] sm:%s184] %v255
                %v257 = vld [vmem:[%s191 + $0x900] sm:%s184]
                %258 = vst [vmem:[%s192 + $0x100] sm:%s184] %v257
                %v259 = vld [vmem:[%s191 + $0x948] sm:%s184]
                %260 = vst [vmem:[%s192 + $0x108] sm:%s184] %v259
                %v261 = vld [vmem:[%s191 + $0x990] sm:%s184]
                %262 = vst [vmem:[%s192 + $0x110] sm:%s184] %v261
                %v263 = vld [vmem:[%s191 + $0x9d8] sm:%s184]
                %264 = vst [vmem:[%s192 + $0x118] sm:%s184] %v263
                %v265 = vld [vmem:[%s191 + $0xa20] sm:%s184]
                %266 = vst [vmem:[%s192 + $0x120] sm:%s184] %v265
                %v267 = vld [vmem:[%s191 + $0xa68] sm:%s184]
                %268 = vst [vmem:[%s192 + $0x128] sm:%s184] %v267
                %v269 = vld [vmem:[%s191 + $0xab0] sm:%s184]
                %270 = vst [vmem:[%s192 + $0x130] sm:%s184] %v269
                %v271 = vld [vmem:[%s191 + $0xaf8] sm:%s184]
                %272 = vst [vmem:[%s192 + $0x138] sm:%s184] %v271
                %v273 = vld [vmem:[%s191 + $0xb40] sm:%s184]
                %274 = vst [vmem:[%s192 + $0x140] sm:%s184] %v273
                %v275 = vld [vmem:[%s191 + $0xb88] sm:%s184]
                %276 = vst [vmem:[%s192 + $0x148] sm:%s184] %v275
                %v277 = vld [vmem:[%s191 + $0xbd0] sm:%s184]
                %278 = vst [vmem:[%s192 + $0x150] sm:%s184] %v277
                %v279 = vld [vmem:[%s191 + $0xc18] sm:%s184]
                %280 = vst [vmem:[%s192 + $0x158] sm:%s184] %v279
                %v281 = vld [vmem:[%s191 + $0xc60] sm:%s184]
                %282 = vst [vmem:[%s192 + $0x160] sm:%s184] %v281
                %v283 = vld [vmem:[%s191 + $0xca8] sm:%s184]
                %284 = vst [vmem:[%s192 + $0x168] sm:%s184] %v283
                %v285 = vld [vmem:[%s191 + $0xcf0] sm:%s184]
                %286 = vst [vmem:[%s192 + $0x170] sm:%s184] %v285
                %v287 = vld [vmem:[%s191 + $0xd38] sm:%s184]
                %288 = vst [vmem:[%s192 + $0x178] sm:%s184] %v287
                %v289 = vld [vmem:[%s191 + $0xd80] sm:%s184]
                %290 = vst [vmem:[%s192 + $0x180] sm:%s184] %v289
                %v291 = vld [vmem:[%s191 + $0xdc8] sm:%s184]
                %292 = vst [vmem:[%s192 + $0x188] sm:%s184] %v291
                %v293 = vld [vmem:[%s191 + $0xe10] sm:%s184]
                %294 = vst [vmem:[%s192 + $0x190] sm:%s184] %v293
                %v295 = vld [vmem:[%s191 + $0xe58] sm:%s184]
                %296 = vst [vmem:[%s192 + $0x198] sm:%s184] %v295
                %v297 = vld [vmem:[%s191 + $0xea0] sm:%s184]
                %298 = vst [vmem:[%s192 + $0x1a0] sm:%s184] %v297
                %v299 = vld [vmem:[%s191 + $0xee8] sm:%s184]
                %300 = vst [vmem:[%s192 + $0x1a8] sm:%s184] %v299
                %v301 = vld [vmem:[%s191 + $0xf30] sm:%s184]
                %302 = vst [vmem:[%s192 + $0x1b0] sm:%s184] %v301
                %v303 = vld [vmem:[%s191 + $0xf78] sm:%s184]
                %304 = vst [vmem:[%s192 + $0x1b8] sm:%s184] %v303
                %v305 = vld [vmem:[%s191 + $0xfc0] sm:%s184]
                %306 = vst [vmem:[%s192 + $0x1c0] sm:%s184] %v305
                %v307 = vld [vmem:[%s191 + $0x1008] sm:%s184]
                %308 = vst [vmem:[%s192 + $0x1c8] sm:%s184] %v307
                %v309 = vld [vmem:[%s191 + $0x1050] sm:%s184]
                %310 = vst [vmem:[%s192 + $0x1d0] sm:%s184] %v309
                %v311 = vld [vmem:[%s191 + $0x1098] sm:%s184]
                %312 = vst [vmem:[%s192 + $0x1d8] sm:%s184] %v311
                %v313 = vld [vmem:[%s191 + $0x10e0] sm:%s184]
                %314 = vst [vmem:[%s192 + $0x1e0] sm:%s184] %v313
                %v315 = vld [vmem:[%s191 + $0x1128] sm:%s184]
                %316 = vst [vmem:[%s192 + $0x1e8] sm:%s184] %v315
                %v317 = vld [vmem:[%s191 + $0x1170] sm:%s184]
                %318 = vst [vmem:[%s192 + $0x1f0] sm:%s184] %v317
                %v319 = vld [vmem:[%s191 + $0x11b8] sm:%s184]
                %320 = vst [vmem:[%s192 + $0x1f8] sm:%s184] %v319
              $region41: #{unet_forward.7} parent=35 // loop_footer
                %s190 = sadd.s32 1, %s186
              $region42: #{unet_forward.7} parent=35 // loop_footer_branch
                %185 = sbr.rel target = $region38
              $region43: #{unet_forward.7} parent=35 // loop_exit
                _
            $region36: #{unet_forward.7} parent=27 // pred_fallthru
              _
          $region28: #{unet_forward.7} parent=23 // pred_fallthru
            _
          %461 = vnop
        $region24: #{unet_forward.7} parent=19 // pred_fallthru
          _
        // Predicated region
        $region59: #{unet_forward.7} parent=19 // pred_check
          %p462 = pneg %p78
        $region60: #{unet_forward.7} parent=19 // pred_check_branch
          %464 = sbr.rel (%p462) target = $region62
        $region61: #{unet_forward.7} parent=19 // pred_region
          %s465 = smul.u32 32, %s18
          %p466 = scmp.lt.s32.totalorder %s465, 287
          %s467 = scalar_select %p466, %s465, 287
          %p468 = scmp.lt.s32.totalorder %s17, 0
          %s469 = scalar_select %p468, %s17, 0
          %s470 = sadd.s32 %s469, %s467
          %s471 = smul.addr %s470, 4
          %s472 = scalar_lea.vmem %s1, %s471
          %s473 = smul.u32 32, %s18
        $region62: #{unet_forward.7} parent=19 // pred_fallthru
          _
      $region20: #{unet_forward.7} parent=5 // pred_fallthru
        _
      %p474 = scmp.le.s32.totalorder 1, %s9
      %p475 = scmp.lt.s32.totalorder %s9, 10
      %p476 = pnand %p474, %p475
      %p477 = pneg %p476
      // Predicated region
      $region63: #{unet_forward.7} parent=5 // pred_check
        _
      $region64: #{unet_forward.7} parent=5 // pred_check_branch
        %479 = sbr.rel (%p476) target = $region66
      $region65: #{unet_forward.7} parent=5 // pred_region
        %s480 = ssub.s32 %s9, 1
        %s481 = sand.u32 %s43, 1
        %s482 = sand.u32 %s43, 1
        %s483 = smul.addr %s482, 512
        %s484 = scalar_lea.vmem [#allocation3], %s483
        // Predicated region
        $region67: #{unet_forward.7} parent=65 // pred_check
          %p485 = pneg %p56
        $region68: #{unet_forward.7} parent=65 // pred_check_branch
          %487 = sbr.rel (%p485) target = $region70
        $region69: #{unet_forward.7} parent=65 // pred_region
          _
        $region70: #{unet_forward.7} parent=65 // pred_fallthru
          _
        %s488 = sand.u32 %s43, 1
        %s489 = sand.u32 %s43, 1
        %s490 = smul.addr %s489, 512
        %s491 = scalar_lea.vmem [#allocation3], %s490
        %p492 = pneg %p56
        %p493 = pneg %p53
        %s494 = smul.u32 32, %s21
        %p495 = scmp.lt.s32.totalorder %s494, 287
        %s496 = scalar_select %p495, %s494, 287
        %p497 = scmp.lt.s32.totalorder %s20, 0
        %s498 = scalar_select %p497, %s20, 0
        %s499 = sadd.s32 %s498, %s496
        %s500 = smul.addr %s499, 4
        %s501 = scalar_lea.vmem %s1, %s500
        %p502 = pneg %p84
        %p503 = pneg %p81
        %p504 = scmp.lt.s32.totalorder %s20, 0
        %s505 = scalar_select %p504, %s20, 0
        %s506 = smul.addr %s505, 8
        %s507 = scalar_lea.vmem %s2, %s506
        %p508 = pneg %p110
        %p509 = pneg %p107
        %p510 = pneg %p138
        %p511 = pneg %p135
        %s512 = smul.u32 64, %s19
        %p513 = scmp.lt.s32.totalorder %s512, 63
        %s514 = scalar_select %p513, %s512, 63
        %p515 = scmp.lt.s32.totalorder %s20, 0
        %s516 = scalar_select %p515, %s20, 0
        %s517 = sadd.s32 %s516, %s514
        %s518 = smul.addr %s517, 8
        %s519 = scalar_lea.vmem %s3, %s518
        %s520 = smul.u32 64, %s19
        %s521 = smul.u32 2, %s21
        %s522 = smul.u32 32, %s21
        %p523 = scmp.lt.s32.totalorder %s522, 287
        %s524 = scalar_select %p523, %s522, 287
        %p525 = scmp.lt.s32.totalorder %s20, 0
        %s526 = scalar_select %p525, %s20, 0
        %s527 = sadd.s32 %s526, %s524
        %s528 = smul.addr %s527, 4
        %s529 = scalar_lea.vmem %s1, %s528
        %s530 = smul.u32 32, %s21
        %p531 = scmp.lt.s32.totalorder %s20, 0
        %s532 = scalar_select %p531, %s20, 0
        %s533 = smul.addr %s532, 8
        %s534 = scalar_lea.vmem %s2, %s533
        %s535 = smul.u32 64, %s19
        %p536 = scmp.lt.s32.totalorder %s535, 63
        %s537 = scalar_select %p536, %s535, 63
        %p538 = scmp.lt.s32.totalorder %s20, 0
        %s539 = scalar_select %p538, %s20, 0
        %s540 = sadd.s32 %s539, %s537
        %s541 = smul.addr %s540, 8
        %s542 = scalar_lea.vmem %s3, %s541
        %s543 = smul.u32 64, %s19
        %p544 = scmp.eq.s32.totalorder %s21, 0
        // Predicated region
        $region71: #{unet_forward.7} parent=65 // pred_check
          %p545 = pneg %p544
        $region72: #{unet_forward.7} parent=65 // pred_check_branch
          %547 = sbr.rel (%p545) target = $region74
        $region73: #{unet_forward.7} parent=65 // pred_region
          %v548 = vld [vmem:[%s534] sm:$0x1]
          %v549 = vperm.slane %v548, 0
          %550 = vst [vmem:[#allocation2] sm:$0xff] %v549
          %551 = vst [vmem:[#allocation2 + $0x8] sm:$0xff] %v549
          %552 = vst [vmem:[#allocation2 + $0x10] sm:$0xff] %v549
          %553 = vst [vmem:[#allocation2 + $0x18] sm:$0xff] %v549
          %554 = vst [vmem:[#allocation2 + $0x20] sm:$0xff] %v549
          %555 = vst [vmem:[#allocation2 + $0x28] sm:$0xff] %v549
          %556 = vst [vmem:[#allocation2 + $0x30] sm:$0xff] %v549
          %557 = vst [vmem:[#allocation2 + $0x38] sm:$0xff] %v549
          %558 = vst [vmem:[#allocation2 + $0x40] sm:$0xff] %v549
          %559 = vst [vmem:[#allocation2 + $0x48] sm:$0xff] %v549
          %560 = vst [vmem:[#allocation2 + $0x50] sm:$0xff] %v549
          %561 = vst [vmem:[#allocation2 + $0x58] sm:$0xff] %v549
          %562 = vst [vmem:[#allocation2 + $0x60] sm:$0xff] %v549
          %563 = vst [vmem:[#allocation2 + $0x68] sm:$0xff] %v549
          %564 = vst [vmem:[#allocation2 + $0x70] sm:$0xff] %v549
          %565 = vst [vmem:[#allocation2 + $0x78] sm:$0xff] %v549
          %566 = vst [vmem:[#allocation2 + $0x80] sm:$0xff] %v549
          %567 = vst [vmem:[#allocation2 + $0x88] sm:$0xff] %v549
          %568 = vst [vmem:[#allocation2 + $0x90] sm:$0xff] %v549
          %569 = vst [vmem:[#allocation2 + $0x98] sm:$0xff] %v549
          %570 = vst [vmem:[#allocation2 + $0xa0] sm:$0xff] %v549
          %571 = vst [vmem:[#allocation2 + $0xa8] sm:$0xff] %v549
          %572 = vst [vmem:[#allocation2 + $0xb0] sm:$0xff] %v549
          %573 = vst [vmem:[#allocation2 + $0xb8] sm:$0xff] %v549
          %574 = vst [vmem:[#allocation2 + $0xc0] sm:$0xff] %v549
          %575 = vst [vmem:[#allocation2 + $0xc8] sm:$0xff] %v549
          %576 = vst [vmem:[#allocation2 + $0xd0] sm:$0xff] %v549
          %577 = vst [vmem:[#allocation2 + $0xd8] sm:$0xff] %v549
          %578 = vst [vmem:[#allocation2 + $0xe0] sm:$0xff] %v549
          %579 = vst [vmem:[#allocation2 + $0xe8] sm:$0xff] %v549
          %580 = vst [vmem:[#allocation2 + $0xf0] sm:$0xff] %v549
          %581 = vst [vmem:[#allocation2 + $0xf8] sm:$0xff] %v549
          %582 = vst [vmem:[#allocation2 + $0x100] sm:$0xff] %v549
          %583 = vst [vmem:[#allocation2 + $0x108] sm:$0xff] %v549
          %584 = vst [vmem:[#allocation2 + $0x110] sm:$0xff] %v549
          %585 = vst [vmem:[#allocation2 + $0x118] sm:$0xff] %v549
          %586 = vst [vmem:[#allocation2 + $0x120] sm:$0xff] %v549
          %587 = vst [vmem:[#allocation2 + $0x128] sm:$0xff] %v549
          %588 = vst [vmem:[#allocation2 + $0x130] sm:$0xff] %v549
          %589 = vst [vmem:[#allocation2 + $0x138] sm:$0xff] %v549
          %590 = vst [vmem:[#allocation2 + $0x140] sm:$0xff] %v549
          %591 = vst [vmem:[#allocation2 + $0x148] sm:$0xff] %v549
          %592 = vst [vmem:[#allocation2 + $0x150] sm:$0xff] %v549
          %593 = vst [vmem:[#allocation2 + $0x158] sm:$0xff] %v549
          %594 = vst [vmem:[#allocation2 + $0x160] sm:$0xff] %v549
          %595 = vst [vmem:[#allocation2 + $0x168] sm:$0xff] %v549
          %596 = vst [vmem:[#allocation2 + $0x170] sm:$0xff] %v549
          %597 = vst [vmem:[#allocation2 + $0x178] sm:$0xff] %v549
          %598 = vst [vmem:[#allocation2 + $0x180] sm:$0xff] %v549
          %599 = vst [vmem:[#allocation2 + $0x188] sm:$0xff] %v549
          %600 = vst [vmem:[#allocation2 + $0x190] sm:$0xff] %v549
          %601 = vst [vmem:[#allocation2 + $0x198] sm:$0xff] %v549
          %602 = vst [vmem:[#allocation2 + $0x1a0] sm:$0xff] %v549
          %603 = vst [vmem:[#allocation2 + $0x1a8] sm:$0xff] %v549
          %604 = vst [vmem:[#allocation2 + $0x1b0] sm:$0xff] %v549
          %605 = vst [vmem:[#allocation2 + $0x1b8] sm:$0xff] %v549
          %606 = vst [vmem:[#allocation2 + $0x1c0] sm:$0xff] %v549
          %607 = vst [vmem:[#allocation2 + $0x1c8] sm:$0xff] %v549
          %608 = vst [vmem:[#allocation2 + $0x1d0] sm:$0xff] %v549
          %609 = vst [vmem:[#allocation2 + $0x1d8] sm:$0xff] %v549
          %610 = vst [vmem:[#allocation2 + $0x1e0] sm:$0xff] %v549
          %611 = vst [vmem:[#allocation2 + $0x1e8] sm:$0xff] %v549
          %612 = vst [vmem:[#allocation2 + $0x1f0] sm:$0xff] %v549
          %613 = vst [vmem:[#allocation2 + $0x1f8] sm:$0xff] %v549
        $region74: #{unet_forward.7} parent=65 // pred_fallthru
          _
        %v614 = vld [vmem:[#allocation2] sm:$0xff]
        %v615 = vld [vmem:[#allocation2 + $0x8] sm:$0xff]
        %v616 = vld [vmem:[#allocation2 + $0x10] sm:$0xff]
        %v617 = vld [vmem:[#allocation2 + $0x18] sm:$0xff]
        %v618 = vld [vmem:[#allocation2 + $0x20] sm:$0xff]
        %v619 = vld [vmem:[#allocation2 + $0x28] sm:$0xff]
        %v620 = vld [vmem:[#allocation2 + $0x30] sm:$0xff]
        %v621 = vld [vmem:[#allocation2 + $0x38] sm:$0xff]
        %v622 = vld [vmem:[#allocation2 + $0x40] sm:$0xff]
        %v623 = vld [vmem:[#allocation2 + $0x48] sm:$0xff]
        %v624 = vld [vmem:[#allocation2 + $0x50] sm:$0xff]
        %v625 = vld [vmem:[#allocation2 + $0x58] sm:$0xff]
        %v626 = vld [vmem:[#allocation2 + $0x60] sm:$0xff]
        %v627 = vld [vmem:[#allocation2 + $0x68] sm:$0xff]
        %v628 = vld [vmem:[#allocation2 + $0x70] sm:$0xff]
        %v629 = vld [vmem:[#allocation2 + $0x78] sm:$0xff]
        %v630 = vld [vmem:[#allocation2 + $0x80] sm:$0xff]
        %v631 = vld [vmem:[#allocation2 + $0x88] sm:$0xff]
        %v632 = vld [vmem:[#allocation2 + $0x90] sm:$0xff]
        %v633 = vld [vmem:[#allocation2 + $0x98] sm:$0xff]
        %v634 = vld [vmem:[#allocation2 + $0xa0] sm:$0xff]
        %v635 = vld [vmem:[#allocation2 + $0xa8] sm:$0xff]
        %v636 = vld [vmem:[#allocation2 + $0xb0] sm:$0xff]
        %v637 = vld [vmem:[#allocation2 + $0xb8] sm:$0xff]
        %v638 = vld [vmem:[#allocation2 + $0xc0] sm:$0xff]
        %v639 = vld [vmem:[#allocation2 + $0xc8] sm:$0xff]
        %v640 = vld [vmem:[#allocation2 + $0xd0] sm:$0xff]
        %v641 = vld [vmem:[#allocation2 + $0xd8] sm:$0xff]
        %v642 = vld [vmem:[#allocation2 + $0xe0] sm:$0xff]
        %v643 = vld [vmem:[#allocation2 + $0xe8] sm:$0xff]
        %v644 = vld [vmem:[#allocation2 + $0xf0] sm:$0xff]
        %v645 = vld [vmem:[#allocation2 + $0xf8] sm:$0xff]
        %v646 = vld [vmem:[#allocation2 + $0x100] sm:$0xff]
        %v647 = vld [vmem:[#allocation2 + $0x108] sm:$0xff]
        %v648 = vld [vmem:[#allocation2 + $0x110] sm:$0xff]
        %v649 = vld [vmem:[#allocation2 + $0x118] sm:$0xff]
        %v650 = vld [vmem:[#allocation2 + $0x120] sm:$0xff]
        %v651 = vld [vmem:[#allocation2 + $0x128] sm:$0xff]
        %v652 = vld [vmem:[#allocation2 + $0x130] sm:$0xff]
        %v653 = vld [vmem:[#allocation2 + $0x138] sm:$0xff]
        %v654 = vld [vmem:[#allocation2 + $0x140] sm:$0xff]
        %v655 = vld [vmem:[#allocation2 + $0x148] sm:$0xff]
        %v656 = vld [vmem:[#allocation2 + $0x150] sm:$0xff]
        %v657 = vld [vmem:[#allocation2 + $0x158] sm:$0xff]
        %v658 = vld [vmem:[#allocation2 + $0x160] sm:$0xff]
        %v659 = vld [vmem:[#allocation2 + $0x168] sm:$0xff]
        %v660 = vld [vmem:[#allocation2 + $0x170] sm:$0xff]
        %v661 = vld [vmem:[#allocation2 + $0x178] sm:$0xff]
        %v662 = vld [vmem:[#allocation2 + $0x180] sm:$0xff]
        %v663 = vld [vmem:[#allocation2 + $0x188] sm:$0xff]
        %v664 = vld [vmem:[#allocation2 + $0x190] sm:$0xff]
        %v665 = vld [vmem:[#allocation2 + $0x198] sm:$0xff]
        %v666 = vld [vmem:[#allocation2 + $0x1a0] sm:$0xff]
        %v667 = vld [vmem:[#allocation2 + $0x1a8] sm:$0xff]
        %v668 = vld [vmem:[#allocation2 + $0x1b0] sm:$0xff]
        %v669 = vld [vmem:[#allocation2 + $0x1b8] sm:$0xff]
        %v670 = vld [vmem:[#allocation2 + $0x1c0] sm:$0xff]
        %v671 = vld [vmem:[#allocation2 + $0x1c8] sm:$0xff]
        %v672 = vld [vmem:[#allocation2 + $0x1d0] sm:$0xff]
        %v673 = vld [vmem:[#allocation2 + $0x1d8] sm:$0xff]
        %v674 = vld [vmem:[#allocation2 + $0x1e0] sm:$0xff]
        %v675 = vld [vmem:[#allocation2 + $0x1e8] sm:$0xff]
        %v676 = vld [vmem:[#allocation2 + $0x1f0] sm:$0xff]
        %v677 = vld [vmem:[#allocation2 + $0x1f8] sm:$0xff]
        %v678 = vld [vmem:[%s484] sm:$0xff]
        %v679 = vld [vmem:[%s484 + $0x8] sm:$0xff]
        %v680 = vld [vmem:[%s484 + $0x10] sm:$0xff]
        %v681 = vld [vmem:[%s484 + $0x18] sm:$0xff]
        %v682 = vld [vmem:[%s484 + $0x20] sm:$0xff]
        %v683 = vld [vmem:[%s484 + $0x28] sm:$0xff]
        %v684 = vld [vmem:[%s484 + $0x30] sm:$0xff]
        %v685 = vld [vmem:[%s484 + $0x38] sm:$0xff]
        %v686 = vld [vmem:[%s484 + $0x40] sm:$0xff]
        %v687 = vld [vmem:[%s484 + $0x48] sm:$0xff]
        %v688 = vld [vmem:[%s484 + $0x50] sm:$0xff]
        %v689 = vld [vmem:[%s484 + $0x58] sm:$0xff]
        %v690 = vld [vmem:[%s484 + $0x60] sm:$0xff]
        %v691 = vld [vmem:[%s484 + $0x68] sm:$0xff]
        %v692 = vld [vmem:[%s484 + $0x70] sm:$0xff]
        %v693 = vld [vmem:[%s484 + $0x78] sm:$0xff]
        %v694 = vld [vmem:[%s484 + $0x80] sm:$0xff]
        %v695 = vld [vmem:[%s484 + $0x88] sm:$0xff]
        %v696 = vld [vmem:[%s484 + $0x90] sm:$0xff]
        %v697 = vld [vmem:[%s484 + $0x98] sm:$0xff]
        %v698 = vld [vmem:[%s484 + $0xa0] sm:$0xff]
        %v699 = vld [vmem:[%s484 + $0xa8] sm:$0xff]
        %v700 = vld [vmem:[%s484 + $0xb0] sm:$0xff]
        %v701 = vld [vmem:[%s484 + $0xb8] sm:$0xff]
        %v702 = vld [vmem:[%s484 + $0xc0] sm:$0xff]
        %v703 = vld [vmem:[%s484 + $0xc8] sm:$0xff]
        %v704 = vld [vmem:[%s484 + $0xd0] sm:$0xff]
        %v705 = vld [vmem:[%s484 + $0xd8] sm:$0xff]
        %v706 = vld [vmem:[%s484 + $0xe0] sm:$0xff]
        %v707 = vld [vmem:[%s484 + $0xe8] sm:$0xff]
        %v708 = vld [vmem:[%s484 + $0xf0] sm:$0xff]
        %v709 = vld [vmem:[%s484 + $0xf8] sm:$0xff]
        %v710 = vld [vmem:[%s484 + $0x100] sm:$0xff]
        %v711 = vld [vmem:[%s484 + $0x108] sm:$0xff]
        %v712 = vld [vmem:[%s484 + $0x110] sm:$0xff]
        %v713 = vld [vmem:[%s484 + $0x118] sm:$0xff]
        %v714 = vld [vmem:[%s484 + $0x120] sm:$0xff]
        %v715 = vld [vmem:[%s484 + $0x128] sm:$0xff]
        %v716 = vld [vmem:[%s484 + $0x130] sm:$0xff]
        %v717 = vld [vmem:[%s484 + $0x138] sm:$0xff]
        %v718 = vld [vmem:[%s484 + $0x140] sm:$0xff]
        %v719 = vld [vmem:[%s484 + $0x148] sm:$0xff]
        %v720 = vld [vmem:[%s484 + $0x150] sm:$0xff]
        %v721 = vld [vmem:[%s484 + $0x158] sm:$0xff]
        %v722 = vld [vmem:[%s484 + $0x160] sm:$0xff]
        %v723 = vld [vmem:[%s484 + $0x168] sm:$0xff]
        %v724 = vld [vmem:[%s484 + $0x170] sm:$0xff]
        %v725 = vld [vmem:[%s484 + $0x178] sm:$0xff]
        %v726 = vld [vmem:[%s484 + $0x180] sm:$0xff]
        %v727 = vld [vmem:[%s484 + $0x188] sm:$0xff]
        %v728 = vld [vmem:[%s484 + $0x190] sm:$0xff]
        %v729 = vld [vmem:[%s484 + $0x198] sm:$0xff]
        %v730 = vld [vmem:[%s484 + $0x1a0] sm:$0xff]
        %v731 = vld [vmem:[%s484 + $0x1a8] sm:$0xff]
        %v732 = vld [vmem:[%s484 + $0x1b0] sm:$0xff]
        %v733 = vld [vmem:[%s484 + $0x1b8] sm:$0xff]
        %v734 = vld [vmem:[%s484 + $0x1c0] sm:$0xff]
        %v735 = vld [vmem:[%s484 + $0x1c8] sm:$0xff]
        %v736 = vld [vmem:[%s484 + $0x1d0] sm:$0xff]
        %v737 = vld [vmem:[%s484 + $0x1d8] sm:$0xff]
        %v738 = vld [vmem:[%s484 + $0x1e0] sm:$0xff]
        %v739 = vld [vmem:[%s484 + $0x1e8] sm:$0xff]
        %v740 = vld [vmem:[%s484 + $0x1f0] sm:$0xff]
        %v741 = vld [vmem:[%s484 + $0x1f8] sm:$0xff]
        %v742 = vld [vmem:[%s529] sm:$0xf]
        %v743 = vld [vmem:[%s529 + $0x4] sm:$0xf]
        %v744 = vld [vmem:[%s529 + $0x8] sm:$0xf]
        %v745 = vld [vmem:[%s529 + $0xc] sm:$0xf]
        %v746 = vld [vmem:[%s529 + $0x10] sm:$0xf]
        %v747 = vld [vmem:[%s529 + $0x14] sm:$0xf]
        %v748 = vld [vmem:[%s529 + $0x18] sm:$0xf]
        %v749 = vld [vmem:[%s529 + $0x1c] sm:$0xf]
        %v750 = vld [vmem:[%s529 + $0x20] sm:$0xf]
        %v751 = vld [vmem:[%s529 + $0x24] sm:$0xf]
        %v752 = vld [vmem:[%s529 + $0x28] sm:$0xf]
        %v753 = vld [vmem:[%s529 + $0x2c] sm:$0xf]
        %v754 = vld [vmem:[%s529 + $0x30] sm:$0xf]
        %v755 = vld [vmem:[%s529 + $0x34] sm:$0xf]
        %v756 = vld [vmem:[%s529 + $0x38] sm:$0xf]
        %v757 = vld [vmem:[%s529 + $0x3c] sm:$0xf]
        %v758 = vld [vmem:[%s529 + $0x40] sm:$0xf]
        %v759 = vld [vmem:[%s529 + $0x44] sm:$0xf]
        %v760 = vld [vmem:[%s529 + $0x48] sm:$0xf]
        %v761 = vld [vmem:[%s529 + $0x4c] sm:$0xf]
        %v762 = vld [vmem:[%s529 + $0x50] sm:$0xf]
        %v763 = vld [vmem:[%s529 + $0x54] sm:$0xf]
        %v764 = vld [vmem:[%s529 + $0x58] sm:$0xf]
        %v765 = vld [vmem:[%s529 + $0x5c] sm:$0xf]
        %v766 = vld [vmem:[%s529 + $0x60] sm:$0xf]
        %v767 = vld [vmem:[%s529 + $0x64] sm:$0xf]
        %v768 = vld [vmem:[%s529 + $0x68] sm:$0xf]
        %v769 = vld [vmem:[%s529 + $0x6c] sm:$0xf]
        %v770 = vld [vmem:[%s529 + $0x70] sm:$0xf]
        %v771 = vld [vmem:[%s529 + $0x74] sm:$0xf]
        %v772 = vld [vmem:[%s529 + $0x78] sm:$0xf]
        %v773 = vld [vmem:[%s529 + $0x7c] sm:$0xf]
        %v838 = vunpack.c.l.b16 %v678
        %v839 = vunpack.c.h.b16 %v678
        %v840 = vunpack.c.l.b16 %v679
        %v841 = vunpack.c.h.b16 %v679
        %v842 = vunpack.c.l.b16 %v680
        %v843 = vunpack.c.h.b16 %v680
        %v844 = vunpack.c.l.b16 %v681
        %v845 = vunpack.c.h.b16 %v681
        %v846 = vunpack.c.l.b16 %v682
        %v847 = vunpack.c.h.b16 %v682
        %v848 = vunpack.c.l.b16 %v683
        %v849 = vunpack.c.h.b16 %v683
        %v850 = vunpack.c.l.b16 %v684
        %v851 = vunpack.c.h.b16 %v684
        %v852 = vunpack.c.l.b16 %v685
        %v853 = vunpack.c.h.b16 %v685
        %v854 = vunpack.c.l.b16 %v686
        %v855 = vunpack.c.h.b16 %v686
        %v856 = vunpack.c.l.b16 %v687
        %v857 = vunpack.c.h.b16 %v687
        %v858 = vunpack.c.l.b16 %v688
        %v859 = vunpack.c.h.b16 %v688
        %v860 = vunpack.c.l.b16 %v689
        %v861 = vunpack.c.h.b16 %v689
        %v862 = vunpack.c.l.b16 %v690
        %v863 = vunpack.c.h.b16 %v690
        %v864 = vunpack.c.l.b16 %v691
        %v865 = vunpack.c.h.b16 %v691
        %v866 = vunpack.c.l.b16 %v692
        %v867 = vunpack.c.h.b16 %v692
        %v868 = vunpack.c.l.b16 %v693
        %v869 = vunpack.c.h.b16 %v693
        %v870 = vunpack.c.l.b16 %v694
        %v871 = vunpack.c.h.b16 %v694
        %v872 = vunpack.c.l.b16 %v695
        %v873 = vunpack.c.h.b16 %v695
        %v874 = vunpack.c.l.b16 %v696
        %v875 = vunpack.c.h.b16 %v696
        %v876 = vunpack.c.l.b16 %v697
        %v877 = vunpack.c.h.b16 %v697
        %v878 = vunpack.c.l.b16 %v698
        %v879 = vunpack.c.h.b16 %v698
        %v880 = vunpack.c.l.b16 %v699
        %v881 = vunpack.c.h.b16 %v699
        %v882 = vunpack.c.l.b16 %v700
        %v883 = vunpack.c.h.b16 %v700
        %v884 = vunpack.c.l.b16 %v701
        %v885 = vunpack.c.h.b16 %v701
        %v886 = vunpack.c.l.b16 %v702
        %v887 = vunpack.c.h.b16 %v702
        %v888 = vunpack.c.l.b16 %v703
        %v889 = vunpack.c.h.b16 %v703
        %v890 = vunpack.c.l.b16 %v704
        %v891 = vunpack.c.h.b16 %v704
        %v892 = vunpack.c.l.b16 %v705
        %v893 = vunpack.c.h.b16 %v705
        %v894 = vunpack.c.l.b16 %v706
        %v895 = vunpack.c.h.b16 %v706
        %v896 = vunpack.c.l.b16 %v707
        %v897 = vunpack.c.h.b16 %v707
        %v898 = vunpack.c.l.b16 %v708
        %v899 = vunpack.c.h.b16 %v708
        %v900 = vunpack.c.l.b16 %v709
        %v901 = vunpack.c.h.b16 %v709
        %v902 = vunpack.c.l.b16 %v710
        %v903 = vunpack.c.h.b16 %v710
        %v904 = vunpack.c.l.b16 %v711
        %v905 = vunpack.c.h.b16 %v711
        %v906 = vunpack.c.l.b16 %v712
        %v907 = vunpack.c.h.b16 %v712
        %v908 = vunpack.c.l.b16 %v713
        %v909 = vunpack.c.h.b16 %v713
        %v910 = vunpack.c.l.b16 %v714
        %v911 = vunpack.c.h.b16 %v714
        %v912 = vunpack.c.l.b16 %v715
        %v913 = vunpack.c.h.b16 %v715
        %v914 = vunpack.c.l.b16 %v716
        %v915 = vunpack.c.h.b16 %v716
        %v916 = vunpack.c.l.b16 %v717
        %v917 = vunpack.c.h.b16 %v717
        %v918 = vunpack.c.l.b16 %v718
        %v919 = vunpack.c.h.b16 %v718
        %v920 = vunpack.c.l.b16 %v719
        %v921 = vunpack.c.h.b16 %v719
        %v922 = vunpack.c.l.b16 %v720
        %v923 = vunpack.c.h.b16 %v720
        %v924 = vunpack.c.l.b16 %v721
        %v925 = vunpack.c.h.b16 %v721
        %v926 = vunpack.c.l.b16 %v722
        %v927 = vunpack.c.h.b16 %v722
        %v928 = vunpack.c.l.b16 %v723
        %v929 = vunpack.c.h.b16 %v723
        %v930 = vunpack.c.l.b16 %v724
        %v931 = vunpack.c.h.b16 %v724
        %v932 = vunpack.c.l.b16 %v725
        %v933 = vunpack.c.h.b16 %v725
        %v934 = vunpack.c.l.b16 %v726
        %v935 = vunpack.c.h.b16 %v726
        %v936 = vunpack.c.l.b16 %v727
        %v937 = vunpack.c.h.b16 %v727
        %v938 = vunpack.c.l.b16 %v728
        %v939 = vunpack.c.h.b16 %v728
        %v940 = vunpack.c.l.b16 %v729
        %v941 = vunpack.c.h.b16 %v729
        %v942 = vunpack.c.l.b16 %v730
        %v943 = vunpack.c.h.b16 %v730
        %v944 = vunpack.c.l.b16 %v731
        %v945 = vunpack.c.h.b16 %v731
        %v946 = vunpack.c.l.b16 %v732
        %v947 = vunpack.c.h.b16 %v732
        %v948 = vunpack.c.l.b16 %v733
        %v949 = vunpack.c.h.b16 %v733
        %v950 = vunpack.c.l.b16 %v734
        %v951 = vunpack.c.h.b16 %v734
        %v952 = vunpack.c.l.b16 %v735
        %v953 = vunpack.c.h.b16 %v735
        %v954 = vunpack.c.l.b16 %v736
        %v955 = vunpack.c.h.b16 %v736
        %v956 = vunpack.c.l.b16 %v737
        %v957 = vunpack.c.h.b16 %v737
        %v958 = vunpack.c.l.b16 %v738
        %v959 = vunpack.c.h.b16 %v738
        %v960 = vunpack.c.l.b16 %v739
        %v961 = vunpack.c.h.b16 %v739
        %v962 = vunpack.c.l.b16 %v740
        %v963 = vunpack.c.h.b16 %v740
        %v964 = vunpack.c.l.b16 %v741
        %v965 = vunpack.c.h.b16 %v741
        %v966 = vpack.c.b16 %v840, %v838
        %v967 = vpack.c.b16 %v841, %v839
        %v968 = vpack.c.b16 %v844, %v842
        %v969 = vpack.c.b16 %v845, %v843
        %v970 = vpack.c.b16 %v848, %v846
        %v971 = vpack.c.b16 %v849, %v847
        %v972 = vpack.c.b16 %v852, %v850
        %v973 = vpack.c.b16 %v853, %v851
        %v974 = vpack.c.b16 %v856, %v854
        %v975 = vpack.c.b16 %v857, %v855
        %v976 = vpack.c.b16 %v860, %v858
        %v977 = vpack.c.b16 %v861, %v859
        %v978 = vpack.c.b16 %v864, %v862
        %v979 = vpack.c.b16 %v865, %v863
        %v980 = vpack.c.b16 %v868, %v866
        %v981 = vpack.c.b16 %v869, %v867
        %v982 = vpack.c.b16 %v872, %v870
        %v983 = vpack.c.b16 %v873, %v871
        %v984 = vpack.c.b16 %v876, %v874
        %v985 = vpack.c.b16 %v877, %v875
        %v986 = vpack.c.b16 %v880, %v878
        %v987 = vpack.c.b16 %v881, %v879
        %v988 = vpack.c.b16 %v884, %v882
        %v989 = vpack.c.b16 %v885, %v883
        %v990 = vpack.c.b16 %v888, %v886
        %v991 = vpack.c.b16 %v889, %v887
        %v992 = vpack.c.b16 %v892, %v890
        %v993 = vpack.c.b16 %v893, %v891
        %v994 = vpack.c.b16 %v896, %v894
        %v995 = vpack.c.b16 %v897, %v895
        %v996 = vpack.c.b16 %v900, %v898
        %v997 = vpack.c.b16 %v901, %v899
        %v998 = vpack.c.b16 %v904, %v902
        %v999 = vpack.c.b16 %v905, %v903
        %v1000 = vpack.c.b16 %v908, %v906
        %v1001 = vpack.c.b16 %v909, %v907
        %v1002 = vpack.c.b16 %v912, %v910
        %v1003 = vpack.c.b16 %v913, %v911
        %v1004 = vpack.c.b16 %v916, %v914
        %v1005 = vpack.c.b16 %v917, %v915
        %v1006 = vpack.c.b16 %v920, %v918
        %v1007 = vpack.c.b16 %v921, %v919
        %v1008 = vpack.c.b16 %v924, %v922
        %v1009 = vpack.c.b16 %v925, %v923
        %v1010 = vpack.c.b16 %v928, %v926
        %v1011 = vpack.c.b16 %v929, %v927
        %v1012 = vpack.c.b16 %v932, %v930
        %v1013 = vpack.c.b16 %v933, %v931
        %v1014 = vpack.c.b16 %v936, %v934
        %v1015 = vpack.c.b16 %v937, %v935
        %v1016 = vpack.c.b16 %v940, %v938
        %v1017 = vpack.c.b16 %v941, %v939
        %v1018 = vpack.c.b16 %v944, %v942
        %v1019 = vpack.c.b16 %v945, %v943
        %v1020 = vpack.c.b16 %v948, %v946
        %v1021 = vpack.c.b16 %v949, %v947
        %v1022 = vpack.c.b16 %v952, %v950
        %v1023 = vpack.c.b16 %v953, %v951
        %v1024 = vpack.c.b16 %v956, %v954
        %v1025 = vpack.c.b16 %v957, %v955
        %v1026 = vpack.c.b16 %v960, %v958
        %v1027 = vpack.c.b16 %v961, %v959
        %v1028 = vpack.c.b16 %v964, %v962
        %v1029 = vpack.c.b16 %v965, %v963
        %v1126 = vunpack.c.l.b16 %v742
        %v1127 = vunpack.c.l.b16 %v743
        %v1128 = vunpack.c.l.b16 %v744
        %v1129 = vunpack.c.l.b16 %v745
        %v1130 = vunpack.c.l.b16 %v746
        %v1131 = vunpack.c.l.b16 %v747
        %v1132 = vunpack.c.l.b16 %v748
        %v1133 = vunpack.c.l.b16 %v749
        %v1134 = vunpack.c.l.b16 %v750
        %v1135 = vunpack.c.l.b16 %v751
        %v1136 = vunpack.c.l.b16 %v752
        %v1137 = vunpack.c.l.b16 %v753
        %v1138 = vunpack.c.l.b16 %v754
        %v1139 = vunpack.c.l.b16 %v755
        %v1140 = vunpack.c.l.b16 %v756
        %v1141 = vunpack.c.l.b16 %v757
        %v1142 = vunpack.c.l.b16 %v758
        %v1143 = vunpack.c.l.b16 %v759
        %v1144 = vunpack.c.l.b16 %v760
        %v1145 = vunpack.c.l.b16 %v761
        %v1146 = vunpack.c.l.b16 %v762
        %v1147 = vunpack.c.l.b16 %v763
        %v1148 = vunpack.c.l.b16 %v764
        %v1149 = vunpack.c.l.b16 %v765
        %v1150 = vunpack.c.l.b16 %v766
        %v1151 = vunpack.c.l.b16 %v767
        %v1152 = vunpack.c.l.b16 %v768
        %v1153 = vunpack.c.l.b16 %v769
        %v1154 = vunpack.c.l.b16 %v770
        %v1155 = vunpack.c.l.b16 %v771
        %v1156 = vunpack.c.l.b16 %v772
        %v1157 = vunpack.c.l.b16 %v773
        %v1158 = vpack.c.b16 %v1127, %v1126
        %v1159 = vpack.c.b16 %v1129, %v1128
        %v1160 = vpack.c.b16 %v1131, %v1130
        %v1161 = vpack.c.b16 %v1133, %v1132
        %v1162 = vpack.c.b16 %v1135, %v1134
        %v1163 = vpack.c.b16 %v1137, %v1136
        %v1164 = vpack.c.b16 %v1139, %v1138
        %v1165 = vpack.c.b16 %v1141, %v1140
        %v1166 = vpack.c.b16 %v1143, %v1142
        %v1167 = vpack.c.b16 %v1145, %v1144
        %v1168 = vpack.c.b16 %v1147, %v1146
        %v1169 = vpack.c.b16 %v1149, %v1148
        %v1170 = vpack.c.b16 %v1151, %v1150
        %v1171 = vpack.c.b16 %v1153, %v1152
        %v1172 = vpack.c.b16 %v1155, %v1154
        %v1173 = vpack.c.b16 %v1157, %v1156
        %1190 = vmatpush.bf16.msra.mxu0 %v1165
        %1191 = vmatpush.bf16.msra.mxu0 %v1164
        %1192 = vmatpush.bf16.msra.mxu0 %v1163
        %1193 = vmatpush.bf16.msra.mxu0 %v1162
        %1194 = vmatpush.bf16.msra.mxu0 %v1161
        %1195 = vmatpush.bf16.msra.mxu0 %v1160
        %1196 = vmatpush.bf16.msra.mxu0 %v1159
        %1197 = vmatpush.bf16.msra.mxu0 %v1158
        %1198 = vmatmul.bf16.gmra.mxu0 %v966
        %v1199 = vpop.f32.mrf.mxu0
        %v1200 = vadd.f32 0.0, %v1199
        %v1201 = vpop.f32.mrf.mxu0
        %v1202 = vadd.f32 0.0, %v1201
        %1203 = vmatmul.bf16.gmra.mxu0 %v968
        %v1204 = vpop.f32.mrf.mxu0
        %v1205 = vadd.f32 0.0, %v1204
        %v1206 = vpop.f32.mrf.mxu0
        %v1207 = vadd.f32 0.0, %v1206
        %1208 = vmatmul.bf16.gmra.mxu0 %v970
        %v1209 = vpop.f32.mrf.mxu0
        %v1210 = vadd.f32 0.0, %v1209
        %v1211 = vpop.f32.mrf.mxu0
        %v1212 = vadd.f32 0.0, %v1211
        %1213 = vmatmul.bf16.gmra.mxu0 %v972
        %v1214 = vpop.f32.mrf.mxu0
        %v1215 = vadd.f32 0.0, %v1214
        %v1216 = vpop.f32.mrf.mxu0
        %v1217 = vadd.f32 0.0, %v1216
        %1218 = vmatmul.bf16.gmra.mxu0 %v974
        %v1219 = vpop.f32.mrf.mxu0
        %v1220 = vadd.f32 0.0, %v1219
        %v1221 = vpop.f32.mrf.mxu0
        %v1222 = vadd.f32 0.0, %v1221
        %1223 = vmatmul.bf16.gmra.mxu0 %v976
        %v1224 = vpop.f32.mrf.mxu0
        %v1225 = vadd.f32 0.0, %v1224
        %v1226 = vpop.f32.mrf.mxu0
        %v1227 = vadd.f32 0.0, %v1226
        %1228 = vmatmul.bf16.gmra.mxu0 %v978
        %v1229 = vpop.f32.mrf.mxu0
        %v1230 = vadd.f32 0.0, %v1229
        %v1231 = vpop.f32.mrf.mxu0
        %v1232 = vadd.f32 0.0, %v1231
        %1233 = vmatmul.bf16.gmra.mxu0 %v980
        %v1234 = vpop.f32.mrf.mxu0
        %v1235 = vadd.f32 0.0, %v1234
        %v1236 = vpop.f32.mrf.mxu0
        %v1237 = vadd.f32 0.0, %v1236
        %1238 = vmatmul.bf16.gmra.mxu0 %v982
        %v1239 = vpop.f32.mrf.mxu0
        %v1240 = vadd.f32 0.0, %v1239
        %v1241 = vpop.f32.mrf.mxu0
        %v1242 = vadd.f32 0.0, %v1241
        %1243 = vmatmul.bf16.gmra.mxu0 %v984
        %v1244 = vpop.f32.mrf.mxu0
        %v1245 = vadd.f32 0.0, %v1244
        %v1246 = vpop.f32.mrf.mxu0
        %v1247 = vadd.f32 0.0, %v1246
        %1248 = vmatmul.bf16.gmra.mxu0 %v986
        %v1249 = vpop.f32.mrf.mxu0
        %v1250 = vadd.f32 0.0, %v1249
        %v1251 = vpop.f32.mrf.mxu0
        %v1252 = vadd.f32 0.0, %v1251
        %1253 = vmatmul.bf16.gmra.mxu0 %v988
        %v1254 = vpop.f32.mrf.mxu0
        %v1255 = vadd.f32 0.0, %v1254
        %v1256 = vpop.f32.mrf.mxu0
        %v1257 = vadd.f32 0.0, %v1256
        %1258 = vmatmul.bf16.gmra.mxu0 %v990
        %v1259 = vpop.f32.mrf.mxu0
        %v1260 = vadd.f32 0.0, %v1259
        %v1261 = vpop.f32.mrf.mxu0
        %v1262 = vadd.f32 0.0, %v1261
        %1263 = vmatmul.bf16.gmra.mxu0 %v992
        %v1264 = vpop.f32.mrf.mxu0
        %v1265 = vadd.f32 0.0, %v1264
        %v1266 = vpop.f32.mrf.mxu0
        %v1267 = vadd.f32 0.0, %v1266
        %1268 = vmatmul.bf16.gmra.mxu0 %v994
        %v1269 = vpop.f32.mrf.mxu0
        %v1270 = vadd.f32 0.0, %v1269
        %v1271 = vpop.f32.mrf.mxu0
        %v1272 = vadd.f32 0.0, %v1271
        %1273 = vmatmul.bf16.gmra.mxu0 %v996
        %v1274 = vpop.f32.mrf.mxu0
        %v1275 = vadd.f32 0.0, %v1274
        %v1276 = vpop.f32.mrf.mxu0
        %v1277 = vadd.f32 0.0, %v1276
        %1278 = vmatmul.bf16.gmra.mxu0 %v998
        %v1279 = vpop.f32.mrf.mxu0
        %v1280 = vadd.f32 0.0, %v1279
        %v1281 = vpop.f32.mrf.mxu0
        %v1282 = vadd.f32 0.0, %v1281
        %1283 = vmatmul.bf16.gmra.mxu0 %v1000
        %v1284 = vpop.f32.mrf.mxu0
        %v1285 = vadd.f32 0.0, %v1284
        %v1286 = vpop.f32.mrf.mxu0
        %v1287 = vadd.f32 0.0, %v1286
        %1288 = vmatmul.bf16.gmra.mxu0 %v1002
        %v1289 = vpop.f32.mrf.mxu0
        %v1290 = vadd.f32 0.0, %v1289
        %v1291 = vpop.f32.mrf.mxu0
        %v1292 = vadd.f32 0.0, %v1291
        %1293 = vmatmul.bf16.gmra.mxu0 %v1004
        %v1294 = vpop.f32.mrf.mxu0
        %v1295 = vadd.f32 0.0, %v1294
        %v1296 = vpop.f32.mrf.mxu0
        %v1297 = vadd.f32 0.0, %v1296
        %1298 = vmatmul.bf16.gmra.mxu0 %v1006
        %v1299 = vpop.f32.mrf.mxu0
        %v1300 = vadd.f32 0.0, %v1299
        %v1301 = vpop.f32.mrf.mxu0
        %v1302 = vadd.f32 0.0, %v1301
        %1303 = vmatmul.bf16.gmra.mxu0 %v1008
        %v1304 = vpop.f32.mrf.mxu0
        %v1305 = vadd.f32 0.0, %v1304
        %v1306 = vpop.f32.mrf.mxu0
        %v1307 = vadd.f32 0.0, %v1306
        %1308 = vmatmul.bf16.gmra.mxu0 %v1010
        %v1309 = vpop.f32.mrf.mxu0
        %v1310 = vadd.f32 0.0, %v1309
        %v1311 = vpop.f32.mrf.mxu0
        %v1312 = vadd.f32 0.0, %v1311
        %1313 = vmatmul.bf16.gmra.mxu0 %v1012
        %v1314 = vpop.f32.mrf.mxu0
        %v1315 = vadd.f32 0.0, %v1314
        %v1316 = vpop.f32.mrf.mxu0
        %v1317 = vadd.f32 0.0, %v1316
        %1318 = vmatmul.bf16.gmra.mxu0 %v1014
        %v1319 = vpop.f32.mrf.mxu0
        %v1320 = vadd.f32 0.0, %v1319
        %v1321 = vpop.f32.mrf.mxu0
        %v1322 = vadd.f32 0.0, %v1321
        %1323 = vmatmul.bf16.gmra.mxu0 %v1016
        %v1324 = vpop.f32.mrf.mxu0
        %v1325 = vadd.f32 0.0, %v1324
        %v1326 = vpop.f32.mrf.mxu0
        %v1327 = vadd.f32 0.0, %v1326
        %1328 = vmatmul.bf16.gmra.mxu0 %v1018
        %v1329 = vpop.f32.mrf.mxu0
        %v1330 = vadd.f32 0.0, %v1329
        %v1331 = vpop.f32.mrf.mxu0
        %v1332 = vadd.f32 0.0, %v1331
        %1333 = vmatmul.bf16.gmra.mxu0 %v1020
        %v1334 = vpop.f32.mrf.mxu0
        %v1335 = vadd.f32 0.0, %v1334
        %v1336 = vpop.f32.mrf.mxu0
        %v1337 = vadd.f32 0.0, %v1336
        %1338 = vmatmul.bf16.gmra.mxu0 %v1022
        %v1339 = vpop.f32.mrf.mxu0
        %v1340 = vadd.f32 0.0, %v1339
        %v1341 = vpop.f32.mrf.mxu0
        %v1342 = vadd.f32 0.0, %v1341
        %1343 = vmatmul.bf16.gmra.mxu0 %v1024
        %v1344 = vpop.f32.mrf.mxu0
        %v1345 = vadd.f32 0.0, %v1344
        %v1346 = vpop.f32.mrf.mxu0
        %v1347 = vadd.f32 0.0, %v1346
        %1348 = vmatmul.bf16.gmra.mxu0 %v1026
        %v1349 = vpop.f32.mrf.mxu0
        %v1350 = vadd.f32 0.0, %v1349
        %v1351 = vpop.f32.mrf.mxu0
        %v1352 = vadd.f32 0.0, %v1351
        %1353 = vmatmul.bf16.gmra.mxu0 %v1028
        %v1354 = vpop.f32.mrf.mxu0
        %v1355 = vadd.f32 0.0, %v1354
        %v1356 = vpop.f32.mrf.mxu0
        %v1357 = vadd.f32 0.0, %v1356
        %1358 = vdwg.mxu0
        %1359 = vmatpush.bf16.msra.mxu0 %v1173
        %1360 = vmatpush.bf16.msra.mxu0 %v1172
        %1361 = vmatpush.bf16.msra.mxu0 %v1171
        %1362 = vmatpush.bf16.msra.mxu0 %v1170
        %1363 = vmatpush.bf16.msra.mxu0 %v1169
        %1364 = vmatpush.bf16.msra.mxu0 %v1168
        %1365 = vmatpush.bf16.msra.mxu0 %v1167
        %1366 = vmatpush.bf16.msra.mxu0 %v1166
        %1367 = vmatmul.bf16.gmra.mxu0 %v967
        %v1368 = vpop.f32.mrf.mxu0
        %v1369 = vadd.f32 %v1200, %v1368
        %v1370 = vpop.f32.mrf.mxu0
        %v1371 = vadd.f32 %v1202, %v1370
        %1372 = vmatmul.bf16.gmra.mxu0 %v969
        %v1373 = vpop.f32.mrf.mxu0
        %v1374 = vadd.f32 %v1205, %v1373
        %v1375 = vpop.f32.mrf.mxu0
        %v1376 = vadd.f32 %v1207, %v1375
        %1377 = vmatmul.bf16.gmra.mxu0 %v971
        %v1378 = vpop.f32.mrf.mxu0
        %v1379 = vadd.f32 %v1210, %v1378
        %v1380 = vpop.f32.mrf.mxu0
        %v1381 = vadd.f32 %v1212, %v1380
        %1382 = vmatmul.bf16.gmra.mxu0 %v973
        %v1383 = vpop.f32.mrf.mxu0
        %v1384 = vadd.f32 %v1215, %v1383
        %v1385 = vpop.f32.mrf.mxu0
        %v1386 = vadd.f32 %v1217, %v1385
        %1387 = vmatmul.bf16.gmra.mxu0 %v975
        %v1388 = vpop.f32.mrf.mxu0
        %v1389 = vadd.f32 %v1220, %v1388
        %v1390 = vpop.f32.mrf.mxu0
        %v1391 = vadd.f32 %v1222, %v1390
        %1392 = vmatmul.bf16.gmra.mxu0 %v977
        %v1393 = vpop.f32.mrf.mxu0
        %v1394 = vadd.f32 %v1225, %v1393
        %v1395 = vpop.f32.mrf.mxu0
        %v1396 = vadd.f32 %v1227, %v1395
        %1397 = vmatmul.bf16.gmra.mxu0 %v979
        %v1398 = vpop.f32.mrf.mxu0
        %v1399 = vadd.f32 %v1230, %v1398
        %v1400 = vpop.f32.mrf.mxu0
        %v1401 = vadd.f32 %v1232, %v1400
        %1402 = vmatmul.bf16.gmra.mxu0 %v981
        %v1403 = vpop.f32.mrf.mxu0
        %v1404 = vadd.f32 %v1235, %v1403
        %v1405 = vpop.f32.mrf.mxu0
        %v1406 = vadd.f32 %v1237, %v1405
        %1407 = vmatmul.bf16.gmra.mxu0 %v983
        %v1408 = vpop.f32.mrf.mxu0
        %v1409 = vadd.f32 %v1240, %v1408
        %v1410 = vpop.f32.mrf.mxu0
        %v1411 = vadd.f32 %v1242, %v1410
        %1412 = vmatmul.bf16.gmra.mxu0 %v985
        %v1413 = vpop.f32.mrf.mxu0
        %v1414 = vadd.f32 %v1245, %v1413
        %v1415 = vpop.f32.mrf.mxu0
        %v1416 = vadd.f32 %v1247, %v1415
        %1417 = vmatmul.bf16.gmra.mxu0 %v987
        %v1418 = vpop.f32.mrf.mxu0
        %v1419 = vadd.f32 %v1250, %v1418
        %v1420 = vpop.f32.mrf.mxu0
        %v1421 = vadd.f32 %v1252, %v1420
        %1422 = vmatmul.bf16.gmra.mxu0 %v989
        %v1423 = vpop.f32.mrf.mxu0
        %v1424 = vadd.f32 %v1255, %v1423
        %v1425 = vpop.f32.mrf.mxu0
        %v1426 = vadd.f32 %v1257, %v1425
        %1427 = vmatmul.bf16.gmra.mxu0 %v991
        %v1428 = vpop.f32.mrf.mxu0
        %v1429 = vadd.f32 %v1260, %v1428
        %v1430 = vpop.f32.mrf.mxu0
        %v1431 = vadd.f32 %v1262, %v1430
        %1432 = vmatmul.bf16.gmra.mxu0 %v993
        %v1433 = vpop.f32.mrf.mxu0
        %v1434 = vadd.f32 %v1265, %v1433
        %v1435 = vpop.f32.mrf.mxu0
        %v1436 = vadd.f32 %v1267, %v1435
        %1437 = vmatmul.bf16.gmra.mxu0 %v995
        %v1438 = vpop.f32.mrf.mxu0
        %v1439 = vadd.f32 %v1270, %v1438
        %v1440 = vpop.f32.mrf.mxu0
        %v1441 = vadd.f32 %v1272, %v1440
        %1442 = vmatmul.bf16.gmra.mxu0 %v997
        %v1443 = vpop.f32.mrf.mxu0
        %v1444 = vadd.f32 %v1275, %v1443
        %v1445 = vpop.f32.mrf.mxu0
        %v1446 = vadd.f32 %v1277, %v1445
        %1447 = vmatmul.bf16.gmra.mxu0 %v999
        %v1448 = vpop.f32.mrf.mxu0
        %v1449 = vadd.f32 %v1280, %v1448
        %v1450 = vpop.f32.mrf.mxu0
        %v1451 = vadd.f32 %v1282, %v1450
        %1452 = vmatmul.bf16.gmra.mxu0 %v1001
        %v1453 = vpop.f32.mrf.mxu0
        %v1454 = vadd.f32 %v1285, %v1453
        %v1455 = vpop.f32.mrf.mxu0
        %v1456 = vadd.f32 %v1287, %v1455
        %1457 = vmatmul.bf16.gmra.mxu0 %v1003
        %v1458 = vpop.f32.mrf.mxu0
        %v1459 = vadd.f32 %v1290, %v1458
        %v1460 = vpop.f32.mrf.mxu0
        %v1461 = vadd.f32 %v1292, %v1460
        %1462 = vmatmul.bf16.gmra.mxu0 %v1005
        %v1463 = vpop.f32.mrf.mxu0
        %v1464 = vadd.f32 %v1295, %v1463
        %v1465 = vpop.f32.mrf.mxu0
        %v1466 = vadd.f32 %v1297, %v1465
        %1467 = vmatmul.bf16.gmra.mxu0 %v1007
        %v1468 = vpop.f32.mrf.mxu0
        %v1469 = vadd.f32 %v1300, %v1468
        %v1470 = vpop.f32.mrf.mxu0
        %v1471 = vadd.f32 %v1302, %v1470
        %1472 = vmatmul.bf16.gmra.mxu0 %v1009
        %v1473 = vpop.f32.mrf.mxu0
        %v1474 = vadd.f32 %v1305, %v1473
        %v1475 = vpop.f32.mrf.mxu0
        %v1476 = vadd.f32 %v1307, %v1475
        %1477 = vmatmul.bf16.gmra.mxu0 %v1011
        %v1478 = vpop.f32.mrf.mxu0
        %v1479 = vadd.f32 %v1310, %v1478
        %v1480 = vpop.f32.mrf.mxu0
        %v1481 = vadd.f32 %v1312, %v1480
        %1482 = vmatmul.bf16.gmra.mxu0 %v1013
        %v1483 = vpop.f32.mrf.mxu0
        %v1484 = vadd.f32 %v1315, %v1483
        %v1485 = vpop.f32.mrf.mxu0
        %v1486 = vadd.f32 %v1317, %v1485
        %1487 = vmatmul.bf16.gmra.mxu0 %v1015
        %v1488 = vpop.f32.mrf.mxu0
        %v1489 = vadd.f32 %v1320, %v1488
        %v1490 = vpop.f32.mrf.mxu0
        %v1491 = vadd.f32 %v1322, %v1490
        %1492 = vmatmul.bf16.gmra.mxu0 %v1017
        %v1493 = vpop.f32.mrf.mxu0
        %v1494 = vadd.f32 %v1325, %v1493
        %v1495 = vpop.f32.mrf.mxu0
        %v1496 = vadd.f32 %v1327, %v1495
        %1497 = vmatmul.bf16.gmra.mxu0 %v1019
        %v1498 = vpop.f32.mrf.mxu0
        %v1499 = vadd.f32 %v1330, %v1498
        %v1500 = vpop.f32.mrf.mxu0
        %v1501 = vadd.f32 %v1332, %v1500
        %1502 = vmatmul.bf16.gmra.mxu0 %v1021
        %v1503 = vpop.f32.mrf.mxu0
        %v1504 = vadd.f32 %v1335, %v1503
        %v1505 = vpop.f32.mrf.mxu0
        %v1506 = vadd.f32 %v1337, %v1505
        %1507 = vmatmul.bf16.gmra.mxu0 %v1023
        %v1508 = vpop.f32.mrf.mxu0
        %v1509 = vadd.f32 %v1340, %v1508
        %v1510 = vpop.f32.mrf.mxu0
        %v1511 = vadd.f32 %v1342, %v1510
        %1512 = vmatmul.bf16.gmra.mxu0 %v1025
        %v1513 = vpop.f32.mrf.mxu0
        %v1514 = vadd.f32 %v1345, %v1513
        %v1515 = vpop.f32.mrf.mxu0
        %v1516 = vadd.f32 %v1347, %v1515
        %1517 = vmatmul.bf16.gmra.mxu0 %v1027
        %v1518 = vpop.f32.mrf.mxu0
        %v1519 = vadd.f32 %v1350, %v1518
        %v1520 = vpop.f32.mrf.mxu0
        %v1521 = vadd.f32 %v1352, %v1520
        %1522 = vmatmul.bf16.gmra.mxu0 %v1029
        %v1523 = vpop.f32.mrf.mxu0
        %v1524 = vadd.f32 %v1355, %v1523
        %v1525 = vpop.f32.mrf.mxu0
        %v1526 = vadd.f32 %v1357, %v1525
        %1527 = vdwg.mxu0
        %v1528 = vadd.f32 %v614, %v1369
        %v1529 = vadd.f32 %v615, %v1371
        %v1530 = vadd.f32 %v616, %v1374
        %v1531 = vadd.f32 %v617, %v1376
        %v1532 = vadd.f32 %v618, %v1379
        %v1533 = vadd.f32 %v619, %v1381
        %v1534 = vadd.f32 %v620, %v1384
        %v1535 = vadd.f32 %v621, %v1386
        %v1536 = vadd.f32 %v622, %v1389
        %v1537 = vadd.f32 %v623, %v1391
        %v1538 = vadd.f32 %v624, %v1394
        %v1539 = vadd.f32 %v625, %v1396
        %v1540 = vadd.f32 %v626, %v1399
        %v1541 = vadd.f32 %v627, %v1401
        %v1542 = vadd.f32 %v628, %v1404
        %v1543 = vadd.f32 %v629, %v1406
        %v1544 = vadd.f32 %v630, %v1409
        %v1545 = vadd.f32 %v631, %v1411
        %v1546 = vadd.f32 %v632, %v1414
        %v1547 = vadd.f32 %v633, %v1416
        %v1548 = vadd.f32 %v634, %v1419
        %v1549 = vadd.f32 %v635, %v1421
        %v1550 = vadd.f32 %v636, %v1424
        %v1551 = vadd.f32 %v637, %v1426
        %v1552 = vadd.f32 %v638, %v1429
        %v1553 = vadd.f32 %v639, %v1431
        %v1554 = vadd.f32 %v640, %v1434
        %v1555 = vadd.f32 %v641, %v1436
        %v1556 = vadd.f32 %v642, %v1439
        %v1557 = vadd.f32 %v643, %v1441
        %v1558 = vadd.f32 %v644, %v1444
        %v1559 = vadd.f32 %v645, %v1446
        %v1560 = vadd.f32 %v646, %v1449
        %v1561 = vadd.f32 %v647, %v1451
        %v1562 = vadd.f32 %v648, %v1454
        %v1563 = vadd.f32 %v649, %v1456
        %v1564 = vadd.f32 %v650, %v1459
        %v1565 = vadd.f32 %v651, %v1461
        %v1566 = vadd.f32 %v652, %v1464
        %v1567 = vadd.f32 %v653, %v1466
        %v1568 = vadd.f32 %v654, %v1469
        %v1569 = vadd.f32 %v655, %v1471
        %v1570 = vadd.f32 %v656, %v1474
        %v1571 = vadd.f32 %v657, %v1476
        %v1572 = vadd.f32 %v658, %v1479
        %v1573 = vadd.f32 %v659, %v1481
        %v1574 = vadd.f32 %v660, %v1484
        %v1575 = vadd.f32 %v661, %v1486
        %v1576 = vadd.f32 %v662, %v1489
        %v1577 = vadd.f32 %v663, %v1491
        %v1578 = vadd.f32 %v664, %v1494
        %v1579 = vadd.f32 %v665, %v1496
        %v1580 = vadd.f32 %v666, %v1499
        %v1581 = vadd.f32 %v667, %v1501
        %v1582 = vadd.f32 %v668, %v1504
        %v1583 = vadd.f32 %v669, %v1506
        %v1584 = vadd.f32 %v670, %v1509
        %v1585 = vadd.f32 %v671, %v1511
        %v1586 = vadd.f32 %v672, %v1514
        %v1587 = vadd.f32 %v673, %v1516
        %v1588 = vadd.f32 %v674, %v1519
        %v1589 = vadd.f32 %v675, %v1521
        %v1590 = vadd.f32 %v676, %v1524
        %v1591 = vadd.f32 %v677, %v1526
        %1592 = vst [vmem:[#allocation2] sm:$0xff] %v1528
        %1593 = vst [vmem:[#allocation2 + $0x8] sm:$0xff] %v1529
        %1594 = vst [vmem:[#allocation2 + $0x10] sm:$0xff] %v1530
        %1595 = vst [vmem:[#allocation2 + $0x18] sm:$0xff] %v1531
        %1596 = vst [vmem:[#allocation2 + $0x20] sm:$0xff] %v1532
        %1597 = vst [vmem:[#allocation2 + $0x28] sm:$0xff] %v1533
        %1598 = vst [vmem:[#allocation2 + $0x30] sm:$0xff] %v1534
        %1599 = vst [vmem:[#allocation2 + $0x38] sm:$0xff] %v1535
        %1600 = vst [vmem:[#allocation2 + $0x40] sm:$0xff] %v1536
        %1601 = vst [vmem:[#allocation2 + $0x48] sm:$0xff] %v1537
        %1602 = vst [vmem:[#allocation2 + $0x50] sm:$0xff] %v1538
        %1603 = vst [vmem:[#allocation2 + $0x58] sm:$0xff] %v1539
        %1604 = vst [vmem:[#allocation2 + $0x60] sm:$0xff] %v1540
        %1605 = vst [vmem:[#allocation2 + $0x68] sm:$0xff] %v1541
        %1606 = vst [vmem:[#allocation2 + $0x70] sm:$0xff] %v1542
        %1607 = vst [vmem:[#allocation2 + $0x78] sm:$0xff] %v1543
        %1608 = vst [vmem:[#allocation2 + $0x80] sm:$0xff] %v1544
        %1609 = vst [vmem:[#allocation2 + $0x88] sm:$0xff] %v1545
        %1610 = vst [vmem:[#allocation2 + $0x90] sm:$0xff] %v1546
        %1611 = vst [vmem:[#allocation2 + $0x98] sm:$0xff] %v1547
        %1612 = vst [vmem:[#allocation2 + $0xa0] sm:$0xff] %v1548
        %1613 = vst [vmem:[#allocation2 + $0xa8] sm:$0xff] %v1549
        %1614 = vst [vmem:[#allocation2 + $0xb0] sm:$0xff] %v1550
        %1615 = vst [vmem:[#allocation2 + $0xb8] sm:$0xff] %v1551
        %1616 = vst [vmem:[#allocation2 + $0xc0] sm:$0xff] %v1552
        %1617 = vst [vmem:[#allocation2 + $0xc8] sm:$0xff] %v1553
        %1618 = vst [vmem:[#allocation2 + $0xd0] sm:$0xff] %v1554
        %1619 = vst [vmem:[#allocation2 + $0xd8] sm:$0xff] %v1555
        %1620 = vst [vmem:[#allocation2 + $0xe0] sm:$0xff] %v1556
        %1621 = vst [vmem:[#allocation2 + $0xe8] sm:$0xff] %v1557
        %1622 = vst [vmem:[#allocation2 + $0xf0] sm:$0xff] %v1558
        %1623 = vst [vmem:[#allocation2 + $0xf8] sm:$0xff] %v1559
        %1624 = vst [vmem:[#allocation2 + $0x100] sm:$0xff] %v1560
        %1625 = vst [vmem:[#allocation2 + $0x108] sm:$0xff] %v1561
        %1626 = vst [vmem:[#allocation2 + $0x110] sm:$0xff] %v1562
        %1627 = vst [vmem:[#allocation2 + $0x118] sm:$0xff] %v1563
        %1628 = vst [vmem:[#allocation2 + $0x120] sm:$0xff] %v1564
        %1629 = vst [vmem:[#allocation2 + $0x128] sm:$0xff] %v1565
        %1630 = vst [vmem:[#allocation2 + $0x130] sm:$0xff] %v1566
        %1631 = vst [vmem:[#allocation2 + $0x138] sm:$0xff] %v1567
        %1632 = vst [vmem:[#allocation2 + $0x140] sm:$0xff] %v1568
        %1633 = vst [vmem:[#allocation2 + $0x148] sm:$0xff] %v1569
        %1634 = vst [vmem:[#allocation2 + $0x150] sm:$0xff] %v1570
        %1635 = vst [vmem:[#allocation2 + $0x158] sm:$0xff] %v1571
        %1636 = vst [vmem:[#allocation2 + $0x160] sm:$0xff] %v1572
        %1637 = vst [vmem:[#allocation2 + $0x168] sm:$0xff] %v1573
        %1638 = vst [vmem:[#allocation2 + $0x170] sm:$0xff] %v1574
        %1639 = vst [vmem:[#allocation2 + $0x178] sm:$0xff] %v1575
        %1640 = vst [vmem:[#allocation2 + $0x180] sm:$0xff] %v1576
        %1641 = vst [vmem:[#allocation2 + $0x188] sm:$0xff] %v1577
        %1642 = vst [vmem:[#allocation2 + $0x190] sm:$0xff] %v1578
        %1643 = vst [vmem:[#allocation2 + $0x198] sm:$0xff] %v1579
        %1644 = vst [vmem:[#allocation2 + $0x1a0] sm:$0xff] %v1580
        %1645 = vst [vmem:[#allocation2 + $0x1a8] sm:$0xff] %v1581
        %1646 = vst [vmem:[#allocation2 + $0x1b0] sm:$0xff] %v1582
        %1647 = vst [vmem:[#allocation2 + $0x1b8] sm:$0xff] %v1583
        %1648 = vst [vmem:[#allocation2 + $0x1c0] sm:$0xff] %v1584
        %1649 = vst [vmem:[#allocation2 + $0x1c8] sm:$0xff] %v1585
        %1650 = vst [vmem:[#allocation2 + $0x1d0] sm:$0xff] %v1586
        %1651 = vst [vmem:[#allocation2 + $0x1d8] sm:$0xff] %v1587
        %1652 = vst [vmem:[#allocation2 + $0x1e0] sm:$0xff] %v1588
        %1653 = vst [vmem:[#allocation2 + $0x1e8] sm:$0xff] %v1589
        %1654 = vst [vmem:[#allocation2 + $0x1f0] sm:$0xff] %v1590
        %1655 = vst [vmem:[#allocation2 + $0x1f8] sm:$0xff] %v1591
        %p1656 = scmp.eq.s32.totalorder %s21, 8
        // Predicated region
        $region75: #{unet_forward.7} parent=65 // pred_check
          %p1657 = pneg %p1656
        $region76: #{unet_forward.7} parent=65 // pred_check_branch
          %1659 = sbr.rel (%p1657) target = $region78
        $region77: #{unet_forward.7} parent=65 // pred_region
          %v1660 = vld [vmem:[#allocation2] sm:$0xff]
          %v1661 = vld [vmem:[#allocation2 + $0x8] sm:$0xff]
          %v1662 = vld [vmem:[#allocation2 + $0x10] sm:$0xff]
          %v1663 = vld [vmem:[#allocation2 + $0x18] sm:$0xff]
          %v1664 = vld [vmem:[#allocation2 + $0x20] sm:$0xff]
          %v1665 = vld [vmem:[#allocation2 + $0x28] sm:$0xff]
          %v1666 = vld [vmem:[#allocation2 + $0x30] sm:$0xff]
          %v1667 = vld [vmem:[#allocation2 + $0x38] sm:$0xff]
          %v1668 = vld [vmem:[#allocation2 + $0x40] sm:$0xff]
          %v1669 = vld [vmem:[#allocation2 + $0x48] sm:$0xff]
          %v1670 = vld [vmem:[#allocation2 + $0x50] sm:$0xff]
          %v1671 = vld [vmem:[#allocation2 + $0x58] sm:$0xff]
          %v1672 = vld [vmem:[#allocation2 + $0x60] sm:$0xff]
          %v1673 = vld [vmem:[#allocation2 + $0x68] sm:$0xff]
          %v1674 = vld [vmem:[#allocation2 + $0x70] sm:$0xff]
          %v1675 = vld [vmem:[#allocation2 + $0x78] sm:$0xff]
          %v1676 = vld [vmem:[#allocation2 + $0x80] sm:$0xff]
          %v1677 = vld [vmem:[#allocation2 + $0x88] sm:$0xff]
          %v1678 = vld [vmem:[#allocation2 + $0x90] sm:$0xff]
          %v1679 = vld [vmem:[#allocation2 + $0x98] sm:$0xff]
          %v1680 = vld [vmem:[#allocation2 + $0xa0] sm:$0xff]
          %v1681 = vld [vmem:[#allocation2 + $0xa8] sm:$0xff]
          %v1682 = vld [vmem:[#allocation2 + $0xb0] sm:$0xff]
          %v1683 = vld [vmem:[#allocation2 + $0xb8] sm:$0xff]
          %v1684 = vld [vmem:[#allocation2 + $0xc0] sm:$0xff]
          %v1685 = vld [vmem:[#allocation2 + $0xc8] sm:$0xff]
          %v1686 = vld [vmem:[#allocation2 + $0xd0] sm:$0xff]
          %v1687 = vld [vmem:[#allocation2 + $0xd8] sm:$0xff]
          %v1688 = vld [vmem:[#allocation2 + $0xe0] sm:$0xff]
          %v1689 = vld [vmem:[#allocation2 + $0xe8] sm:$0xff]
          %v1690 = vld [vmem:[#allocation2 + $0xf0] sm:$0xff]
          %v1691 = vld [vmem:[#allocation2 + $0xf8] sm:$0xff]
          %v1692 = vld [vmem:[#allocation2 + $0x100] sm:$0xff]
          %v1693 = vld [vmem:[#allocation2 + $0x108] sm:$0xff]
          %v1694 = vld [vmem:[#allocation2 + $0x110] sm:$0xff]
          %v1695 = vld [vmem:[#allocation2 + $0x118] sm:$0xff]
          %v1696 = vld [vmem:[#allocation2 + $0x120] sm:$0xff]
          %v1697 = vld [vmem:[#allocation2 + $0x128] sm:$0xff]
          %v1698 = vld [vmem:[#allocation2 + $0x130] sm:$0xff]
          %v1699 = vld [vmem:[#allocation2 + $0x138] sm:$0xff]
          %v1700 = vld [vmem:[#allocation2 + $0x140] sm:$0xff]
          %v1701 = vld [vmem:[#allocation2 + $0x148] sm:$0xff]
          %v1702 = vld [vmem:[#allocation2 + $0x150] sm:$0xff]
          %v1703 = vld [vmem:[#allocation2 + $0x158] sm:$0xff]
          %v1704 = vld [vmem:[#allocation2 + $0x160] sm:$0xff]
          %v1705 = vld [vmem:[#allocation2 + $0x168] sm:$0xff]
          %v1706 = vld [vmem:[#allocation2 + $0x170] sm:$0xff]
          %v1707 = vld [vmem:[#allocation2 + $0x178] sm:$0xff]
          %v1708 = vld [vmem:[#allocation2 + $0x180] sm:$0xff]
          %v1709 = vld [vmem:[#allocation2 + $0x188] sm:$0xff]
          %v1710 = vld [vmem:[#allocation2 + $0x190] sm:$0xff]
          %v1711 = vld [vmem:[#allocation2 + $0x198] sm:$0xff]
          %v1712 = vld [vmem:[#allocation2 + $0x1a0] sm:$0xff]
          %v1713 = vld [vmem:[#allocation2 + $0x1a8] sm:$0xff]
          %v1714 = vld [vmem:[#allocation2 + $0x1b0] sm:$0xff]
          %v1715 = vld [vmem:[#allocation2 + $0x1b8] sm:$0xff]
          %v1716 = vld [vmem:[#allocation2 + $0x1c0] sm:$0xff]
          %v1717 = vld [vmem:[#allocation2 + $0x1c8] sm:$0xff]
          %v1718 = vld [vmem:[#allocation2 + $0x1d0] sm:$0xff]
          %v1719 = vld [vmem:[#allocation2 + $0x1d8] sm:$0xff]
          %v1720 = vld [vmem:[#allocation2 + $0x1e0] sm:$0xff]
          %v1721 = vld [vmem:[#allocation2 + $0x1e8] sm:$0xff]
          %v1722 = vld [vmem:[#allocation2 + $0x1f0] sm:$0xff]
          %v1723 = vld [vmem:[#allocation2 + $0x1f8] sm:$0xff]
          %vm1724 = vcmp.ge.f32.partialorder %v1660, 0.0
          %vm1725 = vcmp.ge.f32.partialorder %v1661, 0.0
          %vm1726 = vcmp.ge.f32.partialorder %v1662, 0.0
          %vm1727 = vcmp.ge.f32.partialorder %v1663, 0.0
          %vm1728 = vcmp.ge.f32.partialorder %v1664, 0.0
          %vm1729 = vcmp.ge.f32.partialorder %v1665, 0.0
          %vm1730 = vcmp.ge.f32.partialorder %v1666, 0.0
          %vm1731 = vcmp.ge.f32.partialorder %v1667, 0.0
          %vm1732 = vcmp.ge.f32.partialorder %v1668, 0.0
          %vm1733 = vcmp.ge.f32.partialorder %v1669, 0.0
          %vm1734 = vcmp.ge.f32.partialorder %v1670, 0.0
          %vm1735 = vcmp.ge.f32.partialorder %v1671, 0.0
          %vm1736 = vcmp.ge.f32.partialorder %v1672, 0.0
          %vm1737 = vcmp.ge.f32.partialorder %v1673, 0.0
          %vm1738 = vcmp.ge.f32.partialorder %v1674, 0.0
          %vm1739 = vcmp.ge.f32.partialorder %v1675, 0.0
          %vm1740 = vcmp.ge.f32.partialorder %v1676, 0.0
          %vm1741 = vcmp.ge.f32.partialorder %v1677, 0.0
          %vm1742 = vcmp.ge.f32.partialorder %v1678, 0.0
          %vm1743 = vcmp.ge.f32.partialorder %v1679, 0.0
          %vm1744 = vcmp.ge.f32.partialorder %v1680, 0.0
          %vm1745 = vcmp.ge.f32.partialorder %v1681, 0.0
          %vm1746 = vcmp.ge.f32.partialorder %v1682, 0.0
          %vm1747 = vcmp.ge.f32.partialorder %v1683, 0.0
          %vm1748 = vcmp.ge.f32.partialorder %v1684, 0.0
          %vm1749 = vcmp.ge.f32.partialorder %v1685, 0.0
          %vm1750 = vcmp.ge.f32.partialorder %v1686, 0.0
          %vm1751 = vcmp.ge.f32.partialorder %v1687, 0.0
          %vm1752 = vcmp.ge.f32.partialorder %v1688, 0.0
          %vm1753 = vcmp.ge.f32.partialorder %v1689, 0.0
          %vm1754 = vcmp.ge.f32.partialorder %v1690, 0.0
          %vm1755 = vcmp.ge.f32.partialorder %v1691, 0.0
          %vm1756 = vcmp.ge.f32.partialorder %v1692, 0.0
          %vm1757 = vcmp.ge.f32.partialorder %v1693, 0.0
          %vm1758 = vcmp.ge.f32.partialorder %v1694, 0.0
          %vm1759 = vcmp.ge.f32.partialorder %v1695, 0.0
          %vm1760 = vcmp.ge.f32.partialorder %v1696, 0.0
          %vm1761 = vcmp.ge.f32.partialorder %v1697, 0.0
          %vm1762 = vcmp.ge.f32.partialorder %v1698, 0.0
          %vm1763 = vcmp.ge.f32.partialorder %v1699, 0.0
          %vm1764 = vcmp.ge.f32.partialorder %v1700, 0.0
          %vm1765 = vcmp.ge.f32.partialorder %v1701, 0.0
          %vm1766 = vcmp.ge.f32.partialorder %v1702, 0.0
          %vm1767 = vcmp.ge.f32.partialorder %v1703, 0.0
          %vm1768 = vcmp.ge.f32.partialorder %v1704, 0.0
          %vm1769 = vcmp.ge.f32.partialorder %v1705, 0.0
          %vm1770 = vcmp.ge.f32.partialorder %v1706, 0.0
          %vm1771 = vcmp.ge.f32.partialorder %v1707, 0.0
          %vm1772 = vcmp.ge.f32.partialorder %v1708, 0.0
          %vm1773 = vcmp.ge.f32.partialorder %v1709, 0.0
          %vm1774 = vcmp.ge.f32.partialorder %v1710, 0.0
          %vm1775 = vcmp.ge.f32.partialorder %v1711, 0.0
          %vm1776 = vcmp.ge.f32.partialorder %v1712, 0.0
          %vm1777 = vcmp.ge.f32.partialorder %v1713, 0.0
          %vm1778 = vcmp.ge.f32.partialorder %v1714, 0.0
          %vm1779 = vcmp.ge.f32.partialorder %v1715, 0.0
          %vm1780 = vcmp.ge.f32.partialorder %v1716, 0.0
          %vm1781 = vcmp.ge.f32.partialorder %v1717, 0.0
          %vm1782 = vcmp.ge.f32.partialorder %v1718, 0.0
          %vm1783 = vcmp.ge.f32.partialorder %v1719, 0.0
          %vm1784 = vcmp.ge.f32.partialorder %v1720, 0.0
          %vm1785 = vcmp.ge.f32.partialorder %v1721, 0.0
          %vm1786 = vcmp.ge.f32.partialorder %v1722, 0.0
          %vm1787 = vcmp.ge.f32.partialorder %v1723, 0.0
          %v1788 = vmul.f32 %v1660, 0.0
          %v1789 = vmul.f32 %v1661, 0.0
          %v1790 = vmul.f32 %v1662, 0.0
          %v1791 = vmul.f32 %v1663, 0.0
          %v1792 = vmul.f32 %v1664, 0.0
          %v1793 = vmul.f32 %v1665, 0.0
          %v1794 = vmul.f32 %v1666, 0.0
          %v1795 = vmul.f32 %v1667, 0.0
          %v1796 = vmul.f32 %v1668, 0.0
          %v1797 = vmul.f32 %v1669, 0.0
          %v1798 = vmul.f32 %v1670, 0.0
          %v1799 = vmul.f32 %v1671, 0.0
          %v1800 = vmul.f32 %v1672, 0.0
          %v1801 = vmul.f32 %v1673, 0.0
          %v1802 = vmul.f32 %v1674, 0.0
          %v1803 = vmul.f32 %v1675, 0.0
          %v1804 = vmul.f32 %v1676, 0.0
          %v1805 = vmul.f32 %v1677, 0.0
          %v1806 = vmul.f32 %v1678, 0.0
          %v1807 = vmul.f32 %v1679, 0.0
          %v1808 = vmul.f32 %v1680, 0.0
          %v1809 = vmul.f32 %v1681, 0.0
          %v1810 = vmul.f32 %v1682, 0.0
          %v1811 = vmul.f32 %v1683, 0.0
          %v1812 = vmul.f32 %v1684, 0.0
          %v1813 = vmul.f32 %v1685, 0.0
          %v1814 = vmul.f32 %v1686, 0.0
          %v1815 = vmul.f32 %v1687, 0.0
          %v1816 = vmul.f32 %v1688, 0.0
          %v1817 = vmul.f32 %v1689, 0.0
          %v1818 = vmul.f32 %v1690, 0.0
          %v1819 = vmul.f32 %v1691, 0.0
          %v1820 = vmul.f32 %v1692, 0.0
          %v1821 = vmul.f32 %v1693, 0.0
          %v1822 = vmul.f32 %v1694, 0.0
          %v1823 = vmul.f32 %v1695, 0.0
          %v1824 = vmul.f32 %v1696, 0.0
          %v1825 = vmul.f32 %v1697, 0.0
          %v1826 = vmul.f32 %v1698, 0.0
          %v1827 = vmul.f32 %v1699, 0.0
          %v1828 = vmul.f32 %v1700, 0.0
          %v1829 = vmul.f32 %v1701, 0.0
          %v1830 = vmul.f32 %v1702, 0.0
          %v1831 = vmul.f32 %v1703, 0.0
          %v1832 = vmul.f32 %v1704, 0.0
          %v1833 = vmul.f32 %v1705, 0.0
          %v1834 = vmul.f32 %v1706, 0.0
          %v1835 = vmul.f32 %v1707, 0.0
          %v1836 = vmul.f32 %v1708, 0.0
          %v1837 = vmul.f32 %v1709, 0.0
          %v1838 = vmul.f32 %v1710, 0.0
          %v1839 = vmul.f32 %v1711, 0.0
          %v1840 = vmul.f32 %v1712, 0.0
          %v1841 = vmul.f32 %v1713, 0.0
          %v1842 = vmul.f32 %v1714, 0.0
          %v1843 = vmul.f32 %v1715, 0.0
          %v1844 = vmul.f32 %v1716, 0.0
          %v1845 = vmul.f32 %v1717, 0.0
          %v1846 = vmul.f32 %v1718, 0.0
          %v1847 = vmul.f32 %v1719, 0.0
          %v1848 = vmul.f32 %v1720, 0.0
          %v1849 = vmul.f32 %v1721, 0.0
          %v1850 = vmul.f32 %v1722, 0.0
          %v1851 = vmul.f32 %v1723, 0.0
          %v1852 = vsel %vm1724, %v1660, %v1788
          %v1853 = vsel %vm1725, %v1661, %v1789
          %v1854 = vsel %vm1726, %v1662, %v1790
          %v1855 = vsel %vm1727, %v1663, %v1791
          %v1856 = vsel %vm1728, %v1664, %v1792
          %v1857 = vsel %vm1729, %v1665, %v1793
          %v1858 = vsel %vm1730, %v1666, %v1794
          %v1859 = vsel %vm1731, %v1667, %v1795
          %v1860 = vsel %vm1732, %v1668, %v1796
          %v1861 = vsel %vm1733, %v1669, %v1797
          %v1862 = vsel %vm1734, %v1670, %v1798
          %v1863 = vsel %vm1735, %v1671, %v1799
          %v1864 = vsel %vm1736, %v1672, %v1800
          %v1865 = vsel %vm1737, %v1673, %v1801
          %v1866 = vsel %vm1738, %v1674, %v1802
          %v1867 = vsel %vm1739, %v1675, %v1803
          %v1868 = vsel %vm1740, %v1676, %v1804
          %v1869 = vsel %vm1741, %v1677, %v1805
          %v1870 = vsel %vm1742, %v1678, %v1806
          %v1871 = vsel %vm1743, %v1679, %v1807
          %v1872 = vsel %vm1744, %v1680, %v1808
          %v1873 = vsel %vm1745, %v1681, %v1809
          %v1874 = vsel %vm1746, %v1682, %v1810
          %v1875 = vsel %vm1747, %v1683, %v1811
          %v1876 = vsel %vm1748, %v1684, %v1812
          %v1877 = vsel %vm1749, %v1685, %v1813
          %v1878 = vsel %vm1750, %v1686, %v1814
          %v1879 = vsel %vm1751, %v1687, %v1815
          %v1880 = vsel %vm1752, %v1688, %v1816
          %v1881 = vsel %vm1753, %v1689, %v1817
          %v1882 = vsel %vm1754, %v1690, %v1818
          %v1883 = vsel %vm1755, %v1691, %v1819
          %v1884 = vsel %vm1756, %v1692, %v1820
          %v1885 = vsel %vm1757, %v1693, %v1821
          %v1886 = vsel %vm1758, %v1694, %v1822
          %v1887 = vsel %vm1759, %v1695, %v1823
          %v1888 = vsel %vm1760, %v1696, %v1824
          %v1889 = vsel %vm1761, %v1697, %v1825
          %v1890 = vsel %vm1762, %v1698, %v1826
          %v1891 = vsel %vm1763, %v1699, %v1827
          %v1892 = vsel %vm1764, %v1700, %v1828
          %v1893 = vsel %vm1765, %v1701, %v1829
          %v1894 = vsel %vm1766, %v1702, %v1830
          %v1895 = vsel %vm1767, %v1703, %v1831
          %v1896 = vsel %vm1768, %v1704, %v1832
          %v1897 = vsel %vm1769, %v1705, %v1833
          %v1898 = vsel %vm1770, %v1706, %v1834
          %v1899 = vsel %vm1771, %v1707, %v1835
          %v1900 = vsel %vm1772, %v1708, %v1836
          %v1901 = vsel %vm1773, %v1709, %v1837
          %v1902 = vsel %vm1774, %v1710, %v1838
          %v1903 = vsel %vm1775, %v1711, %v1839
          %v1904 = vsel %vm1776, %v1712, %v1840
          %v1905 = vsel %vm1777, %v1713, %v1841
          %v1906 = vsel %vm1778, %v1714, %v1842
          %v1907 = vsel %vm1779, %v1715, %v1843
          %v1908 = vsel %vm1780, %v1716, %v1844
          %v1909 = vsel %vm1781, %v1717, %v1845
          %v1910 = vsel %vm1782, %v1718, %v1846
          %v1911 = vsel %vm1783, %v1719, %v1847
          %v1912 = vsel %vm1784, %v1720, %v1848
          %v1913 = vsel %vm1785, %v1721, %v1849
          %v1914 = vsel %vm1786, %v1722, %v1850
          %v1915 = vsel %vm1787, %v1723, %v1851
          %1916 = vst [vmem:[%s542] sm:$0xff] %v1852
          %1917 = vst [vmem:[%s542 + $0x8] sm:$0xff] %v1853
          %1918 = vst [vmem:[%s542 + $0x10] sm:$0xff] %v1854
          %1919 = vst [vmem:[%s542 + $0x18] sm:$0xff] %v1855
          %1920 = vst [vmem:[%s542 + $0x20] sm:$0xff] %v1856
          %1921 = vst [vmem:[%s542 + $0x28] sm:$0xff] %v1857
          %1922 = vst [vmem:[%s542 + $0x30] sm:$0xff] %v1858
          %1923 = vst [vmem:[%s542 + $0x38] sm:$0xff] %v1859
          %1924 = vst [vmem:[%s542 + $0x40] sm:$0xff] %v1860
          %1925 = vst [vmem:[%s542 + $0x48] sm:$0xff] %v1861
          %1926 = vst [vmem:[%s542 + $0x50] sm:$0xff] %v1862
          %1927 = vst [vmem:[%s542 + $0x58] sm:$0xff] %v1863
          %1928 = vst [vmem:[%s542 + $0x60] sm:$0xff] %v1864
          %1929 = vst [vmem:[%s542 + $0x68] sm:$0xff] %v1865
          %1930 = vst [vmem:[%s542 + $0x70] sm:$0xff] %v1866
          %1931 = vst [vmem:[%s542 + $0x78] sm:$0xff] %v1867
          %1932 = vst [vmem:[%s542 + $0x80] sm:$0xff] %v1868
          %1933 = vst [vmem:[%s542 + $0x88] sm:$0xff] %v1869
          %1934 = vst [vmem:[%s542 + $0x90] sm:$0xff] %v1870
          %1935 = vst [vmem:[%s542 + $0x98] sm:$0xff] %v1871
          %1936 = vst [vmem:[%s542 + $0xa0] sm:$0xff] %v1872
          %1937 = vst [vmem:[%s542 + $0xa8] sm:$0xff] %v1873
          %1938 = vst [vmem:[%s542 + $0xb0] sm:$0xff] %v1874
          %1939 = vst [vmem:[%s542 + $0xb8] sm:$0xff] %v1875
          %1940 = vst [vmem:[%s542 + $0xc0] sm:$0xff] %v1876
          %1941 = vst [vmem:[%s542 + $0xc8] sm:$0xff] %v1877
          %1942 = vst [vmem:[%s542 + $0xd0] sm:$0xff] %v1878
          %1943 = vst [vmem:[%s542 + $0xd8] sm:$0xff] %v1879
          %1944 = vst [vmem:[%s542 + $0xe0] sm:$0xff] %v1880
          %1945 = vst [vmem:[%s542 + $0xe8] sm:$0xff] %v1881
          %1946 = vst [vmem:[%s542 + $0xf0] sm:$0xff] %v1882
          %1947 = vst [vmem:[%s542 + $0xf8] sm:$0xff] %v1883
          %1948 = vst [vmem:[%s542 + $0x100] sm:$0xff] %v1884
          %1949 = vst [vmem:[%s542 + $0x108] sm:$0xff] %v1885
          %1950 = vst [vmem:[%s542 + $0x110] sm:$0xff] %v1886
          %1951 = vst [vmem:[%s542 + $0x118] sm:$0xff] %v1887
          %1952 = vst [vmem:[%s542 + $0x120] sm:$0xff] %v1888
          %1953 = vst [vmem:[%s542 + $0x128] sm:$0xff] %v1889
          %1954 = vst [vmem:[%s542 + $0x130] sm:$0xff] %v1890
          %1955 = vst [vmem:[%s542 + $0x138] sm:$0xff] %v1891
          %1956 = vst [vmem:[%s542 + $0x140] sm:$0xff] %v1892
          %1957 = vst [vmem:[%s542 + $0x148] sm:$0xff] %v1893
          %1958 = vst [vmem:[%s542 + $0x150] sm:$0xff] %v1894
          %1959 = vst [vmem:[%s542 + $0x158] sm:$0xff] %v1895
          %1960 = vst [vmem:[%s542 + $0x160] sm:$0xff] %v1896
          %1961 = vst [vmem:[%s542 + $0x168] sm:$0xff] %v1897
          %1962 = vst [vmem:[%s542 + $0x170] sm:$0xff] %v1898
          %1963 = vst [vmem:[%s542 + $0x178] sm:$0xff] %v1899
          %1964 = vst [vmem:[%s542 + $0x180] sm:$0xff] %v1900
          %1965 = vst [vmem:[%s542 + $0x188] sm:$0xff] %v1901
          %1966 = vst [vmem:[%s542 + $0x190] sm:$0xff] %v1902
          %1967 = vst [vmem:[%s542 + $0x198] sm:$0xff] %v1903
          %1968 = vst [vmem:[%s542 + $0x1a0] sm:$0xff] %v1904
          %1969 = vst [vmem:[%s542 + $0x1a8] sm:$0xff] %v1905
          %1970 = vst [vmem:[%s542 + $0x1b0] sm:$0xff] %v1906
          %1971 = vst [vmem:[%s542 + $0x1b8] sm:$0xff] %v1907
          %1972 = vst [vmem:[%s542 + $0x1c0] sm:$0xff] %v1908
          %1973 = vst [vmem:[%s542 + $0x1c8] sm:$0xff] %v1909
          %1974 = vst [vmem:[%s542 + $0x1d0] sm:$0xff] %v1910
          %1975 = vst [vmem:[%s542 + $0x1d8] sm:$0xff] %v1911
          %1976 = vst [vmem:[%s542 + $0x1e0] sm:$0xff] %v1912
          %1977 = vst [vmem:[%s542 + $0x1e8] sm:$0xff] %v1913
          %1978 = vst [vmem:[%s542 + $0x1f0] sm:$0xff] %v1914
          %1979 = vst [vmem:[%s542 + $0x1f8] sm:$0xff] %v1915
        $region78: #{unet_forward.7} parent=65 // pred_fallthru
          _
        %s1980 = smul.u32 64, %s19
        %p1981 = scmp.lt.s32.totalorder %s1980, 63
        %s1982 = scalar_select %p1981, %s1980, 63
        %p1983 = scmp.lt.s32.totalorder %s20, 0
        %s1984 = scalar_select %p1983, %s20, 0
        %s1985 = sadd.s32 %s1984, %s1982
        %s1986 = smul.addr %s1985, 8
        %s1987 = scalar_lea.vmem %s3, %s1986
        // Predicated region
        $region79: #{unet_forward.7} parent=65 // pred_check
          %p1988 = pneg %p135
        $region80: #{unet_forward.7} parent=65 // pred_check_branch
          %1990 = sbr.rel (%p1988) target = $region82
        $region81: #{unet_forward.7} parent=65 // pred_region
          %s1991 = smul.u32 64, %s19
        $region82: #{unet_forward.7} parent=65 // pred_fallthru
          _
        // Predicated region
        $region83: #{unet_forward.7} parent=65 // pred_check
          %p1992 = pneg %p135
        $region84: #{unet_forward.7} parent=65 // pred_check_branch
          %1994 = sbr.rel (%p1992) target = $region86
        $region85: #{unet_forward.7} parent=65 // pred_region
          %s1995 = smul.u32 64, %s19
          %p1996 = scmp.lt.s32.totalorder %s1995, 63
          %s1997 = scalar_select %p1996, %s1995, 63
          %p1998 = scmp.lt.s32.totalorder %s20, 0
          %s1999 = scalar_select %p1998, %s20, 0
          %s2000 = sadd.s32 %s1999, %s1997
          %s2001 = smul.addr %s2000, 8
          %s2002 = scalar_lea.vmem %s3, %s2001
        $region86: #{unet_forward.7} parent=65 // pred_fallthru
          _
      $region66: #{unet_forward.7} parent=5 // pred_fallthru
        _
      %p2003 = scmp.le.s32.totalorder 2, %s9
      // Predicated region
      $region87: #{unet_forward.7} parent=5 // pred_check
        %p2004 = pneg %p2003
      $region88: #{unet_forward.7} parent=5 // pred_check_branch
        %2006 = sbr.rel (%p2004) target = $region90
      $region89: #{unet_forward.7} parent=5 // pred_region
        %s2007 = ssub.s32 %s9, 2
      $region90: #{unet_forward.7} parent=5 // pred_fallthru
        _
    $region6: #{unet_forward.7} parent=1 // loop_footer
      %s13 = sadd.s32 1, %s9
    $region7: #{unet_forward.7} parent=1 // loop_footer_branch
      %8 = sbr.rel target = $region3
    $region8: #{unet_forward.7} parent=1 // loop_exit
      _

</llo_original>
